<compile_context>
chip_gen: v5e
topology: v5e:2x2
jax: 0.10.0
libtpu: 0.0.40
codegen_flags: <defaults>
</compile_context>

<pallas_src>
import jax
import jax.numpy as jnp
from jax import lax
from jax.experimental import pallas as pl
from jax.experimental.pallas import tpu as pltpu


def _basic_block_kernel(x_ref, w1_ref, b1_ref, w2_ref, b2_ref, o_ref,
                        xpad_ref, mid_ref, acc_ref):
    # x_ref   : (H, W, C)       bf16 input for this batch element (unpadded)
    # w1_ref  : (3, 3*C, P)     bf16 conv1 weights, BN1 scale folded, dy-major
    # b1_ref  : (1, P)          f32 folded BN1 bias
    # w2_ref  : (3, 3*P, P)     bf16 conv2 weights, BN2 scale folded
    # b2_ref  : (1, P)          f32 folded BN2 bias
    # o_ref   : (H, W, P)       f32 output
    # xpad_ref: (H+2, W+2, C)   bf16 scratch (zero-halo padded input)
    # mid_ref : (H+2, W+2, P)   bf16 scratch (zero-halo padded conv1 output)
    # acc_ref : (H, W, P)       f32 scratch accumulator
    H, W, C = x_ref.shape
    P = o_ref.shape[-1]
    Hp, Wp = H + 2, W + 2
    N = H * W

    # Zero only the 1-pixel halo frame of the padded scratches (cheap; done
    # every grid step so it stays correct when the batch axis is sharded
    # across TensorCores and scratch VMEM starts uninitialized).
    for ref in (xpad_ref, mid_ref):
        cz = ref.shape[-1]
        zrow = jnp.zeros((1, Wp, cz), ref.dtype)
        zcol = jnp.zeros((Hp, 1, cz), ref.dtype)
        ref[0:1, :, :] = zrow
        ref[Hp - 1:Hp, :, :] = zrow
        ref[:, 0:1, :] = zcol
        ref[:, Wp - 1:Wp, :] = zcol

    # In-kernel padding: copy the interior (no wrapper-side jnp.pad).
    xpad_ref[1:1 + H, 1:1 + W, :] = x_ref[...]

    def conv3x3_bias(src_ref, w_ref, b_ref):
        # Bias folded into accumulator init; then 3 MXU matmuls (one per dy)
        # with the 3 dx taps concatenated on the lane axis -> K = 3 * Cin.
        cin = src_ref.shape[-1]
        acc_ref[...] = jnp.broadcast_to(b_ref[...], (H, W, P)).astype(jnp.float32)
        for dy in range(3):
            slab = src_ref[dy:dy + H, :, :]                   # (H, W+2, cin)
            patch = jnp.concatenate(
                [slab[:, dx:dx + W, :] for dx in range(3)], axis=-1)
            contrib = jnp.dot(patch.reshape(N, 3 * cin), w_ref[dy],
                              preferred_element_type=jnp.float32)
            acc_ref[...] += contrib.reshape(H, W, P)

    # conv1 -> bn1 (scale folded in weights, bias folded in acc init) -> relu
    conv3x3_bias(xpad_ref, w1_ref, b1_ref)
    mid_ref[1:1 + H, 1:1 + W, :] = jnp.maximum(
        acc_ref[...], 0.0).astype(mid_ref.dtype)

    # conv2 -> bn2 -> + identity residual -> relu
    conv3x3_bias(mid_ref, w2_ref, b2_ref)
    residual = x_ref[...].astype(jnp.float32)
    o_ref[...] = jnp.maximum(acc_ref[...] + residual, 0.0)


def _fold_bn(gamma, beta, mean, var, eps=1e-5):
    scale = gamma / jnp.sqrt(var + eps)
    bias = beta - mean * scale
    return scale, bias


def basic_block_forward(x_nchw, params, *, eps=1e-5):
    """Fused BasicBlock forward. x_nchw: (B, C, H, W) f32 -> (B, C, H, W) f32.

    (The NCHW<->NHWC transposes only exist at this PyTorch-convention
    boundary; a full NHWC model would feed the kernel directly.)
    """
    B, C, H, W = x_nchw.shape
    P = params["w1"].shape[0]                     # conv weight is (out, in, 3, 3)
    assert C == P, "identity shortcut requires inplanes == planes"
    # TODO(synk): stride>1 / downsample path and training-mode BN not implemented.

    # NHWC with channels on the lane axis; bf16 matmul operands.
    x = jnp.transpose(x_nchw, (0, 2, 3, 1)).astype(jnp.bfloat16)

    # Fold BN scale into the conv weights; only the bias stays in the kernel.
    s1, b1 = _fold_bn(params["g1"], params["be1"], params["m1"], params["v1"], eps)
    s2, b2 = _fold_bn(params["g2"], params["be2"], params["m2"], params["v2"], eps)
    w1 = jnp.transpose(params["w1"], (2, 3, 1, 0)) * s1        # HWIO, scaled on P
    w2 = jnp.transpose(params["w2"], (2, 3, 1, 0)) * s2
    # dy-major packing (3, 3, Cin, P) -> (3, 3*Cin, P): one deep-K matmul per dy.
    w1r = w1.reshape(3, 3 * C, P).astype(jnp.bfloat16)
    w2r = w2.reshape(3, 3 * P, P).astype(jnp.bfloat16)
    b1 = b1.reshape(1, P).astype(jnp.float32)
    b2 = b2.reshape(1, P).astype(jnp.float32)

    grid_spec = pltpu.PrefetchScalarGridSpec(
        num_scalar_prefetch=0,
        grid=(B,),
        in_specs=[
            pl.BlockSpec((None, H, W, C), lambda b: (b, 0, 0, 0)),   # x
            pl.BlockSpec((3, 3 * C, P), lambda b: (0, 0, 0)),        # w1 (resident)
            pl.BlockSpec((1, P), lambda b: (0, 0)),                  # b1
            pl.BlockSpec((3, 3 * P, P), lambda b: (0, 0, 0)),        # w2 (resident)
            pl.BlockSpec((1, P), lambda b: (0, 0)),                  # b2
        ],
        out_specs=pl.BlockSpec((None, H, W, P), lambda b: (b, 0, 0, 0)),
        scratch_shapes=[
            pltpu.VMEM((H + 2, W + 2, C), jnp.bfloat16),   # padded input
            pltpu.VMEM((H + 2, W + 2, P), jnp.bfloat16),   # padded conv1 output
            pltpu.VMEM((H, W, P), jnp.float32),            # f32 accumulator
        ],
    )

    out_nhwc = pl.pallas_call(
        _basic_block_kernel,
        out_shape=jax.ShapeDtypeStruct((B, H, W, P), jnp.float32),
        grid_spec=grid_spec,
        compiler_params=pltpu.CompilerParams(
            dimension_semantics=("parallel",),        # v7x: shard batch over 2 TCs
            vmem_limit_bytes=32 * 1024 * 1024,        # explicit; safe on v5e/v6e/v7x
        ),
    )(x, w1r, b1, w2r, b2)

    return jnp.transpose(out_nhwc, (0, 3, 1, 2))      # back to NCHW


def _reference_forward(x_nchw, params, *, eps=1e-5):
    """Pure-JAX reference with matched precision (bf16 operands, f32 accum)."""
    def conv(x, w):
        return lax.conv_general_dilated(
            x, w, window_strides=(1, 1), padding=((1, 1), (1, 1)),
            dimension_numbers=("NCHW", "OIHW", "NCHW"),
            preferred_element_type=jnp.float32)

    s1, b1 = _fold_bn(params["g1"], params["be1"], params["m1"], params["v1"], eps)
    s2, b2 = _fold_bn(params["g2"], params["be2"], params["m2"], params["v2"], eps)
    w1 = (params["w1"] * s1[:, None, None, None]).astype(jnp.bfloat16)
    w2 = (params["w2"] * s2[:, None, None, None]).astype(jnp.bfloat16)
    x = x_nchw.astype(jnp.bfloat16)

    out = conv(x, w1) + b1[None, :, None, None]
    out = jnp.maximum(out, 0.0).astype(jnp.bfloat16)
    out = conv(out, w2) + b2[None, :, None, None]
    out = out + x.astype(jnp.float32)
    return jnp.maximum(out, 0.0)


if __name__ == "__main__":
    # inplanes = planes = 128 -> the channel/lane axis is fully dense (128 lanes).
    B, C, H, W = 2, 128, 16, 16
    P = C

    key = jax.random.PRNGKey(0)
    keys = jax.random.split(key, 11)
    params = {
        "w1": 0.1 * jax.random.normal(keys[0], (P, C, 3, 3), jnp.float32),
        "w2": 0.1 * jax.random.normal(keys[1], (P, P, 3, 3), jnp.float32),
        "g1": 1.0 + 0.1 * jax.random.normal(keys[2], (P,), jnp.float32),
        "be1": 0.1 * jax.random.normal(keys[3], (P,), jnp.float32),
        "m1": 0.1 * jax.random.normal(keys[4], (P,), jnp.float32),
        "v1": 0.5 + jnp.abs(jax.random.normal(keys[5], (P,), jnp.float32)),
        "g2": 1.0 + 0.1 * jax.random.normal(keys[6], (P,), jnp.float32),
        "be2": 0.1 * jax.random.normal(keys[7], (P,), jnp.float32),
        "m2": 0.1 * jax.random.normal(keys[8], (P,), jnp.float32),
        "v2": 0.5 + jnp.abs(jax.random.normal(keys[9], (P,), jnp.float32)),
    }
    x = jax.random.normal(keys[10], (B, C, H, W), jnp.float32)

    out = jax.block_until_ready(basic_block_forward(x, params))
    ref = jax.block_until_ready(_reference_forward(x, params))

    assert out.shape == (B, P, H, W), out.shape
    # Both paths use bf16 operands with f32 accumulation; small accumulation-
    # order differences can flip a bf16 ulp in the intermediate activation,
    # so allow a modest absolute tolerance (outputs are O(1)-O(10)).
    err = float(jnp.max(jnp.abs(out - ref)))
    assert err < 3e-2, f"max abs err {err}"
    print("KERNEL_OK")
</pallas_src>

<mosaic_0001>
module attributes {stable_mosaic.version = 11 : i64} {
  func.func @_basic_block_kernel(%arg0: i32, %arg1: memref<1x16x16x128xbf16, #tpu.memory_space<vmem>>, %arg2: memref<3x384x128xbf16, #tpu.memory_space<vmem>>, %arg3: memref<1x128xf32, #tpu.memory_space<vmem>>, %arg4: memref<3x384x128xbf16, #tpu.memory_space<vmem>>, %arg5: memref<1x128xf32, #tpu.memory_space<vmem>>, %arg6: memref<1x16x16x128xf32, #tpu.memory_space<vmem>>, %arg7: memref<18x18x128xbf16, #tpu.memory_space<vmem>>, %arg8: memref<18x18x128xbf16, #tpu.memory_space<vmem>>, %arg9: memref<16x16x128xf32, #tpu.memory_space<vmem>>) attributes {dimension_semantics = [#tpu.dimension_semantics<parallel>], iteration_bounds = array<i64: 2>, scalar_prefetch = 0 : i64, scratch_operands = 3 : i64, tpu.core_type = #tpu.core_type<tc>, window_params = [{transform_indices = @transform_0, window_bounds = array<i64: 1, 16, 16, 128>}, {pipeline_mode = #tpu.pipeline_mode<synchronous>, transform_indices = @transform_1, window_bounds = array<i64: 3, 384, 128>}, {pipeline_mode = #tpu.pipeline_mode<synchronous>, transform_indices = @transform_2, window_bounds = array<i64: 1, 128>}, {pipeline_mode = #tpu.pipeline_mode<synchronous>, transform_indices = @transform_3, window_bounds = array<i64: 3, 384, 128>}, {pipeline_mode = #tpu.pipeline_mode<synchronous>, transform_indices = @transform_4, window_bounds = array<i64: 1, 128>}, {transform_indices = @transform_5, window_bounds = array<i64: 1, 16, 16, 128>}]} {
    %cst = arith.constant 0.000000e+00 : bf16
    %0 = vector.broadcast %cst : bf16 to vector<1x18x128xbf16>
    %cst_0 = arith.constant 0.000000e+00 : bf16
    %1 = vector.broadcast %cst_0 : bf16 to vector<18x1x128xbf16>
    %c0 = arith.constant 0 : index
    %c0_1 = arith.constant 0 : index
    %c0_2 = arith.constant 0 : index
    %2 = vector.load %arg7[%c0, %c0_1, %c0_2] : memref<18x18x128xbf16, #tpu.memory_space<vmem>>, vector<1x18x128xbf16>
    tpu.vector_store %arg7[%c0, %c0_1, %c0_2], %0 {strides = array<i32>} : memref<18x18x128xbf16, #tpu.memory_space<vmem>>, vector<1x18x128xbf16>,
    %c17 = arith.constant 17 : index
    %c0_3 = arith.constant 0 : index
    %c0_4 = arith.constant 0 : index
    %3 = vector.load %arg7[%c17, %c0_3, %c0_4] : memref<18x18x128xbf16, #tpu.memory_space<vmem>>, vector<1x18x128xbf16>
    tpu.vector_store %arg7[%c17, %c0_3, %c0_4], %0 {strides = array<i32>} : memref<18x18x128xbf16, #tpu.memory_space<vmem>>, vector<1x18x128xbf16>,
    %c0_5 = arith.constant 0 : index
    %c0_6 = arith.constant 0 : index
    %c0_7 = arith.constant 0 : index
    %4 = vector.load %arg7[%c0_5, %c0_6, %c0_7] : memref<18x18x128xbf16, #tpu.memory_space<vmem>>, vector<18x1x128xbf16>
    tpu.vector_store %arg7[%c0_5, %c0_6, %c0_7], %1 {strides = array<i32>} : memref<18x18x128xbf16, #tpu.memory_space<vmem>>, vector<18x1x128xbf16>,
    %c0_8 = arith.constant 0 : index
    %c17_9 = arith.constant 17 : index
    %c0_10 = arith.constant 0 : index
    %5 = vector.load %arg7[%c0_8, %c17_9, %c0_10] : memref<18x18x128xbf16, #tpu.memory_space<vmem>>, vector<18x1x128xbf16>
    tpu.vector_store %arg7[%c0_8, %c17_9, %c0_10], %1 {strides = array<i32>} : memref<18x18x128xbf16, #tpu.memory_space<vmem>>, vector<18x1x128xbf16>,
    %cst_11 = arith.constant 0.000000e+00 : bf16
    %6 = vector.broadcast %cst_11 : bf16 to vector<1x18x128xbf16>
    %cst_12 = arith.constant 0.000000e+00 : bf16
    %7 = vector.broadcast %cst_12 : bf16 to vector<18x1x128xbf16>
    %c0_13 = arith.constant 0 : index
    %c0_14 = arith.constant 0 : index
    %c0_15 = arith.constant 0 : index
    %8 = vector.load %arg8[%c0_13, %c0_14, %c0_15] : memref<18x18x128xbf16, #tpu.memory_space<vmem>>, vector<1x18x128xbf16>
    tpu.vector_store %arg8[%c0_13, %c0_14, %c0_15], %6 {strides = array<i32>} : memref<18x18x128xbf16, #tpu.memory_space<vmem>>, vector<1x18x128xbf16>,
    %c17_16 = arith.constant 17 : index
    %c0_17 = arith.constant 0 : index
    %c0_18 = arith.constant 0 : index
    %9 = vector.load %arg8[%c17_16, %c0_17, %c0_18] : memref<18x18x128xbf16, #tpu.memory_space<vmem>>, vector<1x18x128xbf16>
    tpu.vector_store %arg8[%c17_16, %c0_17, %c0_18], %6 {strides = array<i32>} : memref<18x18x128xbf16, #tpu.memory_space<vmem>>, vector<1x18x128xbf16>,
    %c0_19 = arith.constant 0 : index
    %c0_20 = arith.constant 0 : index
    %c0_21 = arith.constant 0 : index
    %10 = vector.load %arg8[%c0_19, %c0_20, %c0_21] : memref<18x18x128xbf16, #tpu.memory_space<vmem>>, vector<18x1x128xbf16>
    tpu.vector_store %arg8[%c0_19, %c0_20, %c0_21], %7 {strides = array<i32>} : memref<18x18x128xbf16, #tpu.memory_space<vmem>>, vector<18x1x128xbf16>,
    %c0_22 = arith.constant 0 : index
    %c17_23 = arith.constant 17 : index
    %c0_24 = arith.constant 0 : index
    %11 = vector.load %arg8[%c0_22, %c17_23, %c0_24] : memref<18x18x128xbf16, #tpu.memory_space<vmem>>, vector<18x1x128xbf16>
    tpu.vector_store %arg8[%c0_22, %c17_23, %c0_24], %7 {strides = array<i32>} : memref<18x18x128xbf16, #tpu.memory_space<vmem>>, vector<18x1x128xbf16>,
    %c0_25 = arith.constant 0 : index
    %c0_26 = arith.constant 0 : index
    %c0_27 = arith.constant 0 : index
    %c0_28 = arith.constant 0 : index
    %12 = vector.load %arg1[%c0_25, %c0_26, %c0_27, %c0_28] : memref<1x16x16x128xbf16, #tpu.memory_space<vmem>>, vector<1x16x16x128xbf16>
    %13 = vector.shape_cast %12 : vector<1x16x16x128xbf16> to vector<16x16x128xbf16>
    %c1 = arith.constant 1 : index
    %c1_29 = arith.constant 1 : index
    %c0_30 = arith.constant 0 : index
    %14 = vector.load %arg7[%c1, %c1_29, %c0_30] : memref<18x18x128xbf16, #tpu.memory_space<vmem>>, vector<16x16x128xbf16>
    tpu.vector_store %arg7[%c1, %c1_29, %c0_30], %13 {strides = array<i32>} : memref<18x18x128xbf16, #tpu.memory_space<vmem>>, vector<16x16x128xbf16>,
    %c0_31 = arith.constant 0 : index
    %c0_32 = arith.constant 0 : index
    %15 = vector.load %arg3[%c0_31, %c0_32] : memref<1x128xf32, #tpu.memory_space<vmem>>, vector<1x128xf32>
    %16 = vector.shape_cast %15 : vector<1x128xf32> to vector<1x1x128xf32>
    %17 = vector.broadcast %16 : vector<1x1x128xf32> to vector<16x16x128xf32>
    %c0_33 = arith.constant 0 : index
    %c0_34 = arith.constant 0 : index
    %c0_35 = arith.constant 0 : index
    %18 = vector.load %arg9[%c0_33, %c0_34, %c0_35] : memref<16x16x128xf32, #tpu.memory_space<vmem>>, vector<16x16x128xf32>
    tpu.vector_store %arg9[%c0_33, %c0_34, %c0_35], %17 {strides = array<i32>} : memref<16x16x128xf32, #tpu.memory_space<vmem>>, vector<16x16x128xf32>,
    %c0_36 = arith.constant 0 : index
    %c0_37 = arith.constant 0 : index
    %c0_38 = arith.constant 0 : index
    %19 = vector.load %arg7[%c0_36, %c0_37, %c0_38] : memref<18x18x128xbf16, #tpu.memory_space<vmem>>, vector<16x18x128xbf16>
    %20 = vector.extract_strided_slice %19 {offsets = [0, 0, 0], sizes = [16, 16, 128], strides = [1, 1, 1]} : vector<16x18x128xbf16> to vector<16x16x128xbf16>
    %21 = vector.extract_strided_slice %19 {offsets = [0, 1, 0], sizes = [16, 16, 128], strides = [1, 1, 1]} : vector<16x18x128xbf16> to vector<16x16x128xbf16>
    %22 = vector.extract_strided_slice %19 {offsets = [0, 2, 0], sizes = [16, 16, 128], strides = [1, 1, 1]} : vector<16x18x128xbf16> to vector<16x16x128xbf16>
    %23 = tpu.concatenate %20, %21, %22 in 2 : vector<16x16x128xbf16>, vector<16x16x128xbf16>, vector<16x16x128xbf16> -> vector<16x16x384xbf16>
    %24 = vector.shape_cast %23 : vector<16x16x384xbf16> to vector<256x384xbf16>
    %c0_39 = arith.constant 0 : index
    %c0_40 = arith.constant 0 : index
    %c0_41 = arith.constant 0 : index
    %25 = vector.load %arg2[%c0_39, %c0_40, %c0_41] : memref<3x384x128xbf16, #tpu.memory_space<vmem>>, vector<1x384x128xbf16>
    %26 = vector.shape_cast %25 : vector<1x384x128xbf16> to vector<384x128xbf16>
    %cst_42 = arith.constant dense<0.000000e+00> : vector<256x128xf32>
    %27 = tpu.matmul %24, %26, %cst_42 {dimension_numbers = #tpu.dot_dimension_numbers<[1], [0], [0], [1], [0, 0, 1, 1], [], []>} : vector<256x384xbf16>, vector<384x128xbf16>, vector<256x128xf32> -> vector<256x128xf32>
    %c0_43 = arith.constant 0 : index
    %c0_44 = arith.constant 0 : index
    %c0_45 = arith.constant 0 : index
    %28 = vector.load %arg9[%c0_43, %c0_44, %c0_45] : memref<16x16x128xf32, #tpu.memory_space<vmem>>, vector<16x16x128xf32>
    %29 = vector.shape_cast %27 : vector<256x128xf32> to vector<16x16x128xf32>
    %30 = arith.addf %28, %29 : vector<16x16x128xf32>
    %c0_46 = arith.constant 0 : index
    %c0_47 = arith.constant 0 : index
    %c0_48 = arith.constant 0 : index
    %31 = vector.load %arg9[%c0_46, %c0_47, %c0_48] : memref<16x16x128xf32, #tpu.memory_space<vmem>>, vector<16x16x128xf32>
    tpu.vector_store %arg9[%c0_46, %c0_47, %c0_48], %30 {strides = array<i32>} : memref<16x16x128xf32, #tpu.memory_space<vmem>>, vector<16x16x128xf32>,
    %c1_49 = arith.constant 1 : index
    %c0_50 = arith.constant 0 : index
    %c0_51 = arith.constant 0 : index
    %32 = vector.load %arg7[%c1_49, %c0_50, %c0_51] : memref<18x18x128xbf16, #tpu.memory_space<vmem>>, vector<16x18x128xbf16>
    %33 = vector.extract_strided_slice %32 {offsets = [0, 0, 0], sizes = [16, 16, 128], strides = [1, 1, 1]} : vector<16x18x128xbf16> to vector<16x16x128xbf16>
    %34 = vector.extract_strided_slice %32 {offsets = [0, 1, 0], sizes = [16, 16, 128], strides = [1, 1, 1]} : vector<16x18x128xbf16> to vector<16x16x128xbf16>
    %35 = vector.extract_strided_slice %32 {offsets = [0, 2, 0], sizes = [16, 16, 128], strides = [1, 1, 1]} : vector<16x18x128xbf16> to vector<16x16x128xbf16>
    %36 = tpu.concatenate %33, %34, %35 in 2 : vector<16x16x128xbf16>, vector<16x16x128xbf16>, vector<16x16x128xbf16> -> vector<16x16x384xbf16>
    %37 = vector.shape_cast %36 : vector<16x16x384xbf16> to vector<256x384xbf16>
    %c1_52 = arith.constant 1 : index
    %c0_53 = arith.constant 0 : index
    %c0_54 = arith.constant 0 : index
    %38 = vector.load %arg2[%c1_52, %c0_53, %c0_54] : memref<3x384x128xbf16, #tpu.memory_space<vmem>>, vector<1x384x128xbf16>
    %39 = vector.shape_cast %38 : vector<1x384x128xbf16> to vector<384x128xbf16>
    %cst_55 = arith.constant dense<0.000000e+00> : vector<256x128xf32>
    %40 = tpu.matmul %37, %39, %cst_55 {dimension_numbers = #tpu.dot_dimension_numbers<[1], [0], [0], [1], [0, 0, 1, 1], [], []>} : vector<256x384xbf16>, vector<384x128xbf16>, vector<256x128xf32> -> vector<256x128xf32>
    %c0_56 = arith.constant 0 : index
    %c0_57 = arith.constant 0 : index
    %c0_58 = arith.constant 0 : index
    %41 = vector.load %arg9[%c0_56, %c0_57, %c0_58] : memref<16x16x128xf32, #tpu.memory_space<vmem>>, vector<16x16x128xf32>
    %42 = vector.shape_cast %40 : vector<256x128xf32> to vector<16x16x128xf32>
    %43 = arith.addf %41, %42 : vector<16x16x128xf32>
    %c0_59 = arith.constant 0 : index
    %c0_60 = arith.constant 0 : index
    %c0_61 = arith.constant 0 : index
    %44 = vector.load %arg9[%c0_59, %c0_60, %c0_61] : memref<16x16x128xf32, #tpu.memory_space<vmem>>, vector<16x16x128xf32>
    tpu.vector_store %arg9[%c0_59, %c0_60, %c0_61], %43 {strides = array<i32>} : memref<16x16x128xf32, #tpu.memory_space<vmem>>, vector<16x16x128xf32>,
    %c2 = arith.constant 2 : index
    %c0_62 = arith.constant 0 : index
    %c0_63 = arith.constant 0 : index
    %45 = vector.load %arg7[%c2, %c0_62, %c0_63] : memref<18x18x128xbf16, #tpu.memory_space<vmem>>, vector<16x18x128xbf16>
    %46 = vector.extract_strided_slice %45 {offsets = [0, 0, 0], sizes = [16, 16, 128], strides = [1, 1, 1]} : vector<16x18x128xbf16> to vector<16x16x128xbf16>
    %47 = vector.extract_strided_slice %45 {offsets = [0, 1, 0], sizes = [16, 16, 128], strides = [1, 1, 1]} : vector<16x18x128xbf16> to vector<16x16x128xbf16>
    %48 = vector.extract_strided_slice %45 {offsets = [0, 2, 0], sizes = [16, 16, 128], strides = [1, 1, 1]} : vector<16x18x128xbf16> to vector<16x16x128xbf16>
    %49 = tpu.concatenate %46, %47, %48 in 2 : vector<16x16x128xbf16>, vector<16x16x128xbf16>, vector<16x16x128xbf16> -> vector<16x16x384xbf16>
    %50 = vector.shape_cast %49 : vector<16x16x384xbf16> to vector<256x384xbf16>
    %c2_64 = arith.constant 2 : index
    %c0_65 = arith.constant 0 : index
    %c0_66 = arith.constant 0 : index
    %51 = vector.load %arg2[%c2_64, %c0_65, %c0_66] : memref<3x384x128xbf16, #tpu.memory_space<vmem>>, vector<1x384x128xbf16>
    %52 = vector.shape_cast %51 : vector<1x384x128xbf16> to vector<384x128xbf16>
    %cst_67 = arith.constant dense<0.000000e+00> : vector<256x128xf32>
    %53 = tpu.matmul %50, %52, %cst_67 {dimension_numbers = #tpu.dot_dimension_numbers<[1], [0], [0], [1], [0, 0, 1, 1], [], []>} : vector<256x384xbf16>, vector<384x128xbf16>, vector<256x128xf32> -> vector<256x128xf32>
    %c0_68 = arith.constant 0 : index
    %c0_69 = arith.constant 0 : index
    %c0_70 = arith.constant 0 : index
    %54 = vector.load %arg9[%c0_68, %c0_69, %c0_70] : memref<16x16x128xf32, #tpu.memory_space<vmem>>, vector<16x16x128xf32>
    %55 = vector.shape_cast %53 : vector<256x128xf32> to vector<16x16x128xf32>
    %56 = arith.addf %54, %55 : vector<16x16x128xf32>
    %c0_71 = arith.constant 0 : index
    %c0_72 = arith.constant 0 : index
    %c0_73 = arith.constant 0 : index
    %57 = vector.load %arg9[%c0_71, %c0_72, %c0_73] : memref<16x16x128xf32, #tpu.memory_space<vmem>>, vector<16x16x128xf32>
    tpu.vector_store %arg9[%c0_71, %c0_72, %c0_73], %56 {strides = array<i32>} : memref<16x16x128xf32, #tpu.memory_space<vmem>>, vector<16x16x128xf32>,
    %c0_74 = arith.constant 0 : index
    %c0_75 = arith.constant 0 : index
    %c0_76 = arith.constant 0 : index
    %58 = vector.load %arg9[%c0_74, %c0_75, %c0_76] : memref<16x16x128xf32, #tpu.memory_space<vmem>>, vector<16x16x128xf32>
    %cst_77 = arith.constant 0.000000e+00 : f32
    %59 = vector.broadcast %cst_77 : f32 to vector<16x16x128xf32>
    %60 = arith.maximumf %58, %59 : vector<16x16x128xf32>
    %61 = arith.truncf %60 : vector<16x16x128xf32> to vector<16x16x128xbf16>
    %c1_78 = arith.constant 1 : index
    %c1_79 = arith.constant 1 : index
    %c0_80 = arith.constant 0 : index
    %62 = vector.load %arg8[%c1_78, %c1_79, %c0_80] : memref<18x18x128xbf16, #tpu.memory_space<vmem>>, vector<16x16x128xbf16>
    tpu.vector_store %arg8[%c1_78, %c1_79, %c0_80], %61 {strides = array<i32>} : memref<18x18x128xbf16, #tpu.memory_space<vmem>>, vector<16x16x128xbf16>,
    %c0_81 = arith.constant 0 : index
    %c0_82 = arith.constant 0 : index
    %63 = vector.load %arg5[%c0_81, %c0_82] : memref<1x128xf32, #tpu.memory_space<vmem>>, vector<1x128xf32>
    %64 = vector.shape_cast %63 : vector<1x128xf32> to vector<1x1x128xf32>
    %65 = vector.broadcast %64 : vector<1x1x128xf32> to vector<16x16x128xf32>
    %c0_83 = arith.constant 0 : index
    %c0_84 = arith.constant 0 : index
    %c0_85 = arith.constant 0 : index
    %66 = vector.load %arg9[%c0_83, %c0_84, %c0_85] : memref<16x16x128xf32, #tpu.memory_space<vmem>>, vector<16x16x128xf32>
    tpu.vector_store %arg9[%c0_83, %c0_84, %c0_85], %65 {strides = array<i32>} : memref<16x16x128xf32, #tpu.memory_space<vmem>>, vector<16x16x128xf32>,
    %c0_86 = arith.constant 0 : index
    %c0_87 = arith.constant 0 : index
    %c0_88 = arith.constant 0 : index
    %67 = vector.load %arg8[%c0_86, %c0_87, %c0_88] : memref<18x18x128xbf16, #tpu.memory_space<vmem>>, vector<16x18x128xbf16>
    %68 = vector.extract_strided_slice %67 {offsets = [0, 0, 0], sizes = [16, 16, 128], strides = [1, 1, 1]} : vector<16x18x128xbf16> to vector<16x16x128xbf16>
    %69 = vector.extract_strided_slice %67 {offsets = [0, 1, 0], sizes = [16, 16, 128], strides = [1, 1, 1]} : vector<16x18x128xbf16> to vector<16x16x128xbf16>
    %70 = vector.extract_strided_slice %67 {offsets = [0, 2, 0], sizes = [16, 16, 128], strides = [1, 1, 1]} : vector<16x18x128xbf16> to vector<16x16x128xbf16>
    %71 = tpu.concatenate %68, %69, %70 in 2 : vector<16x16x128xbf16>, vector<16x16x128xbf16>, vector<16x16x128xbf16> -> vector<16x16x384xbf16>
    %72 = vector.shape_cast %71 : vector<16x16x384xbf16> to vector<256x384xbf16>
    %c0_89 = arith.constant 0 : index
    %c0_90 = arith.constant 0 : index
    %c0_91 = arith.constant 0 : index
    %73 = vector.load %arg4[%c0_89, %c0_90, %c0_91] : memref<3x384x128xbf16, #tpu.memory_space<vmem>>, vector<1x384x128xbf16>
    %74 = vector.shape_cast %73 : vector<1x384x128xbf16> to vector<384x128xbf16>
    %cst_92 = arith.constant dense<0.000000e+00> : vector<256x128xf32>
    %75 = tpu.matmul %72, %74, %cst_92 {dimension_numbers = #tpu.dot_dimension_numbers<[1], [0], [0], [1], [0, 0, 1, 1], [], []>} : vector<256x384xbf16>, vector<384x128xbf16>, vector<256x128xf32> -> vector<256x128xf32>
    %c0_93 = arith.constant 0 : index
    %c0_94 = arith.constant 0 : index
    %c0_95 = arith.constant 0 : index
    %76 = vector.load %arg9[%c0_93, %c0_94, %c0_95] : memref<16x16x128xf32, #tpu.memory_space<vmem>>, vector<16x16x128xf32>
    %77 = vector.shape_cast %75 : vector<256x128xf32> to vector<16x16x128xf32>
    %78 = arith.addf %76, %77 : vector<16x16x128xf32>
    %c0_96 = arith.constant 0 : index
    %c0_97 = arith.constant 0 : index
    %c0_98 = arith.constant 0 : index
    %79 = vector.load %arg9[%c0_96, %c0_97, %c0_98] : memref<16x16x128xf32, #tpu.memory_space<vmem>>, vector<16x16x128xf32>
    tpu.vector_store %arg9[%c0_96, %c0_97, %c0_98], %78 {strides = array<i32>} : memref<16x16x128xf32, #tpu.memory_space<vmem>>, vector<16x16x128xf32>,
    %c1_99 = arith.constant 1 : index
    %c0_100 = arith.constant 0 : index
    %c0_101 = arith.constant 0 : index
    %80 = vector.load %arg8[%c1_99, %c0_100, %c0_101] : memref<18x18x128xbf16, #tpu.memory_space<vmem>>, vector<16x18x128xbf16>
    %81 = vector.extract_strided_slice %80 {offsets = [0, 0, 0], sizes = [16, 16, 128], strides = [1, 1, 1]} : vector<16x18x128xbf16> to vector<16x16x128xbf16>
    %82 = vector.extract_strided_slice %80 {offsets = [0, 1, 0], sizes = [16, 16, 128], strides = [1, 1, 1]} : vector<16x18x128xbf16> to vector<16x16x128xbf16>
    %83 = vector.extract_strided_slice %80 {offsets = [0, 2, 0], sizes = [16, 16, 128], strides = [1, 1, 1]} : vector<16x18x128xbf16> to vector<16x16x128xbf16>
    %84 = tpu.concatenate %81, %82, %83 in 2 : vector<16x16x128xbf16>, vector<16x16x128xbf16>, vector<16x16x128xbf16> -> vector<16x16x384xbf16>
    %85 = vector.shape_cast %84 : vector<16x16x384xbf16> to vector<256x384xbf16>
    %c1_102 = arith.constant 1 : index
    %c0_103 = arith.constant 0 : index
    %c0_104 = arith.constant 0 : index
    %86 = vector.load %arg4[%c1_102, %c0_103, %c0_104] : memref<3x384x128xbf16, #tpu.memory_space<vmem>>, vector<1x384x128xbf16>
    %87 = vector.shape_cast %86 : vector<1x384x128xbf16> to vector<384x128xbf16>
    %cst_105 = arith.constant dense<0.000000e+00> : vector<256x128xf32>
    %88 = tpu.matmul %85, %87, %cst_105 {dimension_numbers = #tpu.dot_dimension_numbers<[1], [0], [0], [1], [0, 0, 1, 1], [], []>} : vector<256x384xbf16>, vector<384x128xbf16>, vector<256x128xf32> -> vector<256x128xf32>
    %c0_106 = arith.constant 0 : index
    %c0_107 = arith.constant 0 : index
    %c0_108 = arith.constant 0 : index
    %89 = vector.load %arg9[%c0_106, %c0_107, %c0_108] : memref<16x16x128xf32, #tpu.memory_space<vmem>>, vector<16x16x128xf32>
    %90 = vector.shape_cast %88 : vector<256x128xf32> to vector<16x16x128xf32>
    %91 = arith.addf %89, %90 : vector<16x16x128xf32>
    %c0_109 = arith.constant 0 : index
    %c0_110 = arith.constant 0 : index
    %c0_111 = arith.constant 0 : index
    %92 = vector.load %arg9[%c0_109, %c0_110, %c0_111] : memref<16x16x128xf32, #tpu.memory_space<vmem>>, vector<16x16x128xf32>
    tpu.vector_store %arg9[%c0_109, %c0_110, %c0_111], %91 {strides = array<i32>} : memref<16x16x128xf32, #tpu.memory_space<vmem>>, vector<16x16x128xf32>,
    %c2_112 = arith.constant 2 : index
    %c0_113 = arith.constant 0 : index
    %c0_114 = arith.constant 0 : index
    %93 = vector.load %arg8[%c2_112, %c0_113, %c0_114] : memref<18x18x128xbf16, #tpu.memory_space<vmem>>, vector<16x18x128xbf16>
    %94 = vector.extract_strided_slice %93 {offsets = [0, 0, 0], sizes = [16, 16, 128], strides = [1, 1, 1]} : vector<16x18x128xbf16> to vector<16x16x128xbf16>
    %95 = vector.extract_strided_slice %93 {offsets = [0, 1, 0], sizes = [16, 16, 128], strides = [1, 1, 1]} : vector<16x18x128xbf16> to vector<16x16x128xbf16>
    %96 = vector.extract_strided_slice %93 {offsets = [0, 2, 0], sizes = [16, 16, 128], strides = [1, 1, 1]} : vector<16x18x128xbf16> to vector<16x16x128xbf16>
    %97 = tpu.concatenate %94, %95, %96 in 2 : vector<16x16x128xbf16>, vector<16x16x128xbf16>, vector<16x16x128xbf16> -> vector<16x16x384xbf16>
    %98 = vector.shape_cast %97 : vector<16x16x384xbf16> to vector<256x384xbf16>
    %c2_115 = arith.constant 2 : index
    %c0_116 = arith.constant 0 : index
    %c0_117 = arith.constant 0 : index
    %99 = vector.load %arg4[%c2_115, %c0_116, %c0_117] : memref<3x384x128xbf16, #tpu.memory_space<vmem>>, vector<1x384x128xbf16>
    %100 = vector.shape_cast %99 : vector<1x384x128xbf16> to vector<384x128xbf16>
    %cst_118 = arith.constant dense<0.000000e+00> : vector<256x128xf32>
    %101 = tpu.matmul %98, %100, %cst_118 {dimension_numbers = #tpu.dot_dimension_numbers<[1], [0], [0], [1], [0, 0, 1, 1], [], []>} : vector<256x384xbf16>, vector<384x128xbf16>, vector<256x128xf32> -> vector<256x128xf32>
    %c0_119 = arith.constant 0 : index
    %c0_120 = arith.constant 0 : index
    %c0_121 = arith.constant 0 : index
    %102 = vector.load %arg9[%c0_119, %c0_120, %c0_121] : memref<16x16x128xf32, #tpu.memory_space<vmem>>, vector<16x16x128xf32>
    %103 = vector.shape_cast %101 : vector<256x128xf32> to vector<16x16x128xf32>
    %104 = arith.addf %102, %103 : vector<16x16x128xf32>
    %c0_122 = arith.constant 0 : index
    %c0_123 = arith.constant 0 : index
    %c0_124 = arith.constant 0 : index
    %105 = vector.load %arg9[%c0_122, %c0_123, %c0_124] : memref<16x16x128xf32, #tpu.memory_space<vmem>>, vector<16x16x128xf32>
    tpu.vector_store %arg9[%c0_122, %c0_123, %c0_124], %104 {strides = array<i32>} : memref<16x16x128xf32, #tpu.memory_space<vmem>>, vector<16x16x128xf32>,
    %c0_125 = arith.constant 0 : index
    %c0_126 = arith.constant 0 : index
    %c0_127 = arith.constant 0 : index
    %c0_128 = arith.constant 0 : index
    %106 = vector.load %arg1[%c0_125, %c0_126, %c0_127, %c0_128] : memref<1x16x16x128xbf16, #tpu.memory_space<vmem>>, vector<1x16x16x128xbf16>
    %107 = vector.shape_cast %106 : vector<1x16x16x128xbf16> to vector<16x16x128xbf16>
    %108 = arith.extf %107 : vector<16x16x128xbf16> to vector<16x16x128xf32>
    %c0_129 = arith.constant 0 : index
    %c0_130 = arith.constant 0 : index
    %c0_131 = arith.constant 0 : index
    %109 = vector.load %arg9[%c0_129, %c0_130, %c0_131] : memref<16x16x128xf32, #tpu.memory_space<vmem>>, vector<16x16x128xf32>
    %110 = arith.addf %109, %108 : vector<16x16x128xf32>
    %cst_132 = arith.constant 0.000000e+00 : f32
    %111 = vector.broadcast %cst_132 : f32 to vector<16x16x128xf32>
    %112 = arith.maximumf %110, %111 : vector<16x16x128xf32>
    %c0_133 = arith.constant 0 : index
    %c0_134 = arith.constant 0 : index
    %c0_135 = arith.constant 0 : index
    %c0_136 = arith.constant 0 : index
    %113 = vector.load %arg6[%c0_133, %c0_134, %c0_135, %c0_136] : memref<1x16x16x128xf32, #tpu.memory_space<vmem>>, vector<1x16x16x128xf32>
    %114 = vector.shape_cast %113 : vector<1x16x16x128xf32> to vector<16x16x128xf32>
    %115 = vector.shape_cast %112 : vector<16x16x128xf32> to vector<1x16x16x128xf32>
    tpu.vector_store %arg6[%c0_133, %c0_134, %c0_135, %c0_136], %115 {strides = array<i32>} : memref<1x16x16x128xf32, #tpu.memory_space<vmem>>, vector<1x16x16x128xf32>,
    return
  }
  func.func @transform_0(%arg0: i32) -> (i32, i32, i32, i32) {
    %c0_i32 = arith.constant 0 : i32
    %c0_i32_0 = arith.constant 0 : i32
    %c0_i32_1 = arith.constant 0 : i32
    %c0_i32_2 = arith.constant 0 : i32
    return %arg0, %c0_i32, %c0_i32_0, %c0_i32_1 : i32, i32, i32, i32
  }
  func.func @transform_1(%arg0: i32) -> (i32, i32, i32) {
    %c0_i32 = arith.constant 0 : i32
    %c0_i32_0 = arith.constant 0 : i32
    %c0_i32_1 = arith.constant 0 : i32
    %c0_i32_2 = arith.constant 0 : i32
    return %c0_i32, %c0_i32_0, %c0_i32_1 : i32, i32, i32
  }
  func.func @transform_2(%arg0: i32) -> (i32, i32) {
    %c0_i32 = arith.constant 0 : i32
    %c0_i32_0 = arith.constant 0 : i32
    %c0_i32_1 = arith.constant 0 : i32
    return %c0_i32, %c0_i32_0 : i32, i32
  }
  func.func @transform_3(%arg0: i32) -> (i32, i32, i32) {
    %c0_i32 = arith.constant 0 : i32
    %c0_i32_0 = arith.constant 0 : i32
    %c0_i32_1 = arith.constant 0 : i32
    %c0_i32_2 = arith.constant 0 : i32
    return %c0_i32, %c0_i32_0, %c0_i32_1 : i32, i32, i32
  }
  func.func @transform_4(%arg0: i32) -> (i32, i32) {
    %c0_i32 = arith.constant 0 : i32
    %c0_i32_0 = arith.constant 0 : i32
    %c0_i32_1 = arith.constant 0 : i32
    return %c0_i32, %c0_i32_0 : i32, i32
  }
  func.func @transform_5(%arg0: i32) -> (i32, i32, i32, i32) {
    %c0_i32 = arith.constant 0 : i32
    %c0_i32_0 = arith.constant 0 : i32
    %c0_i32_1 = arith.constant 0 : i32
    %c0_i32_2 = arith.constant 0 : i32
    return %arg0, %c0_i32, %c0_i32_0, %c0_i32_1 : i32, i32, i32, i32
  }
}

</mosaic_0001>

<llo_original>
// kernel: tpu_custom_call.1
$region0: #{tpu_custom_call.1}
  #allocation0 [shape = 'u32[]', space=smem, size = 0x4, offset = 0x4, fixed_abs, tag = 'smem constant byte address 0x4 - core index']
  #allocation1 [shape = 'u32[72,128]{1,0:T(1,128)}', space=vmem, size = 0x9000, scoped, tag = 'internal scratch']
  #allocation2 [shape = 'bf16[18,18,128]{2,1,0:T(8,128)(2,1)}', space=vmem, size = 0x1b000, scoped, tag = 'scratch operand']
  #allocation3 [shape = 'bf16[18,18,128]{2,1,0:T(8,128)(2,1)}', space=vmem, size = 0x1b000, scoped, tag = 'scratch operand']
  #allocation4 [shape = 'f32[16,16,128]{2,1,0:T(8,128)}', space=vmem, size = 0x20000, scoped, tag = 'scratch operand']
  %s0 = inlined_call_operand.hbm [shape: bf16[2,16,16,128], index: 0, kind: input, shape index: {}]
  %s1 = inlined_call_operand.hbm [shape: bf16[3,384,128], index: 1, kind: input, shape index: {}]
  %s2 = inlined_call_operand.vmem [shape: f32[1,128], index: 2, kind: input, shape index: {}]
  %s3 = inlined_call_operand.hbm [shape: bf16[3,384,128], index: 3, kind: input, shape index: {}]
  %s4 = inlined_call_operand.vmem [shape: f32[1,128], index: 4, kind: input, shape index: {}]
  %s5 = inlined_call_operand.hbm [shape: f32[2,16,16,128], index: 5, kind: output, shape index: {}]
  %s6 = sld [smem:[#allocation0]]
  $region65: #{tpu_custom_call.1} parent=0
    _
  %s8 = ssub.s32 1, %s6
  %s9 = scalar_select 0, %s8, %s6
  $region1: #{tpu_custom_call.1} parent=0
    #allocation5 [shape = 'u8[131072]{0}', space=vmem, size = 0x20000, scoped, tag = 'input window, operand 0']
    #allocation6 [shape = 's32[2]{0}', space=sflag, size = 0x8, scoped, tag = 'scoped memory for tpu_custom_call.1']
    #allocation7 [shape = 's32[2]{0}', space=sflag, size = 0x8, scoped, tag = 'scoped memory for tpu_custom_call.1']
    #allocation8 [shape = 'u8[294912]{0}', space=vmem, size = 0x48000, scoped, tag = 'input window, operand 1, single buffered']
    #allocation9 [shape = 's32[1]{0}', space=sflag, size = 0x4, scoped, tag = 'scoped memory for tpu_custom_call.1']
    #allocation10 [shape = 'u8[294912]{0}', space=vmem, size = 0x48000, scoped, tag = 'input window, operand 3, single buffered']
    #allocation11 [shape = 'u8[262144]{0}', space=vmem, size = 0x40000, scoped, tag = 'output window, operand 0']
    %10 = vsyncpa [#allocation6], 0
    %s11 = scalar_lea.sflag [#allocation6], 1
    %12 = vsyncpa %s11, 0
    %13 = vsyncpa [#allocation9], 0
    %14 = vsyncpa [#allocation7], 0
    %s15 = scalar_lea.sflag [#allocation7], 1
    %16 = vsyncpa %s15, 0
    loop: start=0, step=1, limit=4
    $region2: #{tpu_custom_call.1} parent=1 // loop_pre_header
      _
    $region3: #{tpu_custom_call.1} parent=1 // loop_header
      %s18 = sphi 0, %s22
      %p19 = scmp.ge.s32.totalorder %s18, 4
      %s28 = sphi 0, %s30
      %s31 = sphi 0, %s28
      %s32 = sphi 0, %s31
      %s48 = sphi 0, %s32
      %s52 = sphi 0, %s52
      %s54 = sphi 0, %s52
      %s55 = sphi 0, %s54
      %s69 = sphi 0, %s55
      %s73 = sphi 0, %s73
      %s75 = sphi 0, %s73
      %s76 = sphi 0, %s75
      %s90 = sphi 0, %s76
      %s94 = sphi 0, %s94
      %s96 = sphi 0, %s94
      %s97 = sphi 0, %s96
      %s111 = sphi 0, %s97
      %s115 = sphi 0, %s115
      %s117 = sphi 0, %s115
      %s118 = sphi 0, %s117
      %s132 = sphi 0, %s118
      %s138 = sphi 0, %s140
      %s141 = sphi 0, %s138
      %s142 = sphi 0, %s141
      %s158 = sphi 0, %s142
    $region4: #{tpu_custom_call.1} parent=1 // loop_header_branch
      %21 = sbr.rel (%p19) target = $region8
    $region5: #{tpu_custom_call.1} parent=1 // loop_body
      %s23 = ssub.s32 %s18, 1
      %s24 = ssub.s32 %s18, 2
      %s25 = sadd.s32 %s18, 1
      %s26 = ssub.s32 %s18, %s25
      %p27 = scmp.eq.s32.totalorder %s26, 0
      %s29 = sadd.s32 %s28, 1
      %s30 = scalar_select %p27, %s28, %s29
      %p33 = pneg %p27
      %p34 = scmp.eq.s32.totalorder %s18, 1
      %p35 = por %p33, %p34
      %p36 = scmp.ne.s32.totalorder %s28, %s31
      %p37 = scmp.eq.s32.totalorder %s18, 0
      %p38 = por %p36, %p37
      %p39 = scmp.ne.s32.totalorder %s28, %s31
      %p40 = scmp.eq.s32.totalorder %s23, 1
      %p41 = por %p39, %p40
      %p42 = scmp.ne.s32.totalorder %s31, %s32
      %p43 = scmp.eq.s32.totalorder %s23, 0
      %p44 = por %p42, %p43
      %p45 = scmp.ne.s32.totalorder %s31, %s32
      %p46 = scmp.eq.s32.totalorder %s24, 1
      %p47 = por %p45, %p46
      %p49 = scmp.ne.s32.totalorder %s32, %s48
      %p50 = scmp.eq.s32.totalorder %s24, 0
      %p51 = por %p49, %p50
      %s53 = sadd.s32 %s52, 1
      %p56 = scmp.eq.s32.totalorder %s18, 1
      %p57 = scmp.ne.s32.totalorder %s52, %s54
      %p58 = scmp.eq.s32.totalorder %s18, 0
      %p59 = por %p57, %p58
      %p60 = scmp.ne.s32.totalorder %s52, %s54
      %p61 = scmp.eq.s32.totalorder %s23, 1
      %p62 = por %p60, %p61
      %p63 = scmp.ne.s32.totalorder %s54, %s55
      %p64 = scmp.eq.s32.totalorder %s23, 0
      %p65 = por %p63, %p64
      %p66 = scmp.ne.s32.totalorder %s54, %s55
      %p67 = scmp.eq.s32.totalorder %s24, 1
      %p68 = por %p66, %p67
      %p70 = scmp.ne.s32.totalorder %s55, %s69
      %p71 = scmp.eq.s32.totalorder %s24, 0
      %p72 = por %p70, %p71
      %s74 = sadd.s32 %s73, 1
      %p77 = scmp.eq.s32.totalorder %s18, 1
      %p78 = scmp.ne.s32.totalorder %s73, %s75
      %p79 = scmp.eq.s32.totalorder %s18, 0
      %p80 = por %p78, %p79
      %p81 = scmp.ne.s32.totalorder %s73, %s75
      %p82 = scmp.eq.s32.totalorder %s23, 1
      %p83 = por %p81, %p82
      %p84 = scmp.ne.s32.totalorder %s75, %s76
      %p85 = scmp.eq.s32.totalorder %s23, 0
      %p86 = por %p84, %p85
      %p87 = scmp.ne.s32.totalorder %s75, %s76
      %p88 = scmp.eq.s32.totalorder %s24, 1
      %p89 = por %p87, %p88
      %p91 = scmp.ne.s32.totalorder %s76, %s90
      %p92 = scmp.eq.s32.totalorder %s24, 0
      %p93 = por %p91, %p92
      %s95 = sadd.s32 %s94, 1
      %p98 = scmp.eq.s32.totalorder %s18, 1
      %p99 = scmp.ne.s32.totalorder %s94, %s96
      %p100 = scmp.eq.s32.totalorder %s18, 0
      %p101 = por %p99, %p100
      %p102 = scmp.ne.s32.totalorder %s94, %s96
      %p103 = scmp.eq.s32.totalorder %s23, 1
      %p104 = por %p102, %p103
      %p105 = scmp.ne.s32.totalorder %s96, %s97
      %p106 = scmp.eq.s32.totalorder %s23, 0
      %p107 = por %p105, %p106
      %p108 = scmp.ne.s32.totalorder %s96, %s97
      %p109 = scmp.eq.s32.totalorder %s24, 1
      %p110 = por %p108, %p109
      %p112 = scmp.ne.s32.totalorder %s97, %s111
      %p113 = scmp.eq.s32.totalorder %s24, 0
      %p114 = por %p112, %p113
      %s116 = sadd.s32 %s115, 1
      %p119 = scmp.eq.s32.totalorder %s18, 1
      %p120 = scmp.ne.s32.totalorder %s115, %s117
      %p121 = scmp.eq.s32.totalorder %s18, 0
      %p122 = por %p120, %p121
      %p123 = scmp.ne.s32.totalorder %s115, %s117
      %p124 = scmp.eq.s32.totalorder %s23, 1
      %p125 = por %p123, %p124
      %p126 = scmp.ne.s32.totalorder %s117, %s118
      %p127 = scmp.eq.s32.totalorder %s23, 0
      %p128 = por %p126, %p127
      %p129 = scmp.ne.s32.totalorder %s117, %s118
      %p130 = scmp.eq.s32.totalorder %s24, 1
      %p131 = por %p129, %p130
      %p133 = scmp.ne.s32.totalorder %s118, %s132
      %p134 = scmp.eq.s32.totalorder %s24, 0
      %p135 = por %p133, %p134
      %s136 = ssub.s32 %s18, %s25
      %p137 = scmp.eq.s32.totalorder %s136, 0
      %s139 = sadd.s32 %s138, 1
      %s140 = scalar_select %p137, %s138, %s139
      %p143 = pneg %p137
      %p144 = scmp.eq.s32.totalorder %s18, 1
      %p145 = por %p143, %p144
      %p146 = scmp.ne.s32.totalorder %s138, %s141
      %p147 = scmp.eq.s32.totalorder %s18, 0
      %p148 = por %p146, %p147
      %p149 = scmp.ne.s32.totalorder %s138, %s141
      %p150 = scmp.eq.s32.totalorder %s23, 1
      %p151 = por %p149, %p150
      %p152 = scmp.ne.s32.totalorder %s141, %s142
      %p153 = scmp.eq.s32.totalorder %s23, 0
      %p154 = por %p152, %p153
      %p155 = scmp.ne.s32.totalorder %s141, %s142
      %p156 = scmp.eq.s32.totalorder %s24, 1
      %p157 = por %p155, %p156
      %p159 = scmp.ne.s32.totalorder %s142, %s158
      %p160 = scmp.eq.s32.totalorder %s24, 0
      %p161 = por %p159, %p160
      %p162 = scmp.le.s32.totalorder 1, %s18
      %p163 = scmp.lt.s32.totalorder %s18, 3
      %p164 = pnand %p162, %p163
      %p165 = pneg %p164
      // Predicated region
      $region9: #{tpu_custom_call.1} parent=5 // pred_check
        _
      $region10: #{tpu_custom_call.1} parent=5 // pred_check_branch
        %167 = sbr.rel (%p164) target = $region12
      $region11: #{tpu_custom_call.1} parent=5 // pred_region
        %s168 = ssub.s32 %s18, 1
        // Predicated region
        $region13: #{tpu_custom_call.1} parent=11 // pred_check
          %p169 = pneg %p65
        $region14: #{tpu_custom_call.1} parent=11 // pred_check_branch
          %171 = sbr.rel (%p169) target = $region16
        $region15: #{tpu_custom_call.1} parent=11 // pred_region
          %173 = vsyncadd [#allocation9], 0
          %s174 = sshll.u32 %s1, 4
          %s175 = int_to_ptr.hbm [resolvable:$true] %s174
          %s176 = sshll.u32 [#allocation8], 4
          %s177 = int_to_ptr.vmem [resolvable:$true] %s176
          %182 = dma.hbm_to_vmem [thread:$0]  %s175, 9216, %s177, [#allocation9], 64, 64, 4
        $region16: #{tpu_custom_call.1} parent=11 // pred_fallthru
          _
        // Predicated region
        $region17: #{tpu_custom_call.1} parent=11 // pred_check
          %p183 = pneg %p86
        $region18: #{tpu_custom_call.1} parent=11 // pred_check_branch
          %185 = sbr.rel (%p183) target = $region20
        $region19: #{tpu_custom_call.1} parent=11 // pred_region
          _
        $region20: #{tpu_custom_call.1} parent=11 // pred_fallthru
          _
        // Predicated region
        $region21: #{tpu_custom_call.1} parent=11 // pred_check
          %p186 = pneg %p107
        $region22: #{tpu_custom_call.1} parent=11 // pred_check_branch
          %188 = sbr.rel (%p186) target = $region24
        $region23: #{tpu_custom_call.1} parent=11 // pred_region
          %190 = vsyncadd [#allocation9], 0
          %s191 = sshll.u32 %s3, 4
          %s192 = int_to_ptr.hbm [resolvable:$true] %s191
          %s193 = sshll.u32 [#allocation10], 4
          %s194 = int_to_ptr.vmem [resolvable:$true] %s193
          %199 = dma.hbm_to_vmem [thread:$0]  %s192, 9216, %s194, [#allocation9], 64, 64, 4
        $region24: #{tpu_custom_call.1} parent=11 // pred_fallthru
          _
        // Predicated region
        $region25: #{tpu_custom_call.1} parent=11 // pred_check
          %p200 = pneg %p128
        $region26: #{tpu_custom_call.1} parent=11 // pred_check_branch
          %202 = sbr.rel (%p200) target = $region28
        $region27: #{tpu_custom_call.1} parent=11 // pred_region
          _
        $region28: #{tpu_custom_call.1} parent=11 // pred_fallthru
          _
      $region12: #{tpu_custom_call.1} parent=5 // pred_fallthru
        _
      %p203 = scmp.lt.s32.totalorder %s18, 2
      // Predicated region
      $region29: #{tpu_custom_call.1} parent=5 // pred_check
        %p204 = pneg %p203
      $region30: #{tpu_custom_call.1} parent=5 // pred_check_branch
        %206 = sbr.rel (%p204) target = $region32
      $region31: #{tpu_custom_call.1} parent=5 // pred_region
        // Predicated region
        $region33: #{tpu_custom_call.1} parent=31 // pred_check
          %p207 = pneg %p38
        $region34: #{tpu_custom_call.1} parent=31 // pred_check_branch
          %209 = sbr.rel (%p207) target = $region36
        $region35: #{tpu_custom_call.1} parent=31 // pred_region
          %s210 = sand.u32 %s28, 1
          %s211 = scalar_lea.sflag [#allocation6], %s210
          %s212 = sand.u32 %s28, 1
          %s213 = smul.addr %s212, 128
          %s214 = scalar_lea.vmem [#allocation5], %s213
          %216 = vsyncadd %s211, 0
          %s217 = smul.addr %s18, 32
          %s218 = smul.addr %s217, 4
          %s219 = scalar_lea.hbm %s0, %s218
          %s220 = sshll.u32 %s219, 4
          %s221 = int_to_ptr.hbm [resolvable:$true] %s220
          %s222 = sshll.u32 %s214, 4
          %s223 = int_to_ptr.vmem [resolvable:$true] %s222
          %228 = dma.hbm_to_vmem [thread:$0]  %s221, 2048, %s223, %s211, 64, 64, 4
        $region36: #{tpu_custom_call.1} parent=31 // pred_fallthru
          _
      $region32: #{tpu_custom_call.1} parent=5 // pred_fallthru
        _
      %p229 = scmp.le.s32.totalorder 1, %s18
      %p230 = scmp.lt.s32.totalorder %s18, 3
      %p231 = pnand %p229, %p230
      %p232 = pneg %p231
      // Predicated region
      $region37: #{tpu_custom_call.1} parent=5 // pred_check
        _
      $region38: #{tpu_custom_call.1} parent=5 // pred_check_branch
        %234 = sbr.rel (%p231) target = $region40
      $region39: #{tpu_custom_call.1} parent=5 // pred_region
        %s235 = ssub.s32 %s18, 1
        %s236 = sand.u32 %s31, 1
        %s237 = scalar_lea.sflag [#allocation6], %s236
        %s238 = sand.u32 %s31, 1
        %s239 = smul.addr %s238, 128
        %s240 = scalar_lea.vmem [#allocation5], %s239
        // Predicated region
        $region41: #{tpu_custom_call.1} parent=39 // pred_check
          %p241 = pneg %p44
        $region42: #{tpu_custom_call.1} parent=39 // pred_check_branch
          %243 = sbr.rel (%p241) target = $region44
        $region43: #{tpu_custom_call.1} parent=39 // pred_region
          %245 = dma.done %s237, 2048
        $region44: #{tpu_custom_call.1} parent=39 // pred_fallthru
          _
        // Predicated region
        $region45: #{tpu_custom_call.1} parent=39 // pred_check
          %p246 = pneg %p65
        $region46: #{tpu_custom_call.1} parent=39 // pred_check_branch
          %248 = sbr.rel (%p246) target = $region48
        $region47: #{tpu_custom_call.1} parent=39 // pred_region
          %250 = dma.done [#allocation9], 9216
        $region48: #{tpu_custom_call.1} parent=39 // pred_fallthru
          _
        // Predicated region
        $region49: #{tpu_custom_call.1} parent=39 // pred_check
          %p251 = pneg %p107
        $region50: #{tpu_custom_call.1} parent=39 // pred_check_branch
          %253 = sbr.rel (%p251) target = $region52
        $region51: #{tpu_custom_call.1} parent=39 // pred_region
          %255 = dma.done [#allocation9], 9216
        $region52: #{tpu_custom_call.1} parent=39 // pred_fallthru
          _
        %s256 = sand.u32 %s31, 1
        %s257 = scalar_lea.sflag [#allocation6], %s256
        %s258 = sand.u32 %s31, 1
        %s259 = smul.addr %s258, 128
        %s260 = scalar_lea.vmem [#allocation5], %s259
        %p261 = pneg %p44
        %p262 = pneg %p41
        %p263 = pneg %p65
        %p264 = pneg %p62
        %p265 = pneg %p86
        %p266 = pneg %p83
        %p267 = pneg %p107
        %p268 = pneg %p104
        %p269 = pneg %p128
        %p270 = pneg %p125
        %p271 = pneg %p154
        %p272 = pneg %p151
        %s273 = sand.u32 %s141, 1
        %s274 = scalar_lea.sflag [#allocation7], %s273
        %s275 = sand.u32 %s141, 1
        %s276 = smul.addr %s275, 256
        %s277 = scalar_lea.vmem [#allocation11], %s276
        %279 = vst [vmem:[#allocation2] sm:$0xf] 0
        %280 = vst [vmem:[#allocation2 + $0x4] sm:$0xf] 0
        %281 = vst [vmem:[#allocation2 + $0x8] sm:$0x1] 0
        %s282 = scalar_lea.vmem [#allocation2], 204
        %283 = vst [vmem:[%s282] sm:$0xf] 0
        %284 = vst [vmem:[%s282 + $0x4] sm:$0xf] 0
        %285 = vst [vmem:[%s282 + $0x8] sm:$0x1] 0
        %vm286 = vcmask 1040384
        %vm287 = vsmask.f32 256
        %vm288 = vmand %vm286, %vm287
        %v289 = vld [vmem:[#allocation2] sm:$0x1]
        %v290 = vsel %vm288, 0, %v289
        %291 = vst [vmem:[#allocation2] sm:$0x1] %v290
        %v292 = vld [vmem:[#allocation2 + $0xc] sm:$0x1]
        %v293 = vsel %vm288, 0, %v292
        %294 = vst [vmem:[#allocation2 + $0xc] sm:$0x1] %v293
        %v295 = vld [vmem:[#allocation2 + $0x18] sm:$0x1]
        %v296 = vsel %vm288, 0, %v295
        %297 = vst [vmem:[#allocation2 + $0x18] sm:$0x1] %v296
        %v298 = vld [vmem:[#allocation2 + $0x24] sm:$0x1]
        %v299 = vsel %vm288, 0, %v298
        %300 = vst [vmem:[#allocation2 + $0x24] sm:$0x1] %v299
        %v301 = vld [vmem:[#allocation2 + $0x30] sm:$0x1]
        %v302 = vsel %vm288, 0, %v301
        %303 = vst [vmem:[#allocation2 + $0x30] sm:$0x1] %v302
        %v304 = vld [vmem:[#allocation2 + $0x3c] sm:$0x1]
        %v305 = vsel %vm288, 0, %v304
        %306 = vst [vmem:[#allocation2 + $0x3c] sm:$0x1] %v305
        %v307 = vld [vmem:[#allocation2 + $0x48] sm:$0x1]
        %v308 = vsel %vm288, 0, %v307
        %309 = vst [vmem:[#allocation2 + $0x48] sm:$0x1] %v308
        %v310 = vld [vmem:[#allocation2 + $0x54] sm:$0x1]
        %v311 = vsel %vm288, 0, %v310
        %312 = vst [vmem:[#allocation2 + $0x54] sm:$0x1] %v311
        %v313 = vld [vmem:[#allocation2 + $0x60] sm:$0x1]
        %v314 = vsel %vm288, 0, %v313
        %315 = vst [vmem:[#allocation2 + $0x60] sm:$0x1] %v314
        %v316 = vld [vmem:[#allocation2 + $0x6c] sm:$0x1]
        %v317 = vsel %vm288, 0, %v316
        %318 = vst [vmem:[#allocation2 + $0x6c] sm:$0x1] %v317
        %v319 = vld [vmem:[#allocation2 + $0x78] sm:$0x1]
        %v320 = vsel %vm288, 0, %v319
        %321 = vst [vmem:[#allocation2 + $0x78] sm:$0x1] %v320
        %v322 = vld [vmem:[#allocation2 + $0x84] sm:$0x1]
        %v323 = vsel %vm288, 0, %v322
        %324 = vst [vmem:[#allocation2 + $0x84] sm:$0x1] %v323
        %v325 = vld [vmem:[#allocation2 + $0x90] sm:$0x1]
        %v326 = vsel %vm288, 0, %v325
        %327 = vst [vmem:[#allocation2 + $0x90] sm:$0x1] %v326
        %v328 = vld [vmem:[#allocation2 + $0x9c] sm:$0x1]
        %v329 = vsel %vm288, 0, %v328
        %330 = vst [vmem:[#allocation2 + $0x9c] sm:$0x1] %v329
        %v331 = vld [vmem:[#allocation2 + $0xa8] sm:$0x1]
        %v332 = vsel %vm288, 0, %v331
        %333 = vst [vmem:[#allocation2 + $0xa8] sm:$0x1] %v332
        %v334 = vld [vmem:[#allocation2 + $0xb4] sm:$0x1]
        %v335 = vsel %vm288, 0, %v334
        %336 = vst [vmem:[#allocation2 + $0xb4] sm:$0x1] %v335
        %v337 = vld [vmem:[#allocation2 + $0xc0] sm:$0x1]
        %v338 = vsel %vm288, 0, %v337
        %339 = vst [vmem:[#allocation2 + $0xc0] sm:$0x1] %v338
        %v340 = vld [vmem:[#allocation2 + $0xcc] sm:$0x1]
        %v341 = vsel %vm288, 0, %v340
        %342 = vst [vmem:[#allocation2 + $0xcc] sm:$0x1] %v341
        %vm343 = vsmask.f32 7938
        %vm344 = vmand %vm286, %vm343
        %v345 = vld [vmem:[#allocation2 + $0x8] sm:$0x1]
        %v346 = vsel %vm344, 0, %v345
        %347 = vst [vmem:[#allocation2 + $0x8] sm:$0x1] %v346
        %v348 = vld [vmem:[#allocation2 + $0x14] sm:$0x1]
        %v349 = vsel %vm344, 0, %v348
        %350 = vst [vmem:[#allocation2 + $0x14] sm:$0x1] %v349
        %v351 = vld [vmem:[#allocation2 + $0x20] sm:$0x1]
        %v352 = vsel %vm344, 0, %v351
        %353 = vst [vmem:[#allocation2 + $0x20] sm:$0x1] %v352
        %v354 = vld [vmem:[#allocation2 + $0x2c] sm:$0x1]
        %v355 = vsel %vm344, 0, %v354
        %356 = vst [vmem:[#allocation2 + $0x2c] sm:$0x1] %v355
        %v357 = vld [vmem:[#allocation2 + $0x38] sm:$0x1]
        %v358 = vsel %vm344, 0, %v357
        %359 = vst [vmem:[#allocation2 + $0x38] sm:$0x1] %v358
        %v360 = vld [vmem:[#allocation2 + $0x44] sm:$0x1]
        %v361 = vsel %vm344, 0, %v360
        %362 = vst [vmem:[#allocation2 + $0x44] sm:$0x1] %v361
        %v363 = vld [vmem:[#allocation2 + $0x50] sm:$0x1]
        %v364 = vsel %vm344, 0, %v363
        %365 = vst [vmem:[#allocation2 + $0x50] sm:$0x1] %v364
        %v366 = vld [vmem:[#allocation2 + $0x5c] sm:$0x1]
        %v367 = vsel %vm344, 0, %v366
        %368 = vst [vmem:[#allocation2 + $0x5c] sm:$0x1] %v367
        %v369 = vld [vmem:[#allocation2 + $0x68] sm:$0x1]
        %v370 = vsel %vm344, 0, %v369
        %371 = vst [vmem:[#allocation2 + $0x68] sm:$0x1] %v370
        %v372 = vld [vmem:[#allocation2 + $0x74] sm:$0x1]
        %v373 = vsel %vm344, 0, %v372
        %374 = vst [vmem:[#allocation2 + $0x74] sm:$0x1] %v373
        %v375 = vld [vmem:[#allocation2 + $0x80] sm:$0x1]
        %v376 = vsel %vm344, 0, %v375
        %377 = vst [vmem:[#allocation2 + $0x80] sm:$0x1] %v376
        %v378 = vld [vmem:[#allocation2 + $0x8c] sm:$0x1]
        %v379 = vsel %vm344, 0, %v378
        %380 = vst [vmem:[#allocation2 + $0x8c] sm:$0x1] %v379
        %v381 = vld [vmem:[#allocation2 + $0x98] sm:$0x1]
        %v382 = vsel %vm344, 0, %v381
        %383 = vst [vmem:[#allocation2 + $0x98] sm:$0x1] %v382
        %v384 = vld [vmem:[#allocation2 + $0xa4] sm:$0x1]
        %v385 = vsel %vm344, 0, %v384
        %386 = vst [vmem:[#allocation2 + $0xa4] sm:$0x1] %v385
        %v387 = vld [vmem:[#allocation2 + $0xb0] sm:$0x1]
        %v388 = vsel %vm344, 0, %v387
        %389 = vst [vmem:[#allocation2 + $0xb0] sm:$0x1] %v388
        %v390 = vld [vmem:[#allocation2 + $0xbc] sm:$0x1]
        %v391 = vsel %vm344, 0, %v390
        %392 = vst [vmem:[#allocation2 + $0xbc] sm:$0x1] %v391
        %v393 = vld [vmem:[#allocation2 + $0xc8] sm:$0x1]
        %v394 = vsel %vm344, 0, %v393
        %395 = vst [vmem:[#allocation2 + $0xc8] sm:$0x1] %v394
        %v396 = vld [vmem:[#allocation2 + $0xd4] sm:$0x1]
        %v397 = vsel %vm344, 0, %v396
        %398 = vst [vmem:[#allocation2 + $0xd4] sm:$0x1] %v397
        %399 = vst [vmem:[#allocation3] sm:$0xf] 0
        %400 = vst [vmem:[#allocation3 + $0x4] sm:$0xf] 0
        %401 = vst [vmem:[#allocation3 + $0x8] sm:$0x1] 0
        %s402 = scalar_lea.vmem [#allocation3], 204
        %403 = vst [vmem:[%s402] sm:$0xf] 0
        %404 = vst [vmem:[%s402 + $0x4] sm:$0xf] 0
        %405 = vst [vmem:[%s402 + $0x8] sm:$0x1] 0
        %v406 = vld [vmem:[#allocation3] sm:$0x1]
        %v407 = vsel %vm288, 0, %v406
        %408 = vst [vmem:[#allocation3] sm:$0x1] %v407
        %v409 = vld [vmem:[#allocation3 + $0xc] sm:$0x1]
        %v410 = vsel %vm288, 0, %v409
        %411 = vst [vmem:[#allocation3 + $0xc] sm:$0x1] %v410
        %v412 = vld [vmem:[#allocation3 + $0x18] sm:$0x1]
        %v413 = vsel %vm288, 0, %v412
        %414 = vst [vmem:[#allocation3 + $0x18] sm:$0x1] %v413
        %v415 = vld [vmem:[#allocation3 + $0x24] sm:$0x1]
        %v416 = vsel %vm288, 0, %v415
        %417 = vst [vmem:[#allocation3 + $0x24] sm:$0x1] %v416
        %v418 = vld [vmem:[#allocation3 + $0x30] sm:$0x1]
        %v419 = vsel %vm288, 0, %v418
        %420 = vst [vmem:[#allocation3 + $0x30] sm:$0x1] %v419
        %v421 = vld [vmem:[#allocation3 + $0x3c] sm:$0x1]
        %v422 = vsel %vm288, 0, %v421
        %423 = vst [vmem:[#allocation3 + $0x3c] sm:$0x1] %v422
        %v424 = vld [vmem:[#allocation3 + $0x48] sm:$0x1]
        %v425 = vsel %vm288, 0, %v424
        %426 = vst [vmem:[#allocation3 + $0x48] sm:$0x1] %v425
        %v427 = vld [vmem:[#allocation3 + $0x54] sm:$0x1]
        %v428 = vsel %vm288, 0, %v427
        %429 = vst [vmem:[#allocation3 + $0x54] sm:$0x1] %v428
        %v430 = vld [vmem:[#allocation3 + $0x60] sm:$0x1]
        %v431 = vsel %vm288, 0, %v430
        %432 = vst [vmem:[#allocation3 + $0x60] sm:$0x1] %v431
        %v433 = vld [vmem:[#allocation3 + $0x6c] sm:$0x1]
        %v434 = vsel %vm288, 0, %v433
        %435 = vst [vmem:[#allocation3 + $0x6c] sm:$0x1] %v434
        %v436 = vld [vmem:[#allocation3 + $0x78] sm:$0x1]
        %v437 = vsel %vm288, 0, %v436
        %438 = vst [vmem:[#allocation3 + $0x78] sm:$0x1] %v437
        %v439 = vld [vmem:[#allocation3 + $0x84] sm:$0x1]
        %v440 = vsel %vm288, 0, %v439
        %441 = vst [vmem:[#allocation3 + $0x84] sm:$0x1] %v440
        %v442 = vld [vmem:[#allocation3 + $0x90] sm:$0x1]
        %v443 = vsel %vm288, 0, %v442
        %444 = vst [vmem:[#allocation3 + $0x90] sm:$0x1] %v443
        %v445 = vld [vmem:[#allocation3 + $0x9c] sm:$0x1]
        %v446 = vsel %vm288, 0, %v445
        %447 = vst [vmem:[#allocation3 + $0x9c] sm:$0x1] %v446
        %v448 = vld [vmem:[#allocation3 + $0xa8] sm:$0x1]
        %v449 = vsel %vm288, 0, %v448
        %450 = vst [vmem:[#allocation3 + $0xa8] sm:$0x1] %v449
        %v451 = vld [vmem:[#allocation3 + $0xb4] sm:$0x1]
        %v452 = vsel %vm288, 0, %v451
        %453 = vst [vmem:[#allocation3 + $0xb4] sm:$0x1] %v452
        %v454 = vld [vmem:[#allocation3 + $0xc0] sm:$0x1]
        %v455 = vsel %vm288, 0, %v454
        %456 = vst [vmem:[#allocation3 + $0xc0] sm:$0x1] %v455
        %v457 = vld [vmem:[#allocation3 + $0xcc] sm:$0x1]
        %v458 = vsel %vm288, 0, %v457
        %459 = vst [vmem:[#allocation3 + $0xcc] sm:$0x1] %v458
        %v460 = vld [vmem:[#allocation3 + $0x8] sm:$0x1]
        %v461 = vsel %vm344, 0, %v460
        %462 = vst [vmem:[#allocation3 + $0x8] sm:$0x1] %v461
        %v463 = vld [vmem:[#allocation3 + $0x14] sm:$0x1]
        %v464 = vsel %vm344, 0, %v463
        %465 = vst [vmem:[#allocation3 + $0x14] sm:$0x1] %v464
        %v466 = vld [vmem:[#allocation3 + $0x20] sm:$0x1]
        %v467 = vsel %vm344, 0, %v466
        %468 = vst [vmem:[#allocation3 + $0x20] sm:$0x1] %v467
        %v469 = vld [vmem:[#allocation3 + $0x2c] sm:$0x1]
        %v470 = vsel %vm344, 0, %v469
        %471 = vst [vmem:[#allocation3 + $0x2c] sm:$0x1] %v470
        %v472 = vld [vmem:[#allocation3 + $0x38] sm:$0x1]
        %v473 = vsel %vm344, 0, %v472
        %474 = vst [vmem:[#allocation3 + $0x38] sm:$0x1] %v473
        %v475 = vld [vmem:[#allocation3 + $0x44] sm:$0x1]
        %v476 = vsel %vm344, 0, %v475
        %477 = vst [vmem:[#allocation3 + $0x44] sm:$0x1] %v476
        %v478 = vld [vmem:[#allocation3 + $0x50] sm:$0x1]
        %v479 = vsel %vm344, 0, %v478
        %480 = vst [vmem:[#allocation3 + $0x50] sm:$0x1] %v479
        %v481 = vld [vmem:[#allocation3 + $0x5c] sm:$0x1]
        %v482 = vsel %vm344, 0, %v481
        %483 = vst [vmem:[#allocation3 + $0x5c] sm:$0x1] %v482
        %v484 = vld [vmem:[#allocation3 + $0x68] sm:$0x1]
        %v485 = vsel %vm344, 0, %v484
        %486 = vst [vmem:[#allocation3 + $0x68] sm:$0x1] %v485
        %v487 = vld [vmem:[#allocation3 + $0x74] sm:$0x1]
        %v488 = vsel %vm344, 0, %v487
        %489 = vst [vmem:[#allocation3 + $0x74] sm:$0x1] %v488
        %v490 = vld [vmem:[#allocation3 + $0x80] sm:$0x1]
        %v491 = vsel %vm344, 0, %v490
        %492 = vst [vmem:[#allocation3 + $0x80] sm:$0x1] %v491
        %v493 = vld [vmem:[#allocation3 + $0x8c] sm:$0x1]
        %v494 = vsel %vm344, 0, %v493
        %495 = vst [vmem:[#allocation3 + $0x8c] sm:$0x1] %v494
        %v496 = vld [vmem:[#allocation3 + $0x98] sm:$0x1]
        %v497 = vsel %vm344, 0, %v496
        %498 = vst [vmem:[#allocation3 + $0x98] sm:$0x1] %v497
        %v499 = vld [vmem:[#allocation3 + $0xa4] sm:$0x1]
        %v500 = vsel %vm344, 0, %v499
        %501 = vst [vmem:[#allocation3 + $0xa4] sm:$0x1] %v500
        %v502 = vld [vmem:[#allocation3 + $0xb0] sm:$0x1]
        %v503 = vsel %vm344, 0, %v502
        %504 = vst [vmem:[#allocation3 + $0xb0] sm:$0x1] %v503
        %v505 = vld [vmem:[#allocation3 + $0xbc] sm:$0x1]
        %v506 = vsel %vm344, 0, %v505
        %507 = vst [vmem:[#allocation3 + $0xbc] sm:$0x1] %v506
        %v508 = vld [vmem:[#allocation3 + $0xc8] sm:$0x1]
        %v509 = vsel %vm344, 0, %v508
        %510 = vst [vmem:[#allocation3 + $0xc8] sm:$0x1] %v509
        %v511 = vld [vmem:[#allocation3 + $0xd4] sm:$0x1]
        %v512 = vsel %vm344, 0, %v511
        %513 = vst [vmem:[#allocation3 + $0xd4] sm:$0x1] %v512
        %v514 = vld [vmem:[%s240] sm:$0xf]
        %v515 = vld [vmem:[%s240 + $0x4] sm:$0xf]
        %v516 = vld [vmem:[%s240 + $0x8] sm:$0xf]
        %v517 = vld [vmem:[%s240 + $0xc] sm:$0xf]
        %v518 = vld [vmem:[%s240 + $0x10] sm:$0xf]
        %v519 = vld [vmem:[%s240 + $0x14] sm:$0xf]
        %v520 = vld [vmem:[%s240 + $0x18] sm:$0xf]
        %v521 = vld [vmem:[%s240 + $0x1c] sm:$0xf]
        %v522 = vld [vmem:[%s240 + $0x20] sm:$0xf]
        %v523 = vld [vmem:[%s240 + $0x24] sm:$0xf]
        %v524 = vld [vmem:[%s240 + $0x28] sm:$0xf]
        %v525 = vld [vmem:[%s240 + $0x2c] sm:$0xf]
        %v526 = vld [vmem:[%s240 + $0x30] sm:$0xf]
        %v527 = vld [vmem:[%s240 + $0x34] sm:$0xf]
        %v528 = vld [vmem:[%s240 + $0x38] sm:$0xf]
        %v529 = vld [vmem:[%s240 + $0x3c] sm:$0xf]
        %v530 = vld [vmem:[%s240 + $0x40] sm:$0xf]
        %v531 = vld [vmem:[%s240 + $0x44] sm:$0xf]
        %v532 = vld [vmem:[%s240 + $0x48] sm:$0xf]
        %v533 = vld [vmem:[%s240 + $0x4c] sm:$0xf]
        %v534 = vld [vmem:[%s240 + $0x50] sm:$0xf]
        %v535 = vld [vmem:[%s240 + $0x54] sm:$0xf]
        %v536 = vld [vmem:[%s240 + $0x58] sm:$0xf]
        %v537 = vld [vmem:[%s240 + $0x5c] sm:$0xf]
        %v538 = vld [vmem:[%s240 + $0x60] sm:$0xf]
        %v539 = vld [vmem:[%s240 + $0x64] sm:$0xf]
        %v540 = vld [vmem:[%s240 + $0x68] sm:$0xf]
        %v541 = vld [vmem:[%s240 + $0x6c] sm:$0xf]
        %v542 = vld [vmem:[%s240 + $0x70] sm:$0xf]
        %v543 = vld [vmem:[%s240 + $0x74] sm:$0xf]
        %v544 = vld [vmem:[%s240 + $0x78] sm:$0xf]
        %v545 = vld [vmem:[%s240 + $0x7c] sm:$0xf]
        %vm546 = vsmask.f32 4368
        %vm547 = vmor %vm287, %vm546
        %v549 = vshrl.u32 %v514, 16
        %v551 = vrot.slane %v549, 7
        %v552 = vshll.u32 %v514, 16
        %v554 = vor.u32 %v551, %v552
        %v555 = vrot.slane %v551, 4
        %v557 = vshrl.u32 %v515, 16
        %v559 = vrot.slane %v557, 7
        %v560 = vshll.u32 %v515, 16
        %v562 = vor.u32 %v559, %v560
        %v563 = vsel %vm547, %v555, %v562
        %v564 = vrot.slane %v559, 4
        %v566 = vshrl.u32 %v516, 16
        %v568 = vrot.slane %v566, 7
        %v569 = vshll.u32 %v516, 16
        %v571 = vor.u32 %v568, %v569
        %v572 = vrot.slane %v568, 4
        %v574 = vshrl.u32 %v517, 16
        %v576 = vrot.slane %v574, 7
        %v577 = vshll.u32 %v517, 16
        %v579 = vor.u32 %v576, %v577
        %v580 = vsel %vm547, %v572, %v579
        %v581 = vrot.slane %v576, 4
        %v583 = vshrl.u32 %v518, 16
        %v585 = vrot.slane %v583, 7
        %v586 = vshll.u32 %v518, 16
        %v588 = vor.u32 %v585, %v586
        %v589 = vrot.slane %v585, 4
        %v591 = vshrl.u32 %v519, 16
        %v593 = vrot.slane %v591, 7
        %v594 = vshll.u32 %v519, 16
        %v596 = vor.u32 %v593, %v594
        %v597 = vsel %vm547, %v589, %v596
        %v598 = vrot.slane %v593, 4
        %v600 = vshrl.u32 %v520, 16
        %v602 = vrot.slane %v600, 7
        %v603 = vshll.u32 %v520, 16
        %v605 = vor.u32 %v602, %v603
        %v606 = vrot.slane %v602, 4
        %v608 = vshrl.u32 %v521, 16
        %v610 = vrot.slane %v608, 7
        %v611 = vshll.u32 %v521, 16
        %v613 = vor.u32 %v610, %v611
        %v614 = vsel %vm547, %v606, %v613
        %v615 = vrot.slane %v610, 4
        %v617 = vshrl.u32 %v522, 16
        %v619 = vrot.slane %v617, 7
        %v620 = vshll.u32 %v522, 16
        %v622 = vor.u32 %v619, %v620
        %v623 = vrot.slane %v619, 4
        %v625 = vshrl.u32 %v523, 16
        %v627 = vrot.slane %v625, 7
        %v628 = vshll.u32 %v523, 16
        %v630 = vor.u32 %v627, %v628
        %v631 = vsel %vm547, %v623, %v630
        %v632 = vrot.slane %v627, 4
        %v634 = vshrl.u32 %v524, 16
        %v636 = vrot.slane %v634, 7
        %v637 = vshll.u32 %v524, 16
        %v639 = vor.u32 %v636, %v637
        %v640 = vrot.slane %v636, 4
        %v642 = vshrl.u32 %v525, 16
        %v644 = vrot.slane %v642, 7
        %v645 = vshll.u32 %v525, 16
        %v647 = vor.u32 %v644, %v645
        %v648 = vsel %vm547, %v640, %v647
        %v649 = vrot.slane %v644, 4
        %v651 = vshrl.u32 %v526, 16
        %v653 = vrot.slane %v651, 7
        %v654 = vshll.u32 %v526, 16
        %v656 = vor.u32 %v653, %v654
        %v657 = vrot.slane %v653, 4
        %v659 = vshrl.u32 %v527, 16
        %v661 = vrot.slane %v659, 7
        %v662 = vshll.u32 %v527, 16
        %v664 = vor.u32 %v661, %v662
        %v665 = vsel %vm547, %v657, %v664
        %v666 = vrot.slane %v661, 4
        %v668 = vshrl.u32 %v528, 16
        %v670 = vrot.slane %v668, 7
        %v671 = vshll.u32 %v528, 16
        %v673 = vor.u32 %v670, %v671
        %v674 = vrot.slane %v670, 4
        %v676 = vshrl.u32 %v529, 16
        %v678 = vrot.slane %v676, 7
        %v679 = vshll.u32 %v529, 16
        %v681 = vor.u32 %v678, %v679
        %v682 = vsel %vm547, %v674, %v681
        %v683 = vrot.slane %v678, 4
        %v685 = vshrl.u32 %v530, 16
        %v687 = vrot.slane %v685, 7
        %v688 = vshll.u32 %v530, 16
        %v690 = vor.u32 %v687, %v688
        %v691 = vrot.slane %v687, 4
        %v693 = vshrl.u32 %v531, 16
        %v695 = vrot.slane %v693, 7
        %v696 = vshll.u32 %v531, 16
        %v698 = vor.u32 %v695, %v696
        %v699 = vsel %vm547, %v691, %v698
        %v700 = vrot.slane %v695, 4
        %v702 = vshrl.u32 %v532, 16
        %v704 = vrot.slane %v702, 7
        %v705 = vshll.u32 %v532, 16
        %v707 = vor.u32 %v704, %v705
        %v708 = vrot.slane %v704, 4
        %v710 = vshrl.u32 %v533, 16
        %v712 = vrot.slane %v710, 7
        %v713 = vshll.u32 %v533, 16
        %v715 = vor.u32 %v712, %v713
        %v716 = vsel %vm547, %v708, %v715
        %v717 = vrot.slane %v712, 4
        %v719 = vshrl.u32 %v534, 16
        %v721 = vrot.slane %v719, 7
        %v722 = vshll.u32 %v534, 16
        %v724 = vor.u32 %v721, %v722
        %v725 = vrot.slane %v721, 4
        %v727 = vshrl.u32 %v535, 16
        %v729 = vrot.slane %v727, 7
        %v730 = vshll.u32 %v535, 16
        %v732 = vor.u32 %v729, %v730
        %v733 = vsel %vm547, %v725, %v732
        %v734 = vrot.slane %v729, 4
        %v736 = vshrl.u32 %v536, 16
        %v738 = vrot.slane %v736, 7
        %v739 = vshll.u32 %v536, 16
        %v741 = vor.u32 %v738, %v739
        %v742 = vrot.slane %v738, 4
        %v744 = vshrl.u32 %v537, 16
        %v746 = vrot.slane %v744, 7
        %v747 = vshll.u32 %v537, 16
        %v749 = vor.u32 %v746, %v747
        %v750 = vsel %vm547, %v742, %v749
        %v751 = vrot.slane %v746, 4
        %v753 = vshrl.u32 %v538, 16
        %v755 = vrot.slane %v753, 7
        %v756 = vshll.u32 %v538, 16
        %v758 = vor.u32 %v755, %v756
        %v759 = vrot.slane %v755, 4
        %v761 = vshrl.u32 %v539, 16
        %v763 = vrot.slane %v761, 7
        %v764 = vshll.u32 %v539, 16
        %v766 = vor.u32 %v763, %v764
        %v767 = vsel %vm547, %v759, %v766
        %v768 = vrot.slane %v763, 4
        %v770 = vshrl.u32 %v540, 16
        %v772 = vrot.slane %v770, 7
        %v773 = vshll.u32 %v540, 16
        %v775 = vor.u32 %v772, %v773
        %v776 = vrot.slane %v772, 4
        %v778 = vshrl.u32 %v541, 16
        %v780 = vrot.slane %v778, 7
        %v781 = vshll.u32 %v541, 16
        %v783 = vor.u32 %v780, %v781
        %v784 = vsel %vm547, %v776, %v783
        %v785 = vrot.slane %v780, 4
        %v787 = vshrl.u32 %v542, 16
        %v789 = vrot.slane %v787, 7
        %v790 = vshll.u32 %v542, 16
        %v792 = vor.u32 %v789, %v790
        %v793 = vrot.slane %v789, 4
        %v795 = vshrl.u32 %v543, 16
        %v797 = vrot.slane %v795, 7
        %v798 = vshll.u32 %v543, 16
        %v800 = vor.u32 %v797, %v798
        %v801 = vsel %vm547, %v793, %v800
        %v802 = vrot.slane %v797, 4
        %v804 = vshrl.u32 %v544, 16
        %v806 = vrot.slane %v804, 7
        %v807 = vshll.u32 %v544, 16
        %v809 = vor.u32 %v806, %v807
        %v810 = vrot.slane %v806, 4
        %v812 = vshrl.u32 %v545, 16
        %v814 = vrot.slane %v812, 7
        %v815 = vshll.u32 %v545, 16
        %v817 = vor.u32 %v814, %v815
        %v818 = vsel %vm547, %v810, %v817
        %v819 = vrot.slane %v814, 4
        %s868 = scalar_lea.vmem [#allocation2], 12
        %vm869 = vcmask 1043456
        %vm870 = vmand %vm869, %vm343
        %v871 = vld [vmem:[%s868] sm:$0xf]
        %v872 = vsel %vm870, %v554, %v871
        %873 = vst [vmem:[%s868] sm:$0xf] %v872
        %874 = vst [vmem:[%s868 + $0x4] sm:$0xf] %v563
        %v875 = vld [vmem:[%s868 + $0x8] sm:$0x1]
        %v876 = vsel %vm288, %v564, %v875
        %877 = vst [vmem:[%s868 + $0x8] sm:$0x1] %v876
        %v878 = vld [vmem:[%s868 + $0xc] sm:$0xf]
        %v879 = vsel %vm870, %v571, %v878
        %880 = vst [vmem:[%s868 + $0xc] sm:$0xf] %v879
        %881 = vst [vmem:[%s868 + $0x10] sm:$0xf] %v580
        %v882 = vld [vmem:[%s868 + $0x14] sm:$0x1]
        %v883 = vsel %vm288, %v581, %v882
        %884 = vst [vmem:[%s868 + $0x14] sm:$0x1] %v883
        %v885 = vld [vmem:[%s868 + $0x18] sm:$0xf]
        %v886 = vsel %vm870, %v588, %v885
        %887 = vst [vmem:[%s868 + $0x18] sm:$0xf] %v886
        %888 = vst [vmem:[%s868 + $0x1c] sm:$0xf] %v597
        %v889 = vld [vmem:[%s868 + $0x20] sm:$0x1]
        %v890 = vsel %vm288, %v598, %v889
        %891 = vst [vmem:[%s868 + $0x20] sm:$0x1] %v890
        %v892 = vld [vmem:[%s868 + $0x24] sm:$0xf]
        %v893 = vsel %vm870, %v605, %v892
        %894 = vst [vmem:[%s868 + $0x24] sm:$0xf] %v893
        %895 = vst [vmem:[%s868 + $0x28] sm:$0xf] %v614
        %v896 = vld [vmem:[%s868 + $0x2c] sm:$0x1]
        %v897 = vsel %vm288, %v615, %v896
        %898 = vst [vmem:[%s868 + $0x2c] sm:$0x1] %v897
        %v899 = vld [vmem:[%s868 + $0x30] sm:$0xf]
        %v900 = vsel %vm870, %v622, %v899
        %901 = vst [vmem:[%s868 + $0x30] sm:$0xf] %v900
        %902 = vst [vmem:[%s868 + $0x34] sm:$0xf] %v631
        %v903 = vld [vmem:[%s868 + $0x38] sm:$0x1]
        %v904 = vsel %vm288, %v632, %v903
        %905 = vst [vmem:[%s868 + $0x38] sm:$0x1] %v904
        %v906 = vld [vmem:[%s868 + $0x3c] sm:$0xf]
        %v907 = vsel %vm870, %v639, %v906
        %908 = vst [vmem:[%s868 + $0x3c] sm:$0xf] %v907
        %909 = vst [vmem:[%s868 + $0x40] sm:$0xf] %v648
        %v910 = vld [vmem:[%s868 + $0x44] sm:$0x1]
        %v911 = vsel %vm288, %v649, %v910
        %912 = vst [vmem:[%s868 + $0x44] sm:$0x1] %v911
        %v913 = vld [vmem:[%s868 + $0x48] sm:$0xf]
        %v914 = vsel %vm870, %v656, %v913
        %915 = vst [vmem:[%s868 + $0x48] sm:$0xf] %v914
        %916 = vst [vmem:[%s868 + $0x4c] sm:$0xf] %v665
        %v917 = vld [vmem:[%s868 + $0x50] sm:$0x1]
        %v918 = vsel %vm288, %v666, %v917
        %919 = vst [vmem:[%s868 + $0x50] sm:$0x1] %v918
        %v920 = vld [vmem:[%s868 + $0x54] sm:$0xf]
        %v921 = vsel %vm870, %v673, %v920
        %922 = vst [vmem:[%s868 + $0x54] sm:$0xf] %v921
        %923 = vst [vmem:[%s868 + $0x58] sm:$0xf] %v682
        %v924 = vld [vmem:[%s868 + $0x5c] sm:$0x1]
        %v925 = vsel %vm288, %v683, %v924
        %926 = vst [vmem:[%s868 + $0x5c] sm:$0x1] %v925
        %v927 = vld [vmem:[%s868 + $0x60] sm:$0xf]
        %v928 = vsel %vm870, %v690, %v927
        %929 = vst [vmem:[%s868 + $0x60] sm:$0xf] %v928
        %930 = vst [vmem:[%s868 + $0x64] sm:$0xf] %v699
        %v931 = vld [vmem:[%s868 + $0x68] sm:$0x1]
        %v932 = vsel %vm288, %v700, %v931
        %933 = vst [vmem:[%s868 + $0x68] sm:$0x1] %v932
        %v934 = vld [vmem:[%s868 + $0x6c] sm:$0xf]
        %v935 = vsel %vm870, %v707, %v934
        %936 = vst [vmem:[%s868 + $0x6c] sm:$0xf] %v935
        %937 = vst [vmem:[%s868 + $0x70] sm:$0xf] %v716
        %v938 = vld [vmem:[%s868 + $0x74] sm:$0x1]
        %v939 = vsel %vm288, %v717, %v938
        %940 = vst [vmem:[%s868 + $0x74] sm:$0x1] %v939
        %v941 = vld [vmem:[%s868 + $0x78] sm:$0xf]
        %v942 = vsel %vm870, %v724, %v941
        %943 = vst [vmem:[%s868 + $0x78] sm:$0xf] %v942
        %944 = vst [vmem:[%s868 + $0x7c] sm:$0xf] %v733
        %v945 = vld [vmem:[%s868 + $0x80] sm:$0x1]
        %v946 = vsel %vm288, %v734, %v945
        %947 = vst [vmem:[%s868 + $0x80] sm:$0x1] %v946
        %v948 = vld [vmem:[%s868 + $0x84] sm:$0xf]
        %v949 = vsel %vm870, %v741, %v948
        %950 = vst [vmem:[%s868 + $0x84] sm:$0xf] %v949
        %951 = vst [vmem:[%s868 + $0x88] sm:$0xf] %v750
        %v952 = vld [vmem:[%s868 + $0x8c] sm:$0x1]
        %v953 = vsel %vm288, %v751, %v952
        %954 = vst [vmem:[%s868 + $0x8c] sm:$0x1] %v953
        %v955 = vld [vmem:[%s868 + $0x90] sm:$0xf]
        %v956 = vsel %vm870, %v758, %v955
        %957 = vst [vmem:[%s868 + $0x90] sm:$0xf] %v956
        %958 = vst [vmem:[%s868 + $0x94] sm:$0xf] %v767
        %v959 = vld [vmem:[%s868 + $0x98] sm:$0x1]
        %v960 = vsel %vm288, %v768, %v959
        %961 = vst [vmem:[%s868 + $0x98] sm:$0x1] %v960
        %v962 = vld [vmem:[%s868 + $0x9c] sm:$0xf]
        %v963 = vsel %vm870, %v775, %v962
        %964 = vst [vmem:[%s868 + $0x9c] sm:$0xf] %v963
        %965 = vst [vmem:[%s868 + $0xa0] sm:$0xf] %v784
        %v966 = vld [vmem:[%s868 + $0xa4] sm:$0x1]
        %v967 = vsel %vm288, %v785, %v966
        %968 = vst [vmem:[%s868 + $0xa4] sm:$0x1] %v967
        %v969 = vld [vmem:[%s868 + $0xa8] sm:$0xf]
        %v970 = vsel %vm870, %v792, %v969
        %971 = vst [vmem:[%s868 + $0xa8] sm:$0xf] %v970
        %972 = vst [vmem:[%s868 + $0xac] sm:$0xf] %v801
        %v973 = vld [vmem:[%s868 + $0xb0] sm:$0x1]
        %v974 = vsel %vm288, %v802, %v973
        %975 = vst [vmem:[%s868 + $0xb0] sm:$0x1] %v974
        %v976 = vld [vmem:[%s868 + $0xb4] sm:$0xf]
        %v977 = vsel %vm870, %v809, %v976
        %978 = vst [vmem:[%s868 + $0xb4] sm:$0xf] %v977
        %979 = vst [vmem:[%s868 + $0xb8] sm:$0xf] %v818
        %v980 = vld [vmem:[%s868 + $0xbc] sm:$0x1]
        %v981 = vsel %vm288, %v819, %v980
        %982 = vst [vmem:[%s868 + $0xbc] sm:$0x1] %v981
        %v983 = vld [vmem:[%s2] sm:$0x1]
        %v985 = vperm.slane %v983, 0
        %987 = vst [vmem:[#allocation4] sm:$0xff] %v985
        %988 = vst [vmem:[#allocation4 + $0x8] sm:$0xff] %v985
        %989 = vst [vmem:[#allocation4 + $0x10] sm:$0xff] %v985
        %990 = vst [vmem:[#allocation4 + $0x18] sm:$0xff] %v985
        %991 = vst [vmem:[#allocation4 + $0x20] sm:$0xff] %v985
        %992 = vst [vmem:[#allocation4 + $0x28] sm:$0xff] %v985
        %993 = vst [vmem:[#allocation4 + $0x30] sm:$0xff] %v985
        %994 = vst [vmem:[#allocation4 + $0x38] sm:$0xff] %v985
        %995 = vst [vmem:[#allocation4 + $0x40] sm:$0xff] %v985
        %996 = vst [vmem:[#allocation4 + $0x48] sm:$0xff] %v985
        %997 = vst [vmem:[#allocation4 + $0x50] sm:$0xff] %v985
        %998 = vst [vmem:[#allocation4 + $0x58] sm:$0xff] %v985
        %999 = vst [vmem:[#allocation4 + $0x60] sm:$0xff] %v985
        %1000 = vst [vmem:[#allocation4 + $0x68] sm:$0xff] %v985
        %1001 = vst [vmem:[#allocation4 + $0x70] sm:$0xff] %v985
        %1002 = vst [vmem:[#allocation4 + $0x78] sm:$0xff] %v985
        %1003 = vst [vmem:[#allocation4 + $0x80] sm:$0xff] %v985
        %1004 = vst [vmem:[#allocation4 + $0x88] sm:$0xff] %v985
        %1005 = vst [vmem:[#allocation4 + $0x90] sm:$0xff] %v985
        %1006 = vst [vmem:[#allocation4 + $0x98] sm:$0xff] %v985
        %1007 = vst [vmem:[#allocation4 + $0xa0] sm:$0xff] %v985
        %1008 = vst [vmem:[#allocation4 + $0xa8] sm:$0xff] %v985
        %1009 = vst [vmem:[#allocation4 + $0xb0] sm:$0xff] %v985
        %1010 = vst [vmem:[#allocation4 + $0xb8] sm:$0xff] %v985
        %1011 = vst [vmem:[#allocation4 + $0xc0] sm:$0xff] %v985
        %1012 = vst [vmem:[#allocation4 + $0xc8] sm:$0xff] %v985
        %1013 = vst [vmem:[#allocation4 + $0xd0] sm:$0xff] %v985
        %1014 = vst [vmem:[#allocation4 + $0xd8] sm:$0xff] %v985
        %1015 = vst [vmem:[#allocation4 + $0xe0] sm:$0xff] %v985
        %1016 = vst [vmem:[#allocation4 + $0xe8] sm:$0xff] %v985
        %1017 = vst [vmem:[#allocation4 + $0xf0] sm:$0xff] %v985
        %1018 = vst [vmem:[#allocation4 + $0xf8] sm:$0xff] %v985
        %v1019 = vld [vmem:[#allocation2] sm:$0xf]
        %v1020 = vld [vmem:[#allocation2 + $0x4] sm:$0xf]
        %v1021 = vld [vmem:[#allocation2 + $0x8] sm:$0x1]
        %v1022 = vld [vmem:[#allocation2 + $0xc] sm:$0xf]
        %v1023 = vld [vmem:[#allocation2 + $0x10] sm:$0xf]
        %v1024 = vld [vmem:[#allocation2 + $0x14] sm:$0x1]
        %v1025 = vld [vmem:[#allocation2 + $0x18] sm:$0xf]
        %v1026 = vld [vmem:[#allocation2 + $0x1c] sm:$0xf]
        %v1027 = vld [vmem:[#allocation2 + $0x20] sm:$0x1]
        %v1028 = vld [vmem:[#allocation2 + $0x24] sm:$0xf]
        %v1029 = vld [vmem:[#allocation2 + $0x28] sm:$0xf]
        %v1030 = vld [vmem:[#allocation2 + $0x2c] sm:$0x1]
        %v1031 = vld [vmem:[#allocation2 + $0x30] sm:$0xf]
        %v1032 = vld [vmem:[#allocation2 + $0x34] sm:$0xf]
        %v1033 = vld [vmem:[#allocation2 + $0x38] sm:$0x1]
        %v1034 = vld [vmem:[#allocation2 + $0x3c] sm:$0xf]
        %v1035 = vld [vmem:[#allocation2 + $0x40] sm:$0xf]
        %v1036 = vld [vmem:[#allocation2 + $0x44] sm:$0x1]
        %v1037 = vld [vmem:[#allocation2 + $0x48] sm:$0xf]
        %v1038 = vld [vmem:[#allocation2 + $0x4c] sm:$0xf]
        %v1039 = vld [vmem:[#allocation2 + $0x50] sm:$0x1]
        %v1040 = vld [vmem:[#allocation2 + $0x54] sm:$0xf]
        %v1041 = vld [vmem:[#allocation2 + $0x58] sm:$0xf]
        %v1042 = vld [vmem:[#allocation2 + $0x5c] sm:$0x1]
        %v1043 = vld [vmem:[#allocation2 + $0x60] sm:$0xf]
        %v1044 = vld [vmem:[#allocation2 + $0x64] sm:$0xf]
        %v1045 = vld [vmem:[#allocation2 + $0x68] sm:$0x1]
        %v1046 = vld [vmem:[#allocation2 + $0x6c] sm:$0xf]
        %v1047 = vld [vmem:[#allocation2 + $0x70] sm:$0xf]
        %v1048 = vld [vmem:[#allocation2 + $0x74] sm:$0x1]
        %v1049 = vld [vmem:[#allocation2 + $0x78] sm:$0xf]
        %v1050 = vld [vmem:[#allocation2 + $0x7c] sm:$0xf]
        %v1051 = vld [vmem:[#allocation2 + $0x80] sm:$0x1]
        %v1052 = vld [vmem:[#allocation2 + $0x84] sm:$0xf]
        %v1053 = vld [vmem:[#allocation2 + $0x88] sm:$0xf]
        %v1054 = vld [vmem:[#allocation2 + $0x8c] sm:$0x1]
        %v1055 = vld [vmem:[#allocation2 + $0x90] sm:$0xf]
        %v1056 = vld [vmem:[#allocation2 + $0x94] sm:$0xf]
        %v1057 = vld [vmem:[#allocation2 + $0x98] sm:$0x1]
        %v1058 = vld [vmem:[#allocation2 + $0x9c] sm:$0xf]
        %v1059 = vld [vmem:[#allocation2 + $0xa0] sm:$0xf]
        %v1060 = vld [vmem:[#allocation2 + $0xa4] sm:$0x1]
        %v1061 = vld [vmem:[#allocation2 + $0xa8] sm:$0xf]
        %v1062 = vld [vmem:[#allocation2 + $0xac] sm:$0xf]
        %v1063 = vld [vmem:[#allocation2 + $0xb0] sm:$0x1]
        %v1064 = vld [vmem:[#allocation2 + $0xb4] sm:$0xf]
        %v1065 = vld [vmem:[#allocation2 + $0xb8] sm:$0xf]
        %v1066 = vld [vmem:[#allocation2 + $0xbc] sm:$0x1]
        %v1099 = vunpack.c.l.b16 %v1019
        %v1100 = vunpack.c.l.b16 %v1020
        %v1101 = vunpack.c.l.b16 %v1022
        %v1102 = vunpack.c.l.b16 %v1023
        %v1103 = vunpack.c.l.b16 %v1025
        %v1104 = vunpack.c.l.b16 %v1026
        %v1105 = vunpack.c.l.b16 %v1028
        %v1106 = vunpack.c.l.b16 %v1029
        %v1107 = vunpack.c.l.b16 %v1031
        %v1108 = vunpack.c.l.b16 %v1032
        %v1109 = vunpack.c.l.b16 %v1034
        %v1110 = vunpack.c.l.b16 %v1035
        %v1111 = vunpack.c.l.b16 %v1037
        %v1112 = vunpack.c.l.b16 %v1038
        %v1113 = vunpack.c.l.b16 %v1040
        %v1114 = vunpack.c.l.b16 %v1041
        %v1115 = vunpack.c.l.b16 %v1043
        %v1116 = vunpack.c.l.b16 %v1044
        %v1117 = vunpack.c.l.b16 %v1046
        %v1118 = vunpack.c.l.b16 %v1047
        %v1119 = vunpack.c.l.b16 %v1049
        %v1120 = vunpack.c.l.b16 %v1050
        %v1121 = vunpack.c.l.b16 %v1052
        %v1122 = vunpack.c.l.b16 %v1053
        %v1123 = vunpack.c.l.b16 %v1055
        %v1124 = vunpack.c.l.b16 %v1056
        %v1125 = vunpack.c.l.b16 %v1058
        %v1126 = vunpack.c.l.b16 %v1059
        %v1127 = vunpack.c.l.b16 %v1061
        %v1128 = vunpack.c.l.b16 %v1062
        %v1129 = vunpack.c.l.b16 %v1064
        %v1130 = vunpack.c.l.b16 %v1065
        %v1131 = vpack.c.b16 %v1100, %v1099
        %v1132 = vpack.c.b16 %v1102, %v1101
        %v1133 = vpack.c.b16 %v1104, %v1103
        %v1134 = vpack.c.b16 %v1106, %v1105
        %v1135 = vpack.c.b16 %v1108, %v1107
        %v1136 = vpack.c.b16 %v1110, %v1109
        %v1137 = vpack.c.b16 %v1112, %v1111
        %v1138 = vpack.c.b16 %v1114, %v1113
        %v1139 = vpack.c.b16 %v1116, %v1115
        %v1140 = vpack.c.b16 %v1118, %v1117
        %v1141 = vpack.c.b16 %v1120, %v1119
        %v1142 = vpack.c.b16 %v1122, %v1121
        %v1143 = vpack.c.b16 %v1124, %v1123
        %v1144 = vpack.c.b16 %v1126, %v1125
        %v1145 = vpack.c.b16 %v1128, %v1127
        %v1146 = vpack.c.b16 %v1130, %v1129
        %v1179 = vunpack.c.l.b16 %v1021
        %v1180 = vunpack.c.l.b16 %v1024
        %v1181 = vunpack.c.l.b16 %v1027
        %v1182 = vunpack.c.l.b16 %v1030
        %v1183 = vunpack.c.l.b16 %v1033
        %v1184 = vunpack.c.l.b16 %v1036
        %v1185 = vunpack.c.l.b16 %v1039
        %v1186 = vunpack.c.l.b16 %v1042
        %v1187 = vunpack.c.l.b16 %v1045
        %v1188 = vunpack.c.l.b16 %v1048
        %v1189 = vunpack.c.l.b16 %v1051
        %v1190 = vunpack.c.l.b16 %v1054
        %v1191 = vunpack.c.l.b16 %v1057
        %v1192 = vunpack.c.l.b16 %v1060
        %v1193 = vunpack.c.l.b16 %v1063
        %v1194 = vunpack.c.l.b16 %v1066
        %v1195 = vpack.c.b16 %v1179, %v1179
        %v1196 = vpack.c.b16 %v1180, %v1180
        %v1197 = vpack.c.b16 %v1181, %v1181
        %v1198 = vpack.c.b16 %v1182, %v1182
        %v1199 = vpack.c.b16 %v1183, %v1183
        %v1200 = vpack.c.b16 %v1184, %v1184
        %v1201 = vpack.c.b16 %v1185, %v1185
        %v1202 = vpack.c.b16 %v1186, %v1186
        %v1203 = vpack.c.b16 %v1187, %v1187
        %v1204 = vpack.c.b16 %v1188, %v1188
        %v1205 = vpack.c.b16 %v1189, %v1189
        %v1206 = vpack.c.b16 %v1190, %v1190
        %v1207 = vpack.c.b16 %v1191, %v1191
        %v1208 = vpack.c.b16 %v1192, %v1192
        %v1209 = vpack.c.b16 %v1193, %v1193
        %v1210 = vpack.c.b16 %v1194, %v1194
        %vm1211 = vsmask.f32 7424
        %v1213 = vshrl.u32 %v1131, 16
        %v1215 = vshll.u32 %v1131, 16
        %v1217 = vrot.slane %v1215, 1
        %v1218 = vor.u32 %v1213, %v1217
        %v1220 = vshll.u32 %v1195, 16
        %v1222 = vrot.slane %v1220, 1
        %v1223 = vsel %vm1211, %v1218, %v1222
        %v1225 = vshrl.u32 %v1132, 16
        %v1227 = vshll.u32 %v1132, 16
        %v1229 = vrot.slane %v1227, 1
        %v1230 = vor.u32 %v1225, %v1229
        %v1232 = vshll.u32 %v1196, 16
        %v1234 = vrot.slane %v1232, 1
        %v1235 = vsel %vm1211, %v1230, %v1234
        %v1237 = vshrl.u32 %v1133, 16
        %v1239 = vshll.u32 %v1133, 16
        %v1241 = vrot.slane %v1239, 1
        %v1242 = vor.u32 %v1237, %v1241
        %v1244 = vshll.u32 %v1197, 16
        %v1246 = vrot.slane %v1244, 1
        %v1247 = vsel %vm1211, %v1242, %v1246
        %v1249 = vshrl.u32 %v1134, 16
        %v1251 = vshll.u32 %v1134, 16
        %v1253 = vrot.slane %v1251, 1
        %v1254 = vor.u32 %v1249, %v1253
        %v1256 = vshll.u32 %v1198, 16
        %v1258 = vrot.slane %v1256, 1
        %v1259 = vsel %vm1211, %v1254, %v1258
        %v1261 = vshrl.u32 %v1135, 16
        %v1263 = vshll.u32 %v1135, 16
        %v1265 = vrot.slane %v1263, 1
        %v1266 = vor.u32 %v1261, %v1265
        %v1268 = vshll.u32 %v1199, 16
        %v1270 = vrot.slane %v1268, 1
        %v1271 = vsel %vm1211, %v1266, %v1270
        %v1273 = vshrl.u32 %v1136, 16
        %v1275 = vshll.u32 %v1136, 16
        %v1277 = vrot.slane %v1275, 1
        %v1278 = vor.u32 %v1273, %v1277
        %v1280 = vshll.u32 %v1200, 16
        %v1282 = vrot.slane %v1280, 1
        %v1283 = vsel %vm1211, %v1278, %v1282
        %v1285 = vshrl.u32 %v1137, 16
        %v1287 = vshll.u32 %v1137, 16
        %v1289 = vrot.slane %v1287, 1
        %v1290 = vor.u32 %v1285, %v1289
        %v1292 = vshll.u32 %v1201, 16
        %v1294 = vrot.slane %v1292, 1
        %v1295 = vsel %vm1211, %v1290, %v1294
        %v1297 = vshrl.u32 %v1138, 16
        %v1299 = vshll.u32 %v1138, 16
        %v1301 = vrot.slane %v1299, 1
        %v1302 = vor.u32 %v1297, %v1301
        %v1304 = vshll.u32 %v1202, 16
        %v1306 = vrot.slane %v1304, 1
        %v1307 = vsel %vm1211, %v1302, %v1306
        %v1309 = vshrl.u32 %v1139, 16
        %v1311 = vshll.u32 %v1139, 16
        %v1313 = vrot.slane %v1311, 1
        %v1314 = vor.u32 %v1309, %v1313
        %v1316 = vshll.u32 %v1203, 16
        %v1318 = vrot.slane %v1316, 1
        %v1319 = vsel %vm1211, %v1314, %v1318
        %v1321 = vshrl.u32 %v1140, 16
        %v1323 = vshll.u32 %v1140, 16
        %v1325 = vrot.slane %v1323, 1
        %v1326 = vor.u32 %v1321, %v1325
        %v1328 = vshll.u32 %v1204, 16
        %v1330 = vrot.slane %v1328, 1
        %v1331 = vsel %vm1211, %v1326, %v1330
        %v1333 = vshrl.u32 %v1141, 16
        %v1335 = vshll.u32 %v1141, 16
        %v1337 = vrot.slane %v1335, 1
        %v1338 = vor.u32 %v1333, %v1337
        %v1340 = vshll.u32 %v1205, 16
        %v1342 = vrot.slane %v1340, 1
        %v1343 = vsel %vm1211, %v1338, %v1342
        %v1345 = vshrl.u32 %v1142, 16
        %v1347 = vshll.u32 %v1142, 16
        %v1349 = vrot.slane %v1347, 1
        %v1350 = vor.u32 %v1345, %v1349
        %v1352 = vshll.u32 %v1206, 16
        %v1354 = vrot.slane %v1352, 1
        %v1355 = vsel %vm1211, %v1350, %v1354
        %v1357 = vshrl.u32 %v1143, 16
        %v1359 = vshll.u32 %v1143, 16
        %v1361 = vrot.slane %v1359, 1
        %v1362 = vor.u32 %v1357, %v1361
        %v1364 = vshll.u32 %v1207, 16
        %v1366 = vrot.slane %v1364, 1
        %v1367 = vsel %vm1211, %v1362, %v1366
        %v1369 = vshrl.u32 %v1144, 16
        %v1371 = vshll.u32 %v1144, 16
        %v1373 = vrot.slane %v1371, 1
        %v1374 = vor.u32 %v1369, %v1373
        %v1376 = vshll.u32 %v1208, 16
        %v1378 = vrot.slane %v1376, 1
        %v1379 = vsel %vm1211, %v1374, %v1378
        %v1381 = vshrl.u32 %v1145, 16
        %v1383 = vshll.u32 %v1145, 16
        %v1385 = vrot.slane %v1383, 1
        %v1386 = vor.u32 %v1381, %v1385
        %v1388 = vshll.u32 %v1209, 16
        %v1390 = vrot.slane %v1388, 1
        %v1391 = vsel %vm1211, %v1386, %v1390
        %v1393 = vshrl.u32 %v1146, 16
        %v1395 = vshll.u32 %v1146, 16
        %v1397 = vrot.slane %v1395, 1
        %v1398 = vor.u32 %v1393, %v1397
        %v1400 = vshll.u32 %v1210, 16
        %v1402 = vrot.slane %v1400, 1
        %v1403 = vsel %vm1211, %v1398, %v1402
        %vm1420 = vcmask 1046528
        %v1421 = vrot.slane %v1131, 1
        %v1422 = vrot.slane %v1195, 1
        %v1423 = vsel %vm1420, %v1421, %v1422
        %v1424 = vrot.slane %v1132, 1
        %v1425 = vrot.slane %v1196, 1
        %v1426 = vsel %vm1420, %v1424, %v1425
        %v1427 = vrot.slane %v1133, 1
        %v1428 = vrot.slane %v1197, 1
        %v1429 = vsel %vm1420, %v1427, %v1428
        %v1430 = vrot.slane %v1134, 1
        %v1431 = vrot.slane %v1198, 1
        %v1432 = vsel %vm1420, %v1430, %v1431
        %v1433 = vrot.slane %v1135, 1
        %v1434 = vrot.slane %v1199, 1
        %v1435 = vsel %vm1420, %v1433, %v1434
        %v1436 = vrot.slane %v1136, 1
        %v1437 = vrot.slane %v1200, 1
        %v1438 = vsel %vm1420, %v1436, %v1437
        %v1439 = vrot.slane %v1137, 1
        %v1440 = vrot.slane %v1201, 1
        %v1441 = vsel %vm1420, %v1439, %v1440
        %v1442 = vrot.slane %v1138, 1
        %v1443 = vrot.slane %v1202, 1
        %v1444 = vsel %vm1420, %v1442, %v1443
        %v1445 = vrot.slane %v1139, 1
        %v1446 = vrot.slane %v1203, 1
        %v1447 = vsel %vm1420, %v1445, %v1446
        %v1448 = vrot.slane %v1140, 1
        %v1449 = vrot.slane %v1204, 1
        %v1450 = vsel %vm1420, %v1448, %v1449
        %v1451 = vrot.slane %v1141, 1
        %v1452 = vrot.slane %v1205, 1
        %v1453 = vsel %vm1420, %v1451, %v1452
        %v1454 = vrot.slane %v1142, 1
        %v1455 = vrot.slane %v1206, 1
        %v1456 = vsel %vm1420, %v1454, %v1455
        %v1457 = vrot.slane %v1143, 1
        %v1458 = vrot.slane %v1207, 1
        %v1459 = vsel %vm1420, %v1457, %v1458
        %v1460 = vrot.slane %v1144, 1
        %v1461 = vrot.slane %v1208, 1
        %v1462 = vsel %vm1420, %v1460, %v1461
        %v1463 = vrot.slane %v1145, 1
        %v1464 = vrot.slane %v1209, 1
        %v1465 = vsel %vm1420, %v1463, %v1464
        %v1466 = vrot.slane %v1146, 1
        %v1467 = vrot.slane %v1210, 1
        %v1468 = vsel %vm1420, %v1466, %v1467
        %v1485 = vld [vmem:[#allocation8] sm:$0xf]
        %v1486 = vld [vmem:[#allocation8 + $0x4] sm:$0xf]
        %v1487 = vld [vmem:[#allocation8 + $0x8] sm:$0xf]
        %v1488 = vld [vmem:[#allocation8 + $0xc] sm:$0xf]
        %v1489 = vld [vmem:[#allocation8 + $0x10] sm:$0xf]
        %v1490 = vld [vmem:[#allocation8 + $0x14] sm:$0xf]
        %v1491 = vld [vmem:[#allocation8 + $0x18] sm:$0xf]
        %v1492 = vld [vmem:[#allocation8 + $0x1c] sm:$0xf]
        %v1493 = vld [vmem:[#allocation8 + $0x20] sm:$0xf]
        %v1494 = vld [vmem:[#allocation8 + $0x24] sm:$0xf]
        %v1495 = vld [vmem:[#allocation8 + $0x28] sm:$0xf]
        %v1496 = vld [vmem:[#allocation8 + $0x2c] sm:$0xf]
        %v1497 = vld [vmem:[#allocation8 + $0x30] sm:$0xf]
        %v1498 = vld [vmem:[#allocation8 + $0x34] sm:$0xf]
        %v1499 = vld [vmem:[#allocation8 + $0x38] sm:$0xf]
        %v1500 = vld [vmem:[#allocation8 + $0x3c] sm:$0xf]
        %v1501 = vld [vmem:[#allocation8 + $0x40] sm:$0xf]
        %v1502 = vld [vmem:[#allocation8 + $0x44] sm:$0xf]
        %v1503 = vld [vmem:[#allocation8 + $0x48] sm:$0xf]
        %v1504 = vld [vmem:[#allocation8 + $0x4c] sm:$0xf]
        %v1505 = vld [vmem:[#allocation8 + $0x50] sm:$0xf]
        %v1506 = vld [vmem:[#allocation8 + $0x54] sm:$0xf]
        %v1507 = vld [vmem:[#allocation8 + $0x58] sm:$0xf]
        %v1508 = vld [vmem:[#allocation8 + $0x5c] sm:$0xf]
        %v1509 = vld [vmem:[#allocation8 + $0x60] sm:$0xf]
        %v1510 = vld [vmem:[#allocation8 + $0x64] sm:$0xf]
        %v1511 = vld [vmem:[#allocation8 + $0x68] sm:$0xf]
        %v1512 = vld [vmem:[#allocation8 + $0x6c] sm:$0xf]
        %v1513 = vld [vmem:[#allocation8 + $0x70] sm:$0xf]
        %v1514 = vld [vmem:[#allocation8 + $0x74] sm:$0xf]
        %v1515 = vld [vmem:[#allocation8 + $0x78] sm:$0xf]
        %v1516 = vld [vmem:[#allocation8 + $0x7c] sm:$0xf]
        %v1517 = vld [vmem:[#allocation8 + $0x80] sm:$0xf]
        %v1518 = vld [vmem:[#allocation8 + $0x84] sm:$0xf]
        %v1519 = vld [vmem:[#allocation8 + $0x88] sm:$0xf]
        %v1520 = vld [vmem:[#allocation8 + $0x8c] sm:$0xf]
        %v1521 = vld [vmem:[#allocation8 + $0x90] sm:$0xf]
        %v1522 = vld [vmem:[#allocation8 + $0x94] sm:$0xf]
        %v1523 = vld [vmem:[#allocation8 + $0x98] sm:$0xf]
        %v1524 = vld [vmem:[#allocation8 + $0x9c] sm:$0xf]
        %v1525 = vld [vmem:[#allocation8 + $0xa0] sm:$0xf]
        %v1526 = vld [vmem:[#allocation8 + $0xa4] sm:$0xf]
        %v1527 = vld [vmem:[#allocation8 + $0xa8] sm:$0xf]
        %v1528 = vld [vmem:[#allocation8 + $0xac] sm:$0xf]
        %v1529 = vld [vmem:[#allocation8 + $0xb0] sm:$0xf]
        %v1530 = vld [vmem:[#allocation8 + $0xb4] sm:$0xf]
        %v1531 = vld [vmem:[#allocation8 + $0xb8] sm:$0xf]
        %v1532 = vld [vmem:[#allocation8 + $0xbc] sm:$0xf]
        %v1581 = vunpack.c.l.b16 %v1485
        %v1582 = vunpack.c.l.b16 %v1486
        %v1583 = vunpack.c.l.b16 %v1487
        %v1584 = vunpack.c.l.b16 %v1488
        %v1585 = vunpack.c.l.b16 %v1489
        %v1586 = vunpack.c.l.b16 %v1490
        %v1587 = vunpack.c.l.b16 %v1491
        %v1588 = vunpack.c.l.b16 %v1492
        %v1589 = vunpack.c.l.b16 %v1493
        %v1590 = vunpack.c.l.b16 %v1494
        %v1591 = vunpack.c.l.b16 %v1495
        %v1592 = vunpack.c.l.b16 %v1496
        %v1593 = vunpack.c.l.b16 %v1497
        %v1594 = vunpack.c.l.b16 %v1498
        %v1595 = vunpack.c.l.b16 %v1499
        %v1596 = vunpack.c.l.b16 %v1500
        %v1597 = vunpack.c.l.b16 %v1501
        %v1598 = vunpack.c.l.b16 %v1502
        %v1599 = vunpack.c.l.b16 %v1503
        %v1600 = vunpack.c.l.b16 %v1504
        %v1601 = vunpack.c.l.b16 %v1505
        %v1602 = vunpack.c.l.b16 %v1506
        %v1603 = vunpack.c.l.b16 %v1507
        %v1604 = vunpack.c.l.b16 %v1508
        %v1605 = vunpack.c.l.b16 %v1509
        %v1606 = vunpack.c.l.b16 %v1510
        %v1607 = vunpack.c.l.b16 %v1511
        %v1608 = vunpack.c.l.b16 %v1512
        %v1609 = vunpack.c.l.b16 %v1513
        %v1610 = vunpack.c.l.b16 %v1514
        %v1611 = vunpack.c.l.b16 %v1515
        %v1612 = vunpack.c.l.b16 %v1516
        %v1613 = vunpack.c.l.b16 %v1517
        %v1614 = vunpack.c.l.b16 %v1518
        %v1615 = vunpack.c.l.b16 %v1519
        %v1616 = vunpack.c.l.b16 %v1520
        %v1617 = vunpack.c.l.b16 %v1521
        %v1618 = vunpack.c.l.b16 %v1522
        %v1619 = vunpack.c.l.b16 %v1523
        %v1620 = vunpack.c.l.b16 %v1524
        %v1621 = vunpack.c.l.b16 %v1525
        %v1622 = vunpack.c.l.b16 %v1526
        %v1623 = vunpack.c.l.b16 %v1527
        %v1624 = vunpack.c.l.b16 %v1528
        %v1625 = vunpack.c.l.b16 %v1529
        %v1626 = vunpack.c.l.b16 %v1530
        %v1627 = vunpack.c.l.b16 %v1531
        %v1628 = vunpack.c.l.b16 %v1532
        %v1629 = vpack.c.b16 %v1582, %v1581
        %v1630 = vpack.c.b16 %v1584, %v1583
        %v1631 = vpack.c.b16 %v1586, %v1585
        %v1632 = vpack.c.b16 %v1588, %v1587
        %v1633 = vpack.c.b16 %v1590, %v1589
        %v1634 = vpack.c.b16 %v1592, %v1591
        %v1635 = vpack.c.b16 %v1594, %v1593
        %v1636 = vpack.c.b16 %v1596, %v1595
        %v1637 = vpack.c.b16 %v1598, %v1597
        %v1638 = vpack.c.b16 %v1600, %v1599
        %v1639 = vpack.c.b16 %v1602, %v1601
        %v1640 = vpack.c.b16 %v1604, %v1603
        %v1641 = vpack.c.b16 %v1606, %v1605
        %v1642 = vpack.c.b16 %v1608, %v1607
        %v1643 = vpack.c.b16 %v1610, %v1609
        %v1644 = vpack.c.b16 %v1612, %v1611
        %v1645 = vpack.c.b16 %v1614, %v1613
        %v1646 = vpack.c.b16 %v1616, %v1615
        %v1647 = vpack.c.b16 %v1618, %v1617
        %v1648 = vpack.c.b16 %v1620, %v1619
        %v1649 = vpack.c.b16 %v1622, %v1621
        %v1650 = vpack.c.b16 %v1624, %v1623
        %v1651 = vpack.c.b16 %v1626, %v1625
        %v1652 = vpack.c.b16 %v1628, %v1627
        %1677 = vmatpush.bf16.msra.mxu0 %v1636
        %1678 = vmatpush.bf16.msra.mxu0 %v1635
        %1679 = vmatpush.bf16.msra.mxu0 %v1634
        %1680 = vmatpush.bf16.msra.mxu0 %v1633
        %1681 = vmatpush.bf16.msra.mxu0 %v1632
        %1682 = vmatpush.bf16.msra.mxu0 %v1631
        %1683 = vmatpush.bf16.msra.mxu0 %v1630
        %1684 = vmatpush.bf16.msra.mxu0 %v1629
        %1685 = vmatmul.bf16.gmra.mxu0 %v1131
        %v1686 = vpop.f32.mrf.mxu0
        %v1687 = vadd.f32 0.0, %v1686
        %v1688 = vpop.f32.mrf.mxu0
        %v1689 = vadd.f32 0.0, %v1688
        %1690 = vmatmul.bf16.gmra.mxu0 %v1132
        %v1691 = vpop.f32.mrf.mxu0
        %v1692 = vadd.f32 0.0, %v1691
        %v1693 = vpop.f32.mrf.mxu0
        %v1694 = vadd.f32 0.0, %v1693
        %1695 = vmatmul.bf16.gmra.mxu0 %v1133
        %v1696 = vpop.f32.mrf.mxu0
        %v1697 = vadd.f32 0.0, %v1696
        %v1698 = vpop.f32.mrf.mxu0
        %v1699 = vadd.f32 0.0, %v1698
        %1700 = vmatmul.bf16.gmra.mxu0 %v1134
        %v1701 = vpop.f32.mrf.mxu0
        %v1702 = vadd.f32 0.0, %v1701
        %v1703 = vpop.f32.mrf.mxu0
        %v1704 = vadd.f32 0.0, %v1703
        %1705 = vmatmul.bf16.gmra.mxu0 %v1135
        %v1706 = vpop.f32.mrf.mxu0
        %v1707 = vadd.f32 0.0, %v1706
        %v1708 = vpop.f32.mrf.mxu0
        %v1709 = vadd.f32 0.0, %v1708
        %1710 = vmatmul.bf16.gmra.mxu0 %v1136
        %v1711 = vpop.f32.mrf.mxu0
        %v1712 = vadd.f32 0.0, %v1711
        %v1713 = vpop.f32.mrf.mxu0
        %v1714 = vadd.f32 0.0, %v1713
        %1715 = vmatmul.bf16.gmra.mxu0 %v1137
        %v1716 = vpop.f32.mrf.mxu0
        %v1717 = vadd.f32 0.0, %v1716
        %v1718 = vpop.f32.mrf.mxu0
        %v1719 = vadd.f32 0.0, %v1718
        %1720 = vmatmul.bf16.gmra.mxu0 %v1138
        %v1721 = vpop.f32.mrf.mxu0
        %v1722 = vadd.f32 0.0, %v1721
        %v1723 = vpop.f32.mrf.mxu0
        %v1724 = vadd.f32 0.0, %v1723
        %1725 = vmatmul.bf16.gmra.mxu0 %v1139
        %v1726 = vpop.f32.mrf.mxu0
        %v1727 = vadd.f32 0.0, %v1726
        %v1728 = vpop.f32.mrf.mxu0
        %v1729 = vadd.f32 0.0, %v1728
        %1730 = vmatmul.bf16.gmra.mxu0 %v1140
        %v1731 = vpop.f32.mrf.mxu0
        %v1732 = vadd.f32 0.0, %v1731
        %v1733 = vpop.f32.mrf.mxu0
        %v1734 = vadd.f32 0.0, %v1733
        %1735 = vmatmul.bf16.gmra.mxu0 %v1141
        %v1736 = vpop.f32.mrf.mxu0
        %v1737 = vadd.f32 0.0, %v1736
        %v1738 = vpop.f32.mrf.mxu0
        %v1739 = vadd.f32 0.0, %v1738
        %1740 = vmatmul.bf16.gmra.mxu0 %v1142
        %v1741 = vpop.f32.mrf.mxu0
        %v1742 = vadd.f32 0.0, %v1741
        %v1743 = vpop.f32.mrf.mxu0
        %v1744 = vadd.f32 0.0, %v1743
        %1745 = vmatmul.bf16.gmra.mxu0 %v1143
        %v1746 = vpop.f32.mrf.mxu0
        %v1747 = vadd.f32 0.0, %v1746
        %v1748 = vpop.f32.mrf.mxu0
        %v1749 = vadd.f32 0.0, %v1748
        %1750 = vmatmul.bf16.gmra.mxu0 %v1144
        %v1751 = vpop.f32.mrf.mxu0
        %v1752 = vadd.f32 0.0, %v1751
        %v1753 = vpop.f32.mrf.mxu0
        %v1754 = vadd.f32 0.0, %v1753
        %1755 = vmatmul.bf16.gmra.mxu0 %v1145
        %v1756 = vpop.f32.mrf.mxu0
        %v1757 = vadd.f32 0.0, %v1756
        %v1758 = vpop.f32.mrf.mxu0
        %v1759 = vadd.f32 0.0, %v1758
        %1760 = vmatmul.bf16.gmra.mxu0 %v1146
        %v1761 = vpop.f32.mrf.mxu0
        %v1762 = vadd.f32 0.0, %v1761
        %v1763 = vpop.f32.mrf.mxu0
        %v1764 = vadd.f32 0.0, %v1763
        %1765 = vdwg.mxu0
        %1766 = vmatpush.bf16.msra.mxu0 %v1644
        %1767 = vmatpush.bf16.msra.mxu0 %v1643
        %1768 = vmatpush.bf16.msra.mxu0 %v1642
        %1769 = vmatpush.bf16.msra.mxu0 %v1641
        %1770 = vmatpush.bf16.msra.mxu0 %v1640
        %1771 = vmatpush.bf16.msra.mxu0 %v1639
        %1772 = vmatpush.bf16.msra.mxu0 %v1638
        %1773 = vmatpush.bf16.msra.mxu0 %v1637
        %1774 = vmatmul.bf16.gmra.mxu0 %v1223
        %v1775 = vpop.f32.mrf.mxu0
        %v1776 = vadd.f32 %v1687, %v1775
        %v1777 = vpop.f32.mrf.mxu0
        %v1778 = vadd.f32 %v1689, %v1777
        %1779 = vmatmul.bf16.gmra.mxu0 %v1235
        %v1780 = vpop.f32.mrf.mxu0
        %v1781 = vadd.f32 %v1692, %v1780
        %v1782 = vpop.f32.mrf.mxu0
        %v1783 = vadd.f32 %v1694, %v1782
        %1784 = vmatmul.bf16.gmra.mxu0 %v1247
        %v1785 = vpop.f32.mrf.mxu0
        %v1786 = vadd.f32 %v1697, %v1785
        %v1787 = vpop.f32.mrf.mxu0
        %v1788 = vadd.f32 %v1699, %v1787
        %1789 = vmatmul.bf16.gmra.mxu0 %v1259
        %v1790 = vpop.f32.mrf.mxu0
        %v1791 = vadd.f32 %v1702, %v1790
        %v1792 = vpop.f32.mrf.mxu0
        %v1793 = vadd.f32 %v1704, %v1792
        %1794 = vmatmul.bf16.gmra.mxu0 %v1271
        %v1795 = vpop.f32.mrf.mxu0
        %v1796 = vadd.f32 %v1707, %v1795
        %v1797 = vpop.f32.mrf.mxu0
        %v1798 = vadd.f32 %v1709, %v1797
        %1799 = vmatmul.bf16.gmra.mxu0 %v1283
        %v1800 = vpop.f32.mrf.mxu0
        %v1801 = vadd.f32 %v1712, %v1800
        %v1802 = vpop.f32.mrf.mxu0
        %v1803 = vadd.f32 %v1714, %v1802
        %1804 = vmatmul.bf16.gmra.mxu0 %v1295
        %v1805 = vpop.f32.mrf.mxu0
        %v1806 = vadd.f32 %v1717, %v1805
        %v1807 = vpop.f32.mrf.mxu0
        %v1808 = vadd.f32 %v1719, %v1807
        %1809 = vmatmul.bf16.gmra.mxu0 %v1307
        %v1810 = vpop.f32.mrf.mxu0
        %v1811 = vadd.f32 %v1722, %v1810
        %v1812 = vpop.f32.mrf.mxu0
        %v1813 = vadd.f32 %v1724, %v1812
        %1814 = vmatmul.bf16.gmra.mxu0 %v1319
        %v1815 = vpop.f32.mrf.mxu0
        %v1816 = vadd.f32 %v1727, %v1815
        %v1817 = vpop.f32.mrf.mxu0
        %v1818 = vadd.f32 %v1729, %v1817
        %1819 = vmatmul.bf16.gmra.mxu0 %v1331
        %v1820 = vpop.f32.mrf.mxu0
        %v1821 = vadd.f32 %v1732, %v1820
        %v1822 = vpop.f32.mrf.mxu0
        %v1823 = vadd.f32 %v1734, %v1822
        %1824 = vmatmul.bf16.gmra.mxu0 %v1343
        %v1825 = vpop.f32.mrf.mxu0
        %v1826 = vadd.f32 %v1737, %v1825
        %v1827 = vpop.f32.mrf.mxu0
        %v1828 = vadd.f32 %v1739, %v1827
        %1829 = vmatmul.bf16.gmra.mxu0 %v1355
        %v1830 = vpop.f32.mrf.mxu0
        %v1831 = vadd.f32 %v1742, %v1830
        %v1832 = vpop.f32.mrf.mxu0
        %v1833 = vadd.f32 %v1744, %v1832
        %1834 = vmatmul.bf16.gmra.mxu0 %v1367
        %v1835 = vpop.f32.mrf.mxu0
        %v1836 = vadd.f32 %v1747, %v1835
        %v1837 = vpop.f32.mrf.mxu0
        %v1838 = vadd.f32 %v1749, %v1837
        %1839 = vmatmul.bf16.gmra.mxu0 %v1379
        %v1840 = vpop.f32.mrf.mxu0
        %v1841 = vadd.f32 %v1752, %v1840
        %v1842 = vpop.f32.mrf.mxu0
        %v1843 = vadd.f32 %v1754, %v1842
        %1844 = vmatmul.bf16.gmra.mxu0 %v1391
        %v1845 = vpop.f32.mrf.mxu0
        %v1846 = vadd.f32 %v1757, %v1845
        %v1847 = vpop.f32.mrf.mxu0
        %v1848 = vadd.f32 %v1759, %v1847
        %1849 = vmatmul.bf16.gmra.mxu0 %v1403
        %v1850 = vpop.f32.mrf.mxu0
        %v1851 = vadd.f32 %v1762, %v1850
        %v1852 = vpop.f32.mrf.mxu0
        %v1853 = vadd.f32 %v1764, %v1852
        %1854 = vdwg.mxu0
        %1855 = vmatpush.bf16.msra.mxu0 %v1652
        %1856 = vmatpush.bf16.msra.mxu0 %v1651
        %1857 = vmatpush.bf16.msra.mxu0 %v1650
        %1858 = vmatpush.bf16.msra.mxu0 %v1649
        %1859 = vmatpush.bf16.msra.mxu0 %v1648
        %1860 = vmatpush.bf16.msra.mxu0 %v1647
        %1861 = vmatpush.bf16.msra.mxu0 %v1646
        %1862 = vmatpush.bf16.msra.mxu0 %v1645
        %1863 = vmatmul.bf16.gmra.mxu0 %v1423
        %v1864 = vpop.f32.mrf.mxu0
        %v1865 = vadd.f32 %v1776, %v1864
        %v1866 = vpop.f32.mrf.mxu0
        %v1867 = vadd.f32 %v1778, %v1866
        %1868 = vmatmul.bf16.gmra.mxu0 %v1426
        %v1869 = vpop.f32.mrf.mxu0
        %v1870 = vadd.f32 %v1781, %v1869
        %v1871 = vpop.f32.mrf.mxu0
        %v1872 = vadd.f32 %v1783, %v1871
        %1873 = vmatmul.bf16.gmra.mxu0 %v1429
        %v1874 = vpop.f32.mrf.mxu0
        %v1875 = vadd.f32 %v1786, %v1874
        %v1876 = vpop.f32.mrf.mxu0
        %v1877 = vadd.f32 %v1788, %v1876
        %1878 = vmatmul.bf16.gmra.mxu0 %v1432
        %v1879 = vpop.f32.mrf.mxu0
        %v1880 = vadd.f32 %v1791, %v1879
        %v1881 = vpop.f32.mrf.mxu0
        %v1882 = vadd.f32 %v1793, %v1881
        %1883 = vmatmul.bf16.gmra.mxu0 %v1435
        %v1884 = vpop.f32.mrf.mxu0
        %v1885 = vadd.f32 %v1796, %v1884
        %v1886 = vpop.f32.mrf.mxu0
        %v1887 = vadd.f32 %v1798, %v1886
        %1888 = vmatmul.bf16.gmra.mxu0 %v1438
        %v1889 = vpop.f32.mrf.mxu0
        %v1890 = vadd.f32 %v1801, %v1889
        %v1891 = vpop.f32.mrf.mxu0
        %v1892 = vadd.f32 %v1803, %v1891
        %1893 = vmatmul.bf16.gmra.mxu0 %v1441
        %v1894 = vpop.f32.mrf.mxu0
        %v1895 = vadd.f32 %v1806, %v1894
        %v1896 = vpop.f32.mrf.mxu0
        %v1897 = vadd.f32 %v1808, %v1896
        %1898 = vmatmul.bf16.gmra.mxu0 %v1444
        %v1899 = vpop.f32.mrf.mxu0
        %v1900 = vadd.f32 %v1811, %v1899
        %v1901 = vpop.f32.mrf.mxu0
        %v1902 = vadd.f32 %v1813, %v1901
        %1903 = vmatmul.bf16.gmra.mxu0 %v1447
        %v1904 = vpop.f32.mrf.mxu0
        %v1905 = vadd.f32 %v1816, %v1904
        %v1906 = vpop.f32.mrf.mxu0
        %v1907 = vadd.f32 %v1818, %v1906
        %1908 = vmatmul.bf16.gmra.mxu0 %v1450
        %v1909 = vpop.f32.mrf.mxu0
        %v1910 = vadd.f32 %v1821, %v1909
        %v1911 = vpop.f32.mrf.mxu0
        %v1912 = vadd.f32 %v1823, %v1911
        %1913 = vmatmul.bf16.gmra.mxu0 %v1453
        %v1914 = vpop.f32.mrf.mxu0
        %v1915 = vadd.f32 %v1826, %v1914
        %v1916 = vpop.f32.mrf.mxu0
        %v1917 = vadd.f32 %v1828, %v1916
        %1918 = vmatmul.bf16.gmra.mxu0 %v1456
        %v1919 = vpop.f32.mrf.mxu0
        %v1920 = vadd.f32 %v1831, %v1919
        %v1921 = vpop.f32.mrf.mxu0
        %v1922 = vadd.f32 %v1833, %v1921
        %1923 = vmatmul.bf16.gmra.mxu0 %v1459
        %v1924 = vpop.f32.mrf.mxu0
        %v1925 = vadd.f32 %v1836, %v1924
        %v1926 = vpop.f32.mrf.mxu0
        %v1927 = vadd.f32 %v1838, %v1926
        %1928 = vmatmul.bf16.gmra.mxu0 %v1462
        %v1929 = vpop.f32.mrf.mxu0
        %v1930 = vadd.f32 %v1841, %v1929
        %v1931 = vpop.f32.mrf.mxu0
        %v1932 = vadd.f32 %v1843, %v1931
        %1933 = vmatmul.bf16.gmra.mxu0 %v1465
        %v1934 = vpop.f32.mrf.mxu0
        %v1935 = vadd.f32 %v1846, %v1934
        %v1936 = vpop.f32.mrf.mxu0
        %v1937 = vadd.f32 %v1848, %v1936
        %1938 = vmatmul.bf16.gmra.mxu0 %v1468
        %v1939 = vpop.f32.mrf.mxu0
        %v1940 = vadd.f32 %v1851, %v1939
        %v1941 = vpop.f32.mrf.mxu0
        %v1942 = vadd.f32 %v1853, %v1941
        %1943 = vdwg.mxu0
        %v1944 = vld [vmem:[#allocation4] sm:$0xff]
        %v1945 = vld [vmem:[#allocation4 + $0x8] sm:$0xff]
        %v1946 = vld [vmem:[#allocation4 + $0x10] sm:$0xff]
        %v1947 = vld [vmem:[#allocation4 + $0x18] sm:$0xff]
        %v1948 = vld [vmem:[#allocation4 + $0x20] sm:$0xff]
        %v1949 = vld [vmem:[#allocation4 + $0x28] sm:$0xff]
        %v1950 = vld [vmem:[#allocation4 + $0x30] sm:$0xff]
        %v1951 = vld [vmem:[#allocation4 + $0x38] sm:$0xff]
        %v1952 = vld [vmem:[#allocation4 + $0x40] sm:$0xff]
        %v1953 = vld [vmem:[#allocation4 + $0x48] sm:$0xff]
        %v1954 = vld [vmem:[#allocation4 + $0x50] sm:$0xff]
        %v1955 = vld [vmem:[#allocation4 + $0x58] sm:$0xff]
        %v1956 = vld [vmem:[#allocation4 + $0x60] sm:$0xff]
        %v1957 = vld [vmem:[#allocation4 + $0x68] sm:$0xff]
        %v1958 = vld [vmem:[#allocation4 + $0x70] sm:$0xff]
        %v1959 = vld [vmem:[#allocation4 + $0x78] sm:$0xff]
        %v1960 = vld [vmem:[#allocation4 + $0x80] sm:$0xff]
        %v1961 = vld [vmem:[#allocation4 + $0x88] sm:$0xff]
        %v1962 = vld [vmem:[#allocation4 + $0x90] sm:$0xff]
        %v1963 = vld [vmem:[#allocation4 + $0x98] sm:$0xff]
        %v1964 = vld [vmem:[#allocation4 + $0xa0] sm:$0xff]
        %v1965 = vld [vmem:[#allocation4 + $0xa8] sm:$0xff]
        %v1966 = vld [vmem:[#allocation4 + $0xb0] sm:$0xff]
        %v1967 = vld [vmem:[#allocation4 + $0xb8] sm:$0xff]
        %v1968 = vld [vmem:[#allocation4 + $0xc0] sm:$0xff]
        %v1969 = vld [vmem:[#allocation4 + $0xc8] sm:$0xff]
        %v1970 = vld [vmem:[#allocation4 + $0xd0] sm:$0xff]
        %v1971 = vld [vmem:[#allocation4 + $0xd8] sm:$0xff]
        %v1972 = vld [vmem:[#allocation4 + $0xe0] sm:$0xff]
        %v1973 = vld [vmem:[#allocation4 + $0xe8] sm:$0xff]
        %v1974 = vld [vmem:[#allocation4 + $0xf0] sm:$0xff]
        %v1975 = vld [vmem:[#allocation4 + $0xf8] sm:$0xff]
        %v1976 = vadd.f32 %v1944, %v1865
        %v1977 = vadd.f32 %v1945, %v1867
        %v1978 = vadd.f32 %v1946, %v1870
        %v1979 = vadd.f32 %v1947, %v1872
        %v1980 = vadd.f32 %v1948, %v1875
        %v1981 = vadd.f32 %v1949, %v1877
        %v1982 = vadd.f32 %v1950, %v1880
        %v1983 = vadd.f32 %v1951, %v1882
        %v1984 = vadd.f32 %v1952, %v1885
        %v1985 = vadd.f32 %v1953, %v1887
        %v1986 = vadd.f32 %v1954, %v1890
        %v1987 = vadd.f32 %v1955, %v1892
        %v1988 = vadd.f32 %v1956, %v1895
        %v1989 = vadd.f32 %v1957, %v1897
        %v1990 = vadd.f32 %v1958, %v1900
        %v1991 = vadd.f32 %v1959, %v1902
        %v1992 = vadd.f32 %v1960, %v1905
        %v1993 = vadd.f32 %v1961, %v1907
        %v1994 = vadd.f32 %v1962, %v1910
        %v1995 = vadd.f32 %v1963, %v1912
        %v1996 = vadd.f32 %v1964, %v1915
        %v1997 = vadd.f32 %v1965, %v1917
        %v1998 = vadd.f32 %v1966, %v1920
        %v1999 = vadd.f32 %v1967, %v1922
        %v2000 = vadd.f32 %v1968, %v1925
        %v2001 = vadd.f32 %v1969, %v1927
        %v2002 = vadd.f32 %v1970, %v1930
        %v2003 = vadd.f32 %v1971, %v1932
        %v2004 = vadd.f32 %v1972, %v1935
        %v2005 = vadd.f32 %v1973, %v1937
        %v2006 = vadd.f32 %v1974, %v1940
        %v2007 = vadd.f32 %v1975, %v1942
        %2008 = vst [vmem:[#allocation4] sm:$0xff] %v1976
        %2009 = vst [vmem:[#allocation4 + $0x8] sm:$0xff] %v1977
        %2010 = vst [vmem:[#allocation4 + $0x10] sm:$0xff] %v1978
        %2011 = vst [vmem:[#allocation4 + $0x18] sm:$0xff] %v1979
        %2012 = vst [vmem:[#allocation4 + $0x20] sm:$0xff] %v1980
        %2013 = vst [vmem:[#allocation4 + $0x28] sm:$0xff] %v1981
        %2014 = vst [vmem:[#allocation4 + $0x30] sm:$0xff] %v1982
        %2015 = vst [vmem:[#allocation4 + $0x38] sm:$0xff] %v1983
        %2016 = vst [vmem:[#allocation4 + $0x40] sm:$0xff] %v1984
        %2017 = vst [vmem:[#allocation4 + $0x48] sm:$0xff] %v1985
        %2018 = vst [vmem:[#allocation4 + $0x50] sm:$0xff] %v1986
        %2019 = vst [vmem:[#allocation4 + $0x58] sm:$0xff] %v1987
        %2020 = vst [vmem:[#allocation4 + $0x60] sm:$0xff] %v1988
        %2021 = vst [vmem:[#allocation4 + $0x68] sm:$0xff] %v1989
        %2022 = vst [vmem:[#allocation4 + $0x70] sm:$0xff] %v1990
        %2023 = vst [vmem:[#allocation4 + $0x78] sm:$0xff] %v1991
        %2024 = vst [vmem:[#allocation4 + $0x80] sm:$0xff] %v1992
        %2025 = vst [vmem:[#allocation4 + $0x88] sm:$0xff] %v1993
        %2026 = vst [vmem:[#allocation4 + $0x90] sm:$0xff] %v1994
        %2027 = vst [vmem:[#allocation4 + $0x98] sm:$0xff] %v1995
        %2028 = vst [vmem:[#allocation4 + $0xa0] sm:$0xff] %v1996
        %2029 = vst [vmem:[#allocation4 + $0xa8] sm:$0xff] %v1997
        %2030 = vst [vmem:[#allocation4 + $0xb0] sm:$0xff] %v1998
        %2031 = vst [vmem:[#allocation4 + $0xb8] sm:$0xff] %v1999
        %2032 = vst [vmem:[#allocation4 + $0xc0] sm:$0xff] %v2000
        %2033 = vst [vmem:[#allocation4 + $0xc8] sm:$0xff] %v2001
        %2034 = vst [vmem:[#allocation4 + $0xd0] sm:$0xff] %v2002
        %2035 = vst [vmem:[#allocation4 + $0xd8] sm:$0xff] %v2003
        %2036 = vst [vmem:[#allocation4 + $0xe0] sm:$0xff] %v2004
        %2037 = vst [vmem:[#allocation4 + $0xe8] sm:$0xff] %v2005
        %2038 = vst [vmem:[#allocation4 + $0xf0] sm:$0xff] %v2006
        %2039 = vst [vmem:[#allocation4 + $0xf8] sm:$0xff] %v2007
        %v2040 = vld [vmem:[%s868] sm:$0xf]
        %v2041 = vld [vmem:[%s868 + $0x4] sm:$0xf]
        %v2042 = vld [vmem:[%s868 + $0x8] sm:$0x1]
        %v2043 = vld [vmem:[%s868 + $0xc] sm:$0xf]
        %v2044 = vld [vmem:[%s868 + $0x10] sm:$0xf]
        %v2045 = vld [vmem:[%s868 + $0x14] sm:$0x1]
        %v2046 = vld [vmem:[%s868 + $0x18] sm:$0xf]
        %v2047 = vld [vmem:[%s868 + $0x1c] sm:$0xf]
        %v2048 = vld [vmem:[%s868 + $0x20] sm:$0x1]
        %v2049 = vld [vmem:[%s868 + $0x24] sm:$0xf]
        %v2050 = vld [vmem:[%s868 + $0x28] sm:$0xf]
        %v2051 = vld [vmem:[%s868 + $0x2c] sm:$0x1]
        %v2052 = vld [vmem:[%s868 + $0x30] sm:$0xf]
        %v2053 = vld [vmem:[%s868 + $0x34] sm:$0xf]
        %v2054 = vld [vmem:[%s868 + $0x38] sm:$0x1]
        %v2055 = vld [vmem:[%s868 + $0x3c] sm:$0xf]
        %v2056 = vld [vmem:[%s868 + $0x40] sm:$0xf]
        %v2057 = vld [vmem:[%s868 + $0x44] sm:$0x1]
        %v2058 = vld [vmem:[%s868 + $0x48] sm:$0xf]
        %v2059 = vld [vmem:[%s868 + $0x4c] sm:$0xf]
        %v2060 = vld [vmem:[%s868 + $0x50] sm:$0x1]
        %v2061 = vld [vmem:[%s868 + $0x54] sm:$0xf]
        %v2062 = vld [vmem:[%s868 + $0x58] sm:$0xf]
        %v2063 = vld [vmem:[%s868 + $0x5c] sm:$0x1]
        %v2064 = vld [vmem:[%s868 + $0x60] sm:$0xf]
        %v2065 = vld [vmem:[%s868 + $0x64] sm:$0xf]
        %v2066 = vld [vmem:[%s868 + $0x68] sm:$0x1]
        %v2067 = vld [vmem:[%s868 + $0x6c] sm:$0xf]
        %v2068 = vld [vmem:[%s868 + $0x70] sm:$0xf]
        %v2069 = vld [vmem:[%s868 + $0x74] sm:$0x1]
        %v2070 = vld [vmem:[%s868 + $0x78] sm:$0xf]
        %v2071 = vld [vmem:[%s868 + $0x7c] sm:$0xf]
        %v2072 = vld [vmem:[%s868 + $0x80] sm:$0x1]
        %v2073 = vld [vmem:[%s868 + $0x84] sm:$0xf]
        %v2074 = vld [vmem:[%s868 + $0x88] sm:$0xf]
        %v2075 = vld [vmem:[%s868 + $0x8c] sm:$0x1]
        %v2076 = vld [vmem:[%s868 + $0x90] sm:$0xf]
        %v2077 = vld [vmem:[%s868 + $0x94] sm:$0xf]
        %v2078 = vld [vmem:[%s868 + $0x98] sm:$0x1]
        %v2079 = vld [vmem:[%s868 + $0x9c] sm:$0xf]
        %v2080 = vld [vmem:[%s868 + $0xa0] sm:$0xf]
        %v2081 = vld [vmem:[%s868 + $0xa4] sm:$0x1]
        %v2082 = vld [vmem:[%s868 + $0xa8] sm:$0xf]
        %v2083 = vld [vmem:[%s868 + $0xac] sm:$0xf]
        %v2084 = vld [vmem:[%s868 + $0xb0] sm:$0x1]
        %v2085 = vld [vmem:[%s868 + $0xb4] sm:$0xf]
        %v2086 = vld [vmem:[%s868 + $0xb8] sm:$0xf]
        %v2087 = vld [vmem:[%s868 + $0xbc] sm:$0x1]
        %v2120 = vunpack.c.l.b16 %v2040
        %v2121 = vunpack.c.l.b16 %v2041
        %v2122 = vunpack.c.l.b16 %v2043
        %v2123 = vunpack.c.l.b16 %v2044
        %v2124 = vunpack.c.l.b16 %v2046
        %v2125 = vunpack.c.l.b16 %v2047
        %v2126 = vunpack.c.l.b16 %v2049
        %v2127 = vunpack.c.l.b16 %v2050
        %v2128 = vunpack.c.l.b16 %v2052
        %v2129 = vunpack.c.l.b16 %v2053
        %v2130 = vunpack.c.l.b16 %v2055
        %v2131 = vunpack.c.l.b16 %v2056
        %v2132 = vunpack.c.l.b16 %v2058
        %v2133 = vunpack.c.l.b16 %v2059
        %v2134 = vunpack.c.l.b16 %v2061
        %v2135 = vunpack.c.l.b16 %v2062
        %v2136 = vunpack.c.l.b16 %v2064
        %v2137 = vunpack.c.l.b16 %v2065
        %v2138 = vunpack.c.l.b16 %v2067
        %v2139 = vunpack.c.l.b16 %v2068
        %v2140 = vunpack.c.l.b16 %v2070
        %v2141 = vunpack.c.l.b16 %v2071
        %v2142 = vunpack.c.l.b16 %v2073
        %v2143 = vunpack.c.l.b16 %v2074
        %v2144 = vunpack.c.l.b16 %v2076
        %v2145 = vunpack.c.l.b16 %v2077
        %v2146 = vunpack.c.l.b16 %v2079
        %v2147 = vunpack.c.l.b16 %v2080
        %v2148 = vunpack.c.l.b16 %v2082
        %v2149 = vunpack.c.l.b16 %v2083
        %v2150 = vunpack.c.l.b16 %v2085
        %v2151 = vunpack.c.l.b16 %v2086
        %v2152 = vpack.c.b16 %v2121, %v2120
        %v2153 = vpack.c.b16 %v2123, %v2122
        %v2154 = vpack.c.b16 %v2125, %v2124
        %v2155 = vpack.c.b16 %v2127, %v2126
        %v2156 = vpack.c.b16 %v2129, %v2128
        %v2157 = vpack.c.b16 %v2131, %v2130
        %v2158 = vpack.c.b16 %v2133, %v2132
        %v2159 = vpack.c.b16 %v2135, %v2134
        %v2160 = vpack.c.b16 %v2137, %v2136
        %v2161 = vpack.c.b16 %v2139, %v2138
        %v2162 = vpack.c.b16 %v2141, %v2140
        %v2163 = vpack.c.b16 %v2143, %v2142
        %v2164 = vpack.c.b16 %v2145, %v2144
        %v2165 = vpack.c.b16 %v2147, %v2146
        %v2166 = vpack.c.b16 %v2149, %v2148
        %v2167 = vpack.c.b16 %v2151, %v2150
        %v2200 = vunpack.c.l.b16 %v2042
        %v2201 = vunpack.c.l.b16 %v2045
        %v2202 = vunpack.c.l.b16 %v2048
        %v2203 = vunpack.c.l.b16 %v2051
        %v2204 = vunpack.c.l.b16 %v2054
        %v2205 = vunpack.c.l.b16 %v2057
        %v2206 = vunpack.c.l.b16 %v2060
        %v2207 = vunpack.c.l.b16 %v2063
        %v2208 = vunpack.c.l.b16 %v2066
        %v2209 = vunpack.c.l.b16 %v2069
        %v2210 = vunpack.c.l.b16 %v2072
        %v2211 = vunpack.c.l.b16 %v2075
        %v2212 = vunpack.c.l.b16 %v2078
        %v2213 = vunpack.c.l.b16 %v2081
        %v2214 = vunpack.c.l.b16 %v2084
        %v2215 = vunpack.c.l.b16 %v2087
        %v2216 = vpack.c.b16 %v2200, %v2200
        %v2217 = vpack.c.b16 %v2201, %v2201
        %v2218 = vpack.c.b16 %v2202, %v2202
        %v2219 = vpack.c.b16 %v2203, %v2203
        %v2220 = vpack.c.b16 %v2204, %v2204
        %v2221 = vpack.c.b16 %v2205, %v2205
        %v2222 = vpack.c.b16 %v2206, %v2206
        %v2223 = vpack.c.b16 %v2207, %v2207
        %v2224 = vpack.c.b16 %v2208, %v2208
        %v2225 = vpack.c.b16 %v2209, %v2209
        %v2226 = vpack.c.b16 %v2210, %v2210
        %v2227 = vpack.c.b16 %v2211, %v2211
        %v2228 = vpack.c.b16 %v2212, %v2212
        %v2229 = vpack.c.b16 %v2213, %v2213
        %v2230 = vpack.c.b16 %v2214, %v2214
        %v2231 = vpack.c.b16 %v2215, %v2215
        %v2233 = vshrl.u32 %v2152, 16
        %v2235 = vshll.u32 %v2152, 16
        %v2237 = vrot.slane %v2235, 1
        %v2238 = vor.u32 %v2233, %v2237
        %v2240 = vshll.u32 %v2216, 16
        %v2242 = vrot.slane %v2240, 1
        %v2243 = vsel %vm1211, %v2238, %v2242
        %v2245 = vshrl.u32 %v2153, 16
        %v2247 = vshll.u32 %v2153, 16
        %v2249 = vrot.slane %v2247, 1
        %v2250 = vor.u32 %v2245, %v2249
        %v2252 = vshll.u32 %v2217, 16
        %v2254 = vrot.slane %v2252, 1
        %v2255 = vsel %vm1211, %v2250, %v2254
        %v2257 = vshrl.u32 %v2154, 16
        %v2259 = vshll.u32 %v2154, 16
        %v2261 = vrot.slane %v2259, 1
        %v2262 = vor.u32 %v2257, %v2261
        %v2264 = vshll.u32 %v2218, 16
        %v2266 = vrot.slane %v2264, 1
        %v2267 = vsel %vm1211, %v2262, %v2266
        %v2269 = vshrl.u32 %v2155, 16
        %v2271 = vshll.u32 %v2155, 16
        %v2273 = vrot.slane %v2271, 1
        %v2274 = vor.u32 %v2269, %v2273
        %v2276 = vshll.u32 %v2219, 16
        %v2278 = vrot.slane %v2276, 1
        %v2279 = vsel %vm1211, %v2274, %v2278
        %v2281 = vshrl.u32 %v2156, 16
        %v2283 = vshll.u32 %v2156, 16
        %v2285 = vrot.slane %v2283, 1
        %v2286 = vor.u32 %v2281, %v2285
        %v2288 = vshll.u32 %v2220, 16
        %v2290 = vrot.slane %v2288, 1
        %v2291 = vsel %vm1211, %v2286, %v2290
        %v2293 = vshrl.u32 %v2157, 16
        %v2295 = vshll.u32 %v2157, 16
        %v2297 = vrot.slane %v2295, 1
        %v2298 = vor.u32 %v2293, %v2297
        %v2300 = vshll.u32 %v2221, 16
        %v2302 = vrot.slane %v2300, 1
        %v2303 = vsel %vm1211, %v2298, %v2302
        %v2305 = vshrl.u32 %v2158, 16
        %v2307 = vshll.u32 %v2158, 16
        %v2309 = vrot.slane %v2307, 1
        %v2310 = vor.u32 %v2305, %v2309
        %v2312 = vshll.u32 %v2222, 16
        %v2314 = vrot.slane %v2312, 1
        %v2315 = vsel %vm1211, %v2310, %v2314
        %v2317 = vshrl.u32 %v2159, 16
        %v2319 = vshll.u32 %v2159, 16
        %v2321 = vrot.slane %v2319, 1
        %v2322 = vor.u32 %v2317, %v2321
        %v2324 = vshll.u32 %v2223, 16
        %v2326 = vrot.slane %v2324, 1
        %v2327 = vsel %vm1211, %v2322, %v2326
        %v2329 = vshrl.u32 %v2160, 16
        %v2331 = vshll.u32 %v2160, 16
        %v2333 = vrot.slane %v2331, 1
        %v2334 = vor.u32 %v2329, %v2333
        %v2336 = vshll.u32 %v2224, 16
        %v2338 = vrot.slane %v2336, 1
        %v2339 = vsel %vm1211, %v2334, %v2338
        %v2341 = vshrl.u32 %v2161, 16
        %v2343 = vshll.u32 %v2161, 16
        %v2345 = vrot.slane %v2343, 1
        %v2346 = vor.u32 %v2341, %v2345
        %v2348 = vshll.u32 %v2225, 16
        %v2350 = vrot.slane %v2348, 1
        %v2351 = vsel %vm1211, %v2346, %v2350
        %v2353 = vshrl.u32 %v2162, 16
        %v2355 = vshll.u32 %v2162, 16
        %v2357 = vrot.slane %v2355, 1
        %v2358 = vor.u32 %v2353, %v2357
        %v2360 = vshll.u32 %v2226, 16
        %v2362 = vrot.slane %v2360, 1
        %v2363 = vsel %vm1211, %v2358, %v2362
        %v2365 = vshrl.u32 %v2163, 16
        %v2367 = vshll.u32 %v2163, 16
        %v2369 = vrot.slane %v2367, 1
        %v2370 = vor.u32 %v2365, %v2369
        %v2372 = vshll.u32 %v2227, 16
        %v2374 = vrot.slane %v2372, 1
        %v2375 = vsel %vm1211, %v2370, %v2374
        %v2377 = vshrl.u32 %v2164, 16
        %v2379 = vshll.u32 %v2164, 16
        %v2381 = vrot.slane %v2379, 1
        %v2382 = vor.u32 %v2377, %v2381
        %v2384 = vshll.u32 %v2228, 16
        %v2386 = vrot.slane %v2384, 1
        %v2387 = vsel %vm1211, %v2382, %v2386
        %v2389 = vshrl.u32 %v2165, 16
        %v2391 = vshll.u32 %v2165, 16
        %v2393 = vrot.slane %v2391, 1
        %v2394 = vor.u32 %v2389, %v2393
        %v2396 = vshll.u32 %v2229, 16
        %v2398 = vrot.slane %v2396, 1
        %v2399 = vsel %vm1211, %v2394, %v2398
        %v2401 = vshrl.u32 %v2166, 16
        %v2403 = vshll.u32 %v2166, 16
        %v2405 = vrot.slane %v2403, 1
        %v2406 = vor.u32 %v2401, %v2405
        %v2408 = vshll.u32 %v2230, 16
        %v2410 = vrot.slane %v2408, 1
        %v2411 = vsel %vm1211, %v2406, %v2410
        %v2413 = vshrl.u32 %v2167, 16
        %v2415 = vshll.u32 %v2167, 16
        %v2417 = vrot.slane %v2415, 1
        %v2418 = vor.u32 %v2413, %v2417
        %v2420 = vshll.u32 %v2231, 16
        %v2422 = vrot.slane %v2420, 1
        %v2423 = vsel %vm1211, %v2418, %v2422
        %v2440 = vrot.slane %v2152, 1
        %v2441 = vrot.slane %v2216, 1
        %v2442 = vsel %vm1420, %v2440, %v2441
        %v2443 = vrot.slane %v2153, 1
        %v2444 = vrot.slane %v2217, 1
        %v2445 = vsel %vm1420, %v2443, %v2444
        %v2446 = vrot.slane %v2154, 1
        %v2447 = vrot.slane %v2218, 1
        %v2448 = vsel %vm1420, %v2446, %v2447
        %v2449 = vrot.slane %v2155, 1
        %v2450 = vrot.slane %v2219, 1
        %v2451 = vsel %vm1420, %v2449, %v2450
        %v2452 = vrot.slane %v2156, 1
        %v2453 = vrot.slane %v2220, 1
        %v2454 = vsel %vm1420, %v2452, %v2453
        %v2455 = vrot.slane %v2157, 1
        %v2456 = vrot.slane %v2221, 1
        %v2457 = vsel %vm1420, %v2455, %v2456
        %v2458 = vrot.slane %v2158, 1
        %v2459 = vrot.slane %v2222, 1
        %v2460 = vsel %vm1420, %v2458, %v2459
        %v2461 = vrot.slane %v2159, 1
        %v2462 = vrot.slane %v2223, 1
        %v2463 = vsel %vm1420, %v2461, %v2462
        %v2464 = vrot.slane %v2160, 1
        %v2465 = vrot.slane %v2224, 1
        %v2466 = vsel %vm1420, %v2464, %v2465
        %v2467 = vrot.slane %v2161, 1
        %v2468 = vrot.slane %v2225, 1
        %v2469 = vsel %vm1420, %v2467, %v2468
        %v2470 = vrot.slane %v2162, 1
        %v2471 = vrot.slane %v2226, 1
        %v2472 = vsel %vm1420, %v2470, %v2471
        %v2473 = vrot.slane %v2163, 1
        %v2474 = vrot.slane %v2227, 1
        %v2475 = vsel %vm1420, %v2473, %v2474
        %v2476 = vrot.slane %v2164, 1
        %v2477 = vrot.slane %v2228, 1
        %v2478 = vsel %vm1420, %v2476, %v2477
        %v2479 = vrot.slane %v2165, 1
        %v2480 = vrot.slane %v2229, 1
        %v2481 = vsel %vm1420, %v2479, %v2480
        %v2482 = vrot.slane %v2166, 1
        %v2483 = vrot.slane %v2230, 1
        %v2484 = vsel %vm1420, %v2482, %v2483
        %v2485 = vrot.slane %v2167, 1
        %v2486 = vrot.slane %v2231, 1
        %v2487 = vsel %vm1420, %v2485, %v2486
        %s2504 = scalar_lea.vmem [#allocation8], 192
        %v2505 = vld [vmem:[%s2504] sm:$0xf]
        %v2506 = vld [vmem:[%s2504 + $0x4] sm:$0xf]
        %v2507 = vld [vmem:[%s2504 + $0x8] sm:$0xf]
        %v2508 = vld [vmem:[%s2504 + $0xc] sm:$0xf]
        %v2509 = vld [vmem:[%s2504 + $0x10] sm:$0xf]
        %v2510 = vld [vmem:[%s2504 + $0x14] sm:$0xf]
        %v2511 = vld [vmem:[%s2504 + $0x18] sm:$0xf]
        %v2512 = vld [vmem:[%s2504 + $0x1c] sm:$0xf]
        %v2513 = vld [vmem:[%s2504 + $0x20] sm:$0xf]
        %v2514 = vld [vmem:[%s2504 + $0x24] sm:$0xf]
        %v2515 = vld [vmem:[%s2504 + $0x28] sm:$0xf]
        %v2516 = vld [vmem:[%s2504 + $0x2c] sm:$0xf]
        %v2517 = vld [vmem:[%s2504 + $0x30] sm:$0xf]
        %v2518 = vld [vmem:[%s2504 + $0x34] sm:$0xf]
        %v2519 = vld [vmem:[%s2504 + $0x38] sm:$0xf]
        %v2520 = vld [vmem:[%s2504 + $0x3c] sm:$0xf]
        %v2521 = vld [vmem:[%s2504 + $0x40] sm:$0xf]
        %v2522 = vld [vmem:[%s2504 + $0x44] sm:$0xf]
        %v2523 = vld [vmem:[%s2504 + $0x48] sm:$0xf]
        %v2524 = vld [vmem:[%s2504 + $0x4c] sm:$0xf]
        %v2525 = vld [vmem:[%s2504 + $0x50] sm:$0xf]
        %v2526 = vld [vmem:[%s2504 + $0x54] sm:$0xf]
        %v2527 = vld [vmem:[%s2504 + $0x58] sm:$0xf]
        %v2528 = vld [vmem:[%s2504 + $0x5c] sm:$0xf]
        %v2529 = vld [vmem:[%s2504 + $0x60] sm:$0xf]
        %v2530 = vld [vmem:[%s2504 + $0x64] sm:$0xf]
        %v2531 = vld [vmem:[%s2504 + $0x68] sm:$0xf]
        %v2532 = vld [vmem:[%s2504 + $0x6c] sm:$0xf]
        %v2533 = vld [vmem:[%s2504 + $0x70] sm:$0xf]
        %v2534 = vld [vmem:[%s2504 + $0x74] sm:$0xf]
        %v2535 = vld [vmem:[%s2504 + $0x78] sm:$0xf]
        %v2536 = vld [vmem:[%s2504 + $0x7c] sm:$0xf]
        %v2537 = vld [vmem:[%s2504 + $0x80] sm:$0xf]
        %v2538 = vld [vmem:[%s2504 + $0x84] sm:$0xf]
        %v2539 = vld [vmem:[%s2504 + $0x88] sm:$0xf]
        %v2540 = vld [vmem:[%s2504 + $0x8c] sm:$0xf]
        %v2541 = vld [vmem:[%s2504 + $0x90] sm:$0xf]
        %v2542 = vld [vmem:[%s2504 + $0x94] sm:$0xf]
        %v2543 = vld [vmem:[%s2504 + $0x98] sm:$0xf]
        %v2544 = vld [vmem:[%s2504 + $0x9c] sm:$0xf]
        %v2545 = vld [vmem:[%s2504 + $0xa0] sm:$0xf]
        %v2546 = vld [vmem:[%s2504 + $0xa4] sm:$0xf]
        %v2547 = vld [vmem:[%s2504 + $0xa8] sm:$0xf]
        %v2548 = vld [vmem:[%s2504 + $0xac] sm:$0xf]
        %v2549 = vld [vmem:[%s2504 + $0xb0] sm:$0xf]
        %v2550 = vld [vmem:[%s2504 + $0xb4] sm:$0xf]
        %v2551 = vld [vmem:[%s2504 + $0xb8] sm:$0xf]
        %v2552 = vld [vmem:[%s2504 + $0xbc] sm:$0xf]
        %v2601 = vunpack.c.l.b16 %v2505
        %v2602 = vunpack.c.l.b16 %v2506
        %v2603 = vunpack.c.l.b16 %v2507
        %v2604 = vunpack.c.l.b16 %v2508
        %v2605 = vunpack.c.l.b16 %v2509
        %v2606 = vunpack.c.l.b16 %v2510
        %v2607 = vunpack.c.l.b16 %v2511
        %v2608 = vunpack.c.l.b16 %v2512
        %v2609 = vunpack.c.l.b16 %v2513
        %v2610 = vunpack.c.l.b16 %v2514
        %v2611 = vunpack.c.l.b16 %v2515
        %v2612 = vunpack.c.l.b16 %v2516
        %v2613 = vunpack.c.l.b16 %v2517
        %v2614 = vunpack.c.l.b16 %v2518
        %v2615 = vunpack.c.l.b16 %v2519
        %v2616 = vunpack.c.l.b16 %v2520
        %v2617 = vunpack.c.l.b16 %v2521
        %v2618 = vunpack.c.l.b16 %v2522
        %v2619 = vunpack.c.l.b16 %v2523
        %v2620 = vunpack.c.l.b16 %v2524
        %v2621 = vunpack.c.l.b16 %v2525
        %v2622 = vunpack.c.l.b16 %v2526
        %v2623 = vunpack.c.l.b16 %v2527
        %v2624 = vunpack.c.l.b16 %v2528
        %v2625 = vunpack.c.l.b16 %v2529
        %v2626 = vunpack.c.l.b16 %v2530
        %v2627 = vunpack.c.l.b16 %v2531
        %v2628 = vunpack.c.l.b16 %v2532
        %v2629 = vunpack.c.l.b16 %v2533
        %v2630 = vunpack.c.l.b16 %v2534
        %v2631 = vunpack.c.l.b16 %v2535
        %v2632 = vunpack.c.l.b16 %v2536
        %v2633 = vunpack.c.l.b16 %v2537
        %v2634 = vunpack.c.l.b16 %v2538
        %v2635 = vunpack.c.l.b16 %v2539
        %v2636 = vunpack.c.l.b16 %v2540
        %v2637 = vunpack.c.l.b16 %v2541
        %v2638 = vunpack.c.l.b16 %v2542
        %v2639 = vunpack.c.l.b16 %v2543
        %v2640 = vunpack.c.l.b16 %v2544
        %v2641 = vunpack.c.l.b16 %v2545
        %v2642 = vunpack.c.l.b16 %v2546
        %v2643 = vunpack.c.l.b16 %v2547
        %v2644 = vunpack.c.l.b16 %v2548
        %v2645 = vunpack.c.l.b16 %v2549
        %v2646 = vunpack.c.l.b16 %v2550
        %v2647 = vunpack.c.l.b16 %v2551
        %v2648 = vunpack.c.l.b16 %v2552
        %v2649 = vpack.c.b16 %v2602, %v2601
        %v2650 = vpack.c.b16 %v2604, %v2603
        %v2651 = vpack.c.b16 %v2606, %v2605
        %v2652 = vpack.c.b16 %v2608, %v2607
        %v2653 = vpack.c.b16 %v2610, %v2609
        %v2654 = vpack.c.b16 %v2612, %v2611
        %v2655 = vpack.c.b16 %v2614, %v2613
        %v2656 = vpack.c.b16 %v2616, %v2615
        %v2657 = vpack.c.b16 %v2618, %v2617
        %v2658 = vpack.c.b16 %v2620, %v2619
        %v2659 = vpack.c.b16 %v2622, %v2621
        %v2660 = vpack.c.b16 %v2624, %v2623
        %v2661 = vpack.c.b16 %v2626, %v2625
        %v2662 = vpack.c.b16 %v2628, %v2627
        %v2663 = vpack.c.b16 %v2630, %v2629
        %v2664 = vpack.c.b16 %v2632, %v2631
        %v2665 = vpack.c.b16 %v2634, %v2633
        %v2666 = vpack.c.b16 %v2636, %v2635
        %v2667 = vpack.c.b16 %v2638, %v2637
        %v2668 = vpack.c.b16 %v2640, %v2639
        %v2669 = vpack.c.b16 %v2642, %v2641
        %v2670 = vpack.c.b16 %v2644, %v2643
        %v2671 = vpack.c.b16 %v2646, %v2645
        %v2672 = vpack.c.b16 %v2648, %v2647
        %2697 = vmatpush.bf16.msra.mxu0 %v2656
        %2698 = vmatpush.bf16.msra.mxu0 %v2655
        %2699 = vmatpush.bf16.msra.mxu0 %v2654
        %2700 = vmatpush.bf16.msra.mxu0 %v2653
        %2701 = vmatpush.bf16.msra.mxu0 %v2652
        %2702 = vmatpush.bf16.msra.mxu0 %v2651
        %2703 = vmatpush.bf16.msra.mxu0 %v2650
        %2704 = vmatpush.bf16.msra.mxu0 %v2649
        %2705 = vmatmul.bf16.gmra.mxu0 %v2152
        %v2706 = vpop.f32.mrf.mxu0
        %v2707 = vadd.f32 0.0, %v2706
        %v2708 = vpop.f32.mrf.mxu0
        %v2709 = vadd.f32 0.0, %v2708
        %2710 = vmatmul.bf16.gmra.mxu0 %v2153
        %v2711 = vpop.f32.mrf.mxu0
        %v2712 = vadd.f32 0.0, %v2711
        %v2713 = vpop.f32.mrf.mxu0
        %v2714 = vadd.f32 0.0, %v2713
        %2715 = vmatmul.bf16.gmra.mxu0 %v2154
        %v2716 = vpop.f32.mrf.mxu0
        %v2717 = vadd.f32 0.0, %v2716
        %v2718 = vpop.f32.mrf.mxu0
        %v2719 = vadd.f32 0.0, %v2718
        %2720 = vmatmul.bf16.gmra.mxu0 %v2155
        %v2721 = vpop.f32.mrf.mxu0
        %v2722 = vadd.f32 0.0, %v2721
        %v2723 = vpop.f32.mrf.mxu0
        %v2724 = vadd.f32 0.0, %v2723
        %2725 = vmatmul.bf16.gmra.mxu0 %v2156
        %v2726 = vpop.f32.mrf.mxu0
        %v2727 = vadd.f32 0.0, %v2726
        %v2728 = vpop.f32.mrf.mxu0
        %v2729 = vadd.f32 0.0, %v2728
        %2730 = vmatmul.bf16.gmra.mxu0 %v2157
        %v2731 = vpop.f32.mrf.mxu0
        %v2732 = vadd.f32 0.0, %v2731
        %v2733 = vpop.f32.mrf.mxu0
        %v2734 = vadd.f32 0.0, %v2733
        %2735 = vmatmul.bf16.gmra.mxu0 %v2158
        %v2736 = vpop.f32.mrf.mxu0
        %v2737 = vadd.f32 0.0, %v2736
        %v2738 = vpop.f32.mrf.mxu0
        %v2739 = vadd.f32 0.0, %v2738
        %2740 = vmatmul.bf16.gmra.mxu0 %v2159
        %v2741 = vpop.f32.mrf.mxu0
        %v2742 = vadd.f32 0.0, %v2741
        %v2743 = vpop.f32.mrf.mxu0
        %v2744 = vadd.f32 0.0, %v2743
        %2745 = vmatmul.bf16.gmra.mxu0 %v2160
        %v2746 = vpop.f32.mrf.mxu0
        %v2747 = vadd.f32 0.0, %v2746
        %v2748 = vpop.f32.mrf.mxu0
        %v2749 = vadd.f32 0.0, %v2748
        %2750 = vmatmul.bf16.gmra.mxu0 %v2161
        %v2751 = vpop.f32.mrf.mxu0
        %v2752 = vadd.f32 0.0, %v2751
        %v2753 = vpop.f32.mrf.mxu0
        %v2754 = vadd.f32 0.0, %v2753
        %2755 = vmatmul.bf16.gmra.mxu0 %v2162
        %v2756 = vpop.f32.mrf.mxu0
        %v2757 = vadd.f32 0.0, %v2756
        %v2758 = vpop.f32.mrf.mxu0
        %v2759 = vadd.f32 0.0, %v2758
        %2760 = vmatmul.bf16.gmra.mxu0 %v2163
        %v2761 = vpop.f32.mrf.mxu0
        %v2762 = vadd.f32 0.0, %v2761
        %v2763 = vpop.f32.mrf.mxu0
        %v2764 = vadd.f32 0.0, %v2763
        %2765 = vmatmul.bf16.gmra.mxu0 %v2164
        %v2766 = vpop.f32.mrf.mxu0
        %v2767 = vadd.f32 0.0, %v2766
        %v2768 = vpop.f32.mrf.mxu0
        %v2769 = vadd.f32 0.0, %v2768
        %2770 = vmatmul.bf16.gmra.mxu0 %v2165
        %v2771 = vpop.f32.mrf.mxu0
        %v2772 = vadd.f32 0.0, %v2771
        %v2773 = vpop.f32.mrf.mxu0
        %v2774 = vadd.f32 0.0, %v2773
        %2775 = vmatmul.bf16.gmra.mxu0 %v2166
        %v2776 = vpop.f32.mrf.mxu0
        %v2777 = vadd.f32 0.0, %v2776
        %v2778 = vpop.f32.mrf.mxu0
        %v2779 = vadd.f32 0.0, %v2778
        %2780 = vmatmul.bf16.gmra.mxu0 %v2167
        %v2781 = vpop.f32.mrf.mxu0
        %v2782 = vadd.f32 0.0, %v2781
        %v2783 = vpop.f32.mrf.mxu0
        %v2784 = vadd.f32 0.0, %v2783
        %2785 = vdwg.mxu0
        %2786 = vmatpush.bf16.msra.mxu0 %v2664
        %2787 = vmatpush.bf16.msra.mxu0 %v2663
        %2788 = vmatpush.bf16.msra.mxu0 %v2662
        %2789 = vmatpush.bf16.msra.mxu0 %v2661
        %2790 = vmatpush.bf16.msra.mxu0 %v2660
        %2791 = vmatpush.bf16.msra.mxu0 %v2659
        %2792 = vmatpush.bf16.msra.mxu0 %v2658
        %2793 = vmatpush.bf16.msra.mxu0 %v2657
        %2794 = vmatmul.bf16.gmra.mxu0 %v2243
        %v2795 = vpop.f32.mrf.mxu0
        %v2796 = vadd.f32 %v2707, %v2795
        %v2797 = vpop.f32.mrf.mxu0
        %v2798 = vadd.f32 %v2709, %v2797
        %2799 = vmatmul.bf16.gmra.mxu0 %v2255
        %v2800 = vpop.f32.mrf.mxu0
        %v2801 = vadd.f32 %v2712, %v2800
        %v2802 = vpop.f32.mrf.mxu0
        %v2803 = vadd.f32 %v2714, %v2802
        %2804 = vmatmul.bf16.gmra.mxu0 %v2267
        %v2805 = vpop.f32.mrf.mxu0
        %v2806 = vadd.f32 %v2717, %v2805
        %v2807 = vpop.f32.mrf.mxu0
        %v2808 = vadd.f32 %v2719, %v2807
        %2809 = vmatmul.bf16.gmra.mxu0 %v2279
        %v2810 = vpop.f32.mrf.mxu0
        %v2811 = vadd.f32 %v2722, %v2810
        %v2812 = vpop.f32.mrf.mxu0
        %v2813 = vadd.f32 %v2724, %v2812
        %2814 = vmatmul.bf16.gmra.mxu0 %v2291
        %v2815 = vpop.f32.mrf.mxu0
        %v2816 = vadd.f32 %v2727, %v2815
        %v2817 = vpop.f32.mrf.mxu0
        %v2818 = vadd.f32 %v2729, %v2817
        %2819 = vmatmul.bf16.gmra.mxu0 %v2303
        %v2820 = vpop.f32.mrf.mxu0
        %v2821 = vadd.f32 %v2732, %v2820
        %v2822 = vpop.f32.mrf.mxu0
        %v2823 = vadd.f32 %v2734, %v2822
        %2824 = vmatmul.bf16.gmra.mxu0 %v2315
        %v2825 = vpop.f32.mrf.mxu0
        %v2826 = vadd.f32 %v2737, %v2825
        %v2827 = vpop.f32.mrf.mxu0
        %v2828 = vadd.f32 %v2739, %v2827
        %2829 = vmatmul.bf16.gmra.mxu0 %v2327
        %v2830 = vpop.f32.mrf.mxu0
        %v2831 = vadd.f32 %v2742, %v2830
        %v2832 = vpop.f32.mrf.mxu0
        %v2833 = vadd.f32 %v2744, %v2832
        %2834 = vmatmul.bf16.gmra.mxu0 %v2339
        %v2835 = vpop.f32.mrf.mxu0
        %v2836 = vadd.f32 %v2747, %v2835
        %v2837 = vpop.f32.mrf.mxu0
        %v2838 = vadd.f32 %v2749, %v2837
        %2839 = vmatmul.bf16.gmra.mxu0 %v2351
        %v2840 = vpop.f32.mrf.mxu0
        %v2841 = vadd.f32 %v2752, %v2840
        %v2842 = vpop.f32.mrf.mxu0
        %v2843 = vadd.f32 %v2754, %v2842
        %2844 = vmatmul.bf16.gmra.mxu0 %v2363
        %v2845 = vpop.f32.mrf.mxu0
        %v2846 = vadd.f32 %v2757, %v2845
        %v2847 = vpop.f32.mrf.mxu0
        %v2848 = vadd.f32 %v2759, %v2847
        %2849 = vmatmul.bf16.gmra.mxu0 %v2375
        %v2850 = vpop.f32.mrf.mxu0
        %v2851 = vadd.f32 %v2762, %v2850
        %v2852 = vpop.f32.mrf.mxu0
        %v2853 = vadd.f32 %v2764, %v2852
        %2854 = vmatmul.bf16.gmra.mxu0 %v2387
        %v2855 = vpop.f32.mrf.mxu0
        %v2856 = vadd.f32 %v2767, %v2855
        %v2857 = vpop.f32.mrf.mxu0
        %v2858 = vadd.f32 %v2769, %v2857
        %2859 = vmatmul.bf16.gmra.mxu0 %v2399
        %v2860 = vpop.f32.mrf.mxu0
        %v2861 = vadd.f32 %v2772, %v2860
        %v2862 = vpop.f32.mrf.mxu0
        %v2863 = vadd.f32 %v2774, %v2862
        %2864 = vmatmul.bf16.gmra.mxu0 %v2411
        %v2865 = vpop.f32.mrf.mxu0
        %v2866 = vadd.f32 %v2777, %v2865
        %v2867 = vpop.f32.mrf.mxu0
        %v2868 = vadd.f32 %v2779, %v2867
        %2869 = vmatmul.bf16.gmra.mxu0 %v2423
        %v2870 = vpop.f32.mrf.mxu0
        %v2871 = vadd.f32 %v2782, %v2870
        %v2872 = vpop.f32.mrf.mxu0
        %v2873 = vadd.f32 %v2784, %v2872
        %2874 = vdwg.mxu0
        %2875 = vmatpush.bf16.msra.mxu0 %v2672
        %2876 = vmatpush.bf16.msra.mxu0 %v2671
        %2877 = vmatpush.bf16.msra.mxu0 %v2670
        %2878 = vmatpush.bf16.msra.mxu0 %v2669
        %2879 = vmatpush.bf16.msra.mxu0 %v2668
        %2880 = vmatpush.bf16.msra.mxu0 %v2667
        %2881 = vmatpush.bf16.msra.mxu0 %v2666
        %2882 = vmatpush.bf16.msra.mxu0 %v2665
        %2883 = vmatmul.bf16.gmra.mxu0 %v2442
        %v2884 = vpop.f32.mrf.mxu0
        %v2885 = vadd.f32 %v2796, %v2884
        %v2886 = vpop.f32.mrf.mxu0
        %v2887 = vadd.f32 %v2798, %v2886
        %2888 = vmatmul.bf16.gmra.mxu0 %v2445
        %v2889 = vpop.f32.mrf.mxu0
        %v2890 = vadd.f32 %v2801, %v2889
        %v2891 = vpop.f32.mrf.mxu0
        %v2892 = vadd.f32 %v2803, %v2891
        %2893 = vmatmul.bf16.gmra.mxu0 %v2448
        %v2894 = vpop.f32.mrf.mxu0
        %v2895 = vadd.f32 %v2806, %v2894
        %v2896 = vpop.f32.mrf.mxu0
        %v2897 = vadd.f32 %v2808, %v2896
        %2898 = vmatmul.bf16.gmra.mxu0 %v2451
        %v2899 = vpop.f32.mrf.mxu0
        %v2900 = vadd.f32 %v2811, %v2899
        %v2901 = vpop.f32.mrf.mxu0
        %v2902 = vadd.f32 %v2813, %v2901
        %2903 = vmatmul.bf16.gmra.mxu0 %v2454
        %v2904 = vpop.f32.mrf.mxu0
        %v2905 = vadd.f32 %v2816, %v2904
        %v2906 = vpop.f32.mrf.mxu0
        %v2907 = vadd.f32 %v2818, %v2906
        %2908 = vmatmul.bf16.gmra.mxu0 %v2457
        %v2909 = vpop.f32.mrf.mxu0
        %v2910 = vadd.f32 %v2821, %v2909
        %v2911 = vpop.f32.mrf.mxu0
        %v2912 = vadd.f32 %v2823, %v2911
        %2913 = vmatmul.bf16.gmra.mxu0 %v2460
        %v2914 = vpop.f32.mrf.mxu0
        %v2915 = vadd.f32 %v2826, %v2914
        %v2916 = vpop.f32.mrf.mxu0
        %v2917 = vadd.f32 %v2828, %v2916
        %2918 = vmatmul.bf16.gmra.mxu0 %v2463
        %v2919 = vpop.f32.mrf.mxu0
        %v2920 = vadd.f32 %v2831, %v2919
        %v2921 = vpop.f32.mrf.mxu0
        %v2922 = vadd.f32 %v2833, %v2921
        %2923 = vmatmul.bf16.gmra.mxu0 %v2466
        %v2924 = vpop.f32.mrf.mxu0
        %v2925 = vadd.f32 %v2836, %v2924
        %v2926 = vpop.f32.mrf.mxu0
        %v2927 = vadd.f32 %v2838, %v2926
        %2928 = vmatmul.bf16.gmra.mxu0 %v2469
        %v2929 = vpop.f32.mrf.mxu0
        %v2930 = vadd.f32 %v2841, %v2929
        %v2931 = vpop.f32.mrf.mxu0
        %v2932 = vadd.f32 %v2843, %v2931
        %2933 = vmatmul.bf16.gmra.mxu0 %v2472
        %v2934 = vpop.f32.mrf.mxu0
        %v2935 = vadd.f32 %v2846, %v2934
        %v2936 = vpop.f32.mrf.mxu0
        %v2937 = vadd.f32 %v2848, %v2936
        %2938 = vmatmul.bf16.gmra.mxu0 %v2475
        %v2939 = vpop.f32.mrf.mxu0
        %v2940 = vadd.f32 %v2851, %v2939
        %v2941 = vpop.f32.mrf.mxu0
        %v2942 = vadd.f32 %v2853, %v2941
        %2943 = vmatmul.bf16.gmra.mxu0 %v2478
        %v2944 = vpop.f32.mrf.mxu0
        %v2945 = vadd.f32 %v2856, %v2944
        %v2946 = vpop.f32.mrf.mxu0
        %v2947 = vadd.f32 %v2858, %v2946
        %2948 = vmatmul.bf16.gmra.mxu0 %v2481
        %v2949 = vpop.f32.mrf.mxu0
        %v2950 = vadd.f32 %v2861, %v2949
        %v2951 = vpop.f32.mrf.mxu0
        %v2952 = vadd.f32 %v2863, %v2951
        %2953 = vmatmul.bf16.gmra.mxu0 %v2484
        %v2954 = vpop.f32.mrf.mxu0
        %v2955 = vadd.f32 %v2866, %v2954
        %v2956 = vpop.f32.mrf.mxu0
        %v2957 = vadd.f32 %v2868, %v2956
        %2958 = vmatmul.bf16.gmra.mxu0 %v2487
        %v2959 = vpop.f32.mrf.mxu0
        %v2960 = vadd.f32 %v2871, %v2959
        %v2961 = vpop.f32.mrf.mxu0
        %v2962 = vadd.f32 %v2873, %v2961
        %2963 = vdwg.mxu0
        %v2964 = vld [vmem:[#allocation4] sm:$0xff]
        %v2965 = vld [vmem:[#allocation4 + $0x8] sm:$0xff]
        %v2966 = vld [vmem:[#allocation4 + $0x10] sm:$0xff]
        %v2967 = vld [vmem:[#allocation4 + $0x18] sm:$0xff]
        %v2968 = vld [vmem:[#allocation4 + $0x20] sm:$0xff]
        %v2969 = vld [vmem:[#allocation4 + $0x28] sm:$0xff]
        %v2970 = vld [vmem:[#allocation4 + $0x30] sm:$0xff]
        %v2971 = vld [vmem:[#allocation4 + $0x38] sm:$0xff]
        %v2972 = vld [vmem:[#allocation4 + $0x40] sm:$0xff]
        %v2973 = vld [vmem:[#allocation4 + $0x48] sm:$0xff]
        %v2974 = vld [vmem:[#allocation4 + $0x50] sm:$0xff]
        %v2975 = vld [vmem:[#allocation4 + $0x58] sm:$0xff]
        %v2976 = vld [vmem:[#allocation4 + $0x60] sm:$0xff]
        %v2977 = vld [vmem:[#allocation4 + $0x68] sm:$0xff]
        %v2978 = vld [vmem:[#allocation4 + $0x70] sm:$0xff]
        %v2979 = vld [vmem:[#allocation4 + $0x78] sm:$0xff]
        %v2980 = vld [vmem:[#allocation4 + $0x80] sm:$0xff]
        %v2981 = vld [vmem:[#allocation4 + $0x88] sm:$0xff]
        %v2982 = vld [vmem:[#allocation4 + $0x90] sm:$0xff]
        %v2983 = vld [vmem:[#allocation4 + $0x98] sm:$0xff]
        %v2984 = vld [vmem:[#allocation4 + $0xa0] sm:$0xff]
        %v2985 = vld [vmem:[#allocation4 + $0xa8] sm:$0xff]
        %v2986 = vld [vmem:[#allocation4 + $0xb0] sm:$0xff]
        %v2987 = vld [vmem:[#allocation4 + $0xb8] sm:$0xff]
        %v2988 = vld [vmem:[#allocation4 + $0xc0] sm:$0xff]
        %v2989 = vld [vmem:[#allocation4 + $0xc8] sm:$0xff]
        %v2990 = vld [vmem:[#allocation4 + $0xd0] sm:$0xff]
        %v2991 = vld [vmem:[#allocation4 + $0xd8] sm:$0xff]
        %v2992 = vld [vmem:[#allocation4 + $0xe0] sm:$0xff]
        %v2993 = vld [vmem:[#allocation4 + $0xe8] sm:$0xff]
        %v2994 = vld [vmem:[#allocation4 + $0xf0] sm:$0xff]
        %v2995 = vld [vmem:[#allocation4 + $0xf8] sm:$0xff]
        %v2996 = vadd.f32 %v2964, %v2885
        %v2997 = vadd.f32 %v2965, %v2887
        %v2998 = vadd.f32 %v2966, %v2890
        %v2999 = vadd.f32 %v2967, %v2892
        %v3000 = vadd.f32 %v2968, %v2895
        %v3001 = vadd.f32 %v2969, %v2897
        %v3002 = vadd.f32 %v2970, %v2900
        %v3003 = vadd.f32 %v2971, %v2902
        %v3004 = vadd.f32 %v2972, %v2905
        %v3005 = vadd.f32 %v2973, %v2907
        %v3006 = vadd.f32 %v2974, %v2910
        %v3007 = vadd.f32 %v2975, %v2912
        %v3008 = vadd.f32 %v2976, %v2915
        %v3009 = vadd.f32 %v2977, %v2917
        %v3010 = vadd.f32 %v2978, %v2920
        %v3011 = vadd.f32 %v2979, %v2922
        %v3012 = vadd.f32 %v2980, %v2925
        %v3013 = vadd.f32 %v2981, %v2927
        %v3014 = vadd.f32 %v2982, %v2930
        %v3015 = vadd.f32 %v2983, %v2932
        %v3016 = vadd.f32 %v2984, %v2935
        %v3017 = vadd.f32 %v2985, %v2937
        %v3018 = vadd.f32 %v2986, %v2940
        %v3019 = vadd.f32 %v2987, %v2942
        %v3020 = vadd.f32 %v2988, %v2945
        %v3021 = vadd.f32 %v2989, %v2947
        %v3022 = vadd.f32 %v2990, %v2950
        %v3023 = vadd.f32 %v2991, %v2952
        %v3024 = vadd.f32 %v2992, %v2955
        %v3025 = vadd.f32 %v2993, %v2957
        %v3026 = vadd.f32 %v2994, %v2960
        %v3027 = vadd.f32 %v2995, %v2962
        %3028 = vst [vmem:[#allocation4] sm:$0xff] %v2996
        %3029 = vst [vmem:[#allocation4 + $0x8] sm:$0xff] %v2997
        %3030 = vst [vmem:[#allocation4 + $0x10] sm:$0xff] %v2998
        %3031 = vst [vmem:[#allocation4 + $0x18] sm:$0xff] %v2999
        %3032 = vst [vmem:[#allocation4 + $0x20] sm:$0xff] %v3000
        %3033 = vst [vmem:[#allocation4 + $0x28] sm:$0xff] %v3001
        %3034 = vst [vmem:[#allocation4 + $0x30] sm:$0xff] %v3002
        %3035 = vst [vmem:[#allocation4 + $0x38] sm:$0xff] %v3003
        %3036 = vst [vmem:[#allocation4 + $0x40] sm:$0xff] %v3004
        %3037 = vst [vmem:[#allocation4 + $0x48] sm:$0xff] %v3005
        %3038 = vst [vmem:[#allocation4 + $0x50] sm:$0xff] %v3006
        %3039 = vst [vmem:[#allocation4 + $0x58] sm:$0xff] %v3007
        %3040 = vst [vmem:[#allocation4 + $0x60] sm:$0xff] %v3008
        %3041 = vst [vmem:[#allocation4 + $0x68] sm:$0xff] %v3009
        %3042 = vst [vmem:[#allocation4 + $0x70] sm:$0xff] %v3010
        %3043 = vst [vmem:[#allocation4 + $0x78] sm:$0xff] %v3011
        %3044 = vst [vmem:[#allocation4 + $0x80] sm:$0xff] %v3012
        %3045 = vst [vmem:[#allocation4 + $0x88] sm:$0xff] %v3013
        %3046 = vst [vmem:[#allocation4 + $0x90] sm:$0xff] %v3014
        %3047 = vst [vmem:[#allocation4 + $0x98] sm:$0xff] %v3015
        %3048 = vst [vmem:[#allocation4 + $0xa0] sm:$0xff] %v3016
        %3049 = vst [vmem:[#allocation4 + $0xa8] sm:$0xff] %v3017
        %3050 = vst [vmem:[#allocation4 + $0xb0] sm:$0xff] %v3018
        %3051 = vst [vmem:[#allocation4 + $0xb8] sm:$0xff] %v3019
        %3052 = vst [vmem:[#allocation4 + $0xc0] sm:$0xff] %v3020
        %3053 = vst [vmem:[#allocation4 + $0xc8] sm:$0xff] %v3021
        %3054 = vst [vmem:[#allocation4 + $0xd0] sm:$0xff] %v3022
        %3055 = vst [vmem:[#allocation4 + $0xd8] sm:$0xff] %v3023
        %3056 = vst [vmem:[#allocation4 + $0xe0] sm:$0xff] %v3024
        %3057 = vst [vmem:[#allocation4 + $0xe8] sm:$0xff] %v3025
        %3058 = vst [vmem:[#allocation4 + $0xf0] sm:$0xff] %v3026
        %3059 = vst [vmem:[#allocation4 + $0xf8] sm:$0xff] %v3027
        %s3060 = scalar_lea.vmem [#allocation2], 24
        %v3061 = vld [vmem:[%s3060] sm:$0xf]
        %v3062 = vld [vmem:[%s3060 + $0x4] sm:$0xf]
        %v3063 = vld [vmem:[%s3060 + $0x8] sm:$0x1]
        %v3064 = vld [vmem:[%s3060 + $0xc] sm:$0xf]
        %v3065 = vld [vmem:[%s3060 + $0x10] sm:$0xf]
        %v3066 = vld [vmem:[%s3060 + $0x14] sm:$0x1]
        %v3067 = vld [vmem:[%s3060 + $0x18] sm:$0xf]
        %v3068 = vld [vmem:[%s3060 + $0x1c] sm:$0xf]
        %v3069 = vld [vmem:[%s3060 + $0x20] sm:$0x1]
        %v3070 = vld [vmem:[%s3060 + $0x24] sm:$0xf]
        %v3071 = vld [vmem:[%s3060 + $0x28] sm:$0xf]
        %v3072 = vld [vmem:[%s3060 + $0x2c] sm:$0x1]
        %v3073 = vld [vmem:[%s3060 + $0x30] sm:$0xf]
        %v3074 = vld [vmem:[%s3060 + $0x34] sm:$0xf]
        %v3075 = vld [vmem:[%s3060 + $0x38] sm:$0x1]
        %v3076 = vld [vmem:[%s3060 + $0x3c] sm:$0xf]
        %v3077 = vld [vmem:[%s3060 + $0x40] sm:$0xf]
        %v3078 = vld [vmem:[%s3060 + $0x44] sm:$0x1]
        %v3079 = vld [vmem:[%s3060 + $0x48] sm:$0xf]
        %v3080 = vld [vmem:[%s3060 + $0x4c] sm:$0xf]
        %v3081 = vld [vmem:[%s3060 + $0x50] sm:$0x1]
        %v3082 = vld [vmem:[%s3060 + $0x54] sm:$0xf]
        %v3083 = vld [vmem:[%s3060 + $0x58] sm:$0xf]
        %v3084 = vld [vmem:[%s3060 + $0x5c] sm:$0x1]
        %v3085 = vld [vmem:[%s3060 + $0x60] sm:$0xf]
        %v3086 = vld [vmem:[%s3060 + $0x64] sm:$0xf]
        %v3087 = vld [vmem:[%s3060 + $0x68] sm:$0x1]
        %v3088 = vld [vmem:[%s3060 + $0x6c] sm:$0xf]
        %v3089 = vld [vmem:[%s3060 + $0x70] sm:$0xf]
        %v3090 = vld [vmem:[%s3060 + $0x74] sm:$0x1]
        %v3091 = vld [vmem:[%s3060 + $0x78] sm:$0xf]
        %v3092 = vld [vmem:[%s3060 + $0x7c] sm:$0xf]
        %v3093 = vld [vmem:[%s3060 + $0x80] sm:$0x1]
        %v3094 = vld [vmem:[%s3060 + $0x84] sm:$0xf]
        %v3095 = vld [vmem:[%s3060 + $0x88] sm:$0xf]
        %v3096 = vld [vmem:[%s3060 + $0x8c] sm:$0x1]
        %v3097 = vld [vmem:[%s3060 + $0x90] sm:$0xf]
        %v3098 = vld [vmem:[%s3060 + $0x94] sm:$0xf]
        %v3099 = vld [vmem:[%s3060 + $0x98] sm:$0x1]
        %v3100 = vld [vmem:[%s3060 + $0x9c] sm:$0xf]
        %v3101 = vld [vmem:[%s3060 + $0xa0] sm:$0xf]
        %v3102 = vld [vmem:[%s3060 + $0xa4] sm:$0x1]
        %v3103 = vld [vmem:[%s3060 + $0xa8] sm:$0xf]
        %v3104 = vld [vmem:[%s3060 + $0xac] sm:$0xf]
        %v3105 = vld [vmem:[%s3060 + $0xb0] sm:$0x1]
        %v3106 = vld [vmem:[%s3060 + $0xb4] sm:$0xf]
        %v3107 = vld [vmem:[%s3060 + $0xb8] sm:$0xf]
        %v3108 = vld [vmem:[%s3060 + $0xbc] sm:$0x1]
        %v3141 = vunpack.c.l.b16 %v3061
        %v3142 = vunpack.c.l.b16 %v3062
        %v3143 = vunpack.c.l.b16 %v3064
        %v3144 = vunpack.c.l.b16 %v3065
        %v3145 = vunpack.c.l.b16 %v3067
        %v3146 = vunpack.c.l.b16 %v3068
        %v3147 = vunpack.c.l.b16 %v3070
        %v3148 = vunpack.c.l.b16 %v3071
        %v3149 = vunpack.c.l.b16 %v3073
        %v3150 = vunpack.c.l.b16 %v3074
        %v3151 = vunpack.c.l.b16 %v3076
        %v3152 = vunpack.c.l.b16 %v3077
        %v3153 = vunpack.c.l.b16 %v3079
        %v3154 = vunpack.c.l.b16 %v3080
        %v3155 = vunpack.c.l.b16 %v3082
        %v3156 = vunpack.c.l.b16 %v3083
        %v3157 = vunpack.c.l.b16 %v3085
        %v3158 = vunpack.c.l.b16 %v3086
        %v3159 = vunpack.c.l.b16 %v3088
        %v3160 = vunpack.c.l.b16 %v3089
        %v3161 = vunpack.c.l.b16 %v3091
        %v3162 = vunpack.c.l.b16 %v3092
        %v3163 = vunpack.c.l.b16 %v3094
        %v3164 = vunpack.c.l.b16 %v3095
        %v3165 = vunpack.c.l.b16 %v3097
        %v3166 = vunpack.c.l.b16 %v3098
        %v3167 = vunpack.c.l.b16 %v3100
        %v3168 = vunpack.c.l.b16 %v3101
        %v3169 = vunpack.c.l.b16 %v3103
        %v3170 = vunpack.c.l.b16 %v3104
        %v3171 = vunpack.c.l.b16 %v3106
        %v3172 = vunpack.c.l.b16 %v3107
        %v3173 = vpack.c.b16 %v3142, %v3141
        %v3174 = vpack.c.b16 %v3144, %v3143
        %v3175 = vpack.c.b16 %v3146, %v3145
        %v3176 = vpack.c.b16 %v3148, %v3147
        %v3177 = vpack.c.b16 %v3150, %v3149
        %v3178 = vpack.c.b16 %v3152, %v3151
        %v3179 = vpack.c.b16 %v3154, %v3153
        %v3180 = vpack.c.b16 %v3156, %v3155
        %v3181 = vpack.c.b16 %v3158, %v3157
        %v3182 = vpack.c.b16 %v3160, %v3159
        %v3183 = vpack.c.b16 %v3162, %v3161
        %v3184 = vpack.c.b16 %v3164, %v3163
        %v3185 = vpack.c.b16 %v3166, %v3165
        %v3186 = vpack.c.b16 %v3168, %v3167
        %v3187 = vpack.c.b16 %v3170, %v3169
        %v3188 = vpack.c.b16 %v3172, %v3171
        %v3221 = vunpack.c.l.b16 %v3063
        %v3222 = vunpack.c.l.b16 %v3066
        %v3223 = vunpack.c.l.b16 %v3069
        %v3224 = vunpack.c.l.b16 %v3072
        %v3225 = vunpack.c.l.b16 %v3075
        %v3226 = vunpack.c.l.b16 %v3078
        %v3227 = vunpack.c.l.b16 %v3081
        %v3228 = vunpack.c.l.b16 %v3084
        %v3229 = vunpack.c.l.b16 %v3087
        %v3230 = vunpack.c.l.b16 %v3090
        %v3231 = vunpack.c.l.b16 %v3093
        %v3232 = vunpack.c.l.b16 %v3096
        %v3233 = vunpack.c.l.b16 %v3099
        %v3234 = vunpack.c.l.b16 %v3102
        %v3235 = vunpack.c.l.b16 %v3105
        %v3236 = vunpack.c.l.b16 %v3108
        %v3237 = vpack.c.b16 %v3221, %v3221
        %v3238 = vpack.c.b16 %v3222, %v3222
        %v3239 = vpack.c.b16 %v3223, %v3223
        %v3240 = vpack.c.b16 %v3224, %v3224
        %v3241 = vpack.c.b16 %v3225, %v3225
        %v3242 = vpack.c.b16 %v3226, %v3226
        %v3243 = vpack.c.b16 %v3227, %v3227
        %v3244 = vpack.c.b16 %v3228, %v3228
        %v3245 = vpack.c.b16 %v3229, %v3229
        %v3246 = vpack.c.b16 %v3230, %v3230
        %v3247 = vpack.c.b16 %v3231, %v3231
        %v3248 = vpack.c.b16 %v3232, %v3232
        %v3249 = vpack.c.b16 %v3233, %v3233
        %v3250 = vpack.c.b16 %v3234, %v3234
        %v3251 = vpack.c.b16 %v3235, %v3235
        %v3252 = vpack.c.b16 %v3236, %v3236
        %v3254 = vshrl.u32 %v3173, 16
        %v3256 = vshll.u32 %v3173, 16
        %v3258 = vrot.slane %v3256, 1
        %v3259 = vor.u32 %v3254, %v3258
        %v3261 = vshll.u32 %v3237, 16
        %v3263 = vrot.slane %v3261, 1
        %v3264 = vsel %vm1211, %v3259, %v3263
        %v3266 = vshrl.u32 %v3174, 16
        %v3268 = vshll.u32 %v3174, 16
        %v3270 = vrot.slane %v3268, 1
        %v3271 = vor.u32 %v3266, %v3270
        %v3273 = vshll.u32 %v3238, 16
        %v3275 = vrot.slane %v3273, 1
        %v3276 = vsel %vm1211, %v3271, %v3275
        %v3278 = vshrl.u32 %v3175, 16
        %v3280 = vshll.u32 %v3175, 16
        %v3282 = vrot.slane %v3280, 1
        %v3283 = vor.u32 %v3278, %v3282
        %v3285 = vshll.u32 %v3239, 16
        %v3287 = vrot.slane %v3285, 1
        %v3288 = vsel %vm1211, %v3283, %v3287
        %v3290 = vshrl.u32 %v3176, 16
        %v3292 = vshll.u32 %v3176, 16
        %v3294 = vrot.slane %v3292, 1
        %v3295 = vor.u32 %v3290, %v3294
        %v3297 = vshll.u32 %v3240, 16
        %v3299 = vrot.slane %v3297, 1
        %v3300 = vsel %vm1211, %v3295, %v3299
        %v3302 = vshrl.u32 %v3177, 16
        %v3304 = vshll.u32 %v3177, 16
        %v3306 = vrot.slane %v3304, 1
        %v3307 = vor.u32 %v3302, %v3306
        %v3309 = vshll.u32 %v3241, 16
        %v3311 = vrot.slane %v3309, 1
        %v3312 = vsel %vm1211, %v3307, %v3311
        %v3314 = vshrl.u32 %v3178, 16
        %v3316 = vshll.u32 %v3178, 16
        %v3318 = vrot.slane %v3316, 1
        %v3319 = vor.u32 %v3314, %v3318
        %v3321 = vshll.u32 %v3242, 16
        %v3323 = vrot.slane %v3321, 1
        %v3324 = vsel %vm1211, %v3319, %v3323
        %v3326 = vshrl.u32 %v3179, 16
        %v3328 = vshll.u32 %v3179, 16
        %v3330 = vrot.slane %v3328, 1
        %v3331 = vor.u32 %v3326, %v3330
        %v3333 = vshll.u32 %v3243, 16
        %v3335 = vrot.slane %v3333, 1
        %v3336 = vsel %vm1211, %v3331, %v3335
        %v3338 = vshrl.u32 %v3180, 16
        %v3340 = vshll.u32 %v3180, 16
        %v3342 = vrot.slane %v3340, 1
        %v3343 = vor.u32 %v3338, %v3342
        %v3345 = vshll.u32 %v3244, 16
        %v3347 = vrot.slane %v3345, 1
        %v3348 = vsel %vm1211, %v3343, %v3347
        %v3350 = vshrl.u32 %v3181, 16
        %v3352 = vshll.u32 %v3181, 16
        %v3354 = vrot.slane %v3352, 1
        %v3355 = vor.u32 %v3350, %v3354
        %v3357 = vshll.u32 %v3245, 16
        %v3359 = vrot.slane %v3357, 1
        %v3360 = vsel %vm1211, %v3355, %v3359
        %v3362 = vshrl.u32 %v3182, 16
        %v3364 = vshll.u32 %v3182, 16
        %v3366 = vrot.slane %v3364, 1
        %v3367 = vor.u32 %v3362, %v3366
        %v3369 = vshll.u32 %v3246, 16
        %v3371 = vrot.slane %v3369, 1
        %v3372 = vsel %vm1211, %v3367, %v3371
        %v3374 = vshrl.u32 %v3183, 16
        %v3376 = vshll.u32 %v3183, 16
        %v3378 = vrot.slane %v3376, 1
        %v3379 = vor.u32 %v3374, %v3378
        %v3381 = vshll.u32 %v3247, 16
        %v3383 = vrot.slane %v3381, 1
        %v3384 = vsel %vm1211, %v3379, %v3383
        %v3386 = vshrl.u32 %v3184, 16
        %v3388 = vshll.u32 %v3184, 16
        %v3390 = vrot.slane %v3388, 1
        %v3391 = vor.u32 %v3386, %v3390
        %v3393 = vshll.u32 %v3248, 16
        %v3395 = vrot.slane %v3393, 1
        %v3396 = vsel %vm1211, %v3391, %v3395
        %v3398 = vshrl.u32 %v3185, 16
        %v3400 = vshll.u32 %v3185, 16
        %v3402 = vrot.slane %v3400, 1
        %v3403 = vor.u32 %v3398, %v3402
        %v3405 = vshll.u32 %v3249, 16
        %v3407 = vrot.slane %v3405, 1
        %v3408 = vsel %vm1211, %v3403, %v3407
        %v3410 = vshrl.u32 %v3186, 16
        %v3412 = vshll.u32 %v3186, 16
        %v3414 = vrot.slane %v3412, 1
        %v3415 = vor.u32 %v3410, %v3414
        %v3417 = vshll.u32 %v3250, 16
        %v3419 = vrot.slane %v3417, 1
        %v3420 = vsel %vm1211, %v3415, %v3419
        %v3422 = vshrl.u32 %v3187, 16
        %v3424 = vshll.u32 %v3187, 16
        %v3426 = vrot.slane %v3424, 1
        %v3427 = vor.u32 %v3422, %v3426
        %v3429 = vshll.u32 %v3251, 16
        %v3431 = vrot.slane %v3429, 1
        %v3432 = vsel %vm1211, %v3427, %v3431
        %v3434 = vshrl.u32 %v3188, 16
        %v3436 = vshll.u32 %v3188, 16
        %v3438 = vrot.slane %v3436, 1
        %v3439 = vor.u32 %v3434, %v3438
        %v3441 = vshll.u32 %v3252, 16
        %v3443 = vrot.slane %v3441, 1
        %v3444 = vsel %vm1211, %v3439, %v3443
        %v3461 = vrot.slane %v3173, 1
        %v3462 = vrot.slane %v3237, 1
        %v3463 = vsel %vm1420, %v3461, %v3462
        %v3464 = vrot.slane %v3174, 1
        %v3465 = vrot.slane %v3238, 1
        %v3466 = vsel %vm1420, %v3464, %v3465
        %v3467 = vrot.slane %v3175, 1
        %v3468 = vrot.slane %v3239, 1
        %v3469 = vsel %vm1420, %v3467, %v3468
        %v3470 = vrot.slane %v3176, 1
        %v3471 = vrot.slane %v3240, 1
        %v3472 = vsel %vm1420, %v3470, %v3471
        %v3473 = vrot.slane %v3177, 1
        %v3474 = vrot.slane %v3241, 1
        %v3475 = vsel %vm1420, %v3473, %v3474
        %v3476 = vrot.slane %v3178, 1
        %v3477 = vrot.slane %v3242, 1
        %v3478 = vsel %vm1420, %v3476, %v3477
        %v3479 = vrot.slane %v3179, 1
        %v3480 = vrot.slane %v3243, 1
        %v3481 = vsel %vm1420, %v3479, %v3480
        %v3482 = vrot.slane %v3180, 1
        %v3483 = vrot.slane %v3244, 1
        %v3484 = vsel %vm1420, %v3482, %v3483
        %v3485 = vrot.slane %v3181, 1
        %v3486 = vrot.slane %v3245, 1
        %v3487 = vsel %vm1420, %v3485, %v3486
        %v3488 = vrot.slane %v3182, 1
        %v3489 = vrot.slane %v3246, 1
        %v3490 = vsel %vm1420, %v3488, %v3489
        %v3491 = vrot.slane %v3183, 1
        %v3492 = vrot.slane %v3247, 1
        %v3493 = vsel %vm1420, %v3491, %v3492
        %v3494 = vrot.slane %v3184, 1
        %v3495 = vrot.slane %v3248, 1
        %v3496 = vsel %vm1420, %v3494, %v3495
        %v3497 = vrot.slane %v3185, 1
        %v3498 = vrot.slane %v3249, 1
        %v3499 = vsel %vm1420, %v3497, %v3498
        %v3500 = vrot.slane %v3186, 1
        %v3501 = vrot.slane %v3250, 1
        %v3502 = vsel %vm1420, %v3500, %v3501
        %v3503 = vrot.slane %v3187, 1
        %v3504 = vrot.slane %v3251, 1
        %v3505 = vsel %vm1420, %v3503, %v3504
        %v3506 = vrot.slane %v3188, 1
        %v3507 = vrot.slane %v3252, 1
        %v3508 = vsel %vm1420, %v3506, %v3507
        %s3525 = scalar_lea.vmem [#allocation8], 384
        %v3526 = vld [vmem:[%s3525] sm:$0xf]
        %v3527 = vld [vmem:[%s3525 + $0x4] sm:$0xf]
        %v3528 = vld [vmem:[%s3525 + $0x8] sm:$0xf]
        %v3529 = vld [vmem:[%s3525 + $0xc] sm:$0xf]
        %v3530 = vld [vmem:[%s3525 + $0x10] sm:$0xf]
        %v3531 = vld [vmem:[%s3525 + $0x14] sm:$0xf]
        %v3532 = vld [vmem:[%s3525 + $0x18] sm:$0xf]
        %v3533 = vld [vmem:[%s3525 + $0x1c] sm:$0xf]
        %v3534 = vld [vmem:[%s3525 + $0x20] sm:$0xf]
        %v3535 = vld [vmem:[%s3525 + $0x24] sm:$0xf]
        %v3536 = vld [vmem:[%s3525 + $0x28] sm:$0xf]
        %v3537 = vld [vmem:[%s3525 + $0x2c] sm:$0xf]
        %v3538 = vld [vmem:[%s3525 + $0x30] sm:$0xf]
        %v3539 = vld [vmem:[%s3525 + $0x34] sm:$0xf]
        %v3540 = vld [vmem:[%s3525 + $0x38] sm:$0xf]
        %v3541 = vld [vmem:[%s3525 + $0x3c] sm:$0xf]
        %v3542 = vld [vmem:[%s3525 + $0x40] sm:$0xf]
        %v3543 = vld [vmem:[%s3525 + $0x44] sm:$0xf]
        %v3544 = vld [vmem:[%s3525 + $0x48] sm:$0xf]
        %v3545 = vld [vmem:[%s3525 + $0x4c] sm:$0xf]
        %v3546 = vld [vmem:[%s3525 + $0x50] sm:$0xf]
        %v3547 = vld [vmem:[%s3525 + $0x54] sm:$0xf]
        %v3548 = vld [vmem:[%s3525 + $0x58] sm:$0xf]
        %v3549 = vld [vmem:[%s3525 + $0x5c] sm:$0xf]
        %v3550 = vld [vmem:[%s3525 + $0x60] sm:$0xf]
        %v3551 = vld [vmem:[%s3525 + $0x64] sm:$0xf]
        %v3552 = vld [vmem:[%s3525 + $0x68] sm:$0xf]
        %v3553 = vld [vmem:[%s3525 + $0x6c] sm:$0xf]
        %v3554 = vld [vmem:[%s3525 + $0x70] sm:$0xf]
        %v3555 = vld [vmem:[%s3525 + $0x74] sm:$0xf]
        %v3556 = vld [vmem:[%s3525 + $0x78] sm:$0xf]
        %v3557 = vld [vmem:[%s3525 + $0x7c] sm:$0xf]
        %v3558 = vld [vmem:[%s3525 + $0x80] sm:$0xf]
        %v3559 = vld [vmem:[%s3525 + $0x84] sm:$0xf]
        %v3560 = vld [vmem:[%s3525 + $0x88] sm:$0xf]
        %v3561 = vld [vmem:[%s3525 + $0x8c] sm:$0xf]
        %v3562 = vld [vmem:[%s3525 + $0x90] sm:$0xf]
        %v3563 = vld [vmem:[%s3525 + $0x94] sm:$0xf]
        %v3564 = vld [vmem:[%s3525 + $0x98] sm:$0xf]
        %v3565 = vld [vmem:[%s3525 + $0x9c] sm:$0xf]
        %v3566 = vld [vmem:[%s3525 + $0xa0] sm:$0xf]
        %v3567 = vld [vmem:[%s3525 + $0xa4] sm:$0xf]
        %v3568 = vld [vmem:[%s3525 + $0xa8] sm:$0xf]
        %v3569 = vld [vmem:[%s3525 + $0xac] sm:$0xf]
        %v3570 = vld [vmem:[%s3525 + $0xb0] sm:$0xf]
        %v3571 = vld [vmem:[%s3525 + $0xb4] sm:$0xf]
        %v3572 = vld [vmem:[%s3525 + $0xb8] sm:$0xf]
        %v3573 = vld [vmem:[%s3525 + $0xbc] sm:$0xf]
        %v3622 = vunpack.c.l.b16 %v3526
        %v3623 = vunpack.c.l.b16 %v3527
        %v3624 = vunpack.c.l.b16 %v3528
        %v3625 = vunpack.c.l.b16 %v3529
        %v3626 = vunpack.c.l.b16 %v3530
        %v3627 = vunpack.c.l.b16 %v3531
        %v3628 = vunpack.c.l.b16 %v3532
        %v3629 = vunpack.c.l.b16 %v3533
        %v3630 = vunpack.c.l.b16 %v3534
        %v3631 = vunpack.c.l.b16 %v3535
        %v3632 = vunpack.c.l.b16 %v3536
        %v3633 = vunpack.c.l.b16 %v3537
        %v3634 = vunpack.c.l.b16 %v3538
        %v3635 = vunpack.c.l.b16 %v3539
        %v3636 = vunpack.c.l.b16 %v3540
        %v3637 = vunpack.c.l.b16 %v3541
        %v3638 = vunpack.c.l.b16 %v3542
        %v3639 = vunpack.c.l.b16 %v3543
        %v3640 = vunpack.c.l.b16 %v3544
        %v3641 = vunpack.c.l.b16 %v3545
        %v3642 = vunpack.c.l.b16 %v3546
        %v3643 = vunpack.c.l.b16 %v3547
        %v3644 = vunpack.c.l.b16 %v3548
        %v3645 = vunpack.c.l.b16 %v3549
        %v3646 = vunpack.c.l.b16 %v3550
        %v3647 = vunpack.c.l.b16 %v3551
        %v3648 = vunpack.c.l.b16 %v3552
        %v3649 = vunpack.c.l.b16 %v3553
        %v3650 = vunpack.c.l.b16 %v3554
        %v3651 = vunpack.c.l.b16 %v3555
        %v3652 = vunpack.c.l.b16 %v3556
        %v3653 = vunpack.c.l.b16 %v3557
        %v3654 = vunpack.c.l.b16 %v3558
        %v3655 = vunpack.c.l.b16 %v3559
        %v3656 = vunpack.c.l.b16 %v3560
        %v3657 = vunpack.c.l.b16 %v3561
        %v3658 = vunpack.c.l.b16 %v3562
        %v3659 = vunpack.c.l.b16 %v3563
        %v3660 = vunpack.c.l.b16 %v3564
        %v3661 = vunpack.c.l.b16 %v3565
        %v3662 = vunpack.c.l.b16 %v3566
        %v3663 = vunpack.c.l.b16 %v3567
        %v3664 = vunpack.c.l.b16 %v3568
        %v3665 = vunpack.c.l.b16 %v3569
        %v3666 = vunpack.c.l.b16 %v3570
        %v3667 = vunpack.c.l.b16 %v3571
        %v3668 = vunpack.c.l.b16 %v3572
        %v3669 = vunpack.c.l.b16 %v3573
        %v3670 = vpack.c.b16 %v3623, %v3622
        %v3671 = vpack.c.b16 %v3625, %v3624
        %v3672 = vpack.c.b16 %v3627, %v3626
        %v3673 = vpack.c.b16 %v3629, %v3628
        %v3674 = vpack.c.b16 %v3631, %v3630
        %v3675 = vpack.c.b16 %v3633, %v3632
        %v3676 = vpack.c.b16 %v3635, %v3634
        %v3677 = vpack.c.b16 %v3637, %v3636
        %v3678 = vpack.c.b16 %v3639, %v3638
        %v3679 = vpack.c.b16 %v3641, %v3640
        %v3680 = vpack.c.b16 %v3643, %v3642
        %v3681 = vpack.c.b16 %v3645, %v3644
        %v3682 = vpack.c.b16 %v3647, %v3646
        %v3683 = vpack.c.b16 %v3649, %v3648
        %v3684 = vpack.c.b16 %v3651, %v3650
        %v3685 = vpack.c.b16 %v3653, %v3652
        %v3686 = vpack.c.b16 %v3655, %v3654
        %v3687 = vpack.c.b16 %v3657, %v3656
        %v3688 = vpack.c.b16 %v3659, %v3658
        %v3689 = vpack.c.b16 %v3661, %v3660
        %v3690 = vpack.c.b16 %v3663, %v3662
        %v3691 = vpack.c.b16 %v3665, %v3664
        %v3692 = vpack.c.b16 %v3667, %v3666
        %v3693 = vpack.c.b16 %v3669, %v3668
        %3718 = vmatpush.bf16.msra.mxu0 %v3677
        %3719 = vmatpush.bf16.msra.mxu0 %v3676
        %3720 = vmatpush.bf16.msra.mxu0 %v3675
        %3721 = vmatpush.bf16.msra.mxu0 %v3674
        %3722 = vmatpush.bf16.msra.mxu0 %v3673
        %3723 = vmatpush.bf16.msra.mxu0 %v3672
        %3724 = vmatpush.bf16.msra.mxu0 %v3671
        %3725 = vmatpush.bf16.msra.mxu0 %v3670
        %3726 = vmatmul.bf16.gmra.mxu0 %v3173
        %v3727 = vpop.f32.mrf.mxu0
        %v3728 = vadd.f32 0.0, %v3727
        %v3729 = vpop.f32.mrf.mxu0
        %v3730 = vadd.f32 0.0, %v3729
        %3731 = vmatmul.bf16.gmra.mxu0 %v3174
        %v3732 = vpop.f32.mrf.mxu0
        %v3733 = vadd.f32 0.0, %v3732
        %v3734 = vpop.f32.mrf.mxu0
        %v3735 = vadd.f32 0.0, %v3734
        %3736 = vmatmul.bf16.gmra.mxu0 %v3175
        %v3737 = vpop.f32.mrf.mxu0
        %v3738 = vadd.f32 0.0, %v3737
        %v3739 = vpop.f32.mrf.mxu0
        %v3740 = vadd.f32 0.0, %v3739
        %3741 = vmatmul.bf16.gmra.mxu0 %v3176
        %v3742 = vpop.f32.mrf.mxu0
        %v3743 = vadd.f32 0.0, %v3742
        %v3744 = vpop.f32.mrf.mxu0
        %v3745 = vadd.f32 0.0, %v3744
        %3746 = vmatmul.bf16.gmra.mxu0 %v3177
        %v3747 = vpop.f32.mrf.mxu0
        %v3748 = vadd.f32 0.0, %v3747
        %v3749 = vpop.f32.mrf.mxu0
        %v3750 = vadd.f32 0.0, %v3749
        %3751 = vmatmul.bf16.gmra.mxu0 %v3178
        %v3752 = vpop.f32.mrf.mxu0
        %v3753 = vadd.f32 0.0, %v3752
        %v3754 = vpop.f32.mrf.mxu0
        %v3755 = vadd.f32 0.0, %v3754
        %3756 = vmatmul.bf16.gmra.mxu0 %v3179
        %v3757 = vpop.f32.mrf.mxu0
        %v3758 = vadd.f32 0.0, %v3757
        %v3759 = vpop.f32.mrf.mxu0
        %v3760 = vadd.f32 0.0, %v3759
        %3761 = vmatmul.bf16.gmra.mxu0 %v3180
        %v3762 = vpop.f32.mrf.mxu0
        %v3763 = vadd.f32 0.0, %v3762
        %v3764 = vpop.f32.mrf.mxu0
        %v3765 = vadd.f32 0.0, %v3764
        %3766 = vmatmul.bf16.gmra.mxu0 %v3181
        %v3767 = vpop.f32.mrf.mxu0
        %v3768 = vadd.f32 0.0, %v3767
        %v3769 = vpop.f32.mrf.mxu0
        %v3770 = vadd.f32 0.0, %v3769
        %3771 = vmatmul.bf16.gmra.mxu0 %v3182
        %v3772 = vpop.f32.mrf.mxu0
        %v3773 = vadd.f32 0.0, %v3772
        %v3774 = vpop.f32.mrf.mxu0
        %v3775 = vadd.f32 0.0, %v3774
        %3776 = vmatmul.bf16.gmra.mxu0 %v3183
        %v3777 = vpop.f32.mrf.mxu0
        %v3778 = vadd.f32 0.0, %v3777
        %v3779 = vpop.f32.mrf.mxu0
        %v3780 = vadd.f32 0.0, %v3779
        %3781 = vmatmul.bf16.gmra.mxu0 %v3184
        %v3782 = vpop.f32.mrf.mxu0
        %v3783 = vadd.f32 0.0, %v3782
        %v3784 = vpop.f32.mrf.mxu0
        %v3785 = vadd.f32 0.0, %v3784
        %3786 = vmatmul.bf16.gmra.mxu0 %v3185
        %v3787 = vpop.f32.mrf.mxu0
        %v3788 = vadd.f32 0.0, %v3787
        %v3789 = vpop.f32.mrf.mxu0
        %v3790 = vadd.f32 0.0, %v3789
        %3791 = vmatmul.bf16.gmra.mxu0 %v3186
        %v3792 = vpop.f32.mrf.mxu0
        %v3793 = vadd.f32 0.0, %v3792
        %v3794 = vpop.f32.mrf.mxu0
        %v3795 = vadd.f32 0.0, %v3794
        %3796 = vmatmul.bf16.gmra.mxu0 %v3187
        %v3797 = vpop.f32.mrf.mxu0
        %v3798 = vadd.f32 0.0, %v3797
        %v3799 = vpop.f32.mrf.mxu0
        %v3800 = vadd.f32 0.0, %v3799
        %3801 = vmatmul.bf16.gmra.mxu0 %v3188
        %v3802 = vpop.f32.mrf.mxu0
        %v3803 = vadd.f32 0.0, %v3802
        %v3804 = vpop.f32.mrf.mxu0
        %v3805 = vadd.f32 0.0, %v3804
        %3806 = vdwg.mxu0
        %3807 = vmatpush.bf16.msra.mxu0 %v3685
        %3808 = vmatpush.bf16.msra.mxu0 %v3684
        %3809 = vmatpush.bf16.msra.mxu0 %v3683
        %3810 = vmatpush.bf16.msra.mxu0 %v3682
        %3811 = vmatpush.bf16.msra.mxu0 %v3681
        %3812 = vmatpush.bf16.msra.mxu0 %v3680
        %3813 = vmatpush.bf16.msra.mxu0 %v3679
        %3814 = vmatpush.bf16.msra.mxu0 %v3678
        %3815 = vmatmul.bf16.gmra.mxu0 %v3264
        %v3816 = vpop.f32.mrf.mxu0
        %v3817 = vadd.f32 %v3728, %v3816
        %v3818 = vpop.f32.mrf.mxu0
        %v3819 = vadd.f32 %v3730, %v3818
        %3820 = vmatmul.bf16.gmra.mxu0 %v3276
        %v3821 = vpop.f32.mrf.mxu0
        %v3822 = vadd.f32 %v3733, %v3821
        %v3823 = vpop.f32.mrf.mxu0
        %v3824 = vadd.f32 %v3735, %v3823
        %3825 = vmatmul.bf16.gmra.mxu0 %v3288
        %v3826 = vpop.f32.mrf.mxu0
        %v3827 = vadd.f32 %v3738, %v3826
        %v3828 = vpop.f32.mrf.mxu0
        %v3829 = vadd.f32 %v3740, %v3828
        %3830 = vmatmul.bf16.gmra.mxu0 %v3300
        %v3831 = vpop.f32.mrf.mxu0
        %v3832 = vadd.f32 %v3743, %v3831
        %v3833 = vpop.f32.mrf.mxu0
        %v3834 = vadd.f32 %v3745, %v3833
        %3835 = vmatmul.bf16.gmra.mxu0 %v3312
        %v3836 = vpop.f32.mrf.mxu0
        %v3837 = vadd.f32 %v3748, %v3836
        %v3838 = vpop.f32.mrf.mxu0
        %v3839 = vadd.f32 %v3750, %v3838
        %3840 = vmatmul.bf16.gmra.mxu0 %v3324
        %v3841 = vpop.f32.mrf.mxu0
        %v3842 = vadd.f32 %v3753, %v3841
        %v3843 = vpop.f32.mrf.mxu0
        %v3844 = vadd.f32 %v3755, %v3843
        %3845 = vmatmul.bf16.gmra.mxu0 %v3336
        %v3846 = vpop.f32.mrf.mxu0
        %v3847 = vadd.f32 %v3758, %v3846
        %v3848 = vpop.f32.mrf.mxu0
        %v3849 = vadd.f32 %v3760, %v3848
        %3850 = vmatmul.bf16.gmra.mxu0 %v3348
        %v3851 = vpop.f32.mrf.mxu0
        %v3852 = vadd.f32 %v3763, %v3851
        %v3853 = vpop.f32.mrf.mxu0
        %v3854 = vadd.f32 %v3765, %v3853
        %3855 = vmatmul.bf16.gmra.mxu0 %v3360
        %v3856 = vpop.f32.mrf.mxu0
        %v3857 = vadd.f32 %v3768, %v3856
        %v3858 = vpop.f32.mrf.mxu0
        %v3859 = vadd.f32 %v3770, %v3858
        %3860 = vmatmul.bf16.gmra.mxu0 %v3372
        %v3861 = vpop.f32.mrf.mxu0
        %v3862 = vadd.f32 %v3773, %v3861
        %v3863 = vpop.f32.mrf.mxu0
        %v3864 = vadd.f32 %v3775, %v3863
        %3865 = vmatmul.bf16.gmra.mxu0 %v3384
        %v3866 = vpop.f32.mrf.mxu0
        %v3867 = vadd.f32 %v3778, %v3866
        %v3868 = vpop.f32.mrf.mxu0
        %v3869 = vadd.f32 %v3780, %v3868
        %3870 = vmatmul.bf16.gmra.mxu0 %v3396
        %v3871 = vpop.f32.mrf.mxu0
        %v3872 = vadd.f32 %v3783, %v3871
        %v3873 = vpop.f32.mrf.mxu0
        %v3874 = vadd.f32 %v3785, %v3873
        %3875 = vmatmul.bf16.gmra.mxu0 %v3408
        %v3876 = vpop.f32.mrf.mxu0
        %v3877 = vadd.f32 %v3788, %v3876
        %v3878 = vpop.f32.mrf.mxu0
        %v3879 = vadd.f32 %v3790, %v3878
        %3880 = vmatmul.bf16.gmra.mxu0 %v3420
        %v3881 = vpop.f32.mrf.mxu0
        %v3882 = vadd.f32 %v3793, %v3881
        %v3883 = vpop.f32.mrf.mxu0
        %v3884 = vadd.f32 %v3795, %v3883
        %3885 = vmatmul.bf16.gmra.mxu0 %v3432
        %v3886 = vpop.f32.mrf.mxu0
        %v3887 = vadd.f32 %v3798, %v3886
        %v3888 = vpop.f32.mrf.mxu0
        %v3889 = vadd.f32 %v3800, %v3888
        %3890 = vmatmul.bf16.gmra.mxu0 %v3444
        %v3891 = vpop.f32.mrf.mxu0
        %v3892 = vadd.f32 %v3803, %v3891
        %v3893 = vpop.f32.mrf.mxu0
        %v3894 = vadd.f32 %v3805, %v3893
        %3895 = vdwg.mxu0
        %3896 = vmatpush.bf16.msra.mxu0 %v3693
        %3897 = vmatpush.bf16.msra.mxu0 %v3692
        %3898 = vmatpush.bf16.msra.mxu0 %v3691
        %3899 = vmatpush.bf16.msra.mxu0 %v3690
        %3900 = vmatpush.bf16.msra.mxu0 %v3689
        %3901 = vmatpush.bf16.msra.mxu0 %v3688
        %3902 = vmatpush.bf16.msra.mxu0 %v3687
        %3903 = vmatpush.bf16.msra.mxu0 %v3686
        %3904 = vmatmul.bf16.gmra.mxu0 %v3463
        %v3905 = vpop.f32.mrf.mxu0
        %v3906 = vadd.f32 %v3817, %v3905
        %v3907 = vpop.f32.mrf.mxu0
        %v3908 = vadd.f32 %v3819, %v3907
        %3909 = vmatmul.bf16.gmra.mxu0 %v3466
        %v3910 = vpop.f32.mrf.mxu0
        %v3911 = vadd.f32 %v3822, %v3910
        %v3912 = vpop.f32.mrf.mxu0
        %v3913 = vadd.f32 %v3824, %v3912
        %3914 = vmatmul.bf16.gmra.mxu0 %v3469
        %v3915 = vpop.f32.mrf.mxu0
        %v3916 = vadd.f32 %v3827, %v3915
        %v3917 = vpop.f32.mrf.mxu0
        %v3918 = vadd.f32 %v3829, %v3917
        %3919 = vmatmul.bf16.gmra.mxu0 %v3472
        %v3920 = vpop.f32.mrf.mxu0
        %v3921 = vadd.f32 %v3832, %v3920
        %v3922 = vpop.f32.mrf.mxu0
        %v3923 = vadd.f32 %v3834, %v3922
        %3924 = vmatmul.bf16.gmra.mxu0 %v3475
        %v3925 = vpop.f32.mrf.mxu0
        %v3926 = vadd.f32 %v3837, %v3925
        %v3927 = vpop.f32.mrf.mxu0
        %v3928 = vadd.f32 %v3839, %v3927
        %3929 = vmatmul.bf16.gmra.mxu0 %v3478
        %v3930 = vpop.f32.mrf.mxu0
        %v3931 = vadd.f32 %v3842, %v3930
        %v3932 = vpop.f32.mrf.mxu0
        %v3933 = vadd.f32 %v3844, %v3932
        %3934 = vmatmul.bf16.gmra.mxu0 %v3481
        %v3935 = vpop.f32.mrf.mxu0
        %v3936 = vadd.f32 %v3847, %v3935
        %v3937 = vpop.f32.mrf.mxu0
        %v3938 = vadd.f32 %v3849, %v3937
        %3939 = vmatmul.bf16.gmra.mxu0 %v3484
        %v3940 = vpop.f32.mrf.mxu0
        %v3941 = vadd.f32 %v3852, %v3940
        %v3942 = vpop.f32.mrf.mxu0
        %v3943 = vadd.f32 %v3854, %v3942
        %3944 = vmatmul.bf16.gmra.mxu0 %v3487
        %v3945 = vpop.f32.mrf.mxu0
        %v3946 = vadd.f32 %v3857, %v3945
        %v3947 = vpop.f32.mrf.mxu0
        %v3948 = vadd.f32 %v3859, %v3947
        %3949 = vmatmul.bf16.gmra.mxu0 %v3490
        %v3950 = vpop.f32.mrf.mxu0
        %v3951 = vadd.f32 %v3862, %v3950
        %v3952 = vpop.f32.mrf.mxu0
        %v3953 = vadd.f32 %v3864, %v3952
        %3954 = vmatmul.bf16.gmra.mxu0 %v3493
        %v3955 = vpop.f32.mrf.mxu0
        %v3956 = vadd.f32 %v3867, %v3955
        %v3957 = vpop.f32.mrf.mxu0
        %v3958 = vadd.f32 %v3869, %v3957
        %3959 = vmatmul.bf16.gmra.mxu0 %v3496
        %v3960 = vpop.f32.mrf.mxu0
        %v3961 = vadd.f32 %v3872, %v3960
        %v3962 = vpop.f32.mrf.mxu0
        %v3963 = vadd.f32 %v3874, %v3962
        %3964 = vmatmul.bf16.gmra.mxu0 %v3499
        %v3965 = vpop.f32.mrf.mxu0
        %v3966 = vadd.f32 %v3877, %v3965
        %v3967 = vpop.f32.mrf.mxu0
        %v3968 = vadd.f32 %v3879, %v3967
        %3969 = vmatmul.bf16.gmra.mxu0 %v3502
        %v3970 = vpop.f32.mrf.mxu0
        %v3971 = vadd.f32 %v3882, %v3970
        %v3972 = vpop.f32.mrf.mxu0
        %v3973 = vadd.f32 %v3884, %v3972
        %3974 = vmatmul.bf16.gmra.mxu0 %v3505
        %v3975 = vpop.f32.mrf.mxu0
        %v3976 = vadd.f32 %v3887, %v3975
        %v3977 = vpop.f32.mrf.mxu0
        %v3978 = vadd.f32 %v3889, %v3977
        %3979 = vmatmul.bf16.gmra.mxu0 %v3508
        %v3980 = vpop.f32.mrf.mxu0
        %v3981 = vadd.f32 %v3892, %v3980
        %v3982 = vpop.f32.mrf.mxu0
        %v3983 = vadd.f32 %v3894, %v3982
        %3984 = vdwg.mxu0
        %v3985 = vld [vmem:[#allocation4] sm:$0xff]
        %v3986 = vld [vmem:[#allocation4 + $0x8] sm:$0xff]
        %v3987 = vld [vmem:[#allocation4 + $0x10] sm:$0xff]
        %v3988 = vld [vmem:[#allocation4 + $0x18] sm:$0xff]
        %v3989 = vld [vmem:[#allocation4 + $0x20] sm:$0xff]
        %v3990 = vld [vmem:[#allocation4 + $0x28] sm:$0xff]
        %v3991 = vld [vmem:[#allocation4 + $0x30] sm:$0xff]
        %v3992 = vld [vmem:[#allocation4 + $0x38] sm:$0xff]
        %v3993 = vld [vmem:[#allocation4 + $0x40] sm:$0xff]
        %v3994 = vld [vmem:[#allocation4 + $0x48] sm:$0xff]
        %v3995 = vld [vmem:[#allocation4 + $0x50] sm:$0xff]
        %v3996 = vld [vmem:[#allocation4 + $0x58] sm:$0xff]
        %v3997 = vld [vmem:[#allocation4 + $0x60] sm:$0xff]
        %v3998 = vld [vmem:[#allocation4 + $0x68] sm:$0xff]
        %v3999 = vld [vmem:[#allocation4 + $0x70] sm:$0xff]
        %v4000 = vld [vmem:[#allocation4 + $0x78] sm:$0xff]
        %v4001 = vld [vmem:[#allocation4 + $0x80] sm:$0xff]
        %v4002 = vld [vmem:[#allocation4 + $0x88] sm:$0xff]
        %v4003 = vld [vmem:[#allocation4 + $0x90] sm:$0xff]
        %v4004 = vld [vmem:[#allocation4 + $0x98] sm:$0xff]
        %v4005 = vld [vmem:[#allocation4 + $0xa0] sm:$0xff]
        %v4006 = vld [vmem:[#allocation4 + $0xa8] sm:$0xff]
        %v4007 = vld [vmem:[#allocation4 + $0xb0] sm:$0xff]
        %v4008 = vld [vmem:[#allocation4 + $0xb8] sm:$0xff]
        %v4009 = vld [vmem:[#allocation4 + $0xc0] sm:$0xff]
        %v4010 = vld [vmem:[#allocation4 + $0xc8] sm:$0xff]
        %v4011 = vld [vmem:[#allocation4 + $0xd0] sm:$0xff]
        %v4012 = vld [vmem:[#allocation4 + $0xd8] sm:$0xff]
        %v4013 = vld [vmem:[#allocation4 + $0xe0] sm:$0xff]
        %v4014 = vld [vmem:[#allocation4 + $0xe8] sm:$0xff]
        %v4015 = vld [vmem:[#allocation4 + $0xf0] sm:$0xff]
        %v4016 = vld [vmem:[#allocation4 + $0xf8] sm:$0xff]
        %v4017 = vadd.f32 %v3985, %v3906
        %v4018 = vadd.f32 %v3986, %v3908
        %v4019 = vadd.f32 %v3987, %v3911
        %v4020 = vadd.f32 %v3988, %v3913
        %v4021 = vadd.f32 %v3989, %v3916
        %v4022 = vadd.f32 %v3990, %v3918
        %v4023 = vadd.f32 %v3991, %v3921
        %v4024 = vadd.f32 %v3992, %v3923
        %v4025 = vadd.f32 %v3993, %v3926
        %v4026 = vadd.f32 %v3994, %v3928
        %v4027 = vadd.f32 %v3995, %v3931
        %v4028 = vadd.f32 %v3996, %v3933
        %v4029 = vadd.f32 %v3997, %v3936
        %v4030 = vadd.f32 %v3998, %v3938
        %v4031 = vadd.f32 %v3999, %v3941
        %v4032 = vadd.f32 %v4000, %v3943
        %v4033 = vadd.f32 %v4001, %v3946
        %v4034 = vadd.f32 %v4002, %v3948
        %v4035 = vadd.f32 %v4003, %v3951
        %v4036 = vadd.f32 %v4004, %v3953
        %v4037 = vadd.f32 %v4005, %v3956
        %v4038 = vadd.f32 %v4006, %v3958
        %v4039 = vadd.f32 %v4007, %v3961
        %v4040 = vadd.f32 %v4008, %v3963
        %v4041 = vadd.f32 %v4009, %v3966
        %v4042 = vadd.f32 %v4010, %v3968
        %v4043 = vadd.f32 %v4011, %v3971
        %v4044 = vadd.f32 %v4012, %v3973
        %v4045 = vadd.f32 %v4013, %v3976
        %v4046 = vadd.f32 %v4014, %v3978
        %v4047 = vadd.f32 %v4015, %v3981
        %v4048 = vadd.f32 %v4016, %v3983
        %4049 = vst [vmem:[#allocation4] sm:$0xff] %v4017
        %4050 = vst [vmem:[#allocation4 + $0x8] sm:$0xff] %v4018
        %4051 = vst [vmem:[#allocation4 + $0x10] sm:$0xff] %v4019
        %4052 = vst [vmem:[#allocation4 + $0x18] sm:$0xff] %v4020
        %4053 = vst [vmem:[#allocation4 + $0x20] sm:$0xff] %v4021
        %4054 = vst [vmem:[#allocation4 + $0x28] sm:$0xff] %v4022
        %4055 = vst [vmem:[#allocation4 + $0x30] sm:$0xff] %v4023
        %4056 = vst [vmem:[#allocation4 + $0x38] sm:$0xff] %v4024
        %4057 = vst [vmem:[#allocation4 + $0x40] sm:$0xff] %v4025
        %4058 = vst [vmem:[#allocation4 + $0x48] sm:$0xff] %v4026
        %4059 = vst [vmem:[#allocation4 + $0x50] sm:$0xff] %v4027
        %4060 = vst [vmem:[#allocation4 + $0x58] sm:$0xff] %v4028
        %4061 = vst [vmem:[#allocation4 + $0x60] sm:$0xff] %v4029
        %4062 = vst [vmem:[#allocation4 + $0x68] sm:$0xff] %v4030
        %4063 = vst [vmem:[#allocation4 + $0x70] sm:$0xff] %v4031
        %4064 = vst [vmem:[#allocation4 + $0x78] sm:$0xff] %v4032
        %4065 = vst [vmem:[#allocation4 + $0x80] sm:$0xff] %v4033
        %4066 = vst [vmem:[#allocation4 + $0x88] sm:$0xff] %v4034
        %4067 = vst [vmem:[#allocation4 + $0x90] sm:$0xff] %v4035
        %4068 = vst [vmem:[#allocation4 + $0x98] sm:$0xff] %v4036
        %4069 = vst [vmem:[#allocation4 + $0xa0] sm:$0xff] %v4037
        %4070 = vst [vmem:[#allocation4 + $0xa8] sm:$0xff] %v4038
        %4071 = vst [vmem:[#allocation4 + $0xb0] sm:$0xff] %v4039
        %4072 = vst [vmem:[#allocation4 + $0xb8] sm:$0xff] %v4040
        %4073 = vst [vmem:[#allocation4 + $0xc0] sm:$0xff] %v4041
        %4074 = vst [vmem:[#allocation4 + $0xc8] sm:$0xff] %v4042
        %4075 = vst [vmem:[#allocation4 + $0xd0] sm:$0xff] %v4043
        %4076 = vst [vmem:[#allocation4 + $0xd8] sm:$0xff] %v4044
        %4077 = vst [vmem:[#allocation4 + $0xe0] sm:$0xff] %v4045
        %4078 = vst [vmem:[#allocation4 + $0xe8] sm:$0xff] %v4046
        %4079 = vst [vmem:[#allocation4 + $0xf0] sm:$0xff] %v4047
        %4080 = vst [vmem:[#allocation4 + $0xf8] sm:$0xff] %v4048
        %v4081 = vld [vmem:[#allocation4] sm:$0xff]
        %v4082 = vld [vmem:[#allocation4 + $0x8] sm:$0xff]
        %v4083 = vld [vmem:[#allocation4 + $0x10] sm:$0xff]
        %v4084 = vld [vmem:[#allocation4 + $0x18] sm:$0xff]
        %v4085 = vld [vmem:[#allocation4 + $0x20] sm:$0xff]
        %v4086 = vld [vmem:[#allocation4 + $0x28] sm:$0xff]
        %v4087 = vld [vmem:[#allocation4 + $0x30] sm:$0xff]
        %v4088 = vld [vmem:[#allocation4 + $0x38] sm:$0xff]
        %v4089 = vld [vmem:[#allocation4 + $0x40] sm:$0xff]
        %v4090 = vld [vmem:[#allocation4 + $0x48] sm:$0xff]
        %v4091 = vld [vmem:[#allocation4 + $0x50] sm:$0xff]
        %v4092 = vld [vmem:[#allocation4 + $0x58] sm:$0xff]
        %v4093 = vld [vmem:[#allocation4 + $0x60] sm:$0xff]
        %v4094 = vld [vmem:[#allocation4 + $0x68] sm:$0xff]
        %v4095 = vld [vmem:[#allocation4 + $0x70] sm:$0xff]
        %v4096 = vld [vmem:[#allocation4 + $0x78] sm:$0xff]
        %v4097 = vld [vmem:[#allocation4 + $0x80] sm:$0xff]
        %v4098 = vld [vmem:[#allocation4 + $0x88] sm:$0xff]
        %v4099 = vld [vmem:[#allocation4 + $0x90] sm:$0xff]
        %v4100 = vld [vmem:[#allocation4 + $0x98] sm:$0xff]
        %v4101 = vld [vmem:[#allocation4 + $0xa0] sm:$0xff]
        %v4102 = vld [vmem:[#allocation4 + $0xa8] sm:$0xff]
        %v4103 = vld [vmem:[#allocation4 + $0xb0] sm:$0xff]
        %v4104 = vld [vmem:[#allocation4 + $0xb8] sm:$0xff]
        %v4105 = vld [vmem:[#allocation4 + $0xc0] sm:$0xff]
        %v4106 = vld [vmem:[#allocation4 + $0xc8] sm:$0xff]
        %v4107 = vld [vmem:[#allocation4 + $0xd0] sm:$0xff]
        %v4108 = vld [vmem:[#allocation4 + $0xd8] sm:$0xff]
        %v4109 = vld [vmem:[#allocation4 + $0xe0] sm:$0xff]
        %v4110 = vld [vmem:[#allocation4 + $0xe8] sm:$0xff]
        %v4111 = vld [vmem:[#allocation4 + $0xf0] sm:$0xff]
        %v4112 = vld [vmem:[#allocation4 + $0xf8] sm:$0xff]
        %v4113 = vmax.f32 %v4081, 0.0
        %v4114 = vmax.f32 %v4082, 0.0
        %v4115 = vmax.f32 %v4083, 0.0
        %v4116 = vmax.f32 %v4084, 0.0
        %v4117 = vmax.f32 %v4085, 0.0
        %v4118 = vmax.f32 %v4086, 0.0
        %v4119 = vmax.f32 %v4087, 0.0
        %v4120 = vmax.f32 %v4088, 0.0
        %v4121 = vmax.f32 %v4089, 0.0
        %v4122 = vmax.f32 %v4090, 0.0
        %v4123 = vmax.f32 %v4091, 0.0
        %v4124 = vmax.f32 %v4092, 0.0
        %v4125 = vmax.f32 %v4093, 0.0
        %v4126 = vmax.f32 %v4094, 0.0
        %v4127 = vmax.f32 %v4095, 0.0
        %v4128 = vmax.f32 %v4096, 0.0
        %v4129 = vmax.f32 %v4097, 0.0
        %v4130 = vmax.f32 %v4098, 0.0
        %v4131 = vmax.f32 %v4099, 0.0
        %v4132 = vmax.f32 %v4100, 0.0
        %v4133 = vmax.f32 %v4101, 0.0
        %v4134 = vmax.f32 %v4102, 0.0
        %v4135 = vmax.f32 %v4103, 0.0
        %v4136 = vmax.f32 %v4104, 0.0
        %v4137 = vmax.f32 %v4105, 0.0
        %v4138 = vmax.f32 %v4106, 0.0
        %v4139 = vmax.f32 %v4107, 0.0
        %v4140 = vmax.f32 %v4108, 0.0
        %v4141 = vmax.f32 %v4109, 0.0
        %v4142 = vmax.f32 %v4110, 0.0
        %v4143 = vmax.f32 %v4111, 0.0
        %v4144 = vmax.f32 %v4112, 0.0
        %v4145 = vpack.c.bf16 %v4113, %v4113
        %v4146 = vpack.c.bf16 %v4114, %v4114
        %v4147 = vpack.c.bf16 %v4115, %v4115
        %v4148 = vpack.c.bf16 %v4116, %v4116
        %v4149 = vpack.c.bf16 %v4117, %v4117
        %v4150 = vpack.c.bf16 %v4118, %v4118
        %v4151 = vpack.c.bf16 %v4119, %v4119
        %v4152 = vpack.c.bf16 %v4120, %v4120
        %v4153 = vpack.c.bf16 %v4121, %v4121
        %v4154 = vpack.c.bf16 %v4122, %v4122
        %v4155 = vpack.c.bf16 %v4123, %v4123
        %v4156 = vpack.c.bf16 %v4124, %v4124
        %v4157 = vpack.c.bf16 %v4125, %v4125
        %v4158 = vpack.c.bf16 %v4126, %v4126
        %v4159 = vpack.c.bf16 %v4127, %v4127
        %v4160 = vpack.c.bf16 %v4128, %v4128
        %v4161 = vpack.c.bf16 %v4129, %v4129
        %v4162 = vpack.c.bf16 %v4130, %v4130
        %v4163 = vpack.c.bf16 %v4131, %v4131
        %v4164 = vpack.c.bf16 %v4132, %v4132
        %v4165 = vpack.c.bf16 %v4133, %v4133
        %v4166 = vpack.c.bf16 %v4134, %v4134
        %v4167 = vpack.c.bf16 %v4135, %v4135
        %v4168 = vpack.c.bf16 %v4136, %v4136
        %v4169 = vpack.c.bf16 %v4137, %v4137
        %v4170 = vpack.c.bf16 %v4138, %v4138
        %v4171 = vpack.c.bf16 %v4139, %v4139
        %v4172 = vpack.c.bf16 %v4140, %v4140
        %v4173 = vpack.c.bf16 %v4141, %v4141
        %v4174 = vpack.c.bf16 %v4142, %v4142
        %v4175 = vpack.c.bf16 %v4143, %v4143
        %v4176 = vpack.c.bf16 %v4144, %v4144
        %v4178 = vshrl.u32 %v4145, 16
        %v4180 = vrot.slane %v4178, 7
        %v4181 = vshll.u32 %v4145, 16
        %v4183 = vor.u32 %v4180, %v4181
        %v4184 = vrot.slane %v4180, 4
        %v4186 = vshrl.u32 %v4146, 16
        %v4188 = vrot.slane %v4186, 7
        %v4189 = vshll.u32 %v4146, 16
        %v4191 = vor.u32 %v4188, %v4189
        %v4192 = vsel %vm547, %v4184, %v4191
        %v4193 = vrot.slane %v4188, 4
        %v4195 = vshrl.u32 %v4147, 16
        %v4197 = vrot.slane %v4195, 7
        %v4198 = vshll.u32 %v4147, 16
        %v4200 = vor.u32 %v4197, %v4198
        %v4201 = vrot.slane %v4197, 4
        %v4203 = vshrl.u32 %v4148, 16
        %v4205 = vrot.slane %v4203, 7
        %v4206 = vshll.u32 %v4148, 16
        %v4208 = vor.u32 %v4205, %v4206
        %v4209 = vsel %vm547, %v4201, %v4208
        %v4210 = vrot.slane %v4205, 4
        %v4212 = vshrl.u32 %v4149, 16
        %v4214 = vrot.slane %v4212, 7
        %v4215 = vshll.u32 %v4149, 16
        %v4217 = vor.u32 %v4214, %v4215
        %v4218 = vrot.slane %v4214, 4
        %v4220 = vshrl.u32 %v4150, 16
        %v4222 = vrot.slane %v4220, 7
        %v4223 = vshll.u32 %v4150, 16
        %v4225 = vor.u32 %v4222, %v4223
        %v4226 = vsel %vm547, %v4218, %v4225
        %v4227 = vrot.slane %v4222, 4
        %v4229 = vshrl.u32 %v4151, 16
        %v4231 = vrot.slane %v4229, 7
        %v4232 = vshll.u32 %v4151, 16
        %v4234 = vor.u32 %v4231, %v4232
        %v4235 = vrot.slane %v4231, 4
        %v4237 = vshrl.u32 %v4152, 16
        %v4239 = vrot.slane %v4237, 7
        %v4240 = vshll.u32 %v4152, 16
        %v4242 = vor.u32 %v4239, %v4240
        %v4243 = vsel %vm547, %v4235, %v4242
        %v4244 = vrot.slane %v4239, 4
        %v4246 = vshrl.u32 %v4153, 16
        %v4248 = vrot.slane %v4246, 7
        %v4249 = vshll.u32 %v4153, 16
        %v4251 = vor.u32 %v4248, %v4249
        %v4252 = vrot.slane %v4248, 4
        %v4254 = vshrl.u32 %v4154, 16
        %v4256 = vrot.slane %v4254, 7
        %v4257 = vshll.u32 %v4154, 16
        %v4259 = vor.u32 %v4256, %v4257
        %v4260 = vsel %vm547, %v4252, %v4259
        %v4261 = vrot.slane %v4256, 4
        %v4263 = vshrl.u32 %v4155, 16
        %v4265 = vrot.slane %v4263, 7
        %v4266 = vshll.u32 %v4155, 16
        %v4268 = vor.u32 %v4265, %v4266
        %v4269 = vrot.slane %v4265, 4
        %v4271 = vshrl.u32 %v4156, 16
        %v4273 = vrot.slane %v4271, 7
        %v4274 = vshll.u32 %v4156, 16
        %v4276 = vor.u32 %v4273, %v4274
        %v4277 = vsel %vm547, %v4269, %v4276
        %v4278 = vrot.slane %v4273, 4
        %v4280 = vshrl.u32 %v4157, 16
        %v4282 = vrot.slane %v4280, 7
        %v4283 = vshll.u32 %v4157, 16
        %v4285 = vor.u32 %v4282, %v4283
        %v4286 = vrot.slane %v4282, 4
        %v4288 = vshrl.u32 %v4158, 16
        %v4290 = vrot.slane %v4288, 7
        %v4291 = vshll.u32 %v4158, 16
        %v4293 = vor.u32 %v4290, %v4291
        %v4294 = vsel %vm547, %v4286, %v4293
        %v4295 = vrot.slane %v4290, 4
        %v4297 = vshrl.u32 %v4159, 16
        %v4299 = vrot.slane %v4297, 7
        %v4300 = vshll.u32 %v4159, 16
        %v4302 = vor.u32 %v4299, %v4300
        %v4303 = vrot.slane %v4299, 4
        %v4305 = vshrl.u32 %v4160, 16
        %v4307 = vrot.slane %v4305, 7
        %v4308 = vshll.u32 %v4160, 16
        %v4310 = vor.u32 %v4307, %v4308
        %v4311 = vsel %vm547, %v4303, %v4310
        %v4312 = vrot.slane %v4307, 4
        %v4314 = vshrl.u32 %v4161, 16
        %v4316 = vrot.slane %v4314, 7
        %v4317 = vshll.u32 %v4161, 16
        %v4319 = vor.u32 %v4316, %v4317
        %v4320 = vrot.slane %v4316, 4
        %v4322 = vshrl.u32 %v4162, 16
        %v4324 = vrot.slane %v4322, 7
        %v4325 = vshll.u32 %v4162, 16
        %v4327 = vor.u32 %v4324, %v4325
        %v4328 = vsel %vm547, %v4320, %v4327
        %v4329 = vrot.slane %v4324, 4
        %v4331 = vshrl.u32 %v4163, 16
        %v4333 = vrot.slane %v4331, 7
        %v4334 = vshll.u32 %v4163, 16
        %v4336 = vor.u32 %v4333, %v4334
        %v4337 = vrot.slane %v4333, 4
        %v4339 = vshrl.u32 %v4164, 16
        %v4341 = vrot.slane %v4339, 7
        %v4342 = vshll.u32 %v4164, 16
        %v4344 = vor.u32 %v4341, %v4342
        %v4345 = vsel %vm547, %v4337, %v4344
        %v4346 = vrot.slane %v4341, 4
        %v4348 = vshrl.u32 %v4165, 16
        %v4350 = vrot.slane %v4348, 7
        %v4351 = vshll.u32 %v4165, 16
        %v4353 = vor.u32 %v4350, %v4351
        %v4354 = vrot.slane %v4350, 4
        %v4356 = vshrl.u32 %v4166, 16
        %v4358 = vrot.slane %v4356, 7
        %v4359 = vshll.u32 %v4166, 16
        %v4361 = vor.u32 %v4358, %v4359
        %v4362 = vsel %vm547, %v4354, %v4361
        %v4363 = vrot.slane %v4358, 4
        %v4365 = vshrl.u32 %v4167, 16
        %v4367 = vrot.slane %v4365, 7
        %v4368 = vshll.u32 %v4167, 16
        %v4370 = vor.u32 %v4367, %v4368
        %v4371 = vrot.slane %v4367, 4
        %v4373 = vshrl.u32 %v4168, 16
        %v4375 = vrot.slane %v4373, 7
        %v4376 = vshll.u32 %v4168, 16
        %v4378 = vor.u32 %v4375, %v4376
        %v4379 = vsel %vm547, %v4371, %v4378
        %v4380 = vrot.slane %v4375, 4
        %v4382 = vshrl.u32 %v4169, 16
        %v4384 = vrot.slane %v4382, 7
        %v4385 = vshll.u32 %v4169, 16
        %v4387 = vor.u32 %v4384, %v4385
        %v4388 = vrot.slane %v4384, 4
        %v4390 = vshrl.u32 %v4170, 16
        %v4392 = vrot.slane %v4390, 7
        %v4393 = vshll.u32 %v4170, 16
        %v4395 = vor.u32 %v4392, %v4393
        %v4396 = vsel %vm547, %v4388, %v4395
        %v4397 = vrot.slane %v4392, 4
        %v4399 = vshrl.u32 %v4171, 16
        %v4401 = vrot.slane %v4399, 7
        %v4402 = vshll.u32 %v4171, 16
        %v4404 = vor.u32 %v4401, %v4402
        %v4405 = vrot.slane %v4401, 4
        %v4407 = vshrl.u32 %v4172, 16
        %v4409 = vrot.slane %v4407, 7
        %v4410 = vshll.u32 %v4172, 16
        %v4412 = vor.u32 %v4409, %v4410
        %v4413 = vsel %vm547, %v4405, %v4412
        %v4414 = vrot.slane %v4409, 4
        %v4416 = vshrl.u32 %v4173, 16
        %v4418 = vrot.slane %v4416, 7
        %v4419 = vshll.u32 %v4173, 16
        %v4421 = vor.u32 %v4418, %v4419
        %v4422 = vrot.slane %v4418, 4
        %v4424 = vshrl.u32 %v4174, 16
        %v4426 = vrot.slane %v4424, 7
        %v4427 = vshll.u32 %v4174, 16
        %v4429 = vor.u32 %v4426, %v4427
        %v4430 = vsel %vm547, %v4422, %v4429
        %v4431 = vrot.slane %v4426, 4
        %v4433 = vshrl.u32 %v4175, 16
        %v4435 = vrot.slane %v4433, 7
        %v4436 = vshll.u32 %v4175, 16
        %v4438 = vor.u32 %v4435, %v4436
        %v4439 = vrot.slane %v4435, 4
        %v4441 = vshrl.u32 %v4176, 16
        %v4443 = vrot.slane %v4441, 7
        %v4444 = vshll.u32 %v4176, 16
        %v4446 = vor.u32 %v4443, %v4444
        %v4447 = vsel %vm547, %v4439, %v4446
        %v4448 = vrot.slane %v4443, 4
        %s4497 = scalar_lea.vmem [#allocation3], 12
        %v4498 = vld [vmem:[%s4497] sm:$0xf]
        %v4499 = vsel %vm870, %v4183, %v4498
        %4500 = vst [vmem:[%s4497] sm:$0xf] %v4499
        %4501 = vst [vmem:[%s4497 + $0x4] sm:$0xf] %v4192
        %v4502 = vld [vmem:[%s4497 + $0x8] sm:$0x1]
        %v4503 = vsel %vm288, %v4193, %v4502
        %4504 = vst [vmem:[%s4497 + $0x8] sm:$0x1] %v4503
        %v4505 = vld [vmem:[%s4497 + $0xc] sm:$0xf]
        %v4506 = vsel %vm870, %v4200, %v4505
        %4507 = vst [vmem:[%s4497 + $0xc] sm:$0xf] %v4506
        %4508 = vst [vmem:[%s4497 + $0x10] sm:$0xf] %v4209
        %v4509 = vld [vmem:[%s4497 + $0x14] sm:$0x1]
        %v4510 = vsel %vm288, %v4210, %v4509
        %4511 = vst [vmem:[%s4497 + $0x14] sm:$0x1] %v4510
        %v4512 = vld [vmem:[%s4497 + $0x18] sm:$0xf]
        %v4513 = vsel %vm870, %v4217, %v4512
        %4514 = vst [vmem:[%s4497 + $0x18] sm:$0xf] %v4513
        %4515 = vst [vmem:[%s4497 + $0x1c] sm:$0xf] %v4226
        %v4516 = vld [vmem:[%s4497 + $0x20] sm:$0x1]
        %v4517 = vsel %vm288, %v4227, %v4516
        %4518 = vst [vmem:[%s4497 + $0x20] sm:$0x1] %v4517
        %v4519 = vld [vmem:[%s4497 + $0x24] sm:$0xf]
        %v4520 = vsel %vm870, %v4234, %v4519
        %4521 = vst [vmem:[%s4497 + $0x24] sm:$0xf] %v4520
        %4522 = vst [vmem:[%s4497 + $0x28] sm:$0xf] %v4243
        %v4523 = vld [vmem:[%s4497 + $0x2c] sm:$0x1]
        %v4524 = vsel %vm288, %v4244, %v4523
        %4525 = vst [vmem:[%s4497 + $0x2c] sm:$0x1] %v4524
        %v4526 = vld [vmem:[%s4497 + $0x30] sm:$0xf]
        %v4527 = vsel %vm870, %v4251, %v4526
        %4528 = vst [vmem:[%s4497 + $0x30] sm:$0xf] %v4527
        %4529 = vst [vmem:[%s4497 + $0x34] sm:$0xf] %v4260
        %v4530 = vld [vmem:[%s4497 + $0x38] sm:$0x1]
        %v4531 = vsel %vm288, %v4261, %v4530
        %4532 = vst [vmem:[%s4497 + $0x38] sm:$0x1] %v4531
        %v4533 = vld [vmem:[%s4497 + $0x3c] sm:$0xf]
        %v4534 = vsel %vm870, %v4268, %v4533
        %4535 = vst [vmem:[%s4497 + $0x3c] sm:$0xf] %v4534
        %4536 = vst [vmem:[%s4497 + $0x40] sm:$0xf] %v4277
        %v4537 = vld [vmem:[%s4497 + $0x44] sm:$0x1]
        %v4538 = vsel %vm288, %v4278, %v4537
        %4539 = vst [vmem:[%s4497 + $0x44] sm:$0x1] %v4538
        %v4540 = vld [vmem:[%s4497 + $0x48] sm:$0xf]
        %v4541 = vsel %vm870, %v4285, %v4540
        %4542 = vst [vmem:[%s4497 + $0x48] sm:$0xf] %v4541
        %4543 = vst [vmem:[%s4497 + $0x4c] sm:$0xf] %v4294
        %v4544 = vld [vmem:[%s4497 + $0x50] sm:$0x1]
        %v4545 = vsel %vm288, %v4295, %v4544
        %4546 = vst [vmem:[%s4497 + $0x50] sm:$0x1] %v4545
        %v4547 = vld [vmem:[%s4497 + $0x54] sm:$0xf]
        %v4548 = vsel %vm870, %v4302, %v4547
        %4549 = vst [vmem:[%s4497 + $0x54] sm:$0xf] %v4548
        %4550 = vst [vmem:[%s4497 + $0x58] sm:$0xf] %v4311
        %v4551 = vld [vmem:[%s4497 + $0x5c] sm:$0x1]
        %v4552 = vsel %vm288, %v4312, %v4551
        %4553 = vst [vmem:[%s4497 + $0x5c] sm:$0x1] %v4552
        %v4554 = vld [vmem:[%s4497 + $0x60] sm:$0xf]
        %v4555 = vsel %vm870, %v4319, %v4554
        %4556 = vst [vmem:[%s4497 + $0x60] sm:$0xf] %v4555
        %4557 = vst [vmem:[%s4497 + $0x64] sm:$0xf] %v4328
        %v4558 = vld [vmem:[%s4497 + $0x68] sm:$0x1]
        %v4559 = vsel %vm288, %v4329, %v4558
        %4560 = vst [vmem:[%s4497 + $0x68] sm:$0x1] %v4559
        %v4561 = vld [vmem:[%s4497 + $0x6c] sm:$0xf]
        %v4562 = vsel %vm870, %v4336, %v4561
        %4563 = vst [vmem:[%s4497 + $0x6c] sm:$0xf] %v4562
        %4564 = vst [vmem:[%s4497 + $0x70] sm:$0xf] %v4345
        %v4565 = vld [vmem:[%s4497 + $0x74] sm:$0x1]
        %v4566 = vsel %vm288, %v4346, %v4565
        %4567 = vst [vmem:[%s4497 + $0x74] sm:$0x1] %v4566
        %v4568 = vld [vmem:[%s4497 + $0x78] sm:$0xf]
        %v4569 = vsel %vm870, %v4353, %v4568
        %4570 = vst [vmem:[%s4497 + $0x78] sm:$0xf] %v4569
        %4571 = vst [vmem:[%s4497 + $0x7c] sm:$0xf] %v4362
        %v4572 = vld [vmem:[%s4497 + $0x80] sm:$0x1]
        %v4573 = vsel %vm288, %v4363, %v4572
        %4574 = vst [vmem:[%s4497 + $0x80] sm:$0x1] %v4573
        %v4575 = vld [vmem:[%s4497 + $0x84] sm:$0xf]
        %v4576 = vsel %vm870, %v4370, %v4575
        %4577 = vst [vmem:[%s4497 + $0x84] sm:$0xf] %v4576
        %4578 = vst [vmem:[%s4497 + $0x88] sm:$0xf] %v4379
        %v4579 = vld [vmem:[%s4497 + $0x8c] sm:$0x1]
        %v4580 = vsel %vm288, %v4380, %v4579
        %4581 = vst [vmem:[%s4497 + $0x8c] sm:$0x1] %v4580
        %v4582 = vld [vmem:[%s4497 + $0x90] sm:$0xf]
        %v4583 = vsel %vm870, %v4387, %v4582
        %4584 = vst [vmem:[%s4497 + $0x90] sm:$0xf] %v4583
        %4585 = vst [vmem:[%s4497 + $0x94] sm:$0xf] %v4396
        %v4586 = vld [vmem:[%s4497 + $0x98] sm:$0x1]
        %v4587 = vsel %vm288, %v4397, %v4586
        %4588 = vst [vmem:[%s4497 + $0x98] sm:$0x1] %v4587
        %v4589 = vld [vmem:[%s4497 + $0x9c] sm:$0xf]
        %v4590 = vsel %vm870, %v4404, %v4589
        %4591 = vst [vmem:[%s4497 + $0x9c] sm:$0xf] %v4590
        %4592 = vst [vmem:[%s4497 + $0xa0] sm:$0xf] %v4413
        %v4593 = vld [vmem:[%s4497 + $0xa4] sm:$0x1]
        %v4594 = vsel %vm288, %v4414, %v4593
        %4595 = vst [vmem:[%s4497 + $0xa4] sm:$0x1] %v4594
        %v4596 = vld [vmem:[%s4497 + $0xa8] sm:$0xf]
        %v4597 = vsel %vm870, %v4421, %v4596
        %4598 = vst [vmem:[%s4497 + $0xa8] sm:$0xf] %v4597
        %4599 = vst [vmem:[%s4497 + $0xac] sm:$0xf] %v4430
        %v4600 = vld [vmem:[%s4497 + $0xb0] sm:$0x1]
        %v4601 = vsel %vm288, %v4431, %v4600
        %4602 = vst [vmem:[%s4497 + $0xb0] sm:$0x1] %v4601
        %v4603 = vld [vmem:[%s4497 + $0xb4] sm:$0xf]
        %v4604 = vsel %vm870, %v4438, %v4603
        %4605 = vst [vmem:[%s4497 + $0xb4] sm:$0xf] %v4604
        %4606 = vst [vmem:[%s4497 + $0xb8] sm:$0xf] %v4447
        %v4607 = vld [vmem:[%s4497 + $0xbc] sm:$0x1]
        %v4608 = vsel %vm288, %v4448, %v4607
        %4609 = vst [vmem:[%s4497 + $0xbc] sm:$0x1] %v4608
        %v4610 = vld [vmem:[%s4] sm:$0x1]
        %v4612 = vperm.slane %v4610, 0
        %4614 = vst [vmem:[#allocation4] sm:$0xff] %v4612
        %4615 = vst [vmem:[#allocation4 + $0x8] sm:$0xff] %v4612
        %4616 = vst [vmem:[#allocation4 + $0x10] sm:$0xff] %v4612
        %4617 = vst [vmem:[#allocation4 + $0x18] sm:$0xff] %v4612
        %4618 = vst [vmem:[#allocation4 + $0x20] sm:$0xff] %v4612
        %4619 = vst [vmem:[#allocation4 + $0x28] sm:$0xff] %v4612
        %4620 = vst [vmem:[#allocation4 + $0x30] sm:$0xff] %v4612
        %4621 = vst [vmem:[#allocation4 + $0x38] sm:$0xff] %v4612
        %4622 = vst [vmem:[#allocation4 + $0x40] sm:$0xff] %v4612
        %4623 = vst [vmem:[#allocation4 + $0x48] sm:$0xff] %v4612
        %4624 = vst [vmem:[#allocation4 + $0x50] sm:$0xff] %v4612
        %4625 = vst [vmem:[#allocation4 + $0x58] sm:$0xff] %v4612
        %4626 = vst [vmem:[#allocation4 + $0x60] sm:$0xff] %v4612
        %4627 = vst [vmem:[#allocation4 + $0x68] sm:$0xff] %v4612
        %4628 = vst [vmem:[#allocation4 + $0x70] sm:$0xff] %v4612
        %4629 = vst [vmem:[#allocation4 + $0x78] sm:$0xff] %v4612
        %4630 = vst [vmem:[#allocation4 + $0x80] sm:$0xff] %v4612
        %4631 = vst [vmem:[#allocation4 + $0x88] sm:$0xff] %v4612
        %4632 = vst [vmem:[#allocation4 + $0x90] sm:$0xff] %v4612
        %4633 = vst [vmem:[#allocation4 + $0x98] sm:$0xff] %v4612
        %4634 = vst [vmem:[#allocation4 + $0xa0] sm:$0xff] %v4612
        %4635 = vst [vmem:[#allocation4 + $0xa8] sm:$0xff] %v4612
        %4636 = vst [vmem:[#allocation4 + $0xb0] sm:$0xff] %v4612
        %4637 = vst [vmem:[#allocation4 + $0xb8] sm:$0xff] %v4612
        %4638 = vst [vmem:[#allocation4 + $0xc0] sm:$0xff] %v4612
        %4639 = vst [vmem:[#allocation4 + $0xc8] sm:$0xff] %v4612
        %4640 = vst [vmem:[#allocation4 + $0xd0] sm:$0xff] %v4612
        %4641 = vst [vmem:[#allocation4 + $0xd8] sm:$0xff] %v4612
        %4642 = vst [vmem:[#allocation4 + $0xe0] sm:$0xff] %v4612
        %4643 = vst [vmem:[#allocation4 + $0xe8] sm:$0xff] %v4612
        %4644 = vst [vmem:[#allocation4 + $0xf0] sm:$0xff] %v4612
        %4645 = vst [vmem:[#allocation4 + $0xf8] sm:$0xff] %v4612
        %v4646 = vld [vmem:[#allocation3] sm:$0xf]
        %v4647 = vld [vmem:[#allocation3 + $0x4] sm:$0xf]
        %v4648 = vld [vmem:[#allocation3 + $0x8] sm:$0x1]
        %v4649 = vld [vmem:[#allocation3 + $0xc] sm:$0xf]
        %v4650 = vld [vmem:[#allocation3 + $0x10] sm:$0xf]
        %v4651 = vld [vmem:[#allocation3 + $0x14] sm:$0x1]
        %v4652 = vld [vmem:[#allocation3 + $0x18] sm:$0xf]
        %v4653 = vld [vmem:[#allocation3 + $0x1c] sm:$0xf]
        %v4654 = vld [vmem:[#allocation3 + $0x20] sm:$0x1]
        %v4655 = vld [vmem:[#allocation3 + $0x24] sm:$0xf]
        %v4656 = vld [vmem:[#allocation3 + $0x28] sm:$0xf]
        %v4657 = vld [vmem:[#allocation3 + $0x2c] sm:$0x1]
        %v4658 = vld [vmem:[#allocation3 + $0x30] sm:$0xf]
        %v4659 = vld [vmem:[#allocation3 + $0x34] sm:$0xf]
        %v4660 = vld [vmem:[#allocation3 + $0x38] sm:$0x1]
        %v4661 = vld [vmem:[#allocation3 + $0x3c] sm:$0xf]
        %v4662 = vld [vmem:[#allocation3 + $0x40] sm:$0xf]
        %v4663 = vld [vmem:[#allocation3 + $0x44] sm:$0x1]
        %v4664 = vld [vmem:[#allocation3 + $0x48] sm:$0xf]
        %v4665 = vld [vmem:[#allocation3 + $0x4c] sm:$0xf]
        %v4666 = vld [vmem:[#allocation3 + $0x50] sm:$0x1]
        %v4667 = vld [vmem:[#allocation3 + $0x54] sm:$0xf]
        %v4668 = vld [vmem:[#allocation3 + $0x58] sm:$0xf]
        %v4669 = vld [vmem:[#allocation3 + $0x5c] sm:$0x1]
        %v4670 = vld [vmem:[#allocation3 + $0x60] sm:$0xf]
        %v4671 = vld [vmem:[#allocation3 + $0x64] sm:$0xf]
        %v4672 = vld [vmem:[#allocation3 + $0x68] sm:$0x1]
        %v4673 = vld [vmem:[#allocation3 + $0x6c] sm:$0xf]
        %v4674 = vld [vmem:[#allocation3 + $0x70] sm:$0xf]
        %v4675 = vld [vmem:[#allocation3 + $0x74] sm:$0x1]
        %v4676 = vld [vmem:[#allocation3 + $0x78] sm:$0xf]
        %v4677 = vld [vmem:[#allocation3 + $0x7c] sm:$0xf]
        %v4678 = vld [vmem:[#allocation3 + $0x80] sm:$0x1]
        %v4679 = vld [vmem:[#allocation3 + $0x84] sm:$0xf]
        %v4680 = vld [vmem:[#allocation3 + $0x88] sm:$0xf]
        %v4681 = vld [vmem:[#allocation3 + $0x8c] sm:$0x1]
        %v4682 = vld [vmem:[#allocation3 + $0x90] sm:$0xf]
        %v4683 = vld [vmem:[#allocation3 + $0x94] sm:$0xf]
        %v4684 = vld [vmem:[#allocation3 + $0x98] sm:$0x1]
        %v4685 = vld [vmem:[#allocation3 + $0x9c] sm:$0xf]
        %v4686 = vld [vmem:[#allocation3 + $0xa0] sm:$0xf]
        %v4687 = vld [vmem:[#allocation3 + $0xa4] sm:$0x1]
        %v4688 = vld [vmem:[#allocation3 + $0xa8] sm:$0xf]
        %v4689 = vld [vmem:[#allocation3 + $0xac] sm:$0xf]
        %v4690 = vld [vmem:[#allocation3 + $0xb0] sm:$0x1]
        %v4691 = vld [vmem:[#allocation3 + $0xb4] sm:$0xf]
        %v4692 = vld [vmem:[#allocation3 + $0xb8] sm:$0xf]
        %v4693 = vld [vmem:[#allocation3 + $0xbc] sm:$0x1]
        %v4726 = vunpack.c.l.b16 %v4646
        %v4727 = vunpack.c.l.b16 %v4647
        %v4728 = vunpack.c.l.b16 %v4649
        %v4729 = vunpack.c.l.b16 %v4650
        %v4730 = vunpack.c.l.b16 %v4652
        %v4731 = vunpack.c.l.b16 %v4653
        %v4732 = vunpack.c.l.b16 %v4655
        %v4733 = vunpack.c.l.b16 %v4656
        %v4734 = vunpack.c.l.b16 %v4658
        %v4735 = vunpack.c.l.b16 %v4659
        %v4736 = vunpack.c.l.b16 %v4661
        %v4737 = vunpack.c.l.b16 %v4662
        %v4738 = vunpack.c.l.b16 %v4664
        %v4739 = vunpack.c.l.b16 %v4665
        %v4740 = vunpack.c.l.b16 %v4667
        %v4741 = vunpack.c.l.b16 %v4668
        %v4742 = vunpack.c.l.b16 %v4670
        %v4743 = vunpack.c.l.b16 %v4671
        %v4744 = vunpack.c.l.b16 %v4673
        %v4745 = vunpack.c.l.b16 %v4674
        %v4746 = vunpack.c.l.b16 %v4676
        %v4747 = vunpack.c.l.b16 %v4677
        %v4748 = vunpack.c.l.b16 %v4679
        %v4749 = vunpack.c.l.b16 %v4680
        %v4750 = vunpack.c.l.b16 %v4682
        %v4751 = vunpack.c.l.b16 %v4683
        %v4752 = vunpack.c.l.b16 %v4685
        %v4753 = vunpack.c.l.b16 %v4686
        %v4754 = vunpack.c.l.b16 %v4688
        %v4755 = vunpack.c.l.b16 %v4689
        %v4756 = vunpack.c.l.b16 %v4691
        %v4757 = vunpack.c.l.b16 %v4692
        %v4758 = vpack.c.b16 %v4727, %v4726
        %v4759 = vpack.c.b16 %v4729, %v4728
        %v4760 = vpack.c.b16 %v4731, %v4730
        %v4761 = vpack.c.b16 %v4733, %v4732
        %v4762 = vpack.c.b16 %v4735, %v4734
        %v4763 = vpack.c.b16 %v4737, %v4736
        %v4764 = vpack.c.b16 %v4739, %v4738
        %v4765 = vpack.c.b16 %v4741, %v4740
        %v4766 = vpack.c.b16 %v4743, %v4742
        %v4767 = vpack.c.b16 %v4745, %v4744
        %v4768 = vpack.c.b16 %v4747, %v4746
        %v4769 = vpack.c.b16 %v4749, %v4748
        %v4770 = vpack.c.b16 %v4751, %v4750
        %v4771 = vpack.c.b16 %v4753, %v4752
        %v4772 = vpack.c.b16 %v4755, %v4754
        %v4773 = vpack.c.b16 %v4757, %v4756
        %v4806 = vunpack.c.l.b16 %v4648
        %v4807 = vunpack.c.l.b16 %v4651
        %v4808 = vunpack.c.l.b16 %v4654
        %v4809 = vunpack.c.l.b16 %v4657
        %v4810 = vunpack.c.l.b16 %v4660
        %v4811 = vunpack.c.l.b16 %v4663
        %v4812 = vunpack.c.l.b16 %v4666
        %v4813 = vunpack.c.l.b16 %v4669
        %v4814 = vunpack.c.l.b16 %v4672
        %v4815 = vunpack.c.l.b16 %v4675
        %v4816 = vunpack.c.l.b16 %v4678
        %v4817 = vunpack.c.l.b16 %v4681
        %v4818 = vunpack.c.l.b16 %v4684
        %v4819 = vunpack.c.l.b16 %v4687
        %v4820 = vunpack.c.l.b16 %v4690
        %v4821 = vunpack.c.l.b16 %v4693
        %v4822 = vpack.c.b16 %v4806, %v4806
        %v4823 = vpack.c.b16 %v4807, %v4807
        %v4824 = vpack.c.b16 %v4808, %v4808
        %v4825 = vpack.c.b16 %v4809, %v4809
        %v4826 = vpack.c.b16 %v4810, %v4810
        %v4827 = vpack.c.b16 %v4811, %v4811
        %v4828 = vpack.c.b16 %v4812, %v4812
        %v4829 = vpack.c.b16 %v4813, %v4813
        %v4830 = vpack.c.b16 %v4814, %v4814
        %v4831 = vpack.c.b16 %v4815, %v4815
        %v4832 = vpack.c.b16 %v4816, %v4816
        %v4833 = vpack.c.b16 %v4817, %v4817
        %v4834 = vpack.c.b16 %v4818, %v4818
        %v4835 = vpack.c.b16 %v4819, %v4819
        %v4836 = vpack.c.b16 %v4820, %v4820
        %v4837 = vpack.c.b16 %v4821, %v4821
        %v4839 = vshrl.u32 %v4758, 16
        %v4841 = vshll.u32 %v4758, 16
        %v4843 = vrot.slane %v4841, 1
        %v4844 = vor.u32 %v4839, %v4843
        %v4846 = vshll.u32 %v4822, 16
        %v4848 = vrot.slane %v4846, 1
        %v4849 = vsel %vm1211, %v4844, %v4848
        %v4851 = vshrl.u32 %v4759, 16
        %v4853 = vshll.u32 %v4759, 16
        %v4855 = vrot.slane %v4853, 1
        %v4856 = vor.u32 %v4851, %v4855
        %v4858 = vshll.u32 %v4823, 16
        %v4860 = vrot.slane %v4858, 1
        %v4861 = vsel %vm1211, %v4856, %v4860
        %v4863 = vshrl.u32 %v4760, 16
        %v4865 = vshll.u32 %v4760, 16
        %v4867 = vrot.slane %v4865, 1
        %v4868 = vor.u32 %v4863, %v4867
        %v4870 = vshll.u32 %v4824, 16
        %v4872 = vrot.slane %v4870, 1
        %v4873 = vsel %vm1211, %v4868, %v4872
        %v4875 = vshrl.u32 %v4761, 16
        %v4877 = vshll.u32 %v4761, 16
        %v4879 = vrot.slane %v4877, 1
        %v4880 = vor.u32 %v4875, %v4879
        %v4882 = vshll.u32 %v4825, 16
        %v4884 = vrot.slane %v4882, 1
        %v4885 = vsel %vm1211, %v4880, %v4884
        %v4887 = vshrl.u32 %v4762, 16
        %v4889 = vshll.u32 %v4762, 16
        %v4891 = vrot.slane %v4889, 1
        %v4892 = vor.u32 %v4887, %v4891
        %v4894 = vshll.u32 %v4826, 16
        %v4896 = vrot.slane %v4894, 1
        %v4897 = vsel %vm1211, %v4892, %v4896
        %v4899 = vshrl.u32 %v4763, 16
        %v4901 = vshll.u32 %v4763, 16
        %v4903 = vrot.slane %v4901, 1
        %v4904 = vor.u32 %v4899, %v4903
        %v4906 = vshll.u32 %v4827, 16
        %v4908 = vrot.slane %v4906, 1
        %v4909 = vsel %vm1211, %v4904, %v4908
        %v4911 = vshrl.u32 %v4764, 16
        %v4913 = vshll.u32 %v4764, 16
        %v4915 = vrot.slane %v4913, 1
        %v4916 = vor.u32 %v4911, %v4915
        %v4918 = vshll.u32 %v4828, 16
        %v4920 = vrot.slane %v4918, 1
        %v4921 = vsel %vm1211, %v4916, %v4920
        %v4923 = vshrl.u32 %v4765, 16
        %v4925 = vshll.u32 %v4765, 16
        %v4927 = vrot.slane %v4925, 1
        %v4928 = vor.u32 %v4923, %v4927
        %v4930 = vshll.u32 %v4829, 16
        %v4932 = vrot.slane %v4930, 1
        %v4933 = vsel %vm1211, %v4928, %v4932
        %v4935 = vshrl.u32 %v4766, 16
        %v4937 = vshll.u32 %v4766, 16
        %v4939 = vrot.slane %v4937, 1
        %v4940 = vor.u32 %v4935, %v4939
        %v4942 = vshll.u32 %v4830, 16
        %v4944 = vrot.slane %v4942, 1
        %v4945 = vsel %vm1211, %v4940, %v4944
        %v4947 = vshrl.u32 %v4767, 16
        %v4949 = vshll.u32 %v4767, 16
        %v4951 = vrot.slane %v4949, 1
        %v4952 = vor.u32 %v4947, %v4951
        %v4954 = vshll.u32 %v4831, 16
        %v4956 = vrot.slane %v4954, 1
        %v4957 = vsel %vm1211, %v4952, %v4956
        %v4959 = vshrl.u32 %v4768, 16
        %v4961 = vshll.u32 %v4768, 16
        %v4963 = vrot.slane %v4961, 1
        %v4964 = vor.u32 %v4959, %v4963
        %v4966 = vshll.u32 %v4832, 16
        %v4968 = vrot.slane %v4966, 1
        %v4969 = vsel %vm1211, %v4964, %v4968
        %v4971 = vshrl.u32 %v4769, 16
        %v4973 = vshll.u32 %v4769, 16
        %v4975 = vrot.slane %v4973, 1
        %v4976 = vor.u32 %v4971, %v4975
        %v4978 = vshll.u32 %v4833, 16
        %v4980 = vrot.slane %v4978, 1
        %v4981 = vsel %vm1211, %v4976, %v4980
        %v4983 = vshrl.u32 %v4770, 16
        %v4985 = vshll.u32 %v4770, 16
        %v4987 = vrot.slane %v4985, 1
        %v4988 = vor.u32 %v4983, %v4987
        %v4990 = vshll.u32 %v4834, 16
        %v4992 = vrot.slane %v4990, 1
        %v4993 = vsel %vm1211, %v4988, %v4992
        %v4995 = vshrl.u32 %v4771, 16
        %v4997 = vshll.u32 %v4771, 16
        %v4999 = vrot.slane %v4997, 1
        %v5000 = vor.u32 %v4995, %v4999
        %v5002 = vshll.u32 %v4835, 16
        %v5004 = vrot.slane %v5002, 1
        %v5005 = vsel %vm1211, %v5000, %v5004
        %v5007 = vshrl.u32 %v4772, 16
        %v5009 = vshll.u32 %v4772, 16
        %v5011 = vrot.slane %v5009, 1
        %v5012 = vor.u32 %v5007, %v5011
        %v5014 = vshll.u32 %v4836, 16
        %v5016 = vrot.slane %v5014, 1
        %v5017 = vsel %vm1211, %v5012, %v5016
        %v5019 = vshrl.u32 %v4773, 16
        %v5021 = vshll.u32 %v4773, 16
        %v5023 = vrot.slane %v5021, 1
        %v5024 = vor.u32 %v5019, %v5023
        %v5026 = vshll.u32 %v4837, 16
        %v5028 = vrot.slane %v5026, 1
        %v5029 = vsel %vm1211, %v5024, %v5028
        %v5046 = vrot.slane %v4758, 1
        %v5047 = vrot.slane %v4822, 1
        %v5048 = vsel %vm1420, %v5046, %v5047
        %v5049 = vrot.slane %v4759, 1
        %v5050 = vrot.slane %v4823, 1
        %v5051 = vsel %vm1420, %v5049, %v5050
        %v5052 = vrot.slane %v4760, 1
        %v5053 = vrot.slane %v4824, 1
        %v5054 = vsel %vm1420, %v5052, %v5053
        %v5055 = vrot.slane %v4761, 1
        %v5056 = vrot.slane %v4825, 1
        %v5057 = vsel %vm1420, %v5055, %v5056
        %v5058 = vrot.slane %v4762, 1
        %v5059 = vrot.slane %v4826, 1
        %v5060 = vsel %vm1420, %v5058, %v5059
        %v5061 = vrot.slane %v4763, 1
        %v5062 = vrot.slane %v4827, 1
        %v5063 = vsel %vm1420, %v5061, %v5062
        %v5064 = vrot.slane %v4764, 1
        %v5065 = vrot.slane %v4828, 1
        %v5066 = vsel %vm1420, %v5064, %v5065
        %v5067 = vrot.slane %v4765, 1
        %v5068 = vrot.slane %v4829, 1
        %v5069 = vsel %vm1420, %v5067, %v5068
        %v5070 = vrot.slane %v4766, 1
        %v5071 = vrot.slane %v4830, 1
        %v5072 = vsel %vm1420, %v5070, %v5071
        %v5073 = vrot.slane %v4767, 1
        %v5074 = vrot.slane %v4831, 1
        %v5075 = vsel %vm1420, %v5073, %v5074
        %v5076 = vrot.slane %v4768, 1
        %v5077 = vrot.slane %v4832, 1
        %v5078 = vsel %vm1420, %v5076, %v5077
        %v5079 = vrot.slane %v4769, 1
        %v5080 = vrot.slane %v4833, 1
        %v5081 = vsel %vm1420, %v5079, %v5080
        %v5082 = vrot.slane %v4770, 1
        %v5083 = vrot.slane %v4834, 1
        %v5084 = vsel %vm1420, %v5082, %v5083
        %v5085 = vrot.slane %v4771, 1
        %v5086 = vrot.slane %v4835, 1
        %v5087 = vsel %vm1420, %v5085, %v5086
        %v5088 = vrot.slane %v4772, 1
        %v5089 = vrot.slane %v4836, 1
        %v5090 = vsel %vm1420, %v5088, %v5089
        %v5091 = vrot.slane %v4773, 1
        %v5092 = vrot.slane %v4837, 1
        %v5093 = vsel %vm1420, %v5091, %v5092
        %v5110 = vld [vmem:[#allocation10] sm:$0xf]
        %v5111 = vld [vmem:[#allocation10 + $0x4] sm:$0xf]
        %v5112 = vld [vmem:[#allocation10 + $0x8] sm:$0xf]
        %v5113 = vld [vmem:[#allocation10 + $0xc] sm:$0xf]
        %v5114 = vld [vmem:[#allocation10 + $0x10] sm:$0xf]
        %v5115 = vld [vmem:[#allocation10 + $0x14] sm:$0xf]
        %v5116 = vld [vmem:[#allocation10 + $0x18] sm:$0xf]
        %v5117 = vld [vmem:[#allocation10 + $0x1c] sm:$0xf]
        %v5118 = vld [vmem:[#allocation10 + $0x20] sm:$0xf]
        %v5119 = vld [vmem:[#allocation10 + $0x24] sm:$0xf]
        %v5120 = vld [vmem:[#allocation10 + $0x28] sm:$0xf]
        %v5121 = vld [vmem:[#allocation10 + $0x2c] sm:$0xf]
        %v5122 = vld [vmem:[#allocation10 + $0x30] sm:$0xf]
        %v5123 = vld [vmem:[#allocation10 + $0x34] sm:$0xf]
        %v5124 = vld [vmem:[#allocation10 + $0x38] sm:$0xf]
        %v5125 = vld [vmem:[#allocation10 + $0x3c] sm:$0xf]
        %v5126 = vld [vmem:[#allocation10 + $0x40] sm:$0xf]
        %v5127 = vld [vmem:[#allocation10 + $0x44] sm:$0xf]
        %v5128 = vld [vmem:[#allocation10 + $0x48] sm:$0xf]
        %v5129 = vld [vmem:[#allocation10 + $0x4c] sm:$0xf]
        %v5130 = vld [vmem:[#allocation10 + $0x50] sm:$0xf]
        %v5131 = vld [vmem:[#allocation10 + $0x54] sm:$0xf]
        %v5132 = vld [vmem:[#allocation10 + $0x58] sm:$0xf]
        %v5133 = vld [vmem:[#allocation10 + $0x5c] sm:$0xf]
        %v5134 = vld [vmem:[#allocation10 + $0x60] sm:$0xf]
        %v5135 = vld [vmem:[#allocation10 + $0x64] sm:$0xf]
        %v5136 = vld [vmem:[#allocation10 + $0x68] sm:$0xf]
        %v5137 = vld [vmem:[#allocation10 + $0x6c] sm:$0xf]
        %v5138 = vld [vmem:[#allocation10 + $0x70] sm:$0xf]
        %v5139 = vld [vmem:[#allocation10 + $0x74] sm:$0xf]
        %v5140 = vld [vmem:[#allocation10 + $0x78] sm:$0xf]
        %v5141 = vld [vmem:[#allocation10 + $0x7c] sm:$0xf]
        %v5142 = vld [vmem:[#allocation10 + $0x80] sm:$0xf]
        %v5143 = vld [vmem:[#allocation10 + $0x84] sm:$0xf]
        %v5144 = vld [vmem:[#allocation10 + $0x88] sm:$0xf]
        %v5145 = vld [vmem:[#allocation10 + $0x8c] sm:$0xf]
        %v5146 = vld [vmem:[#allocation10 + $0x90] sm:$0xf]
        %v5147 = vld [vmem:[#allocation10 + $0x94] sm:$0xf]
        %v5148 = vld [vmem:[#allocation10 + $0x98] sm:$0xf]
        %v5149 = vld [vmem:[#allocation10 + $0x9c] sm:$0xf]
        %v5150 = vld [vmem:[#allocation10 + $0xa0] sm:$0xf]
        %v5151 = vld [vmem:[#allocation10 + $0xa4] sm:$0xf]
        %v5152 = vld [vmem:[#allocation10 + $0xa8] sm:$0xf]
        %v5153 = vld [vmem:[#allocation10 + $0xac] sm:$0xf]
        %v5154 = vld [vmem:[#allocation10 + $0xb0] sm:$0xf]
        %v5155 = vld [vmem:[#allocation10 + $0xb4] sm:$0xf]
        %v5156 = vld [vmem:[#allocation10 + $0xb8] sm:$0xf]
        %v5157 = vld [vmem:[#allocation10 + $0xbc] sm:$0xf]
        %v5206 = vunpack.c.l.b16 %v5110
        %v5207 = vunpack.c.l.b16 %v5111
        %v5208 = vunpack.c.l.b16 %v5112
        %v5209 = vunpack.c.l.b16 %v5113
        %v5210 = vunpack.c.l.b16 %v5114
        %v5211 = vunpack.c.l.b16 %v5115
        %v5212 = vunpack.c.l.b16 %v5116
        %v5213 = vunpack.c.l.b16 %v5117
        %v5214 = vunpack.c.l.b16 %v5118
        %v5215 = vunpack.c.l.b16 %v5119
        %v5216 = vunpack.c.l.b16 %v5120
        %v5217 = vunpack.c.l.b16 %v5121
        %v5218 = vunpack.c.l.b16 %v5122
        %v5219 = vunpack.c.l.b16 %v5123
        %v5220 = vunpack.c.l.b16 %v5124
        %v5221 = vunpack.c.l.b16 %v5125
        %v5222 = vunpack.c.l.b16 %v5126
        %v5223 = vunpack.c.l.b16 %v5127
        %v5224 = vunpack.c.l.b16 %v5128
        %v5225 = vunpack.c.l.b16 %v5129
        %v5226 = vunpack.c.l.b16 %v5130
        %v5227 = vunpack.c.l.b16 %v5131
        %v5228 = vunpack.c.l.b16 %v5132
        %v5229 = vunpack.c.l.b16 %v5133
        %v5230 = vunpack.c.l.b16 %v5134
        %v5231 = vunpack.c.l.b16 %v5135
        %v5232 = vunpack.c.l.b16 %v5136
        %v5233 = vunpack.c.l.b16 %v5137
        %v5234 = vunpack.c.l.b16 %v5138
        %v5235 = vunpack.c.l.b16 %v5139
        %v5236 = vunpack.c.l.b16 %v5140
        %v5237 = vunpack.c.l.b16 %v5141
        %v5238 = vunpack.c.l.b16 %v5142
        %v5239 = vunpack.c.l.b16 %v5143
        %v5240 = vunpack.c.l.b16 %v5144
        %v5241 = vunpack.c.l.b16 %v5145
        %v5242 = vunpack.c.l.b16 %v5146
        %v5243 = vunpack.c.l.b16 %v5147
        %v5244 = vunpack.c.l.b16 %v5148
        %v5245 = vunpack.c.l.b16 %v5149
        %v5246 = vunpack.c.l.b16 %v5150
        %v5247 = vunpack.c.l.b16 %v5151
        %v5248 = vunpack.c.l.b16 %v5152
        %v5249 = vunpack.c.l.b16 %v5153
        %v5250 = vunpack.c.l.b16 %v5154
        %v5251 = vunpack.c.l.b16 %v5155
        %v5252 = vunpack.c.l.b16 %v5156
        %v5253 = vunpack.c.l.b16 %v5157
        %v5254 = vpack.c.b16 %v5207, %v5206
        %v5255 = vpack.c.b16 %v5209, %v5208
        %v5256 = vpack.c.b16 %v5211, %v5210
        %v5257 = vpack.c.b16 %v5213, %v5212
        %v5258 = vpack.c.b16 %v5215, %v5214
        %v5259 = vpack.c.b16 %v5217, %v5216
        %v5260 = vpack.c.b16 %v5219, %v5218
        %v5261 = vpack.c.b16 %v5221, %v5220
        %v5262 = vpack.c.b16 %v5223, %v5222
        %v5263 = vpack.c.b16 %v5225, %v5224
        %v5264 = vpack.c.b16 %v5227, %v5226
        %v5265 = vpack.c.b16 %v5229, %v5228
        %v5266 = vpack.c.b16 %v5231, %v5230
        %v5267 = vpack.c.b16 %v5233, %v5232
        %v5268 = vpack.c.b16 %v5235, %v5234
        %v5269 = vpack.c.b16 %v5237, %v5236
        %v5270 = vpack.c.b16 %v5239, %v5238
        %v5271 = vpack.c.b16 %v5241, %v5240
        %v5272 = vpack.c.b16 %v5243, %v5242
        %v5273 = vpack.c.b16 %v5245, %v5244
        %v5274 = vpack.c.b16 %v5247, %v5246
        %v5275 = vpack.c.b16 %v5249, %v5248
        %v5276 = vpack.c.b16 %v5251, %v5250
        %v5277 = vpack.c.b16 %v5253, %v5252
        %5302 = vmatpush.bf16.msra.mxu0 %v5261
        %5303 = vmatpush.bf16.msra.mxu0 %v5260
        %5304 = vmatpush.bf16.msra.mxu0 %v5259
        %5305 = vmatpush.bf16.msra.mxu0 %v5258
        %5306 = vmatpush.bf16.msra.mxu0 %v5257
        %5307 = vmatpush.bf16.msra.mxu0 %v5256
        %5308 = vmatpush.bf16.msra.mxu0 %v5255
        %5309 = vmatpush.bf16.msra.mxu0 %v5254
        %5310 = vmatmul.bf16.gmra.mxu0 %v4758
        %v5311 = vpop.f32.mrf.mxu0
        %v5312 = vadd.f32 0.0, %v5311
        %v5313 = vpop.f32.mrf.mxu0
        %v5314 = vadd.f32 0.0, %v5313
        %5315 = vmatmul.bf16.gmra.mxu0 %v4759
        %v5316 = vpop.f32.mrf.mxu0
        %v5317 = vadd.f32 0.0, %v5316
        %v5318 = vpop.f32.mrf.mxu0
        %v5319 = vadd.f32 0.0, %v5318
        %5320 = vmatmul.bf16.gmra.mxu0 %v4760
        %v5321 = vpop.f32.mrf.mxu0
        %v5322 = vadd.f32 0.0, %v5321
        %v5323 = vpop.f32.mrf.mxu0
        %v5324 = vadd.f32 0.0, %v5323
        %5325 = vmatmul.bf16.gmra.mxu0 %v4761
        %v5326 = vpop.f32.mrf.mxu0
        %v5327 = vadd.f32 0.0, %v5326
        %v5328 = vpop.f32.mrf.mxu0
        %v5329 = vadd.f32 0.0, %v5328
        %5330 = vmatmul.bf16.gmra.mxu0 %v4762
        %v5331 = vpop.f32.mrf.mxu0
        %v5332 = vadd.f32 0.0, %v5331
        %v5333 = vpop.f32.mrf.mxu0
        %v5334 = vadd.f32 0.0, %v5333
        %5335 = vmatmul.bf16.gmra.mxu0 %v4763
        %v5336 = vpop.f32.mrf.mxu0
        %v5337 = vadd.f32 0.0, %v5336
        %v5338 = vpop.f32.mrf.mxu0
        %v5339 = vadd.f32 0.0, %v5338
        %5340 = vmatmul.bf16.gmra.mxu0 %v4764
        %v5341 = vpop.f32.mrf.mxu0
        %v5342 = vadd.f32 0.0, %v5341
        %v5343 = vpop.f32.mrf.mxu0
        %v5344 = vadd.f32 0.0, %v5343
        %5345 = vmatmul.bf16.gmra.mxu0 %v4765
        %v5346 = vpop.f32.mrf.mxu0
        %v5347 = vadd.f32 0.0, %v5346
        %v5348 = vpop.f32.mrf.mxu0
        %v5349 = vadd.f32 0.0, %v5348
        %5350 = vmatmul.bf16.gmra.mxu0 %v4766
        %v5351 = vpop.f32.mrf.mxu0
        %v5352 = vadd.f32 0.0, %v5351
        %v5353 = vpop.f32.mrf.mxu0
        %v5354 = vadd.f32 0.0, %v5353
        %5355 = vmatmul.bf16.gmra.mxu0 %v4767
        %v5356 = vpop.f32.mrf.mxu0
        %v5357 = vadd.f32 0.0, %v5356
        %v5358 = vpop.f32.mrf.mxu0
        %v5359 = vadd.f32 0.0, %v5358
        %5360 = vmatmul.bf16.gmra.mxu0 %v4768
        %v5361 = vpop.f32.mrf.mxu0
        %v5362 = vadd.f32 0.0, %v5361
        %v5363 = vpop.f32.mrf.mxu0
        %v5364 = vadd.f32 0.0, %v5363
        %5365 = vmatmul.bf16.gmra.mxu0 %v4769
        %v5366 = vpop.f32.mrf.mxu0
        %v5367 = vadd.f32 0.0, %v5366
        %v5368 = vpop.f32.mrf.mxu0
        %v5369 = vadd.f32 0.0, %v5368
        %5370 = vmatmul.bf16.gmra.mxu0 %v4770
        %v5371 = vpop.f32.mrf.mxu0
        %v5372 = vadd.f32 0.0, %v5371
        %v5373 = vpop.f32.mrf.mxu0
        %v5374 = vadd.f32 0.0, %v5373
        %5375 = vmatmul.bf16.gmra.mxu0 %v4771
        %v5376 = vpop.f32.mrf.mxu0
        %v5377 = vadd.f32 0.0, %v5376
        %v5378 = vpop.f32.mrf.mxu0
        %v5379 = vadd.f32 0.0, %v5378
        %5380 = vmatmul.bf16.gmra.mxu0 %v4772
        %v5381 = vpop.f32.mrf.mxu0
        %v5382 = vadd.f32 0.0, %v5381
        %v5383 = vpop.f32.mrf.mxu0
        %v5384 = vadd.f32 0.0, %v5383
        %5385 = vmatmul.bf16.gmra.mxu0 %v4773
        %v5386 = vpop.f32.mrf.mxu0
        %v5387 = vadd.f32 0.0, %v5386
        %v5388 = vpop.f32.mrf.mxu0
        %v5389 = vadd.f32 0.0, %v5388
        %5390 = vdwg.mxu0
        %5391 = vmatpush.bf16.msra.mxu0 %v5269
        %5392 = vmatpush.bf16.msra.mxu0 %v5268
        %5393 = vmatpush.bf16.msra.mxu0 %v5267
        %5394 = vmatpush.bf16.msra.mxu0 %v5266
        %5395 = vmatpush.bf16.msra.mxu0 %v5265
        %5396 = vmatpush.bf16.msra.mxu0 %v5264
        %5397 = vmatpush.bf16.msra.mxu0 %v5263
        %5398 = vmatpush.bf16.msra.mxu0 %v5262
        %5399 = vmatmul.bf16.gmra.mxu0 %v4849
        %v5400 = vpop.f32.mrf.mxu0
        %v5401 = vadd.f32 %v5312, %v5400
        %v5402 = vpop.f32.mrf.mxu0
        %v5403 = vadd.f32 %v5314, %v5402
        %5404 = vmatmul.bf16.gmra.mxu0 %v4861
        %v5405 = vpop.f32.mrf.mxu0
        %v5406 = vadd.f32 %v5317, %v5405
        %v5407 = vpop.f32.mrf.mxu0
        %v5408 = vadd.f32 %v5319, %v5407
        %5409 = vmatmul.bf16.gmra.mxu0 %v4873
        %v5410 = vpop.f32.mrf.mxu0
        %v5411 = vadd.f32 %v5322, %v5410
        %v5412 = vpop.f32.mrf.mxu0
        %v5413 = vadd.f32 %v5324, %v5412
        %5414 = vmatmul.bf16.gmra.mxu0 %v4885
        %v5415 = vpop.f32.mrf.mxu0
        %v5416 = vadd.f32 %v5327, %v5415
        %v5417 = vpop.f32.mrf.mxu0
        %v5418 = vadd.f32 %v5329, %v5417
        %5419 = vmatmul.bf16.gmra.mxu0 %v4897
        %v5420 = vpop.f32.mrf.mxu0
        %v5421 = vadd.f32 %v5332, %v5420
        %v5422 = vpop.f32.mrf.mxu0
        %v5423 = vadd.f32 %v5334, %v5422
        %5424 = vmatmul.bf16.gmra.mxu0 %v4909
        %v5425 = vpop.f32.mrf.mxu0
        %v5426 = vadd.f32 %v5337, %v5425
        %v5427 = vpop.f32.mrf.mxu0
        %v5428 = vadd.f32 %v5339, %v5427
        %5429 = vmatmul.bf16.gmra.mxu0 %v4921
        %v5430 = vpop.f32.mrf.mxu0
        %v5431 = vadd.f32 %v5342, %v5430
        %v5432 = vpop.f32.mrf.mxu0
        %v5433 = vadd.f32 %v5344, %v5432
        %5434 = vmatmul.bf16.gmra.mxu0 %v4933
        %v5435 = vpop.f32.mrf.mxu0
        %v5436 = vadd.f32 %v5347, %v5435
        %v5437 = vpop.f32.mrf.mxu0
        %v5438 = vadd.f32 %v5349, %v5437
        %5439 = vmatmul.bf16.gmra.mxu0 %v4945
        %v5440 = vpop.f32.mrf.mxu0
        %v5441 = vadd.f32 %v5352, %v5440
        %v5442 = vpop.f32.mrf.mxu0
        %v5443 = vadd.f32 %v5354, %v5442
        %5444 = vmatmul.bf16.gmra.mxu0 %v4957
        %v5445 = vpop.f32.mrf.mxu0
        %v5446 = vadd.f32 %v5357, %v5445
        %v5447 = vpop.f32.mrf.mxu0
        %v5448 = vadd.f32 %v5359, %v5447
        %5449 = vmatmul.bf16.gmra.mxu0 %v4969
        %v5450 = vpop.f32.mrf.mxu0
        %v5451 = vadd.f32 %v5362, %v5450
        %v5452 = vpop.f32.mrf.mxu0
        %v5453 = vadd.f32 %v5364, %v5452
        %5454 = vmatmul.bf16.gmra.mxu0 %v4981
        %v5455 = vpop.f32.mrf.mxu0
        %v5456 = vadd.f32 %v5367, %v5455
        %v5457 = vpop.f32.mrf.mxu0
        %v5458 = vadd.f32 %v5369, %v5457
        %5459 = vmatmul.bf16.gmra.mxu0 %v4993
        %v5460 = vpop.f32.mrf.mxu0
        %v5461 = vadd.f32 %v5372, %v5460
        %v5462 = vpop.f32.mrf.mxu0
        %v5463 = vadd.f32 %v5374, %v5462
        %5464 = vmatmul.bf16.gmra.mxu0 %v5005
        %v5465 = vpop.f32.mrf.mxu0
        %v5466 = vadd.f32 %v5377, %v5465
        %v5467 = vpop.f32.mrf.mxu0
        %v5468 = vadd.f32 %v5379, %v5467
        %5469 = vmatmul.bf16.gmra.mxu0 %v5017
        %v5470 = vpop.f32.mrf.mxu0
        %v5471 = vadd.f32 %v5382, %v5470
        %v5472 = vpop.f32.mrf.mxu0
        %v5473 = vadd.f32 %v5384, %v5472
        %5474 = vmatmul.bf16.gmra.mxu0 %v5029
        %v5475 = vpop.f32.mrf.mxu0
        %v5476 = vadd.f32 %v5387, %v5475
        %v5477 = vpop.f32.mrf.mxu0
        %v5478 = vadd.f32 %v5389, %v5477
        %5479 = vdwg.mxu0
        %5480 = vmatpush.bf16.msra.mxu0 %v5277
        %5481 = vmatpush.bf16.msra.mxu0 %v5276
        %5482 = vmatpush.bf16.msra.mxu0 %v5275
        %5483 = vmatpush.bf16.msra.mxu0 %v5274
        %5484 = vmatpush.bf16.msra.mxu0 %v5273
        %5485 = vmatpush.bf16.msra.mxu0 %v5272
        %5486 = vmatpush.bf16.msra.mxu0 %v5271
        %5487 = vmatpush.bf16.msra.mxu0 %v5270
        %5488 = vmatmul.bf16.gmra.mxu0 %v5048
        %v5489 = vpop.f32.mrf.mxu0
        %v5490 = vadd.f32 %v5401, %v5489
        %v5491 = vpop.f32.mrf.mxu0
        %v5492 = vadd.f32 %v5403, %v5491
        %5493 = vmatmul.bf16.gmra.mxu0 %v5051
        %v5494 = vpop.f32.mrf.mxu0
        %v5495 = vadd.f32 %v5406, %v5494
        %v5496 = vpop.f32.mrf.mxu0
        %v5497 = vadd.f32 %v5408, %v5496
        %5498 = vmatmul.bf16.gmra.mxu0 %v5054
        %v5499 = vpop.f32.mrf.mxu0
        %v5500 = vadd.f32 %v5411, %v5499
        %v5501 = vpop.f32.mrf.mxu0
        %v5502 = vadd.f32 %v5413, %v5501
        %5503 = vmatmul.bf16.gmra.mxu0 %v5057
        %v5504 = vpop.f32.mrf.mxu0
        %v5505 = vadd.f32 %v5416, %v5504
        %v5506 = vpop.f32.mrf.mxu0
        %v5507 = vadd.f32 %v5418, %v5506
        %5508 = vmatmul.bf16.gmra.mxu0 %v5060
        %v5509 = vpop.f32.mrf.mxu0
        %v5510 = vadd.f32 %v5421, %v5509
        %v5511 = vpop.f32.mrf.mxu0
        %v5512 = vadd.f32 %v5423, %v5511
        %5513 = vmatmul.bf16.gmra.mxu0 %v5063
        %v5514 = vpop.f32.mrf.mxu0
        %v5515 = vadd.f32 %v5426, %v5514
        %v5516 = vpop.f32.mrf.mxu0
        %v5517 = vadd.f32 %v5428, %v5516
        %5518 = vmatmul.bf16.gmra.mxu0 %v5066
        %v5519 = vpop.f32.mrf.mxu0
        %v5520 = vadd.f32 %v5431, %v5519
        %v5521 = vpop.f32.mrf.mxu0
        %v5522 = vadd.f32 %v5433, %v5521
        %5523 = vmatmul.bf16.gmra.mxu0 %v5069
        %v5524 = vpop.f32.mrf.mxu0
        %v5525 = vadd.f32 %v5436, %v5524
        %v5526 = vpop.f32.mrf.mxu0
        %v5527 = vadd.f32 %v5438, %v5526
        %5528 = vmatmul.bf16.gmra.mxu0 %v5072
        %v5529 = vpop.f32.mrf.mxu0
        %v5530 = vadd.f32 %v5441, %v5529
        %v5531 = vpop.f32.mrf.mxu0
        %v5532 = vadd.f32 %v5443, %v5531
        %5533 = vmatmul.bf16.gmra.mxu0 %v5075
        %v5534 = vpop.f32.mrf.mxu0
        %v5535 = vadd.f32 %v5446, %v5534
        %v5536 = vpop.f32.mrf.mxu0
        %v5537 = vadd.f32 %v5448, %v5536
        %5538 = vmatmul.bf16.gmra.mxu0 %v5078
        %v5539 = vpop.f32.mrf.mxu0
        %v5540 = vadd.f32 %v5451, %v5539
        %v5541 = vpop.f32.mrf.mxu0
        %v5542 = vadd.f32 %v5453, %v5541
        %5543 = vmatmul.bf16.gmra.mxu0 %v5081
        %v5544 = vpop.f32.mrf.mxu0
        %v5545 = vadd.f32 %v5456, %v5544
        %v5546 = vpop.f32.mrf.mxu0
        %v5547 = vadd.f32 %v5458, %v5546
        %5548 = vmatmul.bf16.gmra.mxu0 %v5084
        %v5549 = vpop.f32.mrf.mxu0
        %v5550 = vadd.f32 %v5461, %v5549
        %v5551 = vpop.f32.mrf.mxu0
        %v5552 = vadd.f32 %v5463, %v5551
        %5553 = vmatmul.bf16.gmra.mxu0 %v5087
        %v5554 = vpop.f32.mrf.mxu0
        %v5555 = vadd.f32 %v5466, %v5554
        %v5556 = vpop.f32.mrf.mxu0
        %v5557 = vadd.f32 %v5468, %v5556
        %5558 = vmatmul.bf16.gmra.mxu0 %v5090
        %v5559 = vpop.f32.mrf.mxu0
        %v5560 = vadd.f32 %v5471, %v5559
        %v5561 = vpop.f32.mrf.mxu0
        %v5562 = vadd.f32 %v5473, %v5561
        %5563 = vmatmul.bf16.gmra.mxu0 %v5093
        %v5564 = vpop.f32.mrf.mxu0
        %v5565 = vadd.f32 %v5476, %v5564
        %v5566 = vpop.f32.mrf.mxu0
        %v5567 = vadd.f32 %v5478, %v5566
        %5568 = vdwg.mxu0
        %v5569 = vld [vmem:[#allocation4] sm:$0xff]
        %v5570 = vld [vmem:[#allocation4 + $0x8] sm:$0xff]
        %v5571 = vld [vmem:[#allocation4 + $0x10] sm:$0xff]
        %v5572 = vld [vmem:[#allocation4 + $0x18] sm:$0xff]
        %v5573 = vld [vmem:[#allocation4 + $0x20] sm:$0xff]
        %v5574 = vld [vmem:[#allocation4 + $0x28] sm:$0xff]
        %v5575 = vld [vmem:[#allocation4 + $0x30] sm:$0xff]
        %v5576 = vld [vmem:[#allocation4 + $0x38] sm:$0xff]
        %v5577 = vld [vmem:[#allocation4 + $0x40] sm:$0xff]
        %v5578 = vld [vmem:[#allocation4 + $0x48] sm:$0xff]
        %v5579 = vld [vmem:[#allocation4 + $0x50] sm:$0xff]
        %v5580 = vld [vmem:[#allocation4 + $0x58] sm:$0xff]
        %v5581 = vld [vmem:[#allocation4 + $0x60] sm:$0xff]
        %v5582 = vld [vmem:[#allocation4 + $0x68] sm:$0xff]
        %v5583 = vld [vmem:[#allocation4 + $0x70] sm:$0xff]
        %v5584 = vld [vmem:[#allocation4 + $0x78] sm:$0xff]
        %v5585 = vld [vmem:[#allocation4 + $0x80] sm:$0xff]
        %v5586 = vld [vmem:[#allocation4 + $0x88] sm:$0xff]
        %v5587 = vld [vmem:[#allocation4 + $0x90] sm:$0xff]
        %v5588 = vld [vmem:[#allocation4 + $0x98] sm:$0xff]
        %v5589 = vld [vmem:[#allocation4 + $0xa0] sm:$0xff]
        %v5590 = vld [vmem:[#allocation4 + $0xa8] sm:$0xff]
        %v5591 = vld [vmem:[#allocation4 + $0xb0] sm:$0xff]
        %v5592 = vld [vmem:[#allocation4 + $0xb8] sm:$0xff]
        %v5593 = vld [vmem:[#allocation4 + $0xc0] sm:$0xff]
        %v5594 = vld [vmem:[#allocation4 + $0xc8] sm:$0xff]
        %v5595 = vld [vmem:[#allocation4 + $0xd0] sm:$0xff]
        %v5596 = vld [vmem:[#allocation4 + $0xd8] sm:$0xff]
        %v5597 = vld [vmem:[#allocation4 + $0xe0] sm:$0xff]
        %v5598 = vld [vmem:[#allocation4 + $0xe8] sm:$0xff]
        %v5599 = vld [vmem:[#allocation4 + $0xf0] sm:$0xff]
        %v5600 = vld [vmem:[#allocation4 + $0xf8] sm:$0xff]
        %v5601 = vadd.f32 %v5569, %v5490
        %v5602 = vadd.f32 %v5570, %v5492
        %v5603 = vadd.f32 %v5571, %v5495
        %v5604 = vadd.f32 %v5572, %v5497
        %v5605 = vadd.f32 %v5573, %v5500
        %v5606 = vadd.f32 %v5574, %v5502
        %v5607 = vadd.f32 %v5575, %v5505
        %v5608 = vadd.f32 %v5576, %v5507
        %v5609 = vadd.f32 %v5577, %v5510
        %v5610 = vadd.f32 %v5578, %v5512
        %v5611 = vadd.f32 %v5579, %v5515
        %v5612 = vadd.f32 %v5580, %v5517
        %v5613 = vadd.f32 %v5581, %v5520
        %v5614 = vadd.f32 %v5582, %v5522
        %v5615 = vadd.f32 %v5583, %v5525
        %v5616 = vadd.f32 %v5584, %v5527
        %v5617 = vadd.f32 %v5585, %v5530
        %v5618 = vadd.f32 %v5586, %v5532
        %v5619 = vadd.f32 %v5587, %v5535
        %v5620 = vadd.f32 %v5588, %v5537
        %v5621 = vadd.f32 %v5589, %v5540
        %v5622 = vadd.f32 %v5590, %v5542
        %v5623 = vadd.f32 %v5591, %v5545
        %v5624 = vadd.f32 %v5592, %v5547
        %v5625 = vadd.f32 %v5593, %v5550
        %v5626 = vadd.f32 %v5594, %v5552
        %v5627 = vadd.f32 %v5595, %v5555
        %v5628 = vadd.f32 %v5596, %v5557
        %v5629 = vadd.f32 %v5597, %v5560
        %v5630 = vadd.f32 %v5598, %v5562
        %v5631 = vadd.f32 %v5599, %v5565
        %v5632 = vadd.f32 %v5600, %v5567
        %5633 = vst [vmem:[#allocation4] sm:$0xff] %v5601
        %5634 = vst [vmem:[#allocation4 + $0x8] sm:$0xff] %v5602
        %5635 = vst [vmem:[#allocation4 + $0x10] sm:$0xff] %v5603
        %5636 = vst [vmem:[#allocation4 + $0x18] sm:$0xff] %v5604
        %5637 = vst [vmem:[#allocation4 + $0x20] sm:$0xff] %v5605
        %5638 = vst [vmem:[#allocation4 + $0x28] sm:$0xff] %v5606
        %5639 = vst [vmem:[#allocation4 + $0x30] sm:$0xff] %v5607
        %5640 = vst [vmem:[#allocation4 + $0x38] sm:$0xff] %v5608
        %5641 = vst [vmem:[#allocation4 + $0x40] sm:$0xff] %v5609
        %5642 = vst [vmem:[#allocation4 + $0x48] sm:$0xff] %v5610
        %5643 = vst [vmem:[#allocation4 + $0x50] sm:$0xff] %v5611
        %5644 = vst [vmem:[#allocation4 + $0x58] sm:$0xff] %v5612
        %5645 = vst [vmem:[#allocation4 + $0x60] sm:$0xff] %v5613
        %5646 = vst [vmem:[#allocation4 + $0x68] sm:$0xff] %v5614
        %5647 = vst [vmem:[#allocation4 + $0x70] sm:$0xff] %v5615
        %5648 = vst [vmem:[#allocation4 + $0x78] sm:$0xff] %v5616
        %5649 = vst [vmem:[#allocation4 + $0x80] sm:$0xff] %v5617
        %5650 = vst [vmem:[#allocation4 + $0x88] sm:$0xff] %v5618
        %5651 = vst [vmem:[#allocation4 + $0x90] sm:$0xff] %v5619
        %5652 = vst [vmem:[#allocation4 + $0x98] sm:$0xff] %v5620
        %5653 = vst [vmem:[#allocation4 + $0xa0] sm:$0xff] %v5621
        %5654 = vst [vmem:[#allocation4 + $0xa8] sm:$0xff] %v5622
        %5655 = vst [vmem:[#allocation4 + $0xb0] sm:$0xff] %v5623
        %5656 = vst [vmem:[#allocation4 + $0xb8] sm:$0xff] %v5624
        %5657 = vst [vmem:[#allocation4 + $0xc0] sm:$0xff] %v5625
        %5658 = vst [vmem:[#allocation4 + $0xc8] sm:$0xff] %v5626
        %5659 = vst [vmem:[#allocation4 + $0xd0] sm:$0xff] %v5627
        %5660 = vst [vmem:[#allocation4 + $0xd8] sm:$0xff] %v5628
        %5661 = vst [vmem:[#allocation4 + $0xe0] sm:$0xff] %v5629
        %5662 = vst [vmem:[#allocation4 + $0xe8] sm:$0xff] %v5630
        %5663 = vst [vmem:[#allocation4 + $0xf0] sm:$0xff] %v5631
        %5664 = vst [vmem:[#allocation4 + $0xf8] sm:$0xff] %v5632
        %v5665 = vld [vmem:[%s4497] sm:$0xf]
        %v5666 = vld [vmem:[%s4497 + $0x4] sm:$0xf]
        %v5667 = vld [vmem:[%s4497 + $0x8] sm:$0x1]
        %v5668 = vld [vmem:[%s4497 + $0xc] sm:$0xf]
        %v5669 = vld [vmem:[%s4497 + $0x10] sm:$0xf]
        %v5670 = vld [vmem:[%s4497 + $0x14] sm:$0x1]
        %v5671 = vld [vmem:[%s4497 + $0x18] sm:$0xf]
        %v5672 = vld [vmem:[%s4497 + $0x1c] sm:$0xf]
        %v5673 = vld [vmem:[%s4497 + $0x20] sm:$0x1]
        %v5674 = vld [vmem:[%s4497 + $0x24] sm:$0xf]
        %v5675 = vld [vmem:[%s4497 + $0x28] sm:$0xf]
        %v5676 = vld [vmem:[%s4497 + $0x2c] sm:$0x1]
        %v5677 = vld [vmem:[%s4497 + $0x30] sm:$0xf]
        %v5678 = vld [vmem:[%s4497 + $0x34] sm:$0xf]
        %v5679 = vld [vmem:[%s4497 + $0x38] sm:$0x1]
        %v5680 = vld [vmem:[%s4497 + $0x3c] sm:$0xf]
        %v5681 = vld [vmem:[%s4497 + $0x40] sm:$0xf]
        %v5682 = vld [vmem:[%s4497 + $0x44] sm:$0x1]
        %v5683 = vld [vmem:[%s4497 + $0x48] sm:$0xf]
        %v5684 = vld [vmem:[%s4497 + $0x4c] sm:$0xf]
        %v5685 = vld [vmem:[%s4497 + $0x50] sm:$0x1]
        %v5686 = vld [vmem:[%s4497 + $0x54] sm:$0xf]
        %v5687 = vld [vmem:[%s4497 + $0x58] sm:$0xf]
        %v5688 = vld [vmem:[%s4497 + $0x5c] sm:$0x1]
        %v5689 = vld [vmem:[%s4497 + $0x60] sm:$0xf]
        %v5690 = vld [vmem:[%s4497 + $0x64] sm:$0xf]
        %v5691 = vld [vmem:[%s4497 + $0x68] sm:$0x1]
        %v5692 = vld [vmem:[%s4497 + $0x6c] sm:$0xf]
        %v5693 = vld [vmem:[%s4497 + $0x70] sm:$0xf]
        %v5694 = vld [vmem:[%s4497 + $0x74] sm:$0x1]
        %v5695 = vld [vmem:[%s4497 + $0x78] sm:$0xf]
        %v5696 = vld [vmem:[%s4497 + $0x7c] sm:$0xf]
        %v5697 = vld [vmem:[%s4497 + $0x80] sm:$0x1]
        %v5698 = vld [vmem:[%s4497 + $0x84] sm:$0xf]
        %v5699 = vld [vmem:[%s4497 + $0x88] sm:$0xf]
        %v5700 = vld [vmem:[%s4497 + $0x8c] sm:$0x1]
        %v5701 = vld [vmem:[%s4497 + $0x90] sm:$0xf]
        %v5702 = vld [vmem:[%s4497 + $0x94] sm:$0xf]
        %v5703 = vld [vmem:[%s4497 + $0x98] sm:$0x1]
        %v5704 = vld [vmem:[%s4497 + $0x9c] sm:$0xf]
        %v5705 = vld [vmem:[%s4497 + $0xa0] sm:$0xf]
        %v5706 = vld [vmem:[%s4497 + $0xa4] sm:$0x1]
        %v5707 = vld [vmem:[%s4497 + $0xa8] sm:$0xf]
        %v5708 = vld [vmem:[%s4497 + $0xac] sm:$0xf]
        %v5709 = vld [vmem:[%s4497 + $0xb0] sm:$0x1]
        %v5710 = vld [vmem:[%s4497 + $0xb4] sm:$0xf]
        %v5711 = vld [vmem:[%s4497 + $0xb8] sm:$0xf]
        %v5712 = vld [vmem:[%s4497 + $0xbc] sm:$0x1]
        %v5745 = vunpack.c.l.b16 %v5665
        %v5746 = vunpack.c.l.b16 %v5666
        %v5747 = vunpack.c.l.b16 %v5668
        %v5748 = vunpack.c.l.b16 %v5669
        %v5749 = vunpack.c.l.b16 %v5671
        %v5750 = vunpack.c.l.b16 %v5672
        %v5751 = vunpack.c.l.b16 %v5674
        %v5752 = vunpack.c.l.b16 %v5675
        %v5753 = vunpack.c.l.b16 %v5677
        %v5754 = vunpack.c.l.b16 %v5678
        %v5755 = vunpack.c.l.b16 %v5680
        %v5756 = vunpack.c.l.b16 %v5681
        %v5757 = vunpack.c.l.b16 %v5683
        %v5758 = vunpack.c.l.b16 %v5684
        %v5759 = vunpack.c.l.b16 %v5686
        %v5760 = vunpack.c.l.b16 %v5687
        %v5761 = vunpack.c.l.b16 %v5689
        %v5762 = vunpack.c.l.b16 %v5690
        %v5763 = vunpack.c.l.b16 %v5692
        %v5764 = vunpack.c.l.b16 %v5693
        %v5765 = vunpack.c.l.b16 %v5695
        %v5766 = vunpack.c.l.b16 %v5696
        %v5767 = vunpack.c.l.b16 %v5698
        %v5768 = vunpack.c.l.b16 %v5699
        %v5769 = vunpack.c.l.b16 %v5701
        %v5770 = vunpack.c.l.b16 %v5702
        %v5771 = vunpack.c.l.b16 %v5704
        %v5772 = vunpack.c.l.b16 %v5705
        %v5773 = vunpack.c.l.b16 %v5707
        %v5774 = vunpack.c.l.b16 %v5708
        %v5775 = vunpack.c.l.b16 %v5710
        %v5776 = vunpack.c.l.b16 %v5711
        %v5777 = vpack.c.b16 %v5746, %v5745
        %v5778 = vpack.c.b16 %v5748, %v5747
        %v5779 = vpack.c.b16 %v5750, %v5749
        %v5780 = vpack.c.b16 %v5752, %v5751
        %v5781 = vpack.c.b16 %v5754, %v5753
        %v5782 = vpack.c.b16 %v5756, %v5755
        %v5783 = vpack.c.b16 %v5758, %v5757
        %v5784 = vpack.c.b16 %v5760, %v5759
        %v5785 = vpack.c.b16 %v5762, %v5761
        %v5786 = vpack.c.b16 %v5764, %v5763
        %v5787 = vpack.c.b16 %v5766, %v5765
        %v5788 = vpack.c.b16 %v5768, %v5767
        %v5789 = vpack.c.b16 %v5770, %v5769
        %v5790 = vpack.c.b16 %v5772, %v5771
        %v5791 = vpack.c.b16 %v5774, %v5773
        %v5792 = vpack.c.b16 %v5776, %v5775
        %v5825 = vunpack.c.l.b16 %v5667
        %v5826 = vunpack.c.l.b16 %v5670
        %v5827 = vunpack.c.l.b16 %v5673
        %v5828 = vunpack.c.l.b16 %v5676
        %v5829 = vunpack.c.l.b16 %v5679
        %v5830 = vunpack.c.l.b16 %v5682
        %v5831 = vunpack.c.l.b16 %v5685
        %v5832 = vunpack.c.l.b16 %v5688
        %v5833 = vunpack.c.l.b16 %v5691
        %v5834 = vunpack.c.l.b16 %v5694
        %v5835 = vunpack.c.l.b16 %v5697
        %v5836 = vunpack.c.l.b16 %v5700
        %v5837 = vunpack.c.l.b16 %v5703
        %v5838 = vunpack.c.l.b16 %v5706
        %v5839 = vunpack.c.l.b16 %v5709
        %v5840 = vunpack.c.l.b16 %v5712
        %v5841 = vpack.c.b16 %v5825, %v5825
        %v5842 = vpack.c.b16 %v5826, %v5826
        %v5843 = vpack.c.b16 %v5827, %v5827
        %v5844 = vpack.c.b16 %v5828, %v5828
        %v5845 = vpack.c.b16 %v5829, %v5829
        %v5846 = vpack.c.b16 %v5830, %v5830
        %v5847 = vpack.c.b16 %v5831, %v5831
        %v5848 = vpack.c.b16 %v5832, %v5832
        %v5849 = vpack.c.b16 %v5833, %v5833
        %v5850 = vpack.c.b16 %v5834, %v5834
        %v5851 = vpack.c.b16 %v5835, %v5835
        %v5852 = vpack.c.b16 %v5836, %v5836
        %v5853 = vpack.c.b16 %v5837, %v5837
        %v5854 = vpack.c.b16 %v5838, %v5838
        %v5855 = vpack.c.b16 %v5839, %v5839
        %v5856 = vpack.c.b16 %v5840, %v5840
        %v5858 = vshrl.u32 %v5777, 16
        %v5860 = vshll.u32 %v5777, 16
        %v5862 = vrot.slane %v5860, 1
        %v5863 = vor.u32 %v5858, %v5862
        %v5865 = vshll.u32 %v5841, 16
        %v5867 = vrot.slane %v5865, 1
        %v5868 = vsel %vm1211, %v5863, %v5867
        %v5870 = vshrl.u32 %v5778, 16
        %v5872 = vshll.u32 %v5778, 16
        %v5874 = vrot.slane %v5872, 1
        %v5875 = vor.u32 %v5870, %v5874
        %v5877 = vshll.u32 %v5842, 16
        %v5879 = vrot.slane %v5877, 1
        %v5880 = vsel %vm1211, %v5875, %v5879
        %v5882 = vshrl.u32 %v5779, 16
        %v5884 = vshll.u32 %v5779, 16
        %v5886 = vrot.slane %v5884, 1
        %v5887 = vor.u32 %v5882, %v5886
        %v5889 = vshll.u32 %v5843, 16
        %v5891 = vrot.slane %v5889, 1
        %v5892 = vsel %vm1211, %v5887, %v5891
        %v5894 = vshrl.u32 %v5780, 16
        %v5896 = vshll.u32 %v5780, 16
        %v5898 = vrot.slane %v5896, 1
        %v5899 = vor.u32 %v5894, %v5898
        %v5901 = vshll.u32 %v5844, 16
        %v5903 = vrot.slane %v5901, 1
        %v5904 = vsel %vm1211, %v5899, %v5903
        %v5906 = vshrl.u32 %v5781, 16
        %v5908 = vshll.u32 %v5781, 16
        %v5910 = vrot.slane %v5908, 1
        %v5911 = vor.u32 %v5906, %v5910
        %v5913 = vshll.u32 %v5845, 16
        %v5915 = vrot.slane %v5913, 1
        %v5916 = vsel %vm1211, %v5911, %v5915
        %v5918 = vshrl.u32 %v5782, 16
        %v5920 = vshll.u32 %v5782, 16
        %v5922 = vrot.slane %v5920, 1
        %v5923 = vor.u32 %v5918, %v5922
        %v5925 = vshll.u32 %v5846, 16
        %v5927 = vrot.slane %v5925, 1
        %v5928 = vsel %vm1211, %v5923, %v5927
        %v5930 = vshrl.u32 %v5783, 16
        %v5932 = vshll.u32 %v5783, 16
        %v5934 = vrot.slane %v5932, 1
        %v5935 = vor.u32 %v5930, %v5934
        %v5937 = vshll.u32 %v5847, 16
        %v5939 = vrot.slane %v5937, 1
        %v5940 = vsel %vm1211, %v5935, %v5939
        %v5942 = vshrl.u32 %v5784, 16
        %v5944 = vshll.u32 %v5784, 16
        %v5946 = vrot.slane %v5944, 1
        %v5947 = vor.u32 %v5942, %v5946
        %v5949 = vshll.u32 %v5848, 16
        %v5951 = vrot.slane %v5949, 1
        %v5952 = vsel %vm1211, %v5947, %v5951
        %v5954 = vshrl.u32 %v5785, 16
        %v5956 = vshll.u32 %v5785, 16
        %v5958 = vrot.slane %v5956, 1
        %v5959 = vor.u32 %v5954, %v5958
        %v5961 = vshll.u32 %v5849, 16
        %v5963 = vrot.slane %v5961, 1
        %v5964 = vsel %vm1211, %v5959, %v5963
        %v5966 = vshrl.u32 %v5786, 16
        %v5968 = vshll.u32 %v5786, 16
        %v5970 = vrot.slane %v5968, 1
        %v5971 = vor.u32 %v5966, %v5970
        %v5973 = vshll.u32 %v5850, 16
        %v5975 = vrot.slane %v5973, 1
        %v5976 = vsel %vm1211, %v5971, %v5975
        %v5978 = vshrl.u32 %v5787, 16
        %v5980 = vshll.u32 %v5787, 16
        %v5982 = vrot.slane %v5980, 1
        %v5983 = vor.u32 %v5978, %v5982
        %v5985 = vshll.u32 %v5851, 16
        %v5987 = vrot.slane %v5985, 1
        %v5988 = vsel %vm1211, %v5983, %v5987
        %v5990 = vshrl.u32 %v5788, 16
        %v5992 = vshll.u32 %v5788, 16
        %v5994 = vrot.slane %v5992, 1
        %v5995 = vor.u32 %v5990, %v5994
        %v5997 = vshll.u32 %v5852, 16
        %v5999 = vrot.slane %v5997, 1
        %v6000 = vsel %vm1211, %v5995, %v5999
        %v6002 = vshrl.u32 %v5789, 16
        %v6004 = vshll.u32 %v5789, 16
        %v6006 = vrot.slane %v6004, 1
        %v6007 = vor.u32 %v6002, %v6006
        %v6009 = vshll.u32 %v5853, 16
        %v6011 = vrot.slane %v6009, 1
        %v6012 = vsel %vm1211, %v6007, %v6011
        %v6014 = vshrl.u32 %v5790, 16
        %v6016 = vshll.u32 %v5790, 16
        %v6018 = vrot.slane %v6016, 1
        %v6019 = vor.u32 %v6014, %v6018
        %v6021 = vshll.u32 %v5854, 16
        %v6023 = vrot.slane %v6021, 1
        %v6024 = vsel %vm1211, %v6019, %v6023
        %v6026 = vshrl.u32 %v5791, 16
        %v6028 = vshll.u32 %v5791, 16
        %v6030 = vrot.slane %v6028, 1
        %v6031 = vor.u32 %v6026, %v6030
        %v6033 = vshll.u32 %v5855, 16
        %v6035 = vrot.slane %v6033, 1
        %v6036 = vsel %vm1211, %v6031, %v6035
        %v6038 = vshrl.u32 %v5792, 16
        %v6040 = vshll.u32 %v5792, 16
        %v6042 = vrot.slane %v6040, 1
        %v6043 = vor.u32 %v6038, %v6042
        %v6045 = vshll.u32 %v5856, 16
        %v6047 = vrot.slane %v6045, 1
        %v6048 = vsel %vm1211, %v6043, %v6047
        %v6065 = vrot.slane %v5777, 1
        %v6066 = vrot.slane %v5841, 1
        %v6067 = vsel %vm1420, %v6065, %v6066
        %v6068 = vrot.slane %v5778, 1
        %v6069 = vrot.slane %v5842, 1
        %v6070 = vsel %vm1420, %v6068, %v6069
        %v6071 = vrot.slane %v5779, 1
        %v6072 = vrot.slane %v5843, 1
        %v6073 = vsel %vm1420, %v6071, %v6072
        %v6074 = vrot.slane %v5780, 1
        %v6075 = vrot.slane %v5844, 1
        %v6076 = vsel %vm1420, %v6074, %v6075
        %v6077 = vrot.slane %v5781, 1
        %v6078 = vrot.slane %v5845, 1
        %v6079 = vsel %vm1420, %v6077, %v6078
        %v6080 = vrot.slane %v5782, 1
        %v6081 = vrot.slane %v5846, 1
        %v6082 = vsel %vm1420, %v6080, %v6081
        %v6083 = vrot.slane %v5783, 1
        %v6084 = vrot.slane %v5847, 1
        %v6085 = vsel %vm1420, %v6083, %v6084
        %v6086 = vrot.slane %v5784, 1
        %v6087 = vrot.slane %v5848, 1
        %v6088 = vsel %vm1420, %v6086, %v6087
        %v6089 = vrot.slane %v5785, 1
        %v6090 = vrot.slane %v5849, 1
        %v6091 = vsel %vm1420, %v6089, %v6090
        %v6092 = vrot.slane %v5786, 1
        %v6093 = vrot.slane %v5850, 1
        %v6094 = vsel %vm1420, %v6092, %v6093
        %v6095 = vrot.slane %v5787, 1
        %v6096 = vrot.slane %v5851, 1
        %v6097 = vsel %vm1420, %v6095, %v6096
        %v6098 = vrot.slane %v5788, 1
        %v6099 = vrot.slane %v5852, 1
        %v6100 = vsel %vm1420, %v6098, %v6099
        %v6101 = vrot.slane %v5789, 1
        %v6102 = vrot.slane %v5853, 1
        %v6103 = vsel %vm1420, %v6101, %v6102
        %v6104 = vrot.slane %v5790, 1
        %v6105 = vrot.slane %v5854, 1
        %v6106 = vsel %vm1420, %v6104, %v6105
        %v6107 = vrot.slane %v5791, 1
        %v6108 = vrot.slane %v5855, 1
        %v6109 = vsel %vm1420, %v6107, %v6108
        %v6110 = vrot.slane %v5792, 1
        %v6111 = vrot.slane %v5856, 1
        %v6112 = vsel %vm1420, %v6110, %v6111
        %s6129 = scalar_lea.vmem [#allocation10], 192
        %v6130 = vld [vmem:[%s6129] sm:$0xf]
        %v6131 = vld [vmem:[%s6129 + $0x4] sm:$0xf]
        %v6132 = vld [vmem:[%s6129 + $0x8] sm:$0xf]
        %v6133 = vld [vmem:[%s6129 + $0xc] sm:$0xf]
        %v6134 = vld [vmem:[%s6129 + $0x10] sm:$0xf]
        %v6135 = vld [vmem:[%s6129 + $0x14] sm:$0xf]
        %v6136 = vld [vmem:[%s6129 + $0x18] sm:$0xf]
        %v6137 = vld [vmem:[%s6129 + $0x1c] sm:$0xf]
        %v6138 = vld [vmem:[%s6129 + $0x20] sm:$0xf]
        %v6139 = vld [vmem:[%s6129 + $0x24] sm:$0xf]
        %v6140 = vld [vmem:[%s6129 + $0x28] sm:$0xf]
        %v6141 = vld [vmem:[%s6129 + $0x2c] sm:$0xf]
        %v6142 = vld [vmem:[%s6129 + $0x30] sm:$0xf]
        %v6143 = vld [vmem:[%s6129 + $0x34] sm:$0xf]
        %v6144 = vld [vmem:[%s6129 + $0x38] sm:$0xf]
        %v6145 = vld [vmem:[%s6129 + $0x3c] sm:$0xf]
        %v6146 = vld [vmem:[%s6129 + $0x40] sm:$0xf]
        %v6147 = vld [vmem:[%s6129 + $0x44] sm:$0xf]
        %v6148 = vld [vmem:[%s6129 + $0x48] sm:$0xf]
        %v6149 = vld [vmem:[%s6129 + $0x4c] sm:$0xf]
        %v6150 = vld [vmem:[%s6129 + $0x50] sm:$0xf]
        %v6151 = vld [vmem:[%s6129 + $0x54] sm:$0xf]
        %v6152 = vld [vmem:[%s6129 + $0x58] sm:$0xf]
        %v6153 = vld [vmem:[%s6129 + $0x5c] sm:$0xf]
        %v6154 = vld [vmem:[%s6129 + $0x60] sm:$0xf]
        %v6155 = vld [vmem:[%s6129 + $0x64] sm:$0xf]
        %v6156 = vld [vmem:[%s6129 + $0x68] sm:$0xf]
        %v6157 = vld [vmem:[%s6129 + $0x6c] sm:$0xf]
        %v6158 = vld [vmem:[%s6129 + $0x70] sm:$0xf]
        %v6159 = vld [vmem:[%s6129 + $0x74] sm:$0xf]
        %v6160 = vld [vmem:[%s6129 + $0x78] sm:$0xf]
        %v6161 = vld [vmem:[%s6129 + $0x7c] sm:$0xf]
        %v6162 = vld [vmem:[%s6129 + $0x80] sm:$0xf]
        %v6163 = vld [vmem:[%s6129 + $0x84] sm:$0xf]
        %v6164 = vld [vmem:[%s6129 + $0x88] sm:$0xf]
        %v6165 = vld [vmem:[%s6129 + $0x8c] sm:$0xf]
        %v6166 = vld [vmem:[%s6129 + $0x90] sm:$0xf]
        %v6167 = vld [vmem:[%s6129 + $0x94] sm:$0xf]
        %v6168 = vld [vmem:[%s6129 + $0x98] sm:$0xf]
        %v6169 = vld [vmem:[%s6129 + $0x9c] sm:$0xf]
        %v6170 = vld [vmem:[%s6129 + $0xa0] sm:$0xf]
        %v6171 = vld [vmem:[%s6129 + $0xa4] sm:$0xf]
        %v6172 = vld [vmem:[%s6129 + $0xa8] sm:$0xf]
        %v6173 = vld [vmem:[%s6129 + $0xac] sm:$0xf]
        %v6174 = vld [vmem:[%s6129 + $0xb0] sm:$0xf]
        %v6175 = vld [vmem:[%s6129 + $0xb4] sm:$0xf]
        %v6176 = vld [vmem:[%s6129 + $0xb8] sm:$0xf]
        %v6177 = vld [vmem:[%s6129 + $0xbc] sm:$0xf]
        %v6226 = vunpack.c.l.b16 %v6130
        %v6227 = vunpack.c.l.b16 %v6131
        %v6228 = vunpack.c.l.b16 %v6132
        %v6229 = vunpack.c.l.b16 %v6133
        %v6230 = vunpack.c.l.b16 %v6134
        %v6231 = vunpack.c.l.b16 %v6135
        %v6232 = vunpack.c.l.b16 %v6136
        %v6233 = vunpack.c.l.b16 %v6137
        %v6234 = vunpack.c.l.b16 %v6138
        %v6235 = vunpack.c.l.b16 %v6139
        %v6236 = vunpack.c.l.b16 %v6140
        %v6237 = vunpack.c.l.b16 %v6141
        %v6238 = vunpack.c.l.b16 %v6142
        %v6239 = vunpack.c.l.b16 %v6143
        %v6240 = vunpack.c.l.b16 %v6144
        %v6241 = vunpack.c.l.b16 %v6145
        %v6242 = vunpack.c.l.b16 %v6146
        %v6243 = vunpack.c.l.b16 %v6147
        %v6244 = vunpack.c.l.b16 %v6148
        %v6245 = vunpack.c.l.b16 %v6149
        %v6246 = vunpack.c.l.b16 %v6150
        %v6247 = vunpack.c.l.b16 %v6151
        %v6248 = vunpack.c.l.b16 %v6152
        %v6249 = vunpack.c.l.b16 %v6153
        %v6250 = vunpack.c.l.b16 %v6154
        %v6251 = vunpack.c.l.b16 %v6155
        %v6252 = vunpack.c.l.b16 %v6156
        %v6253 = vunpack.c.l.b16 %v6157
        %v6254 = vunpack.c.l.b16 %v6158
        %v6255 = vunpack.c.l.b16 %v6159
        %v6256 = vunpack.c.l.b16 %v6160
        %v6257 = vunpack.c.l.b16 %v6161
        %v6258 = vunpack.c.l.b16 %v6162
        %v6259 = vunpack.c.l.b16 %v6163
        %v6260 = vunpack.c.l.b16 %v6164
        %v6261 = vunpack.c.l.b16 %v6165
        %v6262 = vunpack.c.l.b16 %v6166
        %v6263 = vunpack.c.l.b16 %v6167
        %v6264 = vunpack.c.l.b16 %v6168
        %v6265 = vunpack.c.l.b16 %v6169
        %v6266 = vunpack.c.l.b16 %v6170
        %v6267 = vunpack.c.l.b16 %v6171
        %v6268 = vunpack.c.l.b16 %v6172
        %v6269 = vunpack.c.l.b16 %v6173
        %v6270 = vunpack.c.l.b16 %v6174
        %v6271 = vunpack.c.l.b16 %v6175
        %v6272 = vunpack.c.l.b16 %v6176
        %v6273 = vunpack.c.l.b16 %v6177
        %v6274 = vpack.c.b16 %v6227, %v6226
        %v6275 = vpack.c.b16 %v6229, %v6228
        %v6276 = vpack.c.b16 %v6231, %v6230
        %v6277 = vpack.c.b16 %v6233, %v6232
        %v6278 = vpack.c.b16 %v6235, %v6234
        %v6279 = vpack.c.b16 %v6237, %v6236
        %v6280 = vpack.c.b16 %v6239, %v6238
        %v6281 = vpack.c.b16 %v6241, %v6240
        %v6282 = vpack.c.b16 %v6243, %v6242
        %v6283 = vpack.c.b16 %v6245, %v6244
        %v6284 = vpack.c.b16 %v6247, %v6246
        %v6285 = vpack.c.b16 %v6249, %v6248
        %v6286 = vpack.c.b16 %v6251, %v6250
        %v6287 = vpack.c.b16 %v6253, %v6252
        %v6288 = vpack.c.b16 %v6255, %v6254
        %v6289 = vpack.c.b16 %v6257, %v6256
        %v6290 = vpack.c.b16 %v6259, %v6258
        %v6291 = vpack.c.b16 %v6261, %v6260
        %v6292 = vpack.c.b16 %v6263, %v6262
        %v6293 = vpack.c.b16 %v6265, %v6264
        %v6294 = vpack.c.b16 %v6267, %v6266
        %v6295 = vpack.c.b16 %v6269, %v6268
        %v6296 = vpack.c.b16 %v6271, %v6270
        %v6297 = vpack.c.b16 %v6273, %v6272
        %6322 = vmatpush.bf16.msra.mxu0 %v6281
        %6323 = vmatpush.bf16.msra.mxu0 %v6280
        %6324 = vmatpush.bf16.msra.mxu0 %v6279
        %6325 = vmatpush.bf16.msra.mxu0 %v6278
        %6326 = vmatpush.bf16.msra.mxu0 %v6277
        %6327 = vmatpush.bf16.msra.mxu0 %v6276
        %6328 = vmatpush.bf16.msra.mxu0 %v6275
        %6329 = vmatpush.bf16.msra.mxu0 %v6274
        %6330 = vmatmul.bf16.gmra.mxu0 %v5777
        %v6331 = vpop.f32.mrf.mxu0
        %v6332 = vadd.f32 0.0, %v6331
        %v6333 = vpop.f32.mrf.mxu0
        %v6334 = vadd.f32 0.0, %v6333
        %6335 = vmatmul.bf16.gmra.mxu0 %v5778
        %v6336 = vpop.f32.mrf.mxu0
        %v6337 = vadd.f32 0.0, %v6336
        %v6338 = vpop.f32.mrf.mxu0
        %v6339 = vadd.f32 0.0, %v6338
        %6340 = vmatmul.bf16.gmra.mxu0 %v5779
        %v6341 = vpop.f32.mrf.mxu0
        %v6342 = vadd.f32 0.0, %v6341
        %v6343 = vpop.f32.mrf.mxu0
        %v6344 = vadd.f32 0.0, %v6343
        %6345 = vmatmul.bf16.gmra.mxu0 %v5780
        %v6346 = vpop.f32.mrf.mxu0
        %v6347 = vadd.f32 0.0, %v6346
        %v6348 = vpop.f32.mrf.mxu0
        %v6349 = vadd.f32 0.0, %v6348
        %6350 = vmatmul.bf16.gmra.mxu0 %v5781
        %v6351 = vpop.f32.mrf.mxu0
        %v6352 = vadd.f32 0.0, %v6351
        %v6353 = vpop.f32.mrf.mxu0
        %v6354 = vadd.f32 0.0, %v6353
        %6355 = vmatmul.bf16.gmra.mxu0 %v5782
        %v6356 = vpop.f32.mrf.mxu0
        %v6357 = vadd.f32 0.0, %v6356
        %v6358 = vpop.f32.mrf.mxu0
        %v6359 = vadd.f32 0.0, %v6358
        %6360 = vmatmul.bf16.gmra.mxu0 %v5783
        %v6361 = vpop.f32.mrf.mxu0
        %v6362 = vadd.f32 0.0, %v6361
        %v6363 = vpop.f32.mrf.mxu0
        %v6364 = vadd.f32 0.0, %v6363
        %6365 = vmatmul.bf16.gmra.mxu0 %v5784
        %v6366 = vpop.f32.mrf.mxu0
        %v6367 = vadd.f32 0.0, %v6366
        %v6368 = vpop.f32.mrf.mxu0
        %v6369 = vadd.f32 0.0, %v6368
        %6370 = vmatmul.bf16.gmra.mxu0 %v5785
        %v6371 = vpop.f32.mrf.mxu0
        %v6372 = vadd.f32 0.0, %v6371
        %v6373 = vpop.f32.mrf.mxu0
        %v6374 = vadd.f32 0.0, %v6373
        %6375 = vmatmul.bf16.gmra.mxu0 %v5786
        %v6376 = vpop.f32.mrf.mxu0
        %v6377 = vadd.f32 0.0, %v6376
        %v6378 = vpop.f32.mrf.mxu0
        %v6379 = vadd.f32 0.0, %v6378
        %6380 = vmatmul.bf16.gmra.mxu0 %v5787
        %v6381 = vpop.f32.mrf.mxu0
        %v6382 = vadd.f32 0.0, %v6381
        %v6383 = vpop.f32.mrf.mxu0
        %v6384 = vadd.f32 0.0, %v6383
        %6385 = vmatmul.bf16.gmra.mxu0 %v5788
        %v6386 = vpop.f32.mrf.mxu0
        %v6387 = vadd.f32 0.0, %v6386
        %v6388 = vpop.f32.mrf.mxu0
        %v6389 = vadd.f32 0.0, %v6388
        %6390 = vmatmul.bf16.gmra.mxu0 %v5789
        %v6391 = vpop.f32.mrf.mxu0
        %v6392 = vadd.f32 0.0, %v6391
        %v6393 = vpop.f32.mrf.mxu0
        %v6394 = vadd.f32 0.0, %v6393
        %6395 = vmatmul.bf16.gmra.mxu0 %v5790
        %v6396 = vpop.f32.mrf.mxu0
        %v6397 = vadd.f32 0.0, %v6396
        %v6398 = vpop.f32.mrf.mxu0
        %v6399 = vadd.f32 0.0, %v6398
        %6400 = vmatmul.bf16.gmra.mxu0 %v5791
        %v6401 = vpop.f32.mrf.mxu0
        %v6402 = vadd.f32 0.0, %v6401
        %v6403 = vpop.f32.mrf.mxu0
        %v6404 = vadd.f32 0.0, %v6403
        %6405 = vmatmul.bf16.gmra.mxu0 %v5792
        %v6406 = vpop.f32.mrf.mxu0
        %v6407 = vadd.f32 0.0, %v6406
        %v6408 = vpop.f32.mrf.mxu0
        %v6409 = vadd.f32 0.0, %v6408
        %6410 = vdwg.mxu0
        %6411 = vmatpush.bf16.msra.mxu0 %v6289
        %6412 = vmatpush.bf16.msra.mxu0 %v6288
        %6413 = vmatpush.bf16.msra.mxu0 %v6287
        %6414 = vmatpush.bf16.msra.mxu0 %v6286
        %6415 = vmatpush.bf16.msra.mxu0 %v6285
        %6416 = vmatpush.bf16.msra.mxu0 %v6284
        %6417 = vmatpush.bf16.msra.mxu0 %v6283
        %6418 = vmatpush.bf16.msra.mxu0 %v6282
        %6419 = vmatmul.bf16.gmra.mxu0 %v5868
        %v6420 = vpop.f32.mrf.mxu0
        %v6421 = vadd.f32 %v6332, %v6420
        %v6422 = vpop.f32.mrf.mxu0
        %v6423 = vadd.f32 %v6334, %v6422
        %6424 = vmatmul.bf16.gmra.mxu0 %v5880
        %v6425 = vpop.f32.mrf.mxu0
        %v6426 = vadd.f32 %v6337, %v6425
        %v6427 = vpop.f32.mrf.mxu0
        %v6428 = vadd.f32 %v6339, %v6427
        %6429 = vmatmul.bf16.gmra.mxu0 %v5892
        %v6430 = vpop.f32.mrf.mxu0
        %v6431 = vadd.f32 %v6342, %v6430
        %v6432 = vpop.f32.mrf.mxu0
        %v6433 = vadd.f32 %v6344, %v6432
        %6434 = vmatmul.bf16.gmra.mxu0 %v5904
        %v6435 = vpop.f32.mrf.mxu0
        %v6436 = vadd.f32 %v6347, %v6435
        %v6437 = vpop.f32.mrf.mxu0
        %v6438 = vadd.f32 %v6349, %v6437
        %6439 = vmatmul.bf16.gmra.mxu0 %v5916
        %v6440 = vpop.f32.mrf.mxu0
        %v6441 = vadd.f32 %v6352, %v6440
        %v6442 = vpop.f32.mrf.mxu0
        %v6443 = vadd.f32 %v6354, %v6442
        %6444 = vmatmul.bf16.gmra.mxu0 %v5928
        %v6445 = vpop.f32.mrf.mxu0
        %v6446 = vadd.f32 %v6357, %v6445
        %v6447 = vpop.f32.mrf.mxu0
        %v6448 = vadd.f32 %v6359, %v6447
        %6449 = vmatmul.bf16.gmra.mxu0 %v5940
        %v6450 = vpop.f32.mrf.mxu0
        %v6451 = vadd.f32 %v6362, %v6450
        %v6452 = vpop.f32.mrf.mxu0
        %v6453 = vadd.f32 %v6364, %v6452
        %6454 = vmatmul.bf16.gmra.mxu0 %v5952
        %v6455 = vpop.f32.mrf.mxu0
        %v6456 = vadd.f32 %v6367, %v6455
        %v6457 = vpop.f32.mrf.mxu0
        %v6458 = vadd.f32 %v6369, %v6457
        %6459 = vmatmul.bf16.gmra.mxu0 %v5964
        %v6460 = vpop.f32.mrf.mxu0
        %v6461 = vadd.f32 %v6372, %v6460
        %v6462 = vpop.f32.mrf.mxu0
        %v6463 = vadd.f32 %v6374, %v6462
        %6464 = vmatmul.bf16.gmra.mxu0 %v5976
        %v6465 = vpop.f32.mrf.mxu0
        %v6466 = vadd.f32 %v6377, %v6465
        %v6467 = vpop.f32.mrf.mxu0
        %v6468 = vadd.f32 %v6379, %v6467
        %6469 = vmatmul.bf16.gmra.mxu0 %v5988
        %v6470 = vpop.f32.mrf.mxu0
        %v6471 = vadd.f32 %v6382, %v6470
        %v6472 = vpop.f32.mrf.mxu0
        %v6473 = vadd.f32 %v6384, %v6472
        %6474 = vmatmul.bf16.gmra.mxu0 %v6000
        %v6475 = vpop.f32.mrf.mxu0
        %v6476 = vadd.f32 %v6387, %v6475
        %v6477 = vpop.f32.mrf.mxu0
        %v6478 = vadd.f32 %v6389, %v6477
        %6479 = vmatmul.bf16.gmra.mxu0 %v6012
        %v6480 = vpop.f32.mrf.mxu0
        %v6481 = vadd.f32 %v6392, %v6480
        %v6482 = vpop.f32.mrf.mxu0
        %v6483 = vadd.f32 %v6394, %v6482
        %6484 = vmatmul.bf16.gmra.mxu0 %v6024
        %v6485 = vpop.f32.mrf.mxu0
        %v6486 = vadd.f32 %v6397, %v6485
        %v6487 = vpop.f32.mrf.mxu0
        %v6488 = vadd.f32 %v6399, %v6487
        %6489 = vmatmul.bf16.gmra.mxu0 %v6036
        %v6490 = vpop.f32.mrf.mxu0
        %v6491 = vadd.f32 %v6402, %v6490
        %v6492 = vpop.f32.mrf.mxu0
        %v6493 = vadd.f32 %v6404, %v6492
        %6494 = vmatmul.bf16.gmra.mxu0 %v6048
        %v6495 = vpop.f32.mrf.mxu0
        %v6496 = vadd.f32 %v6407, %v6495
        %v6497 = vpop.f32.mrf.mxu0
        %v6498 = vadd.f32 %v6409, %v6497
        %6499 = vdwg.mxu0
        %6500 = vmatpush.bf16.msra.mxu0 %v6297
        %6501 = vmatpush.bf16.msra.mxu0 %v6296
        %6502 = vmatpush.bf16.msra.mxu0 %v6295
        %6503 = vmatpush.bf16.msra.mxu0 %v6294
        %6504 = vmatpush.bf16.msra.mxu0 %v6293
        %6505 = vmatpush.bf16.msra.mxu0 %v6292
        %6506 = vmatpush.bf16.msra.mxu0 %v6291
        %6507 = vmatpush.bf16.msra.mxu0 %v6290
        %6508 = vmatmul.bf16.gmra.mxu0 %v6067
        %v6509 = vpop.f32.mrf.mxu0
        %v6510 = vadd.f32 %v6421, %v6509
        %v6511 = vpop.f32.mrf.mxu0
        %v6512 = vadd.f32 %v6423, %v6511
        %6513 = vmatmul.bf16.gmra.mxu0 %v6070
        %v6514 = vpop.f32.mrf.mxu0
        %v6515 = vadd.f32 %v6426, %v6514
        %v6516 = vpop.f32.mrf.mxu0
        %v6517 = vadd.f32 %v6428, %v6516
        %6518 = vmatmul.bf16.gmra.mxu0 %v6073
        %v6519 = vpop.f32.mrf.mxu0
        %v6520 = vadd.f32 %v6431, %v6519
        %v6521 = vpop.f32.mrf.mxu0
        %v6522 = vadd.f32 %v6433, %v6521
        %6523 = vmatmul.bf16.gmra.mxu0 %v6076
        %v6524 = vpop.f32.mrf.mxu0
        %v6525 = vadd.f32 %v6436, %v6524
        %v6526 = vpop.f32.mrf.mxu0
        %v6527 = vadd.f32 %v6438, %v6526
        %6528 = vmatmul.bf16.gmra.mxu0 %v6079
        %v6529 = vpop.f32.mrf.mxu0
        %v6530 = vadd.f32 %v6441, %v6529
        %v6531 = vpop.f32.mrf.mxu0
        %v6532 = vadd.f32 %v6443, %v6531
        %6533 = vmatmul.bf16.gmra.mxu0 %v6082
        %v6534 = vpop.f32.mrf.mxu0
        %v6535 = vadd.f32 %v6446, %v6534
        %v6536 = vpop.f32.mrf.mxu0
        %v6537 = vadd.f32 %v6448, %v6536
        %6538 = vmatmul.bf16.gmra.mxu0 %v6085
        %v6539 = vpop.f32.mrf.mxu0
        %v6540 = vadd.f32 %v6451, %v6539
        %v6541 = vpop.f32.mrf.mxu0
        %v6542 = vadd.f32 %v6453, %v6541
        %6543 = vmatmul.bf16.gmra.mxu0 %v6088
        %v6544 = vpop.f32.mrf.mxu0
        %v6545 = vadd.f32 %v6456, %v6544
        %v6546 = vpop.f32.mrf.mxu0
        %v6547 = vadd.f32 %v6458, %v6546
        %6548 = vmatmul.bf16.gmra.mxu0 %v6091
        %v6549 = vpop.f32.mrf.mxu0
        %v6550 = vadd.f32 %v6461, %v6549
        %v6551 = vpop.f32.mrf.mxu0
        %v6552 = vadd.f32 %v6463, %v6551
        %6553 = vmatmul.bf16.gmra.mxu0 %v6094
        %v6554 = vpop.f32.mrf.mxu0
        %v6555 = vadd.f32 %v6466, %v6554
        %v6556 = vpop.f32.mrf.mxu0
        %v6557 = vadd.f32 %v6468, %v6556
        %6558 = vmatmul.bf16.gmra.mxu0 %v6097
        %v6559 = vpop.f32.mrf.mxu0
        %v6560 = vadd.f32 %v6471, %v6559
        %v6561 = vpop.f32.mrf.mxu0
        %v6562 = vadd.f32 %v6473, %v6561
        %6563 = vmatmul.bf16.gmra.mxu0 %v6100
        %v6564 = vpop.f32.mrf.mxu0
        %v6565 = vadd.f32 %v6476, %v6564
        %v6566 = vpop.f32.mrf.mxu0
        %v6567 = vadd.f32 %v6478, %v6566
        %6568 = vmatmul.bf16.gmra.mxu0 %v6103
        %v6569 = vpop.f32.mrf.mxu0
        %v6570 = vadd.f32 %v6481, %v6569
        %v6571 = vpop.f32.mrf.mxu0
        %v6572 = vadd.f32 %v6483, %v6571
        %6573 = vmatmul.bf16.gmra.mxu0 %v6106
        %v6574 = vpop.f32.mrf.mxu0
        %v6575 = vadd.f32 %v6486, %v6574
        %v6576 = vpop.f32.mrf.mxu0
        %v6577 = vadd.f32 %v6488, %v6576
        %6578 = vmatmul.bf16.gmra.mxu0 %v6109
        %v6579 = vpop.f32.mrf.mxu0
        %v6580 = vadd.f32 %v6491, %v6579
        %v6581 = vpop.f32.mrf.mxu0
        %v6582 = vadd.f32 %v6493, %v6581
        %6583 = vmatmul.bf16.gmra.mxu0 %v6112
        %v6584 = vpop.f32.mrf.mxu0
        %v6585 = vadd.f32 %v6496, %v6584
        %v6586 = vpop.f32.mrf.mxu0
        %v6587 = vadd.f32 %v6498, %v6586
        %6588 = vdwg.mxu0
        %v6589 = vld [vmem:[#allocation4] sm:$0xff]
        %v6590 = vld [vmem:[#allocation4 + $0x8] sm:$0xff]
        %v6591 = vld [vmem:[#allocation4 + $0x10] sm:$0xff]
        %v6592 = vld [vmem:[#allocation4 + $0x18] sm:$0xff]
        %v6593 = vld [vmem:[#allocation4 + $0x20] sm:$0xff]
        %v6594 = vld [vmem:[#allocation4 + $0x28] sm:$0xff]
        %v6595 = vld [vmem:[#allocation4 + $0x30] sm:$0xff]
        %v6596 = vld [vmem:[#allocation4 + $0x38] sm:$0xff]
        %v6597 = vld [vmem:[#allocation4 + $0x40] sm:$0xff]
        %v6598 = vld [vmem:[#allocation4 + $0x48] sm:$0xff]
        %v6599 = vld [vmem:[#allocation4 + $0x50] sm:$0xff]
        %v6600 = vld [vmem:[#allocation4 + $0x58] sm:$0xff]
        %v6601 = vld [vmem:[#allocation4 + $0x60] sm:$0xff]
        %v6602 = vld [vmem:[#allocation4 + $0x68] sm:$0xff]
        %v6603 = vld [vmem:[#allocation4 + $0x70] sm:$0xff]
        %v6604 = vld [vmem:[#allocation4 + $0x78] sm:$0xff]
        %v6605 = vld [vmem:[#allocation4 + $0x80] sm:$0xff]
        %v6606 = vld [vmem:[#allocation4 + $0x88] sm:$0xff]
        %v6607 = vld [vmem:[#allocation4 + $0x90] sm:$0xff]
        %v6608 = vld [vmem:[#allocation4 + $0x98] sm:$0xff]
        %v6609 = vld [vmem:[#allocation4 + $0xa0] sm:$0xff]
        %v6610 = vld [vmem:[#allocation4 + $0xa8] sm:$0xff]
        %v6611 = vld [vmem:[#allocation4 + $0xb0] sm:$0xff]
        %v6612 = vld [vmem:[#allocation4 + $0xb8] sm:$0xff]
        %v6613 = vld [vmem:[#allocation4 + $0xc0] sm:$0xff]
        %v6614 = vld [vmem:[#allocation4 + $0xc8] sm:$0xff]
        %v6615 = vld [vmem:[#allocation4 + $0xd0] sm:$0xff]
        %v6616 = vld [vmem:[#allocation4 + $0xd8] sm:$0xff]
        %v6617 = vld [vmem:[#allocation4 + $0xe0] sm:$0xff]
        %v6618 = vld [vmem:[#allocation4 + $0xe8] sm:$0xff]
        %v6619 = vld [vmem:[#allocation4 + $0xf0] sm:$0xff]
        %v6620 = vld [vmem:[#allocation4 + $0xf8] sm:$0xff]
        %v6621 = vadd.f32 %v6589, %v6510
        %v6622 = vadd.f32 %v6590, %v6512
        %v6623 = vadd.f32 %v6591, %v6515
        %v6624 = vadd.f32 %v6592, %v6517
        %v6625 = vadd.f32 %v6593, %v6520
        %v6626 = vadd.f32 %v6594, %v6522
        %v6627 = vadd.f32 %v6595, %v6525
        %v6628 = vadd.f32 %v6596, %v6527
        %v6629 = vadd.f32 %v6597, %v6530
        %v6630 = vadd.f32 %v6598, %v6532
        %v6631 = vadd.f32 %v6599, %v6535
        %v6632 = vadd.f32 %v6600, %v6537
        %v6633 = vadd.f32 %v6601, %v6540
        %v6634 = vadd.f32 %v6602, %v6542
        %v6635 = vadd.f32 %v6603, %v6545
        %v6636 = vadd.f32 %v6604, %v6547
        %v6637 = vadd.f32 %v6605, %v6550
        %v6638 = vadd.f32 %v6606, %v6552
        %v6639 = vadd.f32 %v6607, %v6555
        %v6640 = vadd.f32 %v6608, %v6557
        %v6641 = vadd.f32 %v6609, %v6560
        %v6642 = vadd.f32 %v6610, %v6562
        %v6643 = vadd.f32 %v6611, %v6565
        %v6644 = vadd.f32 %v6612, %v6567
        %v6645 = vadd.f32 %v6613, %v6570
        %v6646 = vadd.f32 %v6614, %v6572
        %v6647 = vadd.f32 %v6615, %v6575
        %v6648 = vadd.f32 %v6616, %v6577
        %v6649 = vadd.f32 %v6617, %v6580
        %v6650 = vadd.f32 %v6618, %v6582
        %v6651 = vadd.f32 %v6619, %v6585
        %v6652 = vadd.f32 %v6620, %v6587
        %6653 = vst [vmem:[#allocation4] sm:$0xff] %v6621
        %6654 = vst [vmem:[#allocation4 + $0x8] sm:$0xff] %v6622
        %6655 = vst [vmem:[#allocation4 + $0x10] sm:$0xff] %v6623
        %6656 = vst [vmem:[#allocation4 + $0x18] sm:$0xff] %v6624
        %6657 = vst [vmem:[#allocation4 + $0x20] sm:$0xff] %v6625
        %6658 = vst [vmem:[#allocation4 + $0x28] sm:$0xff] %v6626
        %6659 = vst [vmem:[#allocation4 + $0x30] sm:$0xff] %v6627
        %6660 = vst [vmem:[#allocation4 + $0x38] sm:$0xff] %v6628
        %6661 = vst [vmem:[#allocation4 + $0x40] sm:$0xff] %v6629
        %6662 = vst [vmem:[#allocation4 + $0x48] sm:$0xff] %v6630
        %6663 = vst [vmem:[#allocation4 + $0x50] sm:$0xff] %v6631
        %6664 = vst [vmem:[#allocation4 + $0x58] sm:$0xff] %v6632
        %6665 = vst [vmem:[#allocation4 + $0x60] sm:$0xff] %v6633
        %6666 = vst [vmem:[#allocation4 + $0x68] sm:$0xff] %v6634
        %6667 = vst [vmem:[#allocation4 + $0x70] sm:$0xff] %v6635
        %6668 = vst [vmem:[#allocation4 + $0x78] sm:$0xff] %v6636
        %6669 = vst [vmem:[#allocation4 + $0x80] sm:$0xff] %v6637
        %6670 = vst [vmem:[#allocation4 + $0x88] sm:$0xff] %v6638
        %6671 = vst [vmem:[#allocation4 + $0x90] sm:$0xff] %v6639
        %6672 = vst [vmem:[#allocation4 + $0x98] sm:$0xff] %v6640
        %6673 = vst [vmem:[#allocation4 + $0xa0] sm:$0xff] %v6641
        %6674 = vst [vmem:[#allocation4 + $0xa8] sm:$0xff] %v6642
        %6675 = vst [vmem:[#allocation4 + $0xb0] sm:$0xff] %v6643
        %6676 = vst [vmem:[#allocation4 + $0xb8] sm:$0xff] %v6644
        %6677 = vst [vmem:[#allocation4 + $0xc0] sm:$0xff] %v6645
        %6678 = vst [vmem:[#allocation4 + $0xc8] sm:$0xff] %v6646
        %6679 = vst [vmem:[#allocation4 + $0xd0] sm:$0xff] %v6647
        %6680 = vst [vmem:[#allocation4 + $0xd8] sm:$0xff] %v6648
        %6681 = vst [vmem:[#allocation4 + $0xe0] sm:$0xff] %v6649
        %6682 = vst [vmem:[#allocation4 + $0xe8] sm:$0xff] %v6650
        %6683 = vst [vmem:[#allocation4 + $0xf0] sm:$0xff] %v6651
        %6684 = vst [vmem:[#allocation4 + $0xf8] sm:$0xff] %v6652
        %s6685 = scalar_lea.vmem [#allocation3], 24
        %v6686 = vld [vmem:[%s6685] sm:$0xf]
        %v6687 = vld [vmem:[%s6685 + $0x4] sm:$0xf]
        %v6688 = vld [vmem:[%s6685 + $0x8] sm:$0x1]
        %v6689 = vld [vmem:[%s6685 + $0xc] sm:$0xf]
        %v6690 = vld [vmem:[%s6685 + $0x10] sm:$0xf]
        %v6691 = vld [vmem:[%s6685 + $0x14] sm:$0x1]
        %v6692 = vld [vmem:[%s6685 + $0x18] sm:$0xf]
        %v6693 = vld [vmem:[%s6685 + $0x1c] sm:$0xf]
        %v6694 = vld [vmem:[%s6685 + $0x20] sm:$0x1]
        %v6695 = vld [vmem:[%s6685 + $0x24] sm:$0xf]
        %v6696 = vld [vmem:[%s6685 + $0x28] sm:$0xf]
        %v6697 = vld [vmem:[%s6685 + $0x2c] sm:$0x1]
        %v6698 = vld [vmem:[%s6685 + $0x30] sm:$0xf]
        %v6699 = vld [vmem:[%s6685 + $0x34] sm:$0xf]
        %v6700 = vld [vmem:[%s6685 + $0x38] sm:$0x1]
        %v6701 = vld [vmem:[%s6685 + $0x3c] sm:$0xf]
        %v6702 = vld [vmem:[%s6685 + $0x40] sm:$0xf]
        %v6703 = vld [vmem:[%s6685 + $0x44] sm:$0x1]
        %v6704 = vld [vmem:[%s6685 + $0x48] sm:$0xf]
        %v6705 = vld [vmem:[%s6685 + $0x4c] sm:$0xf]
        %v6706 = vld [vmem:[%s6685 + $0x50] sm:$0x1]
        %v6707 = vld [vmem:[%s6685 + $0x54] sm:$0xf]
        %v6708 = vld [vmem:[%s6685 + $0x58] sm:$0xf]
        %v6709 = vld [vmem:[%s6685 + $0x5c] sm:$0x1]
        %v6710 = vld [vmem:[%s6685 + $0x60] sm:$0xf]
        %v6711 = vld [vmem:[%s6685 + $0x64] sm:$0xf]
        %v6712 = vld [vmem:[%s6685 + $0x68] sm:$0x1]
        %v6713 = vld [vmem:[%s6685 + $0x6c] sm:$0xf]
        %v6714 = vld [vmem:[%s6685 + $0x70] sm:$0xf]
        %v6715 = vld [vmem:[%s6685 + $0x74] sm:$0x1]
        %v6716 = vld [vmem:[%s6685 + $0x78] sm:$0xf]
        %v6717 = vld [vmem:[%s6685 + $0x7c] sm:$0xf]
        %v6718 = vld [vmem:[%s6685 + $0x80] sm:$0x1]
        %v6719 = vld [vmem:[%s6685 + $0x84] sm:$0xf]
        %v6720 = vld [vmem:[%s6685 + $0x88] sm:$0xf]
        %v6721 = vld [vmem:[%s6685 + $0x8c] sm:$0x1]
        %v6722 = vld [vmem:[%s6685 + $0x90] sm:$0xf]
        %v6723 = vld [vmem:[%s6685 + $0x94] sm:$0xf]
        %v6724 = vld [vmem:[%s6685 + $0x98] sm:$0x1]
        %v6725 = vld [vmem:[%s6685 + $0x9c] sm:$0xf]
        %v6726 = vld [vmem:[%s6685 + $0xa0] sm:$0xf]
        %v6727 = vld [vmem:[%s6685 + $0xa4] sm:$0x1]
        %v6728 = vld [vmem:[%s6685 + $0xa8] sm:$0xf]
        %v6729 = vld [vmem:[%s6685 + $0xac] sm:$0xf]
        %v6730 = vld [vmem:[%s6685 + $0xb0] sm:$0x1]
        %v6731 = vld [vmem:[%s6685 + $0xb4] sm:$0xf]
        %v6732 = vld [vmem:[%s6685 + $0xb8] sm:$0xf]
        %v6733 = vld [vmem:[%s6685 + $0xbc] sm:$0x1]
        %v6766 = vunpack.c.l.b16 %v6686
        %v6767 = vunpack.c.l.b16 %v6687
        %v6768 = vunpack.c.l.b16 %v6689
        %v6769 = vunpack.c.l.b16 %v6690
        %v6770 = vunpack.c.l.b16 %v6692
        %v6771 = vunpack.c.l.b16 %v6693
        %v6772 = vunpack.c.l.b16 %v6695
        %v6773 = vunpack.c.l.b16 %v6696
        %v6774 = vunpack.c.l.b16 %v6698
        %v6775 = vunpack.c.l.b16 %v6699
        %v6776 = vunpack.c.l.b16 %v6701
        %v6777 = vunpack.c.l.b16 %v6702
        %v6778 = vunpack.c.l.b16 %v6704
        %v6779 = vunpack.c.l.b16 %v6705
        %v6780 = vunpack.c.l.b16 %v6707
        %v6781 = vunpack.c.l.b16 %v6708
        %v6782 = vunpack.c.l.b16 %v6710
        %v6783 = vunpack.c.l.b16 %v6711
        %v6784 = vunpack.c.l.b16 %v6713
        %v6785 = vunpack.c.l.b16 %v6714
        %v6786 = vunpack.c.l.b16 %v6716
        %v6787 = vunpack.c.l.b16 %v6717
        %v6788 = vunpack.c.l.b16 %v6719
        %v6789 = vunpack.c.l.b16 %v6720
        %v6790 = vunpack.c.l.b16 %v6722
        %v6791 = vunpack.c.l.b16 %v6723
        %v6792 = vunpack.c.l.b16 %v6725
        %v6793 = vunpack.c.l.b16 %v6726
        %v6794 = vunpack.c.l.b16 %v6728
        %v6795 = vunpack.c.l.b16 %v6729
        %v6796 = vunpack.c.l.b16 %v6731
        %v6797 = vunpack.c.l.b16 %v6732
        %v6798 = vpack.c.b16 %v6767, %v6766
        %v6799 = vpack.c.b16 %v6769, %v6768
        %v6800 = vpack.c.b16 %v6771, %v6770
        %v6801 = vpack.c.b16 %v6773, %v6772
        %v6802 = vpack.c.b16 %v6775, %v6774
        %v6803 = vpack.c.b16 %v6777, %v6776
        %v6804 = vpack.c.b16 %v6779, %v6778
        %v6805 = vpack.c.b16 %v6781, %v6780
        %v6806 = vpack.c.b16 %v6783, %v6782
        %v6807 = vpack.c.b16 %v6785, %v6784
        %v6808 = vpack.c.b16 %v6787, %v6786
        %v6809 = vpack.c.b16 %v6789, %v6788
        %v6810 = vpack.c.b16 %v6791, %v6790
        %v6811 = vpack.c.b16 %v6793, %v6792
        %v6812 = vpack.c.b16 %v6795, %v6794
        %v6813 = vpack.c.b16 %v6797, %v6796
        %v6846 = vunpack.c.l.b16 %v6688
        %v6847 = vunpack.c.l.b16 %v6691
        %v6848 = vunpack.c.l.b16 %v6694
        %v6849 = vunpack.c.l.b16 %v6697
        %v6850 = vunpack.c.l.b16 %v6700
        %v6851 = vunpack.c.l.b16 %v6703
        %v6852 = vunpack.c.l.b16 %v6706
        %v6853 = vunpack.c.l.b16 %v6709
        %v6854 = vunpack.c.l.b16 %v6712
        %v6855 = vunpack.c.l.b16 %v6715
        %v6856 = vunpack.c.l.b16 %v6718
        %v6857 = vunpack.c.l.b16 %v6721
        %v6858 = vunpack.c.l.b16 %v6724
        %v6859 = vunpack.c.l.b16 %v6727
        %v6860 = vunpack.c.l.b16 %v6730
        %v6861 = vunpack.c.l.b16 %v6733
        %v6862 = vpack.c.b16 %v6846, %v6846
        %v6863 = vpack.c.b16 %v6847, %v6847
        %v6864 = vpack.c.b16 %v6848, %v6848
        %v6865 = vpack.c.b16 %v6849, %v6849
        %v6866 = vpack.c.b16 %v6850, %v6850
        %v6867 = vpack.c.b16 %v6851, %v6851
        %v6868 = vpack.c.b16 %v6852, %v6852
        %v6869 = vpack.c.b16 %v6853, %v6853
        %v6870 = vpack.c.b16 %v6854, %v6854
        %v6871 = vpack.c.b16 %v6855, %v6855
        %v6872 = vpack.c.b16 %v6856, %v6856
        %v6873 = vpack.c.b16 %v6857, %v6857
        %v6874 = vpack.c.b16 %v6858, %v6858
        %v6875 = vpack.c.b16 %v6859, %v6859
        %v6876 = vpack.c.b16 %v6860, %v6860
        %v6877 = vpack.c.b16 %v6861, %v6861
        %v6879 = vshrl.u32 %v6798, 16
        %v6881 = vshll.u32 %v6798, 16
        %v6883 = vrot.slane %v6881, 1
        %v6884 = vor.u32 %v6879, %v6883
        %v6886 = vshll.u32 %v6862, 16
        %v6888 = vrot.slane %v6886, 1
        %v6889 = vsel %vm1211, %v6884, %v6888
        %v6891 = vshrl.u32 %v6799, 16
        %v6893 = vshll.u32 %v6799, 16
        %v6895 = vrot.slane %v6893, 1
        %v6896 = vor.u32 %v6891, %v6895
        %v6898 = vshll.u32 %v6863, 16
        %v6900 = vrot.slane %v6898, 1
        %v6901 = vsel %vm1211, %v6896, %v6900
        %v6903 = vshrl.u32 %v6800, 16
        %v6905 = vshll.u32 %v6800, 16
        %v6907 = vrot.slane %v6905, 1
        %v6908 = vor.u32 %v6903, %v6907
        %v6910 = vshll.u32 %v6864, 16
        %v6912 = vrot.slane %v6910, 1
        %v6913 = vsel %vm1211, %v6908, %v6912
        %v6915 = vshrl.u32 %v6801, 16
        %v6917 = vshll.u32 %v6801, 16
        %v6919 = vrot.slane %v6917, 1
        %v6920 = vor.u32 %v6915, %v6919
        %v6922 = vshll.u32 %v6865, 16
        %v6924 = vrot.slane %v6922, 1
        %v6925 = vsel %vm1211, %v6920, %v6924
        %v6927 = vshrl.u32 %v6802, 16
        %v6929 = vshll.u32 %v6802, 16
        %v6931 = vrot.slane %v6929, 1
        %v6932 = vor.u32 %v6927, %v6931
        %v6934 = vshll.u32 %v6866, 16
        %v6936 = vrot.slane %v6934, 1
        %v6937 = vsel %vm1211, %v6932, %v6936
        %v6939 = vshrl.u32 %v6803, 16
        %v6941 = vshll.u32 %v6803, 16
        %v6943 = vrot.slane %v6941, 1
        %v6944 = vor.u32 %v6939, %v6943
        %v6946 = vshll.u32 %v6867, 16
        %v6948 = vrot.slane %v6946, 1
        %v6949 = vsel %vm1211, %v6944, %v6948
        %v6951 = vshrl.u32 %v6804, 16
        %v6953 = vshll.u32 %v6804, 16
        %v6955 = vrot.slane %v6953, 1
        %v6956 = vor.u32 %v6951, %v6955
        %v6958 = vshll.u32 %v6868, 16
        %v6960 = vrot.slane %v6958, 1
        %v6961 = vsel %vm1211, %v6956, %v6960
        %v6963 = vshrl.u32 %v6805, 16
        %v6965 = vshll.u32 %v6805, 16
        %v6967 = vrot.slane %v6965, 1
        %v6968 = vor.u32 %v6963, %v6967
        %v6970 = vshll.u32 %v6869, 16
        %v6972 = vrot.slane %v6970, 1
        %v6973 = vsel %vm1211, %v6968, %v6972
        %v6975 = vshrl.u32 %v6806, 16
        %v6977 = vshll.u32 %v6806, 16
        %v6979 = vrot.slane %v6977, 1
        %v6980 = vor.u32 %v6975, %v6979
        %v6982 = vshll.u32 %v6870, 16
        %v6984 = vrot.slane %v6982, 1
        %v6985 = vsel %vm1211, %v6980, %v6984
        %v6987 = vshrl.u32 %v6807, 16
        %v6989 = vshll.u32 %v6807, 16
        %v6991 = vrot.slane %v6989, 1
        %v6992 = vor.u32 %v6987, %v6991
        %v6994 = vshll.u32 %v6871, 16
        %v6996 = vrot.slane %v6994, 1
        %v6997 = vsel %vm1211, %v6992, %v6996
        %v6999 = vshrl.u32 %v6808, 16
        %v7001 = vshll.u32 %v6808, 16
        %v7003 = vrot.slane %v7001, 1
        %v7004 = vor.u32 %v6999, %v7003
        %v7006 = vshll.u32 %v6872, 16
        %v7008 = vrot.slane %v7006, 1
        %v7009 = vsel %vm1211, %v7004, %v7008
        %v7011 = vshrl.u32 %v6809, 16
        %v7013 = vshll.u32 %v6809, 16
        %v7015 = vrot.slane %v7013, 1
        %v7016 = vor.u32 %v7011, %v7015
        %v7018 = vshll.u32 %v6873, 16
        %v7020 = vrot.slane %v7018, 1
        %v7021 = vsel %vm1211, %v7016, %v7020
        %v7023 = vshrl.u32 %v6810, 16
        %v7025 = vshll.u32 %v6810, 16
        %v7027 = vrot.slane %v7025, 1
        %v7028 = vor.u32 %v7023, %v7027
        %v7030 = vshll.u32 %v6874, 16
        %v7032 = vrot.slane %v7030, 1
        %v7033 = vsel %vm1211, %v7028, %v7032
        %v7035 = vshrl.u32 %v6811, 16
        %v7037 = vshll.u32 %v6811, 16
        %v7039 = vrot.slane %v7037, 1
        %v7040 = vor.u32 %v7035, %v7039
        %v7042 = vshll.u32 %v6875, 16
        %v7044 = vrot.slane %v7042, 1
        %v7045 = vsel %vm1211, %v7040, %v7044
        %v7047 = vshrl.u32 %v6812, 16
        %v7049 = vshll.u32 %v6812, 16
        %v7051 = vrot.slane %v7049, 1
        %v7052 = vor.u32 %v7047, %v7051
        %v7054 = vshll.u32 %v6876, 16
        %v7056 = vrot.slane %v7054, 1
        %v7057 = vsel %vm1211, %v7052, %v7056
        %v7059 = vshrl.u32 %v6813, 16
        %v7061 = vshll.u32 %v6813, 16
        %v7063 = vrot.slane %v7061, 1
        %v7064 = vor.u32 %v7059, %v7063
        %v7066 = vshll.u32 %v6877, 16
        %v7068 = vrot.slane %v7066, 1
        %v7069 = vsel %vm1211, %v7064, %v7068
        %v7086 = vrot.slane %v6798, 1
        %v7087 = vrot.slane %v6862, 1
        %v7088 = vsel %vm1420, %v7086, %v7087
        %v7089 = vrot.slane %v6799, 1
        %v7090 = vrot.slane %v6863, 1
        %v7091 = vsel %vm1420, %v7089, %v7090
        %v7092 = vrot.slane %v6800, 1
        %v7093 = vrot.slane %v6864, 1
        %v7094 = vsel %vm1420, %v7092, %v7093
        %v7095 = vrot.slane %v6801, 1
        %v7096 = vrot.slane %v6865, 1
        %v7097 = vsel %vm1420, %v7095, %v7096
        %v7098 = vrot.slane %v6802, 1
        %v7099 = vrot.slane %v6866, 1
        %v7100 = vsel %vm1420, %v7098, %v7099
        %v7101 = vrot.slane %v6803, 1
        %v7102 = vrot.slane %v6867, 1
        %v7103 = vsel %vm1420, %v7101, %v7102
        %v7104 = vrot.slane %v6804, 1
        %v7105 = vrot.slane %v6868, 1
        %v7106 = vsel %vm1420, %v7104, %v7105
        %v7107 = vrot.slane %v6805, 1
        %v7108 = vrot.slane %v6869, 1
        %v7109 = vsel %vm1420, %v7107, %v7108
        %v7110 = vrot.slane %v6806, 1
        %v7111 = vrot.slane %v6870, 1
        %v7112 = vsel %vm1420, %v7110, %v7111
        %v7113 = vrot.slane %v6807, 1
        %v7114 = vrot.slane %v6871, 1
        %v7115 = vsel %vm1420, %v7113, %v7114
        %v7116 = vrot.slane %v6808, 1
        %v7117 = vrot.slane %v6872, 1
        %v7118 = vsel %vm1420, %v7116, %v7117
        %v7119 = vrot.slane %v6809, 1
        %v7120 = vrot.slane %v6873, 1
        %v7121 = vsel %vm1420, %v7119, %v7120
        %v7122 = vrot.slane %v6810, 1
        %v7123 = vrot.slane %v6874, 1
        %v7124 = vsel %vm1420, %v7122, %v7123
        %v7125 = vrot.slane %v6811, 1
        %v7126 = vrot.slane %v6875, 1
        %v7127 = vsel %vm1420, %v7125, %v7126
        %v7128 = vrot.slane %v6812, 1
        %v7129 = vrot.slane %v6876, 1
        %v7130 = vsel %vm1420, %v7128, %v7129
        %v7131 = vrot.slane %v6813, 1
        %v7132 = vrot.slane %v6877, 1
        %v7133 = vsel %vm1420, %v7131, %v7132
        %s7150 = scalar_lea.vmem [#allocation10], 384
        %v7151 = vld [vmem:[%s7150] sm:$0xf]
        %v7152 = vld [vmem:[%s7150 + $0x4] sm:$0xf]
        %v7153 = vld [vmem:[%s7150 + $0x8] sm:$0xf]
        %v7154 = vld [vmem:[%s7150 + $0xc] sm:$0xf]
        %v7155 = vld [vmem:[%s7150 + $0x10] sm:$0xf]
        %v7156 = vld [vmem:[%s7150 + $0x14] sm:$0xf]
        %v7157 = vld [vmem:[%s7150 + $0x18] sm:$0xf]
        %v7158 = vld [vmem:[%s7150 + $0x1c] sm:$0xf]
        %v7159 = vld [vmem:[%s7150 + $0x20] sm:$0xf]
        %v7160 = vld [vmem:[%s7150 + $0x24] sm:$0xf]
        %v7161 = vld [vmem:[%s7150 + $0x28] sm:$0xf]
        %v7162 = vld [vmem:[%s7150 + $0x2c] sm:$0xf]
        %v7163 = vld [vmem:[%s7150 + $0x30] sm:$0xf]
        %v7164 = vld [vmem:[%s7150 + $0x34] sm:$0xf]
        %v7165 = vld [vmem:[%s7150 + $0x38] sm:$0xf]
        %v7166 = vld [vmem:[%s7150 + $0x3c] sm:$0xf]
        %v7167 = vld [vmem:[%s7150 + $0x40] sm:$0xf]
        %v7168 = vld [vmem:[%s7150 + $0x44] sm:$0xf]
        %v7169 = vld [vmem:[%s7150 + $0x48] sm:$0xf]
        %v7170 = vld [vmem:[%s7150 + $0x4c] sm:$0xf]
        %v7171 = vld [vmem:[%s7150 + $0x50] sm:$0xf]
        %v7172 = vld [vmem:[%s7150 + $0x54] sm:$0xf]
        %v7173 = vld [vmem:[%s7150 + $0x58] sm:$0xf]
        %v7174 = vld [vmem:[%s7150 + $0x5c] sm:$0xf]
        %v7175 = vld [vmem:[%s7150 + $0x60] sm:$0xf]
        %v7176 = vld [vmem:[%s7150 + $0x64] sm:$0xf]
        %v7177 = vld [vmem:[%s7150 + $0x68] sm:$0xf]
        %v7178 = vld [vmem:[%s7150 + $0x6c] sm:$0xf]
        %v7179 = vld [vmem:[%s7150 + $0x70] sm:$0xf]
        %v7180 = vld [vmem:[%s7150 + $0x74] sm:$0xf]
        %v7181 = vld [vmem:[%s7150 + $0x78] sm:$0xf]
        %v7182 = vld [vmem:[%s7150 + $0x7c] sm:$0xf]
        %v7183 = vld [vmem:[%s7150 + $0x80] sm:$0xf]
        %v7184 = vld [vmem:[%s7150 + $0x84] sm:$0xf]
        %v7185 = vld [vmem:[%s7150 + $0x88] sm:$0xf]
        %v7186 = vld [vmem:[%s7150 + $0x8c] sm:$0xf]
        %v7187 = vld [vmem:[%s7150 + $0x90] sm:$0xf]
        %v7188 = vld [vmem:[%s7150 + $0x94] sm:$0xf]
        %v7189 = vld [vmem:[%s7150 + $0x98] sm:$0xf]
        %v7190 = vld [vmem:[%s7150 + $0x9c] sm:$0xf]
        %v7191 = vld [vmem:[%s7150 + $0xa0] sm:$0xf]
        %v7192 = vld [vmem:[%s7150 + $0xa4] sm:$0xf]
        %v7193 = vld [vmem:[%s7150 + $0xa8] sm:$0xf]
        %v7194 = vld [vmem:[%s7150 + $0xac] sm:$0xf]
        %v7195 = vld [vmem:[%s7150 + $0xb0] sm:$0xf]
        %v7196 = vld [vmem:[%s7150 + $0xb4] sm:$0xf]
        %v7197 = vld [vmem:[%s7150 + $0xb8] sm:$0xf]
        %v7198 = vld [vmem:[%s7150 + $0xbc] sm:$0xf]
        %v7247 = vunpack.c.l.b16 %v7151
        %v7248 = vunpack.c.l.b16 %v7152
        %v7249 = vunpack.c.l.b16 %v7153
        %v7250 = vunpack.c.l.b16 %v7154
        %v7251 = vunpack.c.l.b16 %v7155
        %v7252 = vunpack.c.l.b16 %v7156
        %v7253 = vunpack.c.l.b16 %v7157
        %v7254 = vunpack.c.l.b16 %v7158
        %v7255 = vunpack.c.l.b16 %v7159
        %v7256 = vunpack.c.l.b16 %v7160
        %v7257 = vunpack.c.l.b16 %v7161
        %v7258 = vunpack.c.l.b16 %v7162
        %v7259 = vunpack.c.l.b16 %v7163
        %v7260 = vunpack.c.l.b16 %v7164
        %v7261 = vunpack.c.l.b16 %v7165
        %v7262 = vunpack.c.l.b16 %v7166
        %v7263 = vunpack.c.l.b16 %v7167
        %v7264 = vunpack.c.l.b16 %v7168
        %v7265 = vunpack.c.l.b16 %v7169
        %v7266 = vunpack.c.l.b16 %v7170
        %v7267 = vunpack.c.l.b16 %v7171
        %v7268 = vunpack.c.l.b16 %v7172
        %v7269 = vunpack.c.l.b16 %v7173
        %v7270 = vunpack.c.l.b16 %v7174
        %v7271 = vunpack.c.l.b16 %v7175
        %v7272 = vunpack.c.l.b16 %v7176
        %v7273 = vunpack.c.l.b16 %v7177
        %v7274 = vunpack.c.l.b16 %v7178
        %v7275 = vunpack.c.l.b16 %v7179
        %v7276 = vunpack.c.l.b16 %v7180
        %v7277 = vunpack.c.l.b16 %v7181
        %v7278 = vunpack.c.l.b16 %v7182
        %v7279 = vunpack.c.l.b16 %v7183
        %v7280 = vunpack.c.l.b16 %v7184
        %v7281 = vunpack.c.l.b16 %v7185
        %v7282 = vunpack.c.l.b16 %v7186
        %v7283 = vunpack.c.l.b16 %v7187
        %v7284 = vunpack.c.l.b16 %v7188
        %v7285 = vunpack.c.l.b16 %v7189
        %v7286 = vunpack.c.l.b16 %v7190
        %v7287 = vunpack.c.l.b16 %v7191
        %v7288 = vunpack.c.l.b16 %v7192
        %v7289 = vunpack.c.l.b16 %v7193
        %v7290 = vunpack.c.l.b16 %v7194
        %v7291 = vunpack.c.l.b16 %v7195
        %v7292 = vunpack.c.l.b16 %v7196
        %v7293 = vunpack.c.l.b16 %v7197
        %v7294 = vunpack.c.l.b16 %v7198
        %v7295 = vpack.c.b16 %v7248, %v7247
        %v7296 = vpack.c.b16 %v7250, %v7249
        %v7297 = vpack.c.b16 %v7252, %v7251
        %v7298 = vpack.c.b16 %v7254, %v7253
        %v7299 = vpack.c.b16 %v7256, %v7255
        %v7300 = vpack.c.b16 %v7258, %v7257
        %v7301 = vpack.c.b16 %v7260, %v7259
        %v7302 = vpack.c.b16 %v7262, %v7261
        %v7303 = vpack.c.b16 %v7264, %v7263
        %v7304 = vpack.c.b16 %v7266, %v7265
        %v7305 = vpack.c.b16 %v7268, %v7267
        %v7306 = vpack.c.b16 %v7270, %v7269
        %v7307 = vpack.c.b16 %v7272, %v7271
        %v7308 = vpack.c.b16 %v7274, %v7273
        %v7309 = vpack.c.b16 %v7276, %v7275
        %v7310 = vpack.c.b16 %v7278, %v7277
        %v7311 = vpack.c.b16 %v7280, %v7279
        %v7312 = vpack.c.b16 %v7282, %v7281
        %v7313 = vpack.c.b16 %v7284, %v7283
        %v7314 = vpack.c.b16 %v7286, %v7285
        %v7315 = vpack.c.b16 %v7288, %v7287
        %v7316 = vpack.c.b16 %v7290, %v7289
        %v7317 = vpack.c.b16 %v7292, %v7291
        %v7318 = vpack.c.b16 %v7294, %v7293
        %7343 = vmatpush.bf16.msra.mxu0 %v7302
        %7344 = vmatpush.bf16.msra.mxu0 %v7301
        %7345 = vmatpush.bf16.msra.mxu0 %v7300
        %7346 = vmatpush.bf16.msra.mxu0 %v7299
        %7347 = vmatpush.bf16.msra.mxu0 %v7298
        %7348 = vmatpush.bf16.msra.mxu0 %v7297
        %7349 = vmatpush.bf16.msra.mxu0 %v7296
        %7350 = vmatpush.bf16.msra.mxu0 %v7295
        %7351 = vmatmul.bf16.gmra.mxu0 %v6798
        %v7352 = vpop.f32.mrf.mxu0
        %v7353 = vadd.f32 0.0, %v7352
        %v7354 = vpop.f32.mrf.mxu0
        %v7355 = vadd.f32 0.0, %v7354
        %7356 = vmatmul.bf16.gmra.mxu0 %v6799
        %v7357 = vpop.f32.mrf.mxu0
        %v7358 = vadd.f32 0.0, %v7357
        %v7359 = vpop.f32.mrf.mxu0
        %v7360 = vadd.f32 0.0, %v7359
        %7361 = vmatmul.bf16.gmra.mxu0 %v6800
        %v7362 = vpop.f32.mrf.mxu0
        %v7363 = vadd.f32 0.0, %v7362
        %v7364 = vpop.f32.mrf.mxu0
        %v7365 = vadd.f32 0.0, %v7364
        %7366 = vmatmul.bf16.gmra.mxu0 %v6801
        %v7367 = vpop.f32.mrf.mxu0
        %v7368 = vadd.f32 0.0, %v7367
        %v7369 = vpop.f32.mrf.mxu0
        %v7370 = vadd.f32 0.0, %v7369
        %7371 = vmatmul.bf16.gmra.mxu0 %v6802
        %v7372 = vpop.f32.mrf.mxu0
        %v7373 = vadd.f32 0.0, %v7372
        %v7374 = vpop.f32.mrf.mxu0
        %v7375 = vadd.f32 0.0, %v7374
        %7376 = vmatmul.bf16.gmra.mxu0 %v6803
        %v7377 = vpop.f32.mrf.mxu0
        %v7378 = vadd.f32 0.0, %v7377
        %v7379 = vpop.f32.mrf.mxu0
        %v7380 = vadd.f32 0.0, %v7379
        %7381 = vmatmul.bf16.gmra.mxu0 %v6804
        %v7382 = vpop.f32.mrf.mxu0
        %v7383 = vadd.f32 0.0, %v7382
        %v7384 = vpop.f32.mrf.mxu0
        %v7385 = vadd.f32 0.0, %v7384
        %7386 = vmatmul.bf16.gmra.mxu0 %v6805
        %v7387 = vpop.f32.mrf.mxu0
        %v7388 = vadd.f32 0.0, %v7387
        %v7389 = vpop.f32.mrf.mxu0
        %v7390 = vadd.f32 0.0, %v7389
        %7391 = vmatmul.bf16.gmra.mxu0 %v6806
        %v7392 = vpop.f32.mrf.mxu0
        %v7393 = vadd.f32 0.0, %v7392
        %v7394 = vpop.f32.mrf.mxu0
        %v7395 = vadd.f32 0.0, %v7394
        %7396 = vmatmul.bf16.gmra.mxu0 %v6807
        %v7397 = vpop.f32.mrf.mxu0
        %v7398 = vadd.f32 0.0, %v7397
        %v7399 = vpop.f32.mrf.mxu0
        %v7400 = vadd.f32 0.0, %v7399
        %7401 = vmatmul.bf16.gmra.mxu0 %v6808
        %v7402 = vpop.f32.mrf.mxu0
        %v7403 = vadd.f32 0.0, %v7402
        %v7404 = vpop.f32.mrf.mxu0
        %v7405 = vadd.f32 0.0, %v7404
        %7406 = vmatmul.bf16.gmra.mxu0 %v6809
        %v7407 = vpop.f32.mrf.mxu0
        %v7408 = vadd.f32 0.0, %v7407
        %v7409 = vpop.f32.mrf.mxu0
        %v7410 = vadd.f32 0.0, %v7409
        %7411 = vmatmul.bf16.gmra.mxu0 %v6810
        %v7412 = vpop.f32.mrf.mxu0
        %v7413 = vadd.f32 0.0, %v7412
        %v7414 = vpop.f32.mrf.mxu0
        %v7415 = vadd.f32 0.0, %v7414
        %7416 = vmatmul.bf16.gmra.mxu0 %v6811
        %v7417 = vpop.f32.mrf.mxu0
        %v7418 = vadd.f32 0.0, %v7417
        %v7419 = vpop.f32.mrf.mxu0
        %v7420 = vadd.f32 0.0, %v7419
        %7421 = vmatmul.bf16.gmra.mxu0 %v6812
        %v7422 = vpop.f32.mrf.mxu0
        %v7423 = vadd.f32 0.0, %v7422
        %v7424 = vpop.f32.mrf.mxu0
        %v7425 = vadd.f32 0.0, %v7424
        %7426 = vmatmul.bf16.gmra.mxu0 %v6813
        %v7427 = vpop.f32.mrf.mxu0
        %v7428 = vadd.f32 0.0, %v7427
        %v7429 = vpop.f32.mrf.mxu0
        %v7430 = vadd.f32 0.0, %v7429
        %7431 = vdwg.mxu0
        %7432 = vmatpush.bf16.msra.mxu0 %v7310
        %7433 = vmatpush.bf16.msra.mxu0 %v7309
        %7434 = vmatpush.bf16.msra.mxu0 %v7308
        %7435 = vmatpush.bf16.msra.mxu0 %v7307
        %7436 = vmatpush.bf16.msra.mxu0 %v7306
        %7437 = vmatpush.bf16.msra.mxu0 %v7305
        %7438 = vmatpush.bf16.msra.mxu0 %v7304
        %7439 = vmatpush.bf16.msra.mxu0 %v7303
        %7440 = vmatmul.bf16.gmra.mxu0 %v6889
        %v7441 = vpop.f32.mrf.mxu0
        %v7442 = vadd.f32 %v7353, %v7441
        %v7443 = vpop.f32.mrf.mxu0
        %v7444 = vadd.f32 %v7355, %v7443
        %7445 = vmatmul.bf16.gmra.mxu0 %v6901
        %v7446 = vpop.f32.mrf.mxu0
        %v7447 = vadd.f32 %v7358, %v7446
        %v7448 = vpop.f32.mrf.mxu0
        %v7449 = vadd.f32 %v7360, %v7448
        %7450 = vmatmul.bf16.gmra.mxu0 %v6913
        %v7451 = vpop.f32.mrf.mxu0
        %v7452 = vadd.f32 %v7363, %v7451
        %v7453 = vpop.f32.mrf.mxu0
        %v7454 = vadd.f32 %v7365, %v7453
        %7455 = vmatmul.bf16.gmra.mxu0 %v6925
        %v7456 = vpop.f32.mrf.mxu0
        %v7457 = vadd.f32 %v7368, %v7456
        %v7458 = vpop.f32.mrf.mxu0
        %v7459 = vadd.f32 %v7370, %v7458
        %7460 = vmatmul.bf16.gmra.mxu0 %v6937
        %v7461 = vpop.f32.mrf.mxu0
        %v7462 = vadd.f32 %v7373, %v7461
        %v7463 = vpop.f32.mrf.mxu0
        %v7464 = vadd.f32 %v7375, %v7463
        %7465 = vmatmul.bf16.gmra.mxu0 %v6949
        %v7466 = vpop.f32.mrf.mxu0
        %v7467 = vadd.f32 %v7378, %v7466
        %v7468 = vpop.f32.mrf.mxu0
        %v7469 = vadd.f32 %v7380, %v7468
        %7470 = vmatmul.bf16.gmra.mxu0 %v6961
        %v7471 = vpop.f32.mrf.mxu0
        %v7472 = vadd.f32 %v7383, %v7471
        %v7473 = vpop.f32.mrf.mxu0
        %v7474 = vadd.f32 %v7385, %v7473
        %7475 = vmatmul.bf16.gmra.mxu0 %v6973
        %v7476 = vpop.f32.mrf.mxu0
        %v7477 = vadd.f32 %v7388, %v7476
        %v7478 = vpop.f32.mrf.mxu0
        %v7479 = vadd.f32 %v7390, %v7478
        %7480 = vmatmul.bf16.gmra.mxu0 %v6985
        %v7481 = vpop.f32.mrf.mxu0
        %v7482 = vadd.f32 %v7393, %v7481
        %v7483 = vpop.f32.mrf.mxu0
        %v7484 = vadd.f32 %v7395, %v7483
        %7485 = vmatmul.bf16.gmra.mxu0 %v6997
        %v7486 = vpop.f32.mrf.mxu0
        %v7487 = vadd.f32 %v7398, %v7486
        %v7488 = vpop.f32.mrf.mxu0
        %v7489 = vadd.f32 %v7400, %v7488
        %7490 = vmatmul.bf16.gmra.mxu0 %v7009
        %v7491 = vpop.f32.mrf.mxu0
        %v7492 = vadd.f32 %v7403, %v7491
        %v7493 = vpop.f32.mrf.mxu0
        %v7494 = vadd.f32 %v7405, %v7493
        %7495 = vmatmul.bf16.gmra.mxu0 %v7021
        %v7496 = vpop.f32.mrf.mxu0
        %v7497 = vadd.f32 %v7408, %v7496
        %v7498 = vpop.f32.mrf.mxu0
        %v7499 = vadd.f32 %v7410, %v7498
        %7500 = vmatmul.bf16.gmra.mxu0 %v7033
        %v7501 = vpop.f32.mrf.mxu0
        %v7502 = vadd.f32 %v7413, %v7501
        %v7503 = vpop.f32.mrf.mxu0
        %v7504 = vadd.f32 %v7415, %v7503
        %7505 = vmatmul.bf16.gmra.mxu0 %v7045
        %v7506 = vpop.f32.mrf.mxu0
        %v7507 = vadd.f32 %v7418, %v7506
        %v7508 = vpop.f32.mrf.mxu0
        %v7509 = vadd.f32 %v7420, %v7508
        %7510 = vmatmul.bf16.gmra.mxu0 %v7057
        %v7511 = vpop.f32.mrf.mxu0
        %v7512 = vadd.f32 %v7423, %v7511
        %v7513 = vpop.f32.mrf.mxu0
        %v7514 = vadd.f32 %v7425, %v7513
        %7515 = vmatmul.bf16.gmra.mxu0 %v7069
        %v7516 = vpop.f32.mrf.mxu0
        %v7517 = vadd.f32 %v7428, %v7516
        %v7518 = vpop.f32.mrf.mxu0
        %v7519 = vadd.f32 %v7430, %v7518
        %7520 = vdwg.mxu0
        %7521 = vmatpush.bf16.msra.mxu0 %v7318
        %7522 = vmatpush.bf16.msra.mxu0 %v7317
        %7523 = vmatpush.bf16.msra.mxu0 %v7316
        %7524 = vmatpush.bf16.msra.mxu0 %v7315
        %7525 = vmatpush.bf16.msra.mxu0 %v7314
        %7526 = vmatpush.bf16.msra.mxu0 %v7313
        %7527 = vmatpush.bf16.msra.mxu0 %v7312
        %7528 = vmatpush.bf16.msra.mxu0 %v7311
        %7529 = vmatmul.bf16.gmra.mxu0 %v7088
        %v7530 = vpop.f32.mrf.mxu0
        %v7531 = vadd.f32 %v7442, %v7530
        %v7532 = vpop.f32.mrf.mxu0
        %v7533 = vadd.f32 %v7444, %v7532
        %7534 = vmatmul.bf16.gmra.mxu0 %v7091
        %v7535 = vpop.f32.mrf.mxu0
        %v7536 = vadd.f32 %v7447, %v7535
        %v7537 = vpop.f32.mrf.mxu0
        %v7538 = vadd.f32 %v7449, %v7537
        %7539 = vmatmul.bf16.gmra.mxu0 %v7094
        %v7540 = vpop.f32.mrf.mxu0
        %v7541 = vadd.f32 %v7452, %v7540
        %v7542 = vpop.f32.mrf.mxu0
        %v7543 = vadd.f32 %v7454, %v7542
        %7544 = vmatmul.bf16.gmra.mxu0 %v7097
        %v7545 = vpop.f32.mrf.mxu0
        %v7546 = vadd.f32 %v7457, %v7545
        %v7547 = vpop.f32.mrf.mxu0
        %v7548 = vadd.f32 %v7459, %v7547
        %7549 = vmatmul.bf16.gmra.mxu0 %v7100
        %v7550 = vpop.f32.mrf.mxu0
        %v7551 = vadd.f32 %v7462, %v7550
        %v7552 = vpop.f32.mrf.mxu0
        %v7553 = vadd.f32 %v7464, %v7552
        %7554 = vmatmul.bf16.gmra.mxu0 %v7103
        %v7555 = vpop.f32.mrf.mxu0
        %v7556 = vadd.f32 %v7467, %v7555
        %v7557 = vpop.f32.mrf.mxu0
        %v7558 = vadd.f32 %v7469, %v7557
        %7559 = vmatmul.bf16.gmra.mxu0 %v7106
        %v7560 = vpop.f32.mrf.mxu0
        %v7561 = vadd.f32 %v7472, %v7560
        %v7562 = vpop.f32.mrf.mxu0
        %v7563 = vadd.f32 %v7474, %v7562
        %7564 = vmatmul.bf16.gmra.mxu0 %v7109
        %v7565 = vpop.f32.mrf.mxu0
        %v7566 = vadd.f32 %v7477, %v7565
        %v7567 = vpop.f32.mrf.mxu0
        %v7568 = vadd.f32 %v7479, %v7567
        %7569 = vmatmul.bf16.gmra.mxu0 %v7112
        %v7570 = vpop.f32.mrf.mxu0
        %v7571 = vadd.f32 %v7482, %v7570
        %v7572 = vpop.f32.mrf.mxu0
        %v7573 = vadd.f32 %v7484, %v7572
        %7574 = vmatmul.bf16.gmra.mxu0 %v7115
        %v7575 = vpop.f32.mrf.mxu0
        %v7576 = vadd.f32 %v7487, %v7575
        %v7577 = vpop.f32.mrf.mxu0
        %v7578 = vadd.f32 %v7489, %v7577
        %7579 = vmatmul.bf16.gmra.mxu0 %v7118
        %v7580 = vpop.f32.mrf.mxu0
        %v7581 = vadd.f32 %v7492, %v7580
        %v7582 = vpop.f32.mrf.mxu0
        %v7583 = vadd.f32 %v7494, %v7582
        %7584 = vmatmul.bf16.gmra.mxu0 %v7121
        %v7585 = vpop.f32.mrf.mxu0
        %v7586 = vadd.f32 %v7497, %v7585
        %v7587 = vpop.f32.mrf.mxu0
        %v7588 = vadd.f32 %v7499, %v7587
        %7589 = vmatmul.bf16.gmra.mxu0 %v7124
        %v7590 = vpop.f32.mrf.mxu0
        %v7591 = vadd.f32 %v7502, %v7590
        %v7592 = vpop.f32.mrf.mxu0
        %v7593 = vadd.f32 %v7504, %v7592
        %7594 = vmatmul.bf16.gmra.mxu0 %v7127
        %v7595 = vpop.f32.mrf.mxu0
        %v7596 = vadd.f32 %v7507, %v7595
        %v7597 = vpop.f32.mrf.mxu0
        %v7598 = vadd.f32 %v7509, %v7597
        %7599 = vmatmul.bf16.gmra.mxu0 %v7130
        %v7600 = vpop.f32.mrf.mxu0
        %v7601 = vadd.f32 %v7512, %v7600
        %v7602 = vpop.f32.mrf.mxu0
        %v7603 = vadd.f32 %v7514, %v7602
        %7604 = vmatmul.bf16.gmra.mxu0 %v7133
        %v7605 = vpop.f32.mrf.mxu0
        %v7606 = vadd.f32 %v7517, %v7605
        %v7607 = vpop.f32.mrf.mxu0
        %v7608 = vadd.f32 %v7519, %v7607
        %7609 = vdwg.mxu0
        %v7610 = vld [vmem:[#allocation4] sm:$0xff]
        %v7611 = vld [vmem:[#allocation4 + $0x8] sm:$0xff]
        %v7612 = vld [vmem:[#allocation4 + $0x10] sm:$0xff]
        %v7613 = vld [vmem:[#allocation4 + $0x18] sm:$0xff]
        %v7614 = vld [vmem:[#allocation4 + $0x20] sm:$0xff]
        %v7615 = vld [vmem:[#allocation4 + $0x28] sm:$0xff]
        %v7616 = vld [vmem:[#allocation4 + $0x30] sm:$0xff]
        %v7617 = vld [vmem:[#allocation4 + $0x38] sm:$0xff]
        %v7618 = vld [vmem:[#allocation4 + $0x40] sm:$0xff]
        %v7619 = vld [vmem:[#allocation4 + $0x48] sm:$0xff]
        %v7620 = vld [vmem:[#allocation4 + $0x50] sm:$0xff]
        %v7621 = vld [vmem:[#allocation4 + $0x58] sm:$0xff]
        %v7622 = vld [vmem:[#allocation4 + $0x60] sm:$0xff]
        %v7623 = vld [vmem:[#allocation4 + $0x68] sm:$0xff]
        %v7624 = vld [vmem:[#allocation4 + $0x70] sm:$0xff]
        %v7625 = vld [vmem:[#allocation4 + $0x78] sm:$0xff]
        %v7626 = vld [vmem:[#allocation4 + $0x80] sm:$0xff]
        %v7627 = vld [vmem:[#allocation4 + $0x88] sm:$0xff]
        %v7628 = vld [vmem:[#allocation4 + $0x90] sm:$0xff]
        %v7629 = vld [vmem:[#allocation4 + $0x98] sm:$0xff]
        %v7630 = vld [vmem:[#allocation4 + $0xa0] sm:$0xff]
        %v7631 = vld [vmem:[#allocation4 + $0xa8] sm:$0xff]
        %v7632 = vld [vmem:[#allocation4 + $0xb0] sm:$0xff]
        %v7633 = vld [vmem:[#allocation4 + $0xb8] sm:$0xff]
        %v7634 = vld [vmem:[#allocation4 + $0xc0] sm:$0xff]
        %v7635 = vld [vmem:[#allocation4 + $0xc8] sm:$0xff]
        %v7636 = vld [vmem:[#allocation4 + $0xd0] sm:$0xff]
        %v7637 = vld [vmem:[#allocation4 + $0xd8] sm:$0xff]
        %v7638 = vld [vmem:[#allocation4 + $0xe0] sm:$0xff]
        %v7639 = vld [vmem:[#allocation4 + $0xe8] sm:$0xff]
        %v7640 = vld [vmem:[#allocation4 + $0xf0] sm:$0xff]
        %v7641 = vld [vmem:[#allocation4 + $0xf8] sm:$0xff]
        %v7642 = vadd.f32 %v7610, %v7531
        %v7643 = vadd.f32 %v7611, %v7533
        %v7644 = vadd.f32 %v7612, %v7536
        %v7645 = vadd.f32 %v7613, %v7538
        %v7646 = vadd.f32 %v7614, %v7541
        %v7647 = vadd.f32 %v7615, %v7543
        %v7648 = vadd.f32 %v7616, %v7546
        %v7649 = vadd.f32 %v7617, %v7548
        %v7650 = vadd.f32 %v7618, %v7551
        %v7651 = vadd.f32 %v7619, %v7553
        %v7652 = vadd.f32 %v7620, %v7556
        %v7653 = vadd.f32 %v7621, %v7558
        %v7654 = vadd.f32 %v7622, %v7561
        %v7655 = vadd.f32 %v7623, %v7563
        %v7656 = vadd.f32 %v7624, %v7566
        %v7657 = vadd.f32 %v7625, %v7568
        %v7658 = vadd.f32 %v7626, %v7571
        %v7659 = vadd.f32 %v7627, %v7573
        %v7660 = vadd.f32 %v7628, %v7576
        %v7661 = vadd.f32 %v7629, %v7578
        %v7662 = vadd.f32 %v7630, %v7581
        %v7663 = vadd.f32 %v7631, %v7583
        %v7664 = vadd.f32 %v7632, %v7586
        %v7665 = vadd.f32 %v7633, %v7588
        %v7666 = vadd.f32 %v7634, %v7591
        %v7667 = vadd.f32 %v7635, %v7593
        %v7668 = vadd.f32 %v7636, %v7596
        %v7669 = vadd.f32 %v7637, %v7598
        %v7670 = vadd.f32 %v7638, %v7601
        %v7671 = vadd.f32 %v7639, %v7603
        %v7672 = vadd.f32 %v7640, %v7606
        %v7673 = vadd.f32 %v7641, %v7608
        %7674 = vst [vmem:[#allocation4] sm:$0xff] %v7642
        %7675 = vst [vmem:[#allocation4 + $0x8] sm:$0xff] %v7643
        %7676 = vst [vmem:[#allocation4 + $0x10] sm:$0xff] %v7644
        %7677 = vst [vmem:[#allocation4 + $0x18] sm:$0xff] %v7645
        %7678 = vst [vmem:[#allocation4 + $0x20] sm:$0xff] %v7646
        %7679 = vst [vmem:[#allocation4 + $0x28] sm:$0xff] %v7647
        %7680 = vst [vmem:[#allocation4 + $0x30] sm:$0xff] %v7648
        %7681 = vst [vmem:[#allocation4 + $0x38] sm:$0xff] %v7649
        %7682 = vst [vmem:[#allocation4 + $0x40] sm:$0xff] %v7650
        %7683 = vst [vmem:[#allocation4 + $0x48] sm:$0xff] %v7651
        %7684 = vst [vmem:[#allocation4 + $0x50] sm:$0xff] %v7652
        %7685 = vst [vmem:[#allocation4 + $0x58] sm:$0xff] %v7653
        %7686 = vst [vmem:[#allocation4 + $0x60] sm:$0xff] %v7654
        %7687 = vst [vmem:[#allocation4 + $0x68] sm:$0xff] %v7655
        %7688 = vst [vmem:[#allocation4 + $0x70] sm:$0xff] %v7656
        %7689 = vst [vmem:[#allocation4 + $0x78] sm:$0xff] %v7657
        %7690 = vst [vmem:[#allocation4 + $0x80] sm:$0xff] %v7658
        %7691 = vst [vmem:[#allocation4 + $0x88] sm:$0xff] %v7659
        %7692 = vst [vmem:[#allocation4 + $0x90] sm:$0xff] %v7660
        %7693 = vst [vmem:[#allocation4 + $0x98] sm:$0xff] %v7661
        %7694 = vst [vmem:[#allocation4 + $0xa0] sm:$0xff] %v7662
        %7695 = vst [vmem:[#allocation4 + $0xa8] sm:$0xff] %v7663
        %7696 = vst [vmem:[#allocation4 + $0xb0] sm:$0xff] %v7664
        %7697 = vst [vmem:[#allocation4 + $0xb8] sm:$0xff] %v7665
        %7698 = vst [vmem:[#allocation4 + $0xc0] sm:$0xff] %v7666
        %7699 = vst [vmem:[#allocation4 + $0xc8] sm:$0xff] %v7667
        %7700 = vst [vmem:[#allocation4 + $0xd0] sm:$0xff] %v7668
        %7701 = vst [vmem:[#allocation4 + $0xd8] sm:$0xff] %v7669
        %7702 = vst [vmem:[#allocation4 + $0xe0] sm:$0xff] %v7670
        %7703 = vst [vmem:[#allocation4 + $0xe8] sm:$0xff] %v7671
        %7704 = vst [vmem:[#allocation4 + $0xf0] sm:$0xff] %v7672
        %7705 = vst [vmem:[#allocation4 + $0xf8] sm:$0xff] %v7673
        %v7706 = vld [vmem:[%s240] sm:$0xf]
        %v7707 = vld [vmem:[%s240 + $0x4] sm:$0xf]
        %v7708 = vld [vmem:[%s240 + $0x8] sm:$0xf]
        %v7709 = vld [vmem:[%s240 + $0xc] sm:$0xf]
        %v7710 = vld [vmem:[%s240 + $0x10] sm:$0xf]
        %v7711 = vld [vmem:[%s240 + $0x14] sm:$0xf]
        %v7712 = vld [vmem:[%s240 + $0x18] sm:$0xf]
        %v7713 = vld [vmem:[%s240 + $0x1c] sm:$0xf]
        %v7714 = vld [vmem:[%s240 + $0x20] sm:$0xf]
        %v7715 = vld [vmem:[%s240 + $0x24] sm:$0xf]
        %v7716 = vld [vmem:[%s240 + $0x28] sm:$0xf]
        %v7717 = vld [vmem:[%s240 + $0x2c] sm:$0xf]
        %v7718 = vld [vmem:[%s240 + $0x30] sm:$0xf]
        %v7719 = vld [vmem:[%s240 + $0x34] sm:$0xf]
        %v7720 = vld [vmem:[%s240 + $0x38] sm:$0xf]
        %v7721 = vld [vmem:[%s240 + $0x3c] sm:$0xf]
        %v7722 = vld [vmem:[%s240 + $0x40] sm:$0xf]
        %v7723 = vld [vmem:[%s240 + $0x44] sm:$0xf]
        %v7724 = vld [vmem:[%s240 + $0x48] sm:$0xf]
        %v7725 = vld [vmem:[%s240 + $0x4c] sm:$0xf]
        %v7726 = vld [vmem:[%s240 + $0x50] sm:$0xf]
        %v7727 = vld [vmem:[%s240 + $0x54] sm:$0xf]
        %v7728 = vld [vmem:[%s240 + $0x58] sm:$0xf]
        %v7729 = vld [vmem:[%s240 + $0x5c] sm:$0xf]
        %v7730 = vld [vmem:[%s240 + $0x60] sm:$0xf]
        %v7731 = vld [vmem:[%s240 + $0x64] sm:$0xf]
        %v7732 = vld [vmem:[%s240 + $0x68] sm:$0xf]
        %v7733 = vld [vmem:[%s240 + $0x6c] sm:$0xf]
        %v7734 = vld [vmem:[%s240 + $0x70] sm:$0xf]
        %v7735 = vld [vmem:[%s240 + $0x74] sm:$0xf]
        %v7736 = vld [vmem:[%s240 + $0x78] sm:$0xf]
        %v7737 = vld [vmem:[%s240 + $0x7c] sm:$0xf]
        %v7738 = vunpack.c.l.bf16 %v7706
        %v7739 = vunpack.c.l.bf16 %v7707
        %v7740 = vunpack.c.l.bf16 %v7708
        %v7741 = vunpack.c.l.bf16 %v7709
        %v7742 = vunpack.c.l.bf16 %v7710
        %v7743 = vunpack.c.l.bf16 %v7711
        %v7744 = vunpack.c.l.bf16 %v7712
        %v7745 = vunpack.c.l.bf16 %v7713
        %v7746 = vunpack.c.l.bf16 %v7714
        %v7747 = vunpack.c.l.bf16 %v7715
        %v7748 = vunpack.c.l.bf16 %v7716
        %v7749 = vunpack.c.l.bf16 %v7717
        %v7750 = vunpack.c.l.bf16 %v7718
        %v7751 = vunpack.c.l.bf16 %v7719
        %v7752 = vunpack.c.l.bf16 %v7720
        %v7753 = vunpack.c.l.bf16 %v7721
        %v7754 = vunpack.c.l.bf16 %v7722
        %v7755 = vunpack.c.l.bf16 %v7723
        %v7756 = vunpack.c.l.bf16 %v7724
        %v7757 = vunpack.c.l.bf16 %v7725
        %v7758 = vunpack.c.l.bf16 %v7726
        %v7759 = vunpack.c.l.bf16 %v7727
        %v7760 = vunpack.c.l.bf16 %v7728
        %v7761 = vunpack.c.l.bf16 %v7729
        %v7762 = vunpack.c.l.bf16 %v7730
        %v7763 = vunpack.c.l.bf16 %v7731
        %v7764 = vunpack.c.l.bf16 %v7732
        %v7765 = vunpack.c.l.bf16 %v7733
        %v7766 = vunpack.c.l.bf16 %v7734
        %v7767 = vunpack.c.l.bf16 %v7735
        %v7768 = vunpack.c.l.bf16 %v7736
        %v7769 = vunpack.c.l.bf16 %v7737
        %v7770 = vld [vmem:[#allocation4] sm:$0xff]
        %v7771 = vld [vmem:[#allocation4 + $0x8] sm:$0xff]
        %v7772 = vld [vmem:[#allocation4 + $0x10] sm:$0xff]
        %v7773 = vld [vmem:[#allocation4 + $0x18] sm:$0xff]
        %v7774 = vld [vmem:[#allocation4 + $0x20] sm:$0xff]
        %v7775 = vld [vmem:[#allocation4 + $0x28] sm:$0xff]
        %v7776 = vld [vmem:[#allocation4 + $0x30] sm:$0xff]
        %v7777 = vld [vmem:[#allocation4 + $0x38] sm:$0xff]
        %v7778 = vld [vmem:[#allocation4 + $0x40] sm:$0xff]
        %v7779 = vld [vmem:[#allocation4 + $0x48] sm:$0xff]
        %v7780 = vld [vmem:[#allocation4 + $0x50] sm:$0xff]
        %v7781 = vld [vmem:[#allocation4 + $0x58] sm:$0xff]
        %v7782 = vld [vmem:[#allocation4 + $0x60] sm:$0xff]
        %v7783 = vld [vmem:[#allocation4 + $0x68] sm:$0xff]
        %v7784 = vld [vmem:[#allocation4 + $0x70] sm:$0xff]
        %v7785 = vld [vmem:[#allocation4 + $0x78] sm:$0xff]
        %v7786 = vld [vmem:[#allocation4 + $0x80] sm:$0xff]
        %v7787 = vld [vmem:[#allocation4 + $0x88] sm:$0xff]
        %v7788 = vld [vmem:[#allocation4 + $0x90] sm:$0xff]
        %v7789 = vld [vmem:[#allocation4 + $0x98] sm:$0xff]
        %v7790 = vld [vmem:[#allocation4 + $0xa0] sm:$0xff]
        %v7791 = vld [vmem:[#allocation4 + $0xa8] sm:$0xff]
        %v7792 = vld [vmem:[#allocation4 + $0xb0] sm:$0xff]
        %v7793 = vld [vmem:[#allocation4 + $0xb8] sm:$0xff]
        %v7794 = vld [vmem:[#allocation4 + $0xc0] sm:$0xff]
        %v7795 = vld [vmem:[#allocation4 + $0xc8] sm:$0xff]
        %v7796 = vld [vmem:[#allocation4 + $0xd0] sm:$0xff]
        %v7797 = vld [vmem:[#allocation4 + $0xd8] sm:$0xff]
        %v7798 = vld [vmem:[#allocation4 + $0xe0] sm:$0xff]
        %v7799 = vld [vmem:[#allocation4 + $0xe8] sm:$0xff]
        %v7800 = vld [vmem:[#allocation4 + $0xf0] sm:$0xff]
        %v7801 = vld [vmem:[#allocation4 + $0xf8] sm:$0xff]
        %v7802 = vadd.f32 %v7770, %v7738
        %v7803 = vadd.f32 %v7771, %v7739
        %v7804 = vadd.f32 %v7772, %v7740
        %v7805 = vadd.f32 %v7773, %v7741
        %v7806 = vadd.f32 %v7774, %v7742
        %v7807 = vadd.f32 %v7775, %v7743
        %v7808 = vadd.f32 %v7776, %v7744
        %v7809 = vadd.f32 %v7777, %v7745
        %v7810 = vadd.f32 %v7778, %v7746
        %v7811 = vadd.f32 %v7779, %v7747
        %v7812 = vadd.f32 %v7780, %v7748
        %v7813 = vadd.f32 %v7781, %v7749
        %v7814 = vadd.f32 %v7782, %v7750
        %v7815 = vadd.f32 %v7783, %v7751
        %v7816 = vadd.f32 %v7784, %v7752
        %v7817 = vadd.f32 %v7785, %v7753
        %v7818 = vadd.f32 %v7786, %v7754
        %v7819 = vadd.f32 %v7787, %v7755
        %v7820 = vadd.f32 %v7788, %v7756
        %v7821 = vadd.f32 %v7789, %v7757
        %v7822 = vadd.f32 %v7790, %v7758
        %v7823 = vadd.f32 %v7791, %v7759
        %v7824 = vadd.f32 %v7792, %v7760
        %v7825 = vadd.f32 %v7793, %v7761
        %v7826 = vadd.f32 %v7794, %v7762
        %v7827 = vadd.f32 %v7795, %v7763
        %v7828 = vadd.f32 %v7796, %v7764
        %v7829 = vadd.f32 %v7797, %v7765
        %v7830 = vadd.f32 %v7798, %v7766
        %v7831 = vadd.f32 %v7799, %v7767
        %v7832 = vadd.f32 %v7800, %v7768
        %v7833 = vadd.f32 %v7801, %v7769
        %v7834 = vmax.f32 %v7802, 0.0
        %v7835 = vmax.f32 %v7803, 0.0
        %v7836 = vmax.f32 %v7804, 0.0
        %v7837 = vmax.f32 %v7805, 0.0
        %v7838 = vmax.f32 %v7806, 0.0
        %v7839 = vmax.f32 %v7807, 0.0
        %v7840 = vmax.f32 %v7808, 0.0
        %v7841 = vmax.f32 %v7809, 0.0
        %v7842 = vmax.f32 %v7810, 0.0
        %v7843 = vmax.f32 %v7811, 0.0
        %v7844 = vmax.f32 %v7812, 0.0
        %v7845 = vmax.f32 %v7813, 0.0
        %v7846 = vmax.f32 %v7814, 0.0
        %v7847 = vmax.f32 %v7815, 0.0
        %v7848 = vmax.f32 %v7816, 0.0
        %v7849 = vmax.f32 %v7817, 0.0
        %v7850 = vmax.f32 %v7818, 0.0
        %v7851 = vmax.f32 %v7819, 0.0
        %v7852 = vmax.f32 %v7820, 0.0
        %v7853 = vmax.f32 %v7821, 0.0
        %v7854 = vmax.f32 %v7822, 0.0
        %v7855 = vmax.f32 %v7823, 0.0
        %v7856 = vmax.f32 %v7824, 0.0
        %v7857 = vmax.f32 %v7825, 0.0
        %v7858 = vmax.f32 %v7826, 0.0
        %v7859 = vmax.f32 %v7827, 0.0
        %v7860 = vmax.f32 %v7828, 0.0
        %v7861 = vmax.f32 %v7829, 0.0
        %v7862 = vmax.f32 %v7830, 0.0
        %v7863 = vmax.f32 %v7831, 0.0
        %v7864 = vmax.f32 %v7832, 0.0
        %v7865 = vmax.f32 %v7833, 0.0
        %7866 = vst [vmem:[%s277] sm:$0xff] %v7834
        %7867 = vst [vmem:[%s277 + $0x8] sm:$0xff] %v7835
        %7868 = vst [vmem:[%s277 + $0x10] sm:$0xff] %v7836
        %7869 = vst [vmem:[%s277 + $0x18] sm:$0xff] %v7837
        %7870 = vst [vmem:[%s277 + $0x20] sm:$0xff] %v7838
        %7871 = vst [vmem:[%s277 + $0x28] sm:$0xff] %v7839
        %7872 = vst [vmem:[%s277 + $0x30] sm:$0xff] %v7840
        %7873 = vst [vmem:[%s277 + $0x38] sm:$0xff] %v7841
        %7874 = vst [vmem:[%s277 + $0x40] sm:$0xff] %v7842
        %7875 = vst [vmem:[%s277 + $0x48] sm:$0xff] %v7843
        %7876 = vst [vmem:[%s277 + $0x50] sm:$0xff] %v7844
        %7877 = vst [vmem:[%s277 + $0x58] sm:$0xff] %v7845
        %7878 = vst [vmem:[%s277 + $0x60] sm:$0xff] %v7846
        %7879 = vst [vmem:[%s277 + $0x68] sm:$0xff] %v7847
        %7880 = vst [vmem:[%s277 + $0x70] sm:$0xff] %v7848
        %7881 = vst [vmem:[%s277 + $0x78] sm:$0xff] %v7849
        %7882 = vst [vmem:[%s277 + $0x80] sm:$0xff] %v7850
        %7883 = vst [vmem:[%s277 + $0x88] sm:$0xff] %v7851
        %7884 = vst [vmem:[%s277 + $0x90] sm:$0xff] %v7852
        %7885 = vst [vmem:[%s277 + $0x98] sm:$0xff] %v7853
        %7886 = vst [vmem:[%s277 + $0xa0] sm:$0xff] %v7854
        %7887 = vst [vmem:[%s277 + $0xa8] sm:$0xff] %v7855
        %7888 = vst [vmem:[%s277 + $0xb0] sm:$0xff] %v7856
        %7889 = vst [vmem:[%s277 + $0xb8] sm:$0xff] %v7857
        %7890 = vst [vmem:[%s277 + $0xc0] sm:$0xff] %v7858
        %7891 = vst [vmem:[%s277 + $0xc8] sm:$0xff] %v7859
        %7892 = vst [vmem:[%s277 + $0xd0] sm:$0xff] %v7860
        %7893 = vst [vmem:[%s277 + $0xd8] sm:$0xff] %v7861
        %7894 = vst [vmem:[%s277 + $0xe0] sm:$0xff] %v7862
        %7895 = vst [vmem:[%s277 + $0xe8] sm:$0xff] %v7863
        %7896 = vst [vmem:[%s277 + $0xf0] sm:$0xff] %v7864
        %7897 = vst [vmem:[%s277 + $0xf8] sm:$0xff] %v7865
        %s7898 = sand.u32 %s141, 1
        %s7899 = scalar_lea.sflag [#allocation7], %s7898
        %s7900 = sand.u32 %s141, 1
        %s7901 = smul.addr %s7900, 256
        %s7902 = scalar_lea.vmem [#allocation11], %s7901
        // Predicated region
        $region53: #{tpu_custom_call.1} parent=39 // pred_check
          %p7903 = pneg %p151
        $region54: #{tpu_custom_call.1} parent=39 // pred_check_branch
          %7905 = sbr.rel (%p7903) target = $region56
        $region55: #{tpu_custom_call.1} parent=39 // pred_region
          %7907 = vsyncadd %s7899, 0
          %s7908 = smul.addr %s23, 32
          %s7909 = smul.addr %s7908, 8
          %s7910 = scalar_lea.hbm %s5, %s7909
          %s7911 = sshll.u32 %s7902, 4
          %s7912 = int_to_ptr.vmem [resolvable:$true] %s7911
          %s7913 = sshll.u32 %s7910, 4
          %s7914 = int_to_ptr.hbm [resolvable:$true] %s7913
          %7919 = dma.vmem_to_hbm [thread:$0]  %s7912, 4096, %s7914, %s7899, 128, 128, 8
        $region56: #{tpu_custom_call.1} parent=39 // pred_fallthru
          _
      $region40: #{tpu_custom_call.1} parent=5 // pred_fallthru
        _
      %p7920 = scmp.le.s32.totalorder 2, %s18
      // Predicated region
      $region57: #{tpu_custom_call.1} parent=5 // pred_check
        %p7921 = pneg %p7920
      $region58: #{tpu_custom_call.1} parent=5 // pred_check_branch
        %7923 = sbr.rel (%p7921) target = $region60
      $region59: #{tpu_custom_call.1} parent=5 // pred_region
        %s7924 = ssub.s32 %s18, 2
        // Predicated region
        $region61: #{tpu_custom_call.1} parent=59 // pred_check
          %p7925 = pneg %p157
        $region62: #{tpu_custom_call.1} parent=59 // pred_check_branch
          %7927 = sbr.rel (%p7925) target = $region64
        $region63: #{tpu_custom_call.1} parent=59 // pred_region
          %s7928 = sand.u32 %s142, 1
          %s7929 = scalar_lea.sflag [#allocation7], %s7928
          %s7930 = sand.u32 %s142, 1
          %s7931 = smul.addr %s7930, 256
          %s7932 = scalar_lea.vmem [#allocation11], %s7931
          %7934 = dma.done %s7929, 4096
        $region64: #{tpu_custom_call.1} parent=59 // pred_fallthru
          _
      $region60: #{tpu_custom_call.1} parent=5 // pred_fallthru
        _
    $region6: #{tpu_custom_call.1} parent=1 // loop_footer
      %s22 = sadd.s32 1, %s18
    $region7: #{tpu_custom_call.1} parent=1 // loop_footer_branch
      %17 = sbr.rel target = $region3
    $region8: #{tpu_custom_call.1} parent=1 // loop_exit
      _
    %7935 = vsyncpa [#allocation6], 1
    %s7936 = scalar_lea.sflag [#allocation6], 1
    %7937 = vsyncpa %s7936, 1
    %7938 = vsyncpa [#allocation9], 1
    %7939 = vsyncpa [#allocation7], 1
    %s7940 = scalar_lea.sflag [#allocation7], 1
    %7941 = vsyncpa %s7940, 1

</llo_original>
